<compile_context>
chip_gen: v7x
topology: tpu7x:2x2x1
jax: 0.10.0
libtpu: 0.0.40
codegen_flags: <defaults>
</compile_context>

<pallas_src>
import jax
import jax.numpy as jnp
import numpy as np
from jax.experimental import pallas as pl
from jax.experimental.pallas import tpu as pltpu

_BN_EPS = 1e-5

# (Cin, Cout, K, stride, pad) for the four conv blocks of the module.
_CONV_CONFIG = (
    (1, 32, 7, 2, 3),
    (32, 64, 5, 2, 2),
    (64, 128, 3, 2, 1),
    (128, 256, 3, 2, 1),
)


def _cdiv(a, b):
    return -(-a // b)


def _round_up(x, m):
    return _cdiv(x, m) * m


def _choose_steps(m):
    """Row-tile grid steps: 1 for small M, otherwise an even count (v7x megacore
    balance) with <= ~4K rows/step; padding is bounded by 8*steps rows."""
    if m <= 1024:
        return 1
    return 2 * _cdiv(m, 8192)


# ---------------------------------------------------------------------------
# Kernel 1/2: fused  relu(patches @ W_eff + bias_eff)   (BN folded into W / bias)
# ---------------------------------------------------------------------------
def _gemm_bias_relu_kernel(a_ref, w_ref, b_ref, o_ref):
    acc = jnp.dot(a_ref[...], w_ref[...], preferred_element_type=jnp.float32)
    o_ref[...] = jnp.maximum(acc + b_ref[...], 0.0).astype(o_ref.dtype)


def _conv_gemm(patches, w_mat, bias):
    """patches (M, K) bf16, w_mat (K, N) bf16, bias (1, N) f32 -> (M, N) bf16."""
    m, k = patches.shape
    n = w_mat.shape[1]
    steps = _choose_steps(m)
    tm = _round_up(_cdiv(m, steps), 8)
    m_pad = tm * steps
    if m_pad != m:
        patches = jnp.pad(patches, ((0, m_pad - m), (0, 0)))

    out = pl.pallas_call(
        _gemm_bias_relu_kernel,
        out_shape=jax.ShapeDtypeStruct((m_pad, n), jnp.bfloat16),
        grid=(steps,),
        in_specs=[
            pl.BlockSpec((tm, k), lambda i: (i, 0)),
            pl.BlockSpec((k, n), lambda i: (0, 0)),
            pl.BlockSpec((1, n), lambda i: (0, 0)),
        ],
        out_specs=pl.BlockSpec((tm, n), lambda i: (i, 0)),
        compiler_params=pltpu.CompilerParams(dimension_semantics=("parallel",)),
        cost_estimate=pl.CostEstimate(
            flops=int(2 * m_pad * k * n + 2 * m_pad * n),
            transcendentals=0,
            bytes_accessed=int(2 * (m_pad * k + k * n + m_pad * n) + 4 * n),
        ),
    )(patches, w_mat, bias)
    return out[:m] if m_pad != m else out


# ---------------------------------------------------------------------------
# Kernel 3: fused  conv3 (GEMM) -> conv4 (in-kernel one-hot gather) -> pool -> FC
# ---------------------------------------------------------------------------
def _tail_kernel(p3_ref, w3_ref, b3_ref, g_ref, w4_ref, b4_ref, pm_ref,
                 wf_ref, bf_ref, o_ref):
    # conv3: GEMM + bias + ReLU  -> (M3, C3)
    a3 = jnp.dot(p3_ref[...], w3_ref[...], preferred_element_type=jnp.float32)
    a3 = jnp.maximum(a3 + b3_ref[...], 0.0).astype(jnp.bfloat16)

    # conv4: stride-2 3x3 im2col done in-kernel with a constant one-hot gather
    # (rows ordered [tap, out_pos]); then one small matmul per tap (unrolled).
    xg = jnp.dot(g_ref[...], a3, preferred_element_type=jnp.float32)
    xg = xg.astype(jnp.bfloat16)                                   # (KK*M4, C3)
    n_taps = w4_ref.shape[0]
    m4 = pm_ref.shape[1]
    acc = jnp.zeros((m4, w4_ref.shape[2]), jnp.float32)
    for t in range(n_taps):
        acc = acc + jnp.dot(xg[t * m4:(t + 1) * m4, :], w4_ref[t],
                            preferred_element_type=jnp.float32)
    a4 = jnp.maximum(acc + b4_ref[...], 0.0)                       # (M4, C4) f32

    # global average pool as a tiny matmul, then the FC head (lane-dense output).
    pooled = jnp.dot(pm_ref[...], a4, preferred_element_type=jnp.float32)   # (B, C4)
    y = jnp.dot(pooled.astype(jnp.bfloat16), wf_ref[...],
                preferred_element_type=jnp.float32)
    o_ref[...] = (y + bf_ref[...]).astype(o_ref.dtype)


def _tail_call(p3, w3, b3, gmat, w4, b4, pmat, wf, bfc):
    bsz, feat = pmat.shape[0], wf.shape[1]

    def full(shape):
        return pl.BlockSpec(tuple(shape), lambda i, _s=len(shape): (0,) * _s)

    flops = int(2 * p3.shape[0] * p3.shape[1] * w3.shape[1]
                + 2 * gmat.shape[0] * gmat.shape[1] * w3.shape[1]
                + 2 * gmat.shape[0] * w4.shape[1] * w4.shape[2]
                + 2 * bsz * pmat.shape[1] * w4.shape[2]
                + 2 * bsz * wf.shape[0] * feat)
    nbytes = int(sum(int(np.prod(a.shape)) * a.dtype.itemsize
                     for a in (p3, w3, b3, gmat, w4, b4, pmat, wf, bfc))
                 + bsz * feat * 4)

    return pl.pallas_call(
        _tail_kernel,
        out_shape=jax.ShapeDtypeStruct((bsz, feat), jnp.float32),
        grid=(1,),
        in_specs=[full(p3.shape), full(w3.shape), full(b3.shape),
                  full(gmat.shape), full(w4.shape), full(b4.shape),
                  full(pmat.shape), full(wf.shape), full(bfc.shape)],
        out_specs=full((bsz, feat)),
        compiler_params=pltpu.CompilerParams(dimension_semantics=("arbitrary",)),
        cost_estimate=pl.CostEstimate(flops=flops, transcendentals=0,
                                      bytes_accessed=nbytes),
    )(p3, w3, b3, gmat, w4, b4, pmat, wf, bfc)


# ---------------------------------------------------------------------------
# Wrapper-side layout plumbing (no significant FLOPs).
# ---------------------------------------------------------------------------
def _extract_patches(x, kk, stride, pad):
    """im2col via one grouped identity conv (pure gather; exact in bf16).
    Output feature order: c * kk*kk + i*kk + j  (channel-major, tap-minor)."""
    b, h, w, c = x.shape
    eye = jnp.eye(kk * kk, dtype=x.dtype).reshape(kk, kk, 1, kk * kk)
    rhs = jnp.tile(eye, (1, 1, 1, c))                    # (kk, kk, 1, c*kk*kk)
    p = jax.lax.conv_general_dilated(
        x, rhs, (stride, stride), [(pad, pad), (pad, pad)],
        dimension_numbers=("NHWC", "HWIO", "NHWC"),
        feature_group_count=c)
    ho = (h + 2 * pad - kk) // stride + 1
    wo = (w + 2 * pad - kk) // stride + 1
    return p.reshape(b * ho * wo, c * kk * kk), ho, wo


def _fold_bn_gemm(layer, cfg):
    """Fold conv bias + eval-mode BN into (Cin*K*K, Cout) bf16 weights + f32 bias row."""
    cin, cout, kk, _, _ = cfg
    scale = layer["gamma"] / jnp.sqrt(layer["var"] + _BN_EPS)
    bias = (layer["b"] - layer["mean"]) * scale + layer["beta"]
    w = jnp.transpose(layer["w"], (1, 2, 3, 0)).reshape(cin * kk * kk, cout)
    return ((w * scale[None, :]).astype(jnp.bfloat16),
            bias.reshape(1, cout).astype(jnp.float32))


def _fold_bn_taps(layer, cfg):
    """Same folding, but weights laid out (K*K, Cin, Cout) for per-tap accumulation."""
    cin, cout, kk, _, _ = cfg
    scale = layer["gamma"] / jnp.sqrt(layer["var"] + _BN_EPS)
    bias = (layer["b"] - layer["mean"]) * scale + layer["beta"]
    w = jnp.transpose(layer["w"], (2, 3, 1, 0)).reshape(kk * kk, cin, cout)
    return ((w * scale[None, None, :]).astype(jnp.bfloat16),
            bias.reshape(1, cout).astype(jnp.float32))


def _gather_matrix(b, h_in, w_in, kk, stride, pad, dtype):
    """Constant one-hot gather (K*K*M_out, M_in) mapping flat conv-input rows to
    [tap, out_pos]-ordered patch rows (zeros for padding taps)."""
    h_out = (h_in + 2 * pad - kk) // stride + 1
    w_out = (w_in + 2 * pad - kk) // stride + 1
    m_in, m_out = b * h_in * w_in, b * h_out * w_out
    g = np.zeros((kk * kk * m_out, m_in), dtype=np.float32)
    for t in range(kk * kk):
        di, dj = divmod(t, kk)
        for bi in range(b):
            for ho in range(h_out):
                hh = stride * ho + di - pad
                if not (0 <= hh < h_in):
                    continue
                for wo in range(w_out):
                    ww = stride * wo + dj - pad
                    if 0 <= ww < w_in:
                        g[t * m_out + bi * h_out * w_out + ho * w_out + wo,
                          bi * h_in * w_in + hh * w_in + ww] = 1.0
    return jnp.asarray(g, dtype=dtype)


def _pool_matrix(b, spatial):
    """Constant (B, B*spatial) averaging matrix for the global average pool."""
    p = np.zeros((b, b * spatial), dtype=np.float32)
    for bi in range(b):
        p[bi, bi * spatial:(bi + 1) * spatial] = 1.0 / spatial
    return jnp.asarray(p)


@jax.jit
def feature_extractor_forward(x_nchw, params):
    """Pallas forward of OptimizedLargeKernelFeatureExtractor. x_nchw: (B, 1, H, W)."""
    x = jnp.transpose(x_nchw, (0, 2, 3, 1)).astype(jnp.bfloat16)   # NHWC, channels on lanes
    bsz = x.shape[0]

    # conv1 / conv2: GEMM kernels over wrapper-extracted patches.
    for li in (0, 1):
        cfg = _CONV_CONFIG[li]
        _, cout, kk, stride, pad = cfg
        patches, ho, wo = _extract_patches(x, kk, stride, pad)
        w_mat, bias = _fold_bn_gemm(params["convs"][li], cfg)
        y = _conv_gemm(patches, w_mat, bias)                        # (B*ho*wo, cout) bf16
        x = y.reshape(bsz, ho, wo, cout)

    # fused tail: conv3 (GEMM) + conv4 (in-kernel gather) + avg-pool + FC.
    cfg3, cfg4 = _CONV_CONFIG[2], _CONV_CONFIG[3]
    p3, h3, w3o = _extract_patches(x, cfg3[2], cfg3[3], cfg3[4])
    w3_mat, b3 = _fold_bn_gemm(params["convs"][2], cfg3)
    w4_taps, b4 = _fold_bn_taps(params["convs"][3], cfg4)
    gmat = _gather_matrix(bsz, h3, w3o, cfg4[2], cfg4[3], cfg4[4], jnp.bfloat16)
    h4 = (h3 + 2 * cfg4[4] - cfg4[2]) // cfg4[3] + 1
    w4o = (w3o + 2 * cfg4[4] - cfg4[2]) // cfg4[3] + 1
    pmat = _pool_matrix(bsz, h4 * w4o)
    return _tail_call(p3, w3_mat, b3, gmat, w4_taps, b4, pmat,
                      params["fc_w_t"].astype(jnp.bfloat16), params["fc_b"])


# ---------------------------------------------------------------------------
# Pure-JAX f32 reference mirroring the PyTorch forward (eval-mode BN).
# ---------------------------------------------------------------------------
@jax.jit
def _reference(x_nchw, params):
    x = jnp.transpose(x_nchw, (0, 2, 3, 1)).astype(jnp.float32)
    for layer, (_, _, kk, stride, pad) in zip(params["convs"], _CONV_CONFIG):
        w_hwio = jnp.transpose(layer["w"], (2, 3, 1, 0))
        y = jax.lax.conv_general_dilated(
            x, w_hwio, (stride, stride), [(pad, pad), (pad, pad)],
            dimension_numbers=("NHWC", "HWIO", "NHWC"),
            precision=jax.lax.Precision.HIGHEST)
        y = y + layer["b"][None, None, None, :]
        y = (y - layer["mean"]) / jnp.sqrt(layer["var"] + _BN_EPS) * layer["gamma"] + layer["beta"]
        x = jnp.maximum(y, 0.0)
    pooled = jnp.mean(x, axis=(1, 2))
    return jnp.dot(pooled, params["fc_w_t"],
                   precision=jax.lax.Precision.HIGHEST) + params["fc_b"]


if __name__ == "__main__":
    bsz, hh, ww = 2, 96, 96        # the module is the 96x96-optimized extractor
    feature_dim = 128

    keys = iter(jax.random.split(jax.random.PRNGKey(0), 32))
    convs = []
    for (cin, cout, kk, stride, pad) in _CONV_CONFIG:
        convs.append({
            "w": 0.05 * jax.random.normal(next(keys), (cout, cin, kk, kk), dtype=jnp.float32),
            "b": 0.1 * jax.random.normal(next(keys), (cout,), dtype=jnp.float32),
            "gamma": jax.random.uniform(next(keys), (cout,), jnp.float32, 0.5, 1.5),
            "beta": 0.1 * jax.random.normal(next(keys), (cout,), dtype=jnp.float32),
            "mean": 0.1 * jax.random.normal(next(keys), (cout,), dtype=jnp.float32),
            "var": jax.random.uniform(next(keys), (cout,), jnp.float32, 0.5, 1.5),
        })
    params = {
        "convs": convs,
        "fc_w_t": 0.05 * jax.random.normal(next(keys), (256, feature_dim), dtype=jnp.float32),
        "fc_b": 0.1 * jax.random.normal(next(keys), (1, feature_dim), dtype=jnp.float32),
    }
    x = jax.random.normal(next(keys), (bsz, 1, hh, ww), dtype=jnp.float32)

    out = jax.block_until_ready(feature_extractor_forward(x, params))
    ref = jax.block_until_ready(_reference(x, params))

    assert out.shape == (bsz, feature_dim), out.shape
    # bf16 GEMM operands (f32 accumulation) -> loosened tolerance vs the f32 reference.
    assert jnp.allclose(out, ref, atol=2e-2, rtol=2e-2), float(jnp.max(jnp.abs(out - ref)))
    print("KERNEL_OK")
</pallas_src>

<mosaic_0001>
module attributes {stable_mosaic.version = 11 : i64} {
  func.func @_gemm_bias_relu_kernel(%arg0: i32, %arg1: memref<2304x49xbf16, #tpu.memory_space<vmem>>, %arg2: memref<49x32xbf16, #tpu.memory_space<vmem>>, %arg3: memref<1x32xf32, #tpu.memory_space<vmem>>, %arg4: memref<2304x32xbf16, #tpu.memory_space<vmem>>) attributes {dimension_semantics = [#tpu.dimension_semantics<parallel>], iteration_bounds = array<i64: 2>, scalar_prefetch = 0 : i64, scratch_operands = 0 : i64, tpu.core_type = #tpu.core_type<tc>, window_params = [{transform_indices = @transform_0, window_bounds = array<i64: 2304, 49>}, {pipeline_mode = #tpu.pipeline_mode<synchronous>, transform_indices = @transform_1, window_bounds = array<i64: 49, 32>}, {pipeline_mode = #tpu.pipeline_mode<synchronous>, transform_indices = @transform_2, window_bounds = array<i64: 1, 32>}, {transform_indices = @transform_3, window_bounds = array<i64: 2304, 32>}]} {
    %c0 = arith.constant 0 : index
    %c0_0 = arith.constant 0 : index
    %0 = vector.load %arg1[%c0, %c0_0] : memref<2304x49xbf16, #tpu.memory_space<vmem>>, vector<2304x49xbf16>
    %c0_1 = arith.constant 0 : index
    %c0_2 = arith.constant 0 : index
    %1 = vector.load %arg2[%c0_1, %c0_2] : memref<49x32xbf16, #tpu.memory_space<vmem>>, vector<49x32xbf16>
    %cst = arith.constant dense<0.000000e+00> : vector<2304x32xf32>
    %2 = tpu.matmul %0, %1, %cst {dimension_numbers = #tpu.dot_dimension_numbers<[1], [0], [0], [1], [0, 0, 1, 1], [], []>} : vector<2304x49xbf16>, vector<49x32xbf16>, vector<2304x32xf32> -> vector<2304x32xf32>
    %c0_3 = arith.constant 0 : index
    %c0_4 = arith.constant 0 : index
    %3 = vector.load %arg3[%c0_3, %c0_4] : memref<1x32xf32, #tpu.memory_space<vmem>>, vector<1x32xf32>
    %4 = vector.broadcast %3 : vector<1x32xf32> to vector<2304x32xf32>
    %5 = arith.addf %2, %4 : vector<2304x32xf32>
    %cst_5 = arith.constant 0.000000e+00 : f32
    %6 = vector.broadcast %cst_5 : f32 to vector<2304x32xf32>
    %7 = arith.maximumf %5, %6 : vector<2304x32xf32>
    %8 = arith.truncf %7 : vector<2304x32xf32> to vector<2304x32xbf16>
    %c0_6 = arith.constant 0 : index
    %c0_7 = arith.constant 0 : index
    %9 = vector.load %arg4[%c0_6, %c0_7] : memref<2304x32xbf16, #tpu.memory_space<vmem>>, vector<2304x32xbf16>
    tpu.vector_store %arg4[%c0_6, %c0_7], %8 {strides = array<i32>} : memref<2304x32xbf16, #tpu.memory_space<vmem>>, vector<2304x32xbf16>,
    return
  }
  func.func @transform_0(%arg0: i32) -> (i32, i32) {
    %c0_i32 = arith.constant 0 : i32
    %c0_i32_0 = arith.constant 0 : i32
    return %arg0, %c0_i32 : i32, i32
  }
  func.func @transform_1(%arg0: i32) -> (i32, i32) {
    %c0_i32 = arith.constant 0 : i32
    %c0_i32_0 = arith.constant 0 : i32
    %c0_i32_1 = arith.constant 0 : i32
    return %c0_i32, %c0_i32_0 : i32, i32
  }
  func.func @transform_2(%arg0: i32) -> (i32, i32) {
    %c0_i32 = arith.constant 0 : i32
    %c0_i32_0 = arith.constant 0 : i32
    %c0_i32_1 = arith.constant 0 : i32
    return %c0_i32, %c0_i32_0 : i32, i32
  }
  func.func @transform_3(%arg0: i32) -> (i32, i32) {
    %c0_i32 = arith.constant 0 : i32
    %c0_i32_0 = arith.constant 0 : i32
    return %arg0, %c0_i32 : i32, i32
  }
}

module attributes {stable_mosaic.version = 11 : i64} {
  func.func @_gemm_bias_relu_kernel(%arg0: i32, %arg1: memref<576x800xbf16, #tpu.memory_space<vmem>>, %arg2: memref<800x64xbf16, #tpu.memory_space<vmem>>, %arg3: memref<1x64xf32, #tpu.memory_space<vmem>>, %arg4: memref<576x64xbf16, #tpu.memory_space<vmem>>) attributes {dimension_semantics = [#tpu.dimension_semantics<parallel>], iteration_bounds = array<i64: 2>, scalar_prefetch = 0 : i64, scratch_operands = 0 : i64, tpu.core_type = #tpu.core_type<tc>, window_params = [{transform_indices = @transform_0, window_bounds = array<i64: 576, 800>}, {pipeline_mode = #tpu.pipeline_mode<synchronous>, transform_indices = @transform_1, window_bounds = array<i64: 800, 64>}, {pipeline_mode = #tpu.pipeline_mode<synchronous>, transform_indices = @transform_2, window_bounds = array<i64: 1, 64>}, {transform_indices = @transform_3, window_bounds = array<i64: 576, 64>}]} {
    %c0 = arith.constant 0 : index
    %c0_0 = arith.constant 0 : index
    %0 = vector.load %arg1[%c0, %c0_0] : memref<576x800xbf16, #tpu.memory_space<vmem>>, vector<576x800xbf16>
    %c0_1 = arith.constant 0 : index
    %c0_2 = arith.constant 0 : index
    %1 = vector.load %arg2[%c0_1, %c0_2] : memref<800x64xbf16, #tpu.memory_space<vmem>>, vector<800x64xbf16>
    %cst = arith.constant dense<0.000000e+00> : vector<576x64xf32>
    %2 = tpu.matmul %0, %1, %cst {dimension_numbers = #tpu.dot_dimension_numbers<[1], [0], [0], [1], [0, 0, 1, 1], [], []>} : vector<576x800xbf16>, vector<800x64xbf16>, vector<576x64xf32> -> vector<576x64xf32>
    %c0_3 = arith.constant 0 : index
    %c0_4 = arith.constant 0 : index
    %3 = vector.load %arg3[%c0_3, %c0_4] : memref<1x64xf32, #tpu.memory_space<vmem>>, vector<1x64xf32>
    %4 = vector.broadcast %3 : vector<1x64xf32> to vector<576x64xf32>
    %5 = arith.addf %2, %4 : vector<576x64xf32>
    %cst_5 = arith.constant 0.000000e+00 : f32
    %6 = vector.broadcast %cst_5 : f32 to vector<576x64xf32>
    %7 = arith.maximumf %5, %6 : vector<576x64xf32>
    %8 = arith.truncf %7 : vector<576x64xf32> to vector<576x64xbf16>
    %c0_6 = arith.constant 0 : index
    %c0_7 = arith.constant 0 : index
    %9 = vector.load %arg4[%c0_6, %c0_7] : memref<576x64xbf16, #tpu.memory_space<vmem>>, vector<576x64xbf16>
    tpu.vector_store %arg4[%c0_6, %c0_7], %8 {strides = array<i32>} : memref<576x64xbf16, #tpu.memory_space<vmem>>, vector<576x64xbf16>,
    return
  }
  func.func @transform_0(%arg0: i32) -> (i32, i32) {
    %c0_i32 = arith.constant 0 : i32
    %c0_i32_0 = arith.constant 0 : i32
    return %arg0, %c0_i32 : i32, i32
  }
  func.func @transform_1(%arg0: i32) -> (i32, i32) {
    %c0_i32 = arith.constant 0 : i32
    %c0_i32_0 = arith.constant 0 : i32
    %c0_i32_1 = arith.constant 0 : i32
    return %c0_i32, %c0_i32_0 : i32, i32
  }
  func.func @transform_2(%arg0: i32) -> (i32, i32) {
    %c0_i32 = arith.constant 0 : i32
    %c0_i32_0 = arith.constant 0 : i32
    %c0_i32_1 = arith.constant 0 : i32
    return %c0_i32, %c0_i32_0 : i32, i32
  }
  func.func @transform_3(%arg0: i32) -> (i32, i32) {
    %c0_i32 = arith.constant 0 : i32
    %c0_i32_0 = arith.constant 0 : i32
    return %arg0, %c0_i32 : i32, i32
  }
}

module attributes {stable_mosaic.version = 11 : i64} {
  func.func @_tail_kernel(%arg0: i32, %arg1: memref<288x576xbf16, #tpu.memory_space<vmem>>, %arg2: memref<576x128xbf16, #tpu.memory_space<vmem>>, %arg3: memref<1x128xf32, #tpu.memory_space<vmem>>, %arg4: memref<648x288xbf16, #tpu.memory_space<vmem>>, %arg5: memref<9x128x256xbf16, #tpu.memory_space<vmem>>, %arg6: memref<1x256xf32, #tpu.memory_space<vmem>>, %arg7: memref<2x72xf32, #tpu.memory_space<vmem>>, %arg8: memref<256x128xbf16, #tpu.memory_space<vmem>>, %arg9: memref<1x128xf32, #tpu.memory_space<vmem>>, %arg10: memref<2x128xf32, #tpu.memory_space<vmem>>) attributes {dimension_semantics = [#tpu.dimension_semantics<arbitrary>], iteration_bounds = array<i64: 1>, scalar_prefetch = 0 : i64, scratch_operands = 0 : i64, tpu.core_type = #tpu.core_type<tc>, window_params = [{pipeline_mode = #tpu.pipeline_mode<synchronous>, transform_indices = @transform_0, window_bounds = array<i64: 288, 576>}, {pipeline_mode = #tpu.pipeline_mode<synchronous>, transform_indices = @transform_1, window_bounds = array<i64: 576, 128>}, {pipeline_mode = #tpu.pipeline_mode<synchronous>, transform_indices = @transform_2, window_bounds = array<i64: 1, 128>}, {pipeline_mode = #tpu.pipeline_mode<synchronous>, transform_indices = @transform_3, window_bounds = array<i64: 648, 288>}, {pipeline_mode = #tpu.pipeline_mode<synchronous>, transform_indices = @transform_4, window_bounds = array<i64: 9, 128, 256>}, {pipeline_mode = #tpu.pipeline_mode<synchronous>, transform_indices = @transform_5, window_bounds = array<i64: 1, 256>}, {pipeline_mode = #tpu.pipeline_mode<synchronous>, transform_indices = @transform_6, window_bounds = array<i64: 2, 72>}, {pipeline_mode = #tpu.pipeline_mode<synchronous>, transform_indices = @transform_7, window_bounds = array<i64: 256, 128>}, {pipeline_mode = #tpu.pipeline_mode<synchronous>, transform_indices = @transform_8, window_bounds = array<i64: 1, 128>}, {pipeline_mode = #tpu.pipeline_mode<synchronous>, transform_indices = @transform_9, window_bounds = array<i64: 2, 128>}]} {
    %c0 = arith.constant 0 : index
    %c0_0 = arith.constant 0 : index
    %0 = vector.load %arg1[%c0, %c0_0] : memref<288x576xbf16, #tpu.memory_space<vmem>>, vector<288x576xbf16>
    %c0_1 = arith.constant 0 : index
    %c0_2 = arith.constant 0 : index
    %1 = vector.load %arg2[%c0_1, %c0_2] : memref<576x128xbf16, #tpu.memory_space<vmem>>, vector<576x128xbf16>
    %cst = arith.constant dense<0.000000e+00> : vector<288x128xf32>
    %2 = tpu.matmul %0, %1, %cst {dimension_numbers = #tpu.dot_dimension_numbers<[1], [0], [0], [1], [0, 0, 1, 1], [], []>} : vector<288x576xbf16>, vector<576x128xbf16>, vector<288x128xf32> -> vector<288x128xf32>
    %c0_3 = arith.constant 0 : index
    %c0_4 = arith.constant 0 : index
    %3 = vector.load %arg3[%c0_3, %c0_4] : memref<1x128xf32, #tpu.memory_space<vmem>>, vector<1x128xf32>
    %4 = vector.broadcast %3 : vector<1x128xf32> to vector<288x128xf32>
    %5 = arith.addf %2, %4 : vector<288x128xf32>
    %cst_5 = arith.constant 0.000000e+00 : f32
    %6 = vector.broadcast %cst_5 : f32 to vector<288x128xf32>
    %7 = arith.maximumf %5, %6 : vector<288x128xf32>
    %8 = arith.truncf %7 : vector<288x128xf32> to vector<288x128xbf16>
    %c0_6 = arith.constant 0 : index
    %c0_7 = arith.constant 0 : index
    %9 = vector.load %arg4[%c0_6, %c0_7] : memref<648x288xbf16, #tpu.memory_space<vmem>>, vector<648x288xbf16>
    %cst_8 = arith.constant dense<0.000000e+00> : vector<648x128xf32>
    %10 = tpu.matmul %9, %8, %cst_8 {dimension_numbers = #tpu.dot_dimension_numbers<[1], [0], [0], [1], [0, 0, 1, 1], [], []>} : vector<648x288xbf16>, vector<288x128xbf16>, vector<648x128xf32> -> vector<648x128xf32>
    %11 = arith.truncf %10 : vector<648x128xf32> to vector<648x128xbf16>
    %cst_9 = arith.constant 0.000000e+00 : f32
    %12 = vector.broadcast %cst_9 : f32 to vector<72x256xf32>
    %13 = vector.extract_strided_slice %11 {offsets = [0, 0], sizes = [72, 128], strides = [1, 1]} : vector<648x128xbf16> to vector<72x128xbf16>
    %c0_10 = arith.constant 0 : index
    %c0_11 = arith.constant 0 : index
    %c0_12 = arith.constant 0 : index
    %14 = vector.load %arg5[%c0_10, %c0_11, %c0_12] : memref<9x128x256xbf16, #tpu.memory_space<vmem>>, vector<1x128x256xbf16>
    %15 = vector.shape_cast %14 : vector<1x128x256xbf16> to vector<128x256xbf16>
    %cst_13 = arith.constant dense<0.000000e+00> : vector<72x256xf32>
    %16 = tpu.matmul %13, %15, %cst_13 {dimension_numbers = #tpu.dot_dimension_numbers<[1], [0], [0], [1], [0, 0, 1, 1], [], []>} : vector<72x128xbf16>, vector<128x256xbf16>, vector<72x256xf32> -> vector<72x256xf32>
    %17 = arith.addf %12, %16 : vector<72x256xf32>
    %18 = vector.extract_strided_slice %11 {offsets = [72, 0], sizes = [72, 128], strides = [1, 1]} : vector<648x128xbf16> to vector<72x128xbf16>
    %c1 = arith.constant 1 : index
    %c0_14 = arith.constant 0 : index
    %c0_15 = arith.constant 0 : index
    %19 = vector.load %arg5[%c1, %c0_14, %c0_15] : memref<9x128x256xbf16, #tpu.memory_space<vmem>>, vector<1x128x256xbf16>
    %20 = vector.shape_cast %19 : vector<1x128x256xbf16> to vector<128x256xbf16>
    %cst_16 = arith.constant dense<0.000000e+00> : vector<72x256xf32>
    %21 = tpu.matmul %18, %20, %cst_16 {dimension_numbers = #tpu.dot_dimension_numbers<[1], [0], [0], [1], [0, 0, 1, 1], [], []>} : vector<72x128xbf16>, vector<128x256xbf16>, vector<72x256xf32> -> vector<72x256xf32>
    %22 = arith.addf %17, %21 : vector<72x256xf32>
    %23 = vector.extract_strided_slice %11 {offsets = [144, 0], sizes = [72, 128], strides = [1, 1]} : vector<648x128xbf16> to vector<72x128xbf16>
    %c2 = arith.constant 2 : index
    %c0_17 = arith.constant 0 : index
    %c0_18 = arith.constant 0 : index
    %24 = vector.load %arg5[%c2, %c0_17, %c0_18] : memref<9x128x256xbf16, #tpu.memory_space<vmem>>, vector<1x128x256xbf16>
    %25 = vector.shape_cast %24 : vector<1x128x256xbf16> to vector<128x256xbf16>
    %cst_19 = arith.constant dense<0.000000e+00> : vector<72x256xf32>
    %26 = tpu.matmul %23, %25, %cst_19 {dimension_numbers = #tpu.dot_dimension_numbers<[1], [0], [0], [1], [0, 0, 1, 1], [], []>} : vector<72x128xbf16>, vector<128x256xbf16>, vector<72x256xf32> -> vector<72x256xf32>
    %27 = arith.addf %22, %26 : vector<72x256xf32>
    %28 = vector.extract_strided_slice %11 {offsets = [216, 0], sizes = [72, 128], strides = [1, 1]} : vector<648x128xbf16> to vector<72x128xbf16>
    %c3 = arith.constant 3 : index
    %c0_20 = arith.constant 0 : index
    %c0_21 = arith.constant 0 : index
    %29 = vector.load %arg5[%c3, %c0_20, %c0_21] : memref<9x128x256xbf16, #tpu.memory_space<vmem>>, vector<1x128x256xbf16>
    %30 = vector.shape_cast %29 : vector<1x128x256xbf16> to vector<128x256xbf16>
    %cst_22 = arith.constant dense<0.000000e+00> : vector<72x256xf32>
    %31 = tpu.matmul %28, %30, %cst_22 {dimension_numbers = #tpu.dot_dimension_numbers<[1], [0], [0], [1], [0, 0, 1, 1], [], []>} : vector<72x128xbf16>, vector<128x256xbf16>, vector<72x256xf32> -> vector<72x256xf32>
    %32 = arith.addf %27, %31 : vector<72x256xf32>
    %33 = vector.extract_strided_slice %11 {offsets = [288, 0], sizes = [72, 128], strides = [1, 1]} : vector<648x128xbf16> to vector<72x128xbf16>
    %c4 = arith.constant 4 : index
    %c0_23 = arith.constant 0 : index
    %c0_24 = arith.constant 0 : index
    %34 = vector.load %arg5[%c4, %c0_23, %c0_24] : memref<9x128x256xbf16, #tpu.memory_space<vmem>>, vector<1x128x256xbf16>
    %35 = vector.shape_cast %34 : vector<1x128x256xbf16> to vector<128x256xbf16>
    %cst_25 = arith.constant dense<0.000000e+00> : vector<72x256xf32>
    %36 = tpu.matmul %33, %35, %cst_25 {dimension_numbers = #tpu.dot_dimension_numbers<[1], [0], [0], [1], [0, 0, 1, 1], [], []>} : vector<72x128xbf16>, vector<128x256xbf16>, vector<72x256xf32> -> vector<72x256xf32>
    %37 = arith.addf %32, %36 : vector<72x256xf32>
    %38 = vector.extract_strided_slice %11 {offsets = [360, 0], sizes = [72, 128], strides = [1, 1]} : vector<648x128xbf16> to vector<72x128xbf16>
    %c5 = arith.constant 5 : index
    %c0_26 = arith.constant 0 : index
    %c0_27 = arith.constant 0 : index
    %39 = vector.load %arg5[%c5, %c0_26, %c0_27] : memref<9x128x256xbf16, #tpu.memory_space<vmem>>, vector<1x128x256xbf16>
    %40 = vector.shape_cast %39 : vector<1x128x256xbf16> to vector<128x256xbf16>
    %cst_28 = arith.constant dense<0.000000e+00> : vector<72x256xf32>
    %41 = tpu.matmul %38, %40, %cst_28 {dimension_numbers = #tpu.dot_dimension_numbers<[1], [0], [0], [1], [0, 0, 1, 1], [], []>} : vector<72x128xbf16>, vector<128x256xbf16>, vector<72x256xf32> -> vector<72x256xf32>
    %42 = arith.addf %37, %41 : vector<72x256xf32>
    %43 = vector.extract_strided_slice %11 {offsets = [432, 0], sizes = [72, 128], strides = [1, 1]} : vector<648x128xbf16> to vector<72x128xbf16>
    %c6 = arith.constant 6 : index
    %c0_29 = arith.constant 0 : index
    %c0_30 = arith.constant 0 : index
    %44 = vector.load %arg5[%c6, %c0_29, %c0_30] : memref<9x128x256xbf16, #tpu.memory_space<vmem>>, vector<1x128x256xbf16>
    %45 = vector.shape_cast %44 : vector<1x128x256xbf16> to vector<128x256xbf16>
    %cst_31 = arith.constant dense<0.000000e+00> : vector<72x256xf32>
    %46 = tpu.matmul %43, %45, %cst_31 {dimension_numbers = #tpu.dot_dimension_numbers<[1], [0], [0], [1], [0, 0, 1, 1], [], []>} : vector<72x128xbf16>, vector<128x256xbf16>, vector<72x256xf32> -> vector<72x256xf32>
    %47 = arith.addf %42, %46 : vector<72x256xf32>
    %48 = vector.extract_strided_slice %11 {offsets = [504, 0], sizes = [72, 128], strides = [1, 1]} : vector<648x128xbf16> to vector<72x128xbf16>
    %c7 = arith.constant 7 : index
    %c0_32 = arith.constant 0 : index
    %c0_33 = arith.constant 0 : index
    %49 = vector.load %arg5[%c7, %c0_32, %c0_33] : memref<9x128x256xbf16, #tpu.memory_space<vmem>>, vector<1x128x256xbf16>
    %50 = vector.shape_cast %49 : vector<1x128x256xbf16> to vector<128x256xbf16>
    %cst_34 = arith.constant dense<0.000000e+00> : vector<72x256xf32>
    %51 = tpu.matmul %48, %50, %cst_34 {dimension_numbers = #tpu.dot_dimension_numbers<[1], [0], [0], [1], [0, 0, 1, 1], [], []>} : vector<72x128xbf16>, vector<128x256xbf16>, vector<72x256xf32> -> vector<72x256xf32>
    %52 = arith.addf %47, %51 : vector<72x256xf32>
    %53 = vector.extract_strided_slice %11 {offsets = [576, 0], sizes = [72, 128], strides = [1, 1]} : vector<648x128xbf16> to vector<72x128xbf16>
    %c8 = arith.constant 8 : index
    %c0_35 = arith.constant 0 : index
    %c0_36 = arith.constant 0 : index
    %54 = vector.load %arg5[%c8, %c0_35, %c0_36] : memref<9x128x256xbf16, #tpu.memory_space<vmem>>, vector<1x128x256xbf16>
    %55 = vector.shape_cast %54 : vector<1x128x256xbf16> to vector<128x256xbf16>
    %cst_37 = arith.constant dense<0.000000e+00> : vector<72x256xf32>
    %56 = tpu.matmul %53, %55, %cst_37 {dimension_numbers = #tpu.dot_dimension_numbers<[1], [0], [0], [1], [0, 0, 1, 1], [], []>} : vector<72x128xbf16>, vector<128x256xbf16>, vector<72x256xf32> -> vector<72x256xf32>
    %57 = arith.addf %52, %56 : vector<72x256xf32>
    %c0_38 = arith.constant 0 : index
    %c0_39 = arith.constant 0 : index
    %58 = vector.load %arg6[%c0_38, %c0_39] : memref<1x256xf32, #tpu.memory_space<vmem>>, vector<1x256xf32>
    %59 = vector.broadcast %58 : vector<1x256xf32> to vector<72x256xf32>
    %60 = arith.addf %57, %59 : vector<72x256xf32>
    %cst_40 = arith.constant 0.000000e+00 : f32
    %61 = vector.broadcast %cst_40 : f32 to vector<72x256xf32>
    %62 = arith.maximumf %60, %61 : vector<72x256xf32>
    %c0_41 = arith.constant 0 : index
    %c0_42 = arith.constant 0 : index
    %63 = vector.load %arg7[%c0_41, %c0_42] : memref<2x72xf32, #tpu.memory_space<vmem>>, vector<2x72xf32>
    %cst_43 = arith.constant dense<0.000000e+00> : vector<2x256xf32>
    %64 = tpu.matmul %63, %62, %cst_43 {dimension_numbers = #tpu.dot_dimension_numbers<[1], [0], [0], [1], [0, 0, 1, 1], [], []>} : vector<2x72xf32>, vector<72x256xf32>, vector<2x256xf32> -> vector<2x256xf32>
    %65 = arith.truncf %64 : vector<2x256xf32> to vector<2x256xbf16>
    %c0_44 = arith.constant 0 : index
    %c0_45 = arith.constant 0 : index
    %66 = vector.load %arg8[%c0_44, %c0_45] : memref<256x128xbf16, #tpu.memory_space<vmem>>, vector<256x128xbf16>
    %cst_46 = arith.constant dense<0.000000e+00> : vector<2x128xf32>
    %67 = tpu.matmul %65, %66, %cst_46 {dimension_numbers = #tpu.dot_dimension_numbers<[1], [0], [0], [1], [0, 0, 1, 1], [], []>} : vector<2x256xbf16>, vector<256x128xbf16>, vector<2x128xf32> -> vector<2x128xf32>
    %c0_47 = arith.constant 0 : index
    %c0_48 = arith.constant 0 : index
    %68 = vector.load %arg9[%c0_47, %c0_48] : memref<1x128xf32, #tpu.memory_space<vmem>>, vector<1x128xf32>
    %69 = vector.broadcast %68 : vector<1x128xf32> to vector<2x128xf32>
    %70 = arith.addf %67, %69 : vector<2x128xf32>
    %c0_49 = arith.constant 0 : index
    %c0_50 = arith.constant 0 : index
    %71 = vector.load %arg10[%c0_49, %c0_50] : memref<2x128xf32, #tpu.memory_space<vmem>>, vector<2x128xf32>
    tpu.vector_store %arg10[%c0_49, %c0_50], %70 {strides = array<i32>} : memref<2x128xf32, #tpu.memory_space<vmem>>, vector<2x128xf32>,
    return
  }
  func.func @transform_0(%arg0: i32) -> (i32, i32) {
    %c0_i32 = arith.constant 0 : i32
    %c0_i32_0 = arith.constant 0 : i32
    %c0_i32_1 = arith.constant 0 : i32
    return %c0_i32, %c0_i32_0 : i32, i32
  }
  func.func @transform_1(%arg0: i32) -> (i32, i32) {
    %c0_i32 = arith.constant 0 : i32
    %c0_i32_0 = arith.constant 0 : i32
    %c0_i32_1 = arith.constant 0 : i32
    return %c0_i32, %c0_i32_0 : i32, i32
  }
  func.func @transform_2(%arg0: i32) -> (i32, i32) {
    %c0_i32 = arith.constant 0 : i32
    %c0_i32_0 = arith.constant 0 : i32
    %c0_i32_1 = arith.constant 0 : i32
    return %c0_i32, %c0_i32_0 : i32, i32
  }
  func.func @transform_3(%arg0: i32) -> (i32, i32) {
    %c0_i32 = arith.constant 0 : i32
    %c0_i32_0 = arith.constant 0 : i32
    %c0_i32_1 = arith.constant 0 : i32
    return %c0_i32, %c0_i32_0 : i32, i32
  }
  func.func @transform_4(%arg0: i32) -> (i32, i32, i32) {
    %c0_i32 = arith.constant 0 : i32
    %c0_i32_0 = arith.constant 0 : i32
    %c0_i32_1 = arith.constant 0 : i32
    %c0_i32_2 = arith.constant 0 : i32
    return %c0_i32, %c0_i32_0, %c0_i32_1 : i32, i32, i32
  }
  func.func @transform_5(%arg0: i32) -> (i32, i32) {
    %c0_i32 = arith.constant 0 : i32
    %c0_i32_0 = arith.constant 0 : i32
    %c0_i32_1 = arith.constant 0 : i32
    return %c0_i32, %c0_i32_0 : i32, i32
  }
  func.func @transform_6(%arg0: i32) -> (i32, i32) {
    %c0_i32 = arith.constant 0 : i32
    %c0_i32_0 = arith.constant 0 : i32
    %c0_i32_1 = arith.constant 0 : i32
    return %c0_i32, %c0_i32_0 : i32, i32
  }
  func.func @transform_7(%arg0: i32) -> (i32, i32) {
    %c0_i32 = arith.constant 0 : i32
    %c0_i32_0 = arith.constant 0 : i32
    %c0_i32_1 = arith.constant 0 : i32
    return %c0_i32, %c0_i32_0 : i32, i32
  }
  func.func @transform_8(%arg0: i32) -> (i32, i32) {
    %c0_i32 = arith.constant 0 : i32
    %c0_i32_0 = arith.constant 0 : i32
    %c0_i32_1 = arith.constant 0 : i32
    return %c0_i32, %c0_i32_0 : i32, i32
  }
  func.func @transform_9(%arg0: i32) -> (i32, i32) {
    %c0_i32 = arith.constant 0 : i32
    %c0_i32_0 = arith.constant 0 : i32
    %c0_i32_1 = arith.constant 0 : i32
    return %c0_i32, %c0_i32_0 : i32, i32
  }
}

</mosaic_0001>

<llo_original>
// kernel: feature_extractor_forward.3
$region0: #{feature_extractor_forward.3}
  #allocation0 [shape = 'u32[]', space=smem, size = 0x4, offset = 0x4, fixed_abs, tag = 'smem constant byte address 0x4 - core index']
  #allocation1 [shape = 'u32[144,128]{1,0:T(1,128)}', space=vmem, size = 0x12000, scoped, tag = 'internal scratch']
  %s0 = inlined_call_operand.vmem [shape: bf16[4608,49], index: 0, kind: input, shape index: {}]
  %s1 = inlined_call_operand.vmem [shape: bf16[49,32], index: 1, kind: input, shape index: {}]
  %s2 = inlined_call_operand.vmem [shape: f32[1,32], index: 2, kind: input, shape index: {}]
  %s3 = inlined_call_operand.vmem [shape: bf16[4608,32], index: 3, kind: output, shape index: {}]
  %s4 = sld [smem:[#allocation0]]
  $region45: #{feature_extractor_forward.3} parent=0
    _
  %s6 = ssub.s32 1, %s4
  %s7 = scalar_select 0, %s6, %s4
  loop: start=0, step=1, limit=4
  $region2: #{feature_extractor_forward.3} parent=0 // loop_pre_header
    _
  $region3: #{feature_extractor_forward.3} parent=0 // loop_header
    %s9 = sphi 0, %s13
    %p10 = scmp.ge.s32.totalorder %s9, 4
    %s19 = sphi 0, %s21
    %s22 = sphi 0, %s19
    %s23 = sphi 0, %s22
    %s39 = sphi 0, %s23
    %s43 = sphi 0, %s43
    %s45 = sphi 0, %s43
    %s46 = sphi 0, %s45
    %s60 = sphi 0, %s46
    %s64 = sphi 0, %s64
    %s66 = sphi 0, %s64
    %s67 = sphi 0, %s66
    %s81 = sphi 0, %s67
    %s87 = sphi 0, %s89
    %s90 = sphi 0, %s87
    %s91 = sphi 0, %s90
    %s107 = sphi 0, %s91
  $region4: #{feature_extractor_forward.3} parent=0 // loop_header_branch
    %12 = sbr.rel (%p10) target = $region8
  $region5: #{feature_extractor_forward.3} parent=0 // loop_body
    %s14 = ssub.s32 %s9, 1
    %s15 = ssub.s32 %s9, 2
    %s16 = sadd.s32 %s9, 1
    %s17 = ssub.s32 %s9, %s16
    %p18 = scmp.eq.s32.totalorder %s17, 0
    %s20 = sadd.s32 %s19, 1
    %s21 = scalar_select %p18, %s19, %s20
    %p24 = pneg %p18
    %p25 = scmp.eq.s32.totalorder %s9, 1
    %p26 = por %p24, %p25
    %p27 = scmp.ne.s32.totalorder %s19, %s22
    %p28 = scmp.eq.s32.totalorder %s9, 0
    %p29 = por %p27, %p28
    %p30 = scmp.ne.s32.totalorder %s19, %s22
    %p31 = scmp.eq.s32.totalorder %s14, 1
    %p32 = por %p30, %p31
    %p33 = scmp.ne.s32.totalorder %s22, %s23
    %p34 = scmp.eq.s32.totalorder %s14, 0
    %p35 = por %p33, %p34
    %p36 = scmp.ne.s32.totalorder %s22, %s23
    %p37 = scmp.eq.s32.totalorder %s15, 1
    %p38 = por %p36, %p37
    %p40 = scmp.ne.s32.totalorder %s23, %s39
    %p41 = scmp.eq.s32.totalorder %s15, 0
    %p42 = por %p40, %p41
    %s44 = sadd.s32 %s43, 1
    %p47 = scmp.eq.s32.totalorder %s9, 1
    %p48 = scmp.ne.s32.totalorder %s43, %s45
    %p49 = scmp.eq.s32.totalorder %s9, 0
    %p50 = por %p48, %p49
    %p51 = scmp.ne.s32.totalorder %s43, %s45
    %p52 = scmp.eq.s32.totalorder %s14, 1
    %p53 = por %p51, %p52
    %p54 = scmp.ne.s32.totalorder %s45, %s46
    %p55 = scmp.eq.s32.totalorder %s14, 0
    %p56 = por %p54, %p55
    %p57 = scmp.ne.s32.totalorder %s45, %s46
    %p58 = scmp.eq.s32.totalorder %s15, 1
    %p59 = por %p57, %p58
    %p61 = scmp.ne.s32.totalorder %s46, %s60
    %p62 = scmp.eq.s32.totalorder %s15, 0
    %p63 = por %p61, %p62
    %s65 = sadd.s32 %s64, 1
    %p68 = scmp.eq.s32.totalorder %s9, 1
    %p69 = scmp.ne.s32.totalorder %s64, %s66
    %p70 = scmp.eq.s32.totalorder %s9, 0
    %p71 = por %p69, %p70
    %p72 = scmp.ne.s32.totalorder %s64, %s66
    %p73 = scmp.eq.s32.totalorder %s14, 1
    %p74 = por %p72, %p73
    %p75 = scmp.ne.s32.totalorder %s66, %s67
    %p76 = scmp.eq.s32.totalorder %s14, 0
    %p77 = por %p75, %p76
    %p78 = scmp.ne.s32.totalorder %s66, %s67
    %p79 = scmp.eq.s32.totalorder %s15, 1
    %p80 = por %p78, %p79
    %p82 = scmp.ne.s32.totalorder %s67, %s81
    %p83 = scmp.eq.s32.totalorder %s15, 0
    %p84 = por %p82, %p83
    %s85 = ssub.s32 %s9, %s16
    %p86 = scmp.eq.s32.totalorder %s85, 0
    %s88 = sadd.s32 %s87, 1
    %s89 = scalar_select %p86, %s87, %s88
    %p92 = pneg %p86
    %p93 = scmp.eq.s32.totalorder %s9, 1
    %p94 = por %p92, %p93
    %p95 = scmp.ne.s32.totalorder %s87, %s90
    %p96 = scmp.eq.s32.totalorder %s9, 0
    %p97 = por %p95, %p96
    %p98 = scmp.ne.s32.totalorder %s87, %s90
    %p99 = scmp.eq.s32.totalorder %s14, 1
    %p100 = por %p98, %p99
    %p101 = scmp.ne.s32.totalorder %s90, %s91
    %p102 = scmp.eq.s32.totalorder %s14, 0
    %p103 = por %p101, %p102
    %p104 = scmp.ne.s32.totalorder %s90, %s91
    %p105 = scmp.eq.s32.totalorder %s15, 1
    %p106 = por %p104, %p105
    %p108 = scmp.ne.s32.totalorder %s91, %s107
    %p109 = scmp.eq.s32.totalorder %s15, 0
    %p110 = por %p108, %p109
    %p111 = scmp.le.s32.totalorder 1, %s9
    %p112 = scmp.lt.s32.totalorder %s9, 3
    %p113 = pnand %p111, %p112
    %p114 = pneg %p113
    // Predicated region
    $region9: #{feature_extractor_forward.3} parent=5 // pred_check
      _
    $region10: #{feature_extractor_forward.3} parent=5 // pred_check_branch
      %116 = sbr.rel (%p113) target = $region12
    $region11: #{feature_extractor_forward.3} parent=5 // pred_region
      %s117 = ssub.s32 %s9, 1
      // Predicated region
      $region13: #{feature_extractor_forward.3} parent=11 // pred_check
        %p118 = pneg %p56
      $region14: #{feature_extractor_forward.3} parent=11 // pred_check_branch
        %120 = sbr.rel (%p118) target = $region16
      $region15: #{feature_extractor_forward.3} parent=11 // pred_region
        _
      $region16: #{feature_extractor_forward.3} parent=11 // pred_fallthru
        _
      // Predicated region
      $region17: #{feature_extractor_forward.3} parent=11 // pred_check
        %p121 = pneg %p77
      $region18: #{feature_extractor_forward.3} parent=11 // pred_check_branch
        %123 = sbr.rel (%p121) target = $region20
      $region19: #{feature_extractor_forward.3} parent=11 // pred_region
        _
      $region20: #{feature_extractor_forward.3} parent=11 // pred_fallthru
        _
    $region12: #{feature_extractor_forward.3} parent=5 // pred_fallthru
      _
    %p124 = scmp.lt.s32.totalorder %s9, 2
    // Predicated region
    $region21: #{feature_extractor_forward.3} parent=5 // pred_check
      %p125 = pneg %p124
    $region22: #{feature_extractor_forward.3} parent=5 // pred_check_branch
      %127 = sbr.rel (%p125) target = $region24
    $region23: #{feature_extractor_forward.3} parent=5 // pred_region
      // Predicated region
      $region25: #{feature_extractor_forward.3} parent=23 // pred_check
        %p128 = pneg %p29
      $region26: #{feature_extractor_forward.3} parent=23 // pred_check_branch
        %130 = sbr.rel (%p128) target = $region28
      $region27: #{feature_extractor_forward.3} parent=23 // pred_region
        %s131 = smul.u32 288, %s9
        %p132 = scmp.lt.s32.totalorder %s131, 575
        %s133 = scalar_select %p132, %s131, 575
        %s134 = smul.addr %s133, 4
        %s135 = scalar_lea.vmem %s0, %s134
        %s136 = smul.u32 288, %s9
      $region28: #{feature_extractor_forward.3} parent=23 // pred_fallthru
        _
    $region24: #{feature_extractor_forward.3} parent=5 // pred_fallthru
      _
    %p137 = scmp.le.s32.totalorder 1, %s9
    %p138 = scmp.lt.s32.totalorder %s9, 3
    %p139 = pnand %p137, %p138
    %p140 = pneg %p139
    // Predicated region
    $region29: #{feature_extractor_forward.3} parent=5 // pred_check
      _
    $region30: #{feature_extractor_forward.3} parent=5 // pred_check_branch
      %142 = sbr.rel (%p139) target = $region32
    $region31: #{feature_extractor_forward.3} parent=5 // pred_region
      %s143 = ssub.s32 %s9, 1
      %s144 = smul.u32 288, %s14
      %p145 = scmp.lt.s32.totalorder %s144, 575
      %s146 = scalar_select %p145, %s144, 575
      %s147 = smul.addr %s146, 4
      %s148 = scalar_lea.vmem %s0, %s147
      %p149 = pneg %p35
      %p150 = pneg %p32
      %p151 = pneg %p56
      %p152 = pneg %p53
      %p153 = pneg %p77
      %p154 = pneg %p74
      %p155 = pneg %p103
      %p156 = pneg %p100
      %s157 = smul.u32 288, %s14
      %p158 = scmp.lt.s32.totalorder %s157, 575
      %s159 = scalar_select %p158, %s157, 575
      %s160 = smul.addr %s159, 4
      %s161 = scalar_lea.vmem %s3, %s160
      %s162 = smul.u32 288, %s14
      %p163 = scmp.lt.s32.totalorder %s162, 575
      %s164 = scalar_select %p163, %s162, 575
      %s165 = smul.addr %s164, 4
      %s166 = scalar_lea.vmem %s0, %s165
      %s167 = smul.u32 288, %s14
      %s168 = smul.u32 288, %s14
      %p169 = scmp.lt.s32.totalorder %s168, 575
      %s170 = scalar_select %p169, %s168, 575
      %s171 = smul.addr %s170, 4
      %s172 = scalar_lea.vmem %s3, %s171
      %s173 = smul.u32 288, %s14
      %v175 = vld [vmem:[%s166] sm:$0xf]
      %v176 = vld [vmem:[%s166 + $0x4] sm:$0xf]
      %v177 = vld [vmem:[%s166 + $0x8] sm:$0xf]
      %v178 = vld [vmem:[%s166 + $0xc] sm:$0xf]
      %v179 = vld [vmem:[%s166 + $0x10] sm:$0xf]
      %v180 = vld [vmem:[%s166 + $0x14] sm:$0xf]
      %v181 = vld [vmem:[%s166 + $0x18] sm:$0xf]
      %v182 = vld [vmem:[%s166 + $0x1c] sm:$0xf]
      %v183 = vld [vmem:[%s166 + $0x20] sm:$0xf]
      %v184 = vld [vmem:[%s166 + $0x24] sm:$0xf]
      %v185 = vld [vmem:[%s166 + $0x28] sm:$0xf]
      %v186 = vld [vmem:[%s166 + $0x2c] sm:$0xf]
      %v187 = vld [vmem:[%s166 + $0x30] sm:$0xf]
      %v188 = vld [vmem:[%s166 + $0x34] sm:$0xf]
      %v189 = vld [vmem:[%s166 + $0x38] sm:$0xf]
      %v190 = vld [vmem:[%s166 + $0x3c] sm:$0xf]
      %v191 = vld [vmem:[%s166 + $0x40] sm:$0xf]
      %v192 = vld [vmem:[%s166 + $0x44] sm:$0xf]
      %v193 = vld [vmem:[%s166 + $0x48] sm:$0xf]
      %v194 = vld [vmem:[%s166 + $0x4c] sm:$0xf]
      %v195 = vld [vmem:[%s166 + $0x50] sm:$0xf]
      %v196 = vld [vmem:[%s166 + $0x54] sm:$0xf]
      %v197 = vld [vmem:[%s166 + $0x58] sm:$0xf]
      %v198 = vld [vmem:[%s166 + $0x5c] sm:$0xf]
      %v199 = vld [vmem:[%s166 + $0x60] sm:$0xf]
      %v200 = vld [vmem:[%s166 + $0x64] sm:$0xf]
      %v201 = vld [vmem:[%s166 + $0x68] sm:$0xf]
      %v202 = vld [vmem:[%s166 + $0x6c] sm:$0xf]
      %v203 = vld [vmem:[%s166 + $0x70] sm:$0xf]
      %v204 = vld [vmem:[%s166 + $0x74] sm:$0xf]
      %v205 = vld [vmem:[%s166 + $0x78] sm:$0xf]
      %v206 = vld [vmem:[%s166 + $0x7c] sm:$0xf]
      %v207 = vld [vmem:[%s166 + $0x80] sm:$0xf]
      %v208 = vld [vmem:[%s166 + $0x84] sm:$0xf]
      %v209 = vld [vmem:[%s166 + $0x88] sm:$0xf]
      %v210 = vld [vmem:[%s166 + $0x8c] sm:$0xf]
      %v211 = vld [vmem:[%s166 + $0x90] sm:$0xf]
      %v212 = vld [vmem:[%s166 + $0x94] sm:$0xf]
      %v213 = vld [vmem:[%s166 + $0x98] sm:$0xf]
      %v214 = vld [vmem:[%s166 + $0x9c] sm:$0xf]
      %v215 = vld [vmem:[%s166 + $0xa0] sm:$0xf]
      %v216 = vld [vmem:[%s166 + $0xa4] sm:$0xf]
      %v217 = vld [vmem:[%s166 + $0xa8] sm:$0xf]
      %v218 = vld [vmem:[%s166 + $0xac] sm:$0xf]
      %v219 = vld [vmem:[%s166 + $0xb0] sm:$0xf]
      %v220 = vld [vmem:[%s166 + $0xb4] sm:$0xf]
      %v221 = vld [vmem:[%s166 + $0xb8] sm:$0xf]
      %v222 = vld [vmem:[%s166 + $0xbc] sm:$0xf]
      %v223 = vld [vmem:[%s166 + $0xc0] sm:$0xf]
      %v224 = vld [vmem:[%s166 + $0xc4] sm:$0xf]
      %v225 = vld [vmem:[%s166 + $0xc8] sm:$0xf]
      %v226 = vld [vmem:[%s166 + $0xcc] sm:$0xf]
      %v227 = vld [vmem:[%s166 + $0xd0] sm:$0xf]
      %v228 = vld [vmem:[%s166 + $0xd4] sm:$0xf]
      %v229 = vld [vmem:[%s166 + $0xd8] sm:$0xf]
      %v230 = vld [vmem:[%s166 + $0xdc] sm:$0xf]
      %v231 = vld [vmem:[%s166 + $0xe0] sm:$0xf]
      %v232 = vld [vmem:[%s166 + $0xe4] sm:$0xf]
      %v233 = vld [vmem:[%s166 + $0xe8] sm:$0xf]
      %v234 = vld [vmem:[%s166 + $0xec] sm:$0xf]
      %v235 = vld [vmem:[%s166 + $0xf0] sm:$0xf]
      %v236 = vld [vmem:[%s166 + $0xf4] sm:$0xf]
      %v237 = vld [vmem:[%s166 + $0xf8] sm:$0xf]
      %v238 = vld [vmem:[%s166 + $0xfc] sm:$0xf]
      %v239 = vld [vmem:[%s166 + $0x100] sm:$0xf]
      %v240 = vld [vmem:[%s166 + $0x104] sm:$0xf]
      %v241 = vld [vmem:[%s166 + $0x108] sm:$0xf]
      %v242 = vld [vmem:[%s166 + $0x10c] sm:$0xf]
      %v243 = vld [vmem:[%s166 + $0x110] sm:$0xf]
      %v244 = vld [vmem:[%s166 + $0x114] sm:$0xf]
      %v245 = vld [vmem:[%s166 + $0x118] sm:$0xf]
      %v246 = vld [vmem:[%s166 + $0x11c] sm:$0xf]
      %v247 = vld [vmem:[%s166 + $0x120] sm:$0xf]
      %v248 = vld [vmem:[%s166 + $0x124] sm:$0xf]
      %v249 = vld [vmem:[%s166 + $0x128] sm:$0xf]
      %v250 = vld [vmem:[%s166 + $0x12c] sm:$0xf]
      %v251 = vld [vmem:[%s166 + $0x130] sm:$0xf]
      %v252 = vld [vmem:[%s166 + $0x134] sm:$0xf]
      %v253 = vld [vmem:[%s166 + $0x138] sm:$0xf]
      %v254 = vld [vmem:[%s166 + $0x13c] sm:$0xf]
      %v255 = vld [vmem:[%s166 + $0x140] sm:$0xf]
      %v256 = vld [vmem:[%s166 + $0x144] sm:$0xf]
      %v257 = vld [vmem:[%s166 + $0x148] sm:$0xf]
      %v258 = vld [vmem:[%s166 + $0x14c] sm:$0xf]
      %v259 = vld [vmem:[%s166 + $0x150] sm:$0xf]
      %v260 = vld [vmem:[%s166 + $0x154] sm:$0xf]
      %v261 = vld [vmem:[%s166 + $0x158] sm:$0xf]
      %v262 = vld [vmem:[%s166 + $0x15c] sm:$0xf]
      %v263 = vld [vmem:[%s166 + $0x160] sm:$0xf]
      %v264 = vld [vmem:[%s166 + $0x164] sm:$0xf]
      %v265 = vld [vmem:[%s166 + $0x168] sm:$0xf]
      %v266 = vld [vmem:[%s166 + $0x16c] sm:$0xf]
      %v267 = vld [vmem:[%s166 + $0x170] sm:$0xf]
      %v268 = vld [vmem:[%s166 + $0x174] sm:$0xf]
      %v269 = vld [vmem:[%s166 + $0x178] sm:$0xf]
      %v270 = vld [vmem:[%s166 + $0x17c] sm:$0xf]
      %v271 = vld [vmem:[%s166 + $0x180] sm:$0xf]
      %v272 = vld [vmem:[%s166 + $0x184] sm:$0xf]
      %v273 = vld [vmem:[%s166 + $0x188] sm:$0xf]
      %v274 = vld [vmem:[%s166 + $0x18c] sm:$0xf]
      %v275 = vld [vmem:[%s166 + $0x190] sm:$0xf]
      %v276 = vld [vmem:[%s166 + $0x194] sm:$0xf]
      %v277 = vld [vmem:[%s166 + $0x198] sm:$0xf]
      %v278 = vld [vmem:[%s166 + $0x19c] sm:$0xf]
      %v279 = vld [vmem:[%s166 + $0x1a0] sm:$0xf]
      %v280 = vld [vmem:[%s166 + $0x1a4] sm:$0xf]
      %v281 = vld [vmem:[%s166 + $0x1a8] sm:$0xf]
      %v282 = vld [vmem:[%s166 + $0x1ac] sm:$0xf]
      %v283 = vld [vmem:[%s166 + $0x1b0] sm:$0xf]
      %v284 = vld [vmem:[%s166 + $0x1b4] sm:$0xf]
      %v285 = vld [vmem:[%s166 + $0x1b8] sm:$0xf]
      %v286 = vld [vmem:[%s166 + $0x1bc] sm:$0xf]
      %v287 = vld [vmem:[%s166 + $0x1c0] sm:$0xf]
      %v288 = vld [vmem:[%s166 + $0x1c4] sm:$0xf]
      %v289 = vld [vmem:[%s166 + $0x1c8] sm:$0xf]
      %v290 = vld [vmem:[%s166 + $0x1cc] sm:$0xf]
      %v291 = vld [vmem:[%s166 + $0x1d0] sm:$0xf]
      %v292 = vld [vmem:[%s166 + $0x1d4] sm:$0xf]
      %v293 = vld [vmem:[%s166 + $0x1d8] sm:$0xf]
      %v294 = vld [vmem:[%s166 + $0x1dc] sm:$0xf]
      %v295 = vld [vmem:[%s166 + $0x1e0] sm:$0xf]
      %v296 = vld [vmem:[%s166 + $0x1e4] sm:$0xf]
      %v297 = vld [vmem:[%s166 + $0x1e8] sm:$0xf]
      %v298 = vld [vmem:[%s166 + $0x1ec] sm:$0xf]
      %v299 = vld [vmem:[%s166 + $0x1f0] sm:$0xf]
      %v300 = vld [vmem:[%s166 + $0x1f4] sm:$0xf]
      %v301 = vld [vmem:[%s166 + $0x1f8] sm:$0xf]
      %v302 = vld [vmem:[%s166 + $0x1fc] sm:$0xf]
      %v303 = vld [vmem:[%s166 + $0x200] sm:$0xf]
      %v304 = vld [vmem:[%s166 + $0x204] sm:$0xf]
      %v305 = vld [vmem:[%s166 + $0x208] sm:$0xf]
      %v306 = vld [vmem:[%s166 + $0x20c] sm:$0xf]
      %v307 = vld [vmem:[%s166 + $0x210] sm:$0xf]
      %v308 = vld [vmem:[%s166 + $0x214] sm:$0xf]
      %v309 = vld [vmem:[%s166 + $0x218] sm:$0xf]
      %v310 = vld [vmem:[%s166 + $0x21c] sm:$0xf]
      %v311 = vld [vmem:[%s166 + $0x220] sm:$0xf]
      %v312 = vld [vmem:[%s166 + $0x224] sm:$0xf]
      %v313 = vld [vmem:[%s166 + $0x228] sm:$0xf]
      %v314 = vld [vmem:[%s166 + $0x22c] sm:$0xf]
      %v315 = vld [vmem:[%s166 + $0x230] sm:$0xf]
      %v316 = vld [vmem:[%s166 + $0x234] sm:$0xf]
      %v317 = vld [vmem:[%s166 + $0x238] sm:$0xf]
      %v318 = vld [vmem:[%s166 + $0x23c] sm:$0xf]
      %v319 = vld [vmem:[%s166 + $0x240] sm:$0xf]
      %v320 = vld [vmem:[%s166 + $0x244] sm:$0xf]
      %v321 = vld [vmem:[%s166 + $0x248] sm:$0xf]
      %v322 = vld [vmem:[%s166 + $0x24c] sm:$0xf]
      %v323 = vld [vmem:[%s166 + $0x250] sm:$0xf]
      %v324 = vld [vmem:[%s166 + $0x254] sm:$0xf]
      %v325 = vld [vmem:[%s166 + $0x258] sm:$0xf]
      %v326 = vld [vmem:[%s166 + $0x25c] sm:$0xf]
      %v327 = vld [vmem:[%s166 + $0x260] sm:$0xf]
      %v328 = vld [vmem:[%s166 + $0x264] sm:$0xf]
      %v329 = vld [vmem:[%s166 + $0x268] sm:$0xf]
      %v330 = vld [vmem:[%s166 + $0x26c] sm:$0xf]
      %v331 = vld [vmem:[%s166 + $0x270] sm:$0xf]
      %v332 = vld [vmem:[%s166 + $0x274] sm:$0xf]
      %v333 = vld [vmem:[%s166 + $0x278] sm:$0xf]
      %v334 = vld [vmem:[%s166 + $0x27c] sm:$0xf]
      %v335 = vld [vmem:[%s166 + $0x280] sm:$0xf]
      %v336 = vld [vmem:[%s166 + $0x284] sm:$0xf]
      %v337 = vld [vmem:[%s166 + $0x288] sm:$0xf]
      %v338 = vld [vmem:[%s166 + $0x28c] sm:$0xf]
      %v339 = vld [vmem:[%s166 + $0x290] sm:$0xf]
      %v340 = vld [vmem:[%s166 + $0x294] sm:$0xf]
      %v341 = vld [vmem:[%s166 + $0x298] sm:$0xf]
      %v342 = vld [vmem:[%s166 + $0x29c] sm:$0xf]
      %v343 = vld [vmem:[%s166 + $0x2a0] sm:$0xf]
      %v344 = vld [vmem:[%s166 + $0x2a4] sm:$0xf]
      %v345 = vld [vmem:[%s166 + $0x2a8] sm:$0xf]
      %v346 = vld [vmem:[%s166 + $0x2ac] sm:$0xf]
      %v347 = vld [vmem:[%s166 + $0x2b0] sm:$0xf]
      %v348 = vld [vmem:[%s166 + $0x2b4] sm:$0xf]
      %v349 = vld [vmem:[%s166 + $0x2b8] sm:$0xf]
      %v350 = vld [vmem:[%s166 + $0x2bc] sm:$0xf]
      %v351 = vld [vmem:[%s166 + $0x2c0] sm:$0xf]
      %v352 = vld [vmem:[%s166 + $0x2c4] sm:$0xf]
      %v353 = vld [vmem:[%s166 + $0x2c8] sm:$0xf]
      %v354 = vld [vmem:[%s166 + $0x2cc] sm:$0xf]
      %v355 = vld [vmem:[%s166 + $0x2d0] sm:$0xf]
      %v356 = vld [vmem:[%s166 + $0x2d4] sm:$0xf]
      %v357 = vld [vmem:[%s166 + $0x2d8] sm:$0xf]
      %v358 = vld [vmem:[%s166 + $0x2dc] sm:$0xf]
      %v359 = vld [vmem:[%s166 + $0x2e0] sm:$0xf]
      %v360 = vld [vmem:[%s166 + $0x2e4] sm:$0xf]
      %v361 = vld [vmem:[%s166 + $0x2e8] sm:$0xf]
      %v362 = vld [vmem:[%s166 + $0x2ec] sm:$0xf]
      %v363 = vld [vmem:[%s166 + $0x2f0] sm:$0xf]
      %v364 = vld [vmem:[%s166 + $0x2f4] sm:$0xf]
      %v365 = vld [vmem:[%s166 + $0x2f8] sm:$0xf]
      %v366 = vld [vmem:[%s166 + $0x2fc] sm:$0xf]
      %v367 = vld [vmem:[%s166 + $0x300] sm:$0xf]
      %v368 = vld [vmem:[%s166 + $0x304] sm:$0xf]
      %v369 = vld [vmem:[%s166 + $0x308] sm:$0xf]
      %v370 = vld [vmem:[%s166 + $0x30c] sm:$0xf]
      %v371 = vld [vmem:[%s166 + $0x310] sm:$0xf]
      %v372 = vld [vmem:[%s166 + $0x314] sm:$0xf]
      %v373 = vld [vmem:[%s166 + $0x318] sm:$0xf]
      %v374 = vld [vmem:[%s166 + $0x31c] sm:$0xf]
      %v375 = vld [vmem:[%s166 + $0x320] sm:$0xf]
      %v376 = vld [vmem:[%s166 + $0x324] sm:$0xf]
      %v377 = vld [vmem:[%s166 + $0x328] sm:$0xf]
      %v378 = vld [vmem:[%s166 + $0x32c] sm:$0xf]
      %v379 = vld [vmem:[%s166 + $0x330] sm:$0xf]
      %v380 = vld [vmem:[%s166 + $0x334] sm:$0xf]
      %v381 = vld [vmem:[%s166 + $0x338] sm:$0xf]
      %v382 = vld [vmem:[%s166 + $0x33c] sm:$0xf]
      %v383 = vld [vmem:[%s166 + $0x340] sm:$0xf]
      %v384 = vld [vmem:[%s166 + $0x344] sm:$0xf]
      %v385 = vld [vmem:[%s166 + $0x348] sm:$0xf]
      %v386 = vld [vmem:[%s166 + $0x34c] sm:$0xf]
      %v387 = vld [vmem:[%s166 + $0x350] sm:$0xf]
      %v388 = vld [vmem:[%s166 + $0x354] sm:$0xf]
      %v389 = vld [vmem:[%s166 + $0x358] sm:$0xf]
      %v390 = vld [vmem:[%s166 + $0x35c] sm:$0xf]
      %v391 = vld [vmem:[%s166 + $0x360] sm:$0xf]
      %v392 = vld [vmem:[%s166 + $0x364] sm:$0xf]
      %v393 = vld [vmem:[%s166 + $0x368] sm:$0xf]
      %v394 = vld [vmem:[%s166 + $0x36c] sm:$0xf]
      %v395 = vld [vmem:[%s166 + $0x370] sm:$0xf]
      %v396 = vld [vmem:[%s166 + $0x374] sm:$0xf]
      %v397 = vld [vmem:[%s166 + $0x378] sm:$0xf]
      %v398 = vld [vmem:[%s166 + $0x37c] sm:$0xf]
      %v399 = vld [vmem:[%s166 + $0x380] sm:$0xf]
      %v400 = vld [vmem:[%s166 + $0x384] sm:$0xf]
      %v401 = vld [vmem:[%s166 + $0x388] sm:$0xf]
      %v402 = vld [vmem:[%s166 + $0x38c] sm:$0xf]
      %v403 = vld [vmem:[%s166 + $0x390] sm:$0xf]
      %v404 = vld [vmem:[%s166 + $0x394] sm:$0xf]
      %v405 = vld [vmem:[%s166 + $0x398] sm:$0xf]
      %v406 = vld [vmem:[%s166 + $0x39c] sm:$0xf]
      %v407 = vld [vmem:[%s166 + $0x3a0] sm:$0xf]
      %v408 = vld [vmem:[%s166 + $0x3a4] sm:$0xf]
      %v409 = vld [vmem:[%s166 + $0x3a8] sm:$0xf]
      %v410 = vld [vmem:[%s166 + $0x3ac] sm:$0xf]
      %v411 = vld [vmem:[%s166 + $0x3b0] sm:$0xf]
      %v412 = vld [vmem:[%s166 + $0x3b4] sm:$0xf]
      %v413 = vld [vmem:[%s166 + $0x3b8] sm:$0xf]
      %v414 = vld [vmem:[%s166 + $0x3bc] sm:$0xf]
      %v415 = vld [vmem:[%s166 + $0x3c0] sm:$0xf]
      %v416 = vld [vmem:[%s166 + $0x3c4] sm:$0xf]
      %v417 = vld [vmem:[%s166 + $0x3c8] sm:$0xf]
      %v418 = vld [vmem:[%s166 + $0x3cc] sm:$0xf]
      %v419 = vld [vmem:[%s166 + $0x3d0] sm:$0xf]
      %v420 = vld [vmem:[%s166 + $0x3d4] sm:$0xf]
      %v421 = vld [vmem:[%s166 + $0x3d8] sm:$0xf]
      %v422 = vld [vmem:[%s166 + $0x3dc] sm:$0xf]
      %v423 = vld [vmem:[%s166 + $0x3e0] sm:$0xf]
      %v424 = vld [vmem:[%s166 + $0x3e4] sm:$0xf]
      %v425 = vld [vmem:[%s166 + $0x3e8] sm:$0xf]
      %v426 = vld [vmem:[%s166 + $0x3ec] sm:$0xf]
      %v427 = vld [vmem:[%s166 + $0x3f0] sm:$0xf]
      %v428 = vld [vmem:[%s166 + $0x3f4] sm:$0xf]
      %v429 = vld [vmem:[%s166 + $0x3f8] sm:$0xf]
      %v430 = vld [vmem:[%s166 + $0x3fc] sm:$0xf]
      %v431 = vld [vmem:[%s166 + $0x400] sm:$0xf]
      %v432 = vld [vmem:[%s166 + $0x404] sm:$0xf]
      %v433 = vld [vmem:[%s166 + $0x408] sm:$0xf]
      %v434 = vld [vmem:[%s166 + $0x40c] sm:$0xf]
      %v435 = vld [vmem:[%s166 + $0x410] sm:$0xf]
      %v436 = vld [vmem:[%s166 + $0x414] sm:$0xf]
      %v437 = vld [vmem:[%s166 + $0x418] sm:$0xf]
      %v438 = vld [vmem:[%s166 + $0x41c] sm:$0xf]
      %v439 = vld [vmem:[%s166 + $0x420] sm:$0xf]
      %v440 = vld [vmem:[%s166 + $0x424] sm:$0xf]
      %v441 = vld [vmem:[%s166 + $0x428] sm:$0xf]
      %v442 = vld [vmem:[%s166 + $0x42c] sm:$0xf]
      %v443 = vld [vmem:[%s166 + $0x430] sm:$0xf]
      %v444 = vld [vmem:[%s166 + $0x434] sm:$0xf]
      %v445 = vld [vmem:[%s166 + $0x438] sm:$0xf]
      %v446 = vld [vmem:[%s166 + $0x43c] sm:$0xf]
      %v447 = vld [vmem:[%s166 + $0x440] sm:$0xf]
      %v448 = vld [vmem:[%s166 + $0x444] sm:$0xf]
      %v449 = vld [vmem:[%s166 + $0x448] sm:$0xf]
      %v450 = vld [vmem:[%s166 + $0x44c] sm:$0xf]
      %v451 = vld [vmem:[%s166 + $0x450] sm:$0xf]
      %v452 = vld [vmem:[%s166 + $0x454] sm:$0xf]
      %v453 = vld [vmem:[%s166 + $0x458] sm:$0xf]
      %v454 = vld [vmem:[%s166 + $0x45c] sm:$0xf]
      %v455 = vld [vmem:[%s166 + $0x460] sm:$0xf]
      %v456 = vld [vmem:[%s166 + $0x464] sm:$0xf]
      %v457 = vld [vmem:[%s166 + $0x468] sm:$0xf]
      %v458 = vld [vmem:[%s166 + $0x46c] sm:$0xf]
      %v459 = vld [vmem:[%s166 + $0x470] sm:$0xf]
      %v460 = vld [vmem:[%s166 + $0x474] sm:$0xf]
      %v461 = vld [vmem:[%s166 + $0x478] sm:$0xf]
      %v462 = vld [vmem:[%s166 + $0x47c] sm:$0xf]
      %v463 = vld [vmem:[%s1] sm:$0xf]
      %v464 = vld [vmem:[%s1 + $0x4] sm:$0xf]
      %v465 = vld [vmem:[%s1 + $0x8] sm:$0xf]
      %v466 = vld [vmem:[%s1 + $0xc] sm:$0xf]
      %v467 = vld [vmem:[%s1 + $0x10] sm:$0xf]
      %v468 = vld [vmem:[%s1 + $0x14] sm:$0xf]
      %v469 = vld [vmem:[%s1 + $0x18] sm:$0x1]
      %v470 = vld [vmem:[%s2] sm:$0x1]
      %v472 = vlaneseq
      %v473 = vshrl.u32 %v472, 7
      %v474 = vsub.s32 0, %v473
      %v475 = vrot.slane %v470, %v474
      %v765 = vunpack.c.l.b16 %v175
      %v766 = vunpack.c.l.b16 %v176
      %v767 = vunpack.c.l.b16 %v177
      %v768 = vunpack.c.l.b16 %v178
      %v769 = vunpack.c.l.b16 %v179
      %v770 = vunpack.c.l.b16 %v180
      %v771 = vunpack.c.l.b16 %v181
      %v772 = vunpack.c.l.b16 %v182
      %v773 = vunpack.c.l.b16 %v183
      %v774 = vunpack.c.l.b16 %v184
      %v775 = vunpack.c.l.b16 %v185
      %v776 = vunpack.c.l.b16 %v186
      %v777 = vunpack.c.l.b16 %v187
      %v778 = vunpack.c.l.b16 %v188
      %v779 = vunpack.c.l.b16 %v189
      %v780 = vunpack.c.l.b16 %v190
      %v781 = vunpack.c.l.b16 %v191
      %v782 = vunpack.c.l.b16 %v192
      %v783 = vunpack.c.l.b16 %v193
      %v784 = vunpack.c.l.b16 %v194
      %v785 = vunpack.c.l.b16 %v195
      %v786 = vunpack.c.l.b16 %v196
      %v787 = vunpack.c.l.b16 %v197
      %v788 = vunpack.c.l.b16 %v198
      %v789 = vunpack.c.l.b16 %v199
      %v790 = vunpack.c.l.b16 %v200
      %v791 = vunpack.c.l.b16 %v201
      %v792 = vunpack.c.l.b16 %v202
      %v793 = vunpack.c.l.b16 %v203
      %v794 = vunpack.c.l.b16 %v204
      %v795 = vunpack.c.l.b16 %v205
      %v796 = vunpack.c.l.b16 %v206
      %v797 = vunpack.c.l.b16 %v207
      %v798 = vunpack.c.l.b16 %v208
      %v799 = vunpack.c.l.b16 %v209
      %v800 = vunpack.c.l.b16 %v210
      %v801 = vunpack.c.l.b16 %v211
      %v802 = vunpack.c.l.b16 %v212
      %v803 = vunpack.c.l.b16 %v213
      %v804 = vunpack.c.l.b16 %v214
      %v805 = vunpack.c.l.b16 %v215
      %v806 = vunpack.c.l.b16 %v216
      %v807 = vunpack.c.l.b16 %v217
      %v808 = vunpack.c.l.b16 %v218
      %v809 = vunpack.c.l.b16 %v219
      %v810 = vunpack.c.l.b16 %v220
      %v811 = vunpack.c.l.b16 %v221
      %v812 = vunpack.c.l.b16 %v222
      %v813 = vunpack.c.l.b16 %v223
      %v814 = vunpack.c.l.b16 %v224
      %v815 = vunpack.c.l.b16 %v225
      %v816 = vunpack.c.l.b16 %v226
      %v817 = vunpack.c.l.b16 %v227
      %v818 = vunpack.c.l.b16 %v228
      %v819 = vunpack.c.l.b16 %v229
      %v820 = vunpack.c.l.b16 %v230
      %v821 = vunpack.c.l.b16 %v231
      %v822 = vunpack.c.l.b16 %v232
      %v823 = vunpack.c.l.b16 %v233
      %v824 = vunpack.c.l.b16 %v234
      %v825 = vunpack.c.l.b16 %v235
      %v826 = vunpack.c.l.b16 %v236
      %v827 = vunpack.c.l.b16 %v237
      %v828 = vunpack.c.l.b16 %v238
      %v829 = vunpack.c.l.b16 %v239
      %v830 = vunpack.c.l.b16 %v240
      %v831 = vunpack.c.l.b16 %v241
      %v832 = vunpack.c.l.b16 %v242
      %v833 = vunpack.c.l.b16 %v243
      %v834 = vunpack.c.l.b16 %v244
      %v835 = vunpack.c.l.b16 %v245
      %v836 = vunpack.c.l.b16 %v246
      %v837 = vunpack.c.l.b16 %v247
      %v838 = vunpack.c.l.b16 %v248
      %v839 = vunpack.c.l.b16 %v249
      %v840 = vunpack.c.l.b16 %v250
      %v841 = vunpack.c.l.b16 %v251
      %v842 = vunpack.c.l.b16 %v252
      %v843 = vunpack.c.l.b16 %v253
      %v844 = vunpack.c.l.b16 %v254
      %v845 = vunpack.c.l.b16 %v255
      %v846 = vunpack.c.l.b16 %v256
      %v847 = vunpack.c.l.b16 %v257
      %v848 = vunpack.c.l.b16 %v258
      %v849 = vunpack.c.l.b16 %v259
      %v850 = vunpack.c.l.b16 %v260
      %v851 = vunpack.c.l.b16 %v261
      %v852 = vunpack.c.l.b16 %v262
      %v853 = vunpack.c.l.b16 %v263
      %v854 = vunpack.c.l.b16 %v264
      %v855 = vunpack.c.l.b16 %v265
      %v856 = vunpack.c.l.b16 %v266
      %v857 = vunpack.c.l.b16 %v267
      %v858 = vunpack.c.l.b16 %v268
      %v859 = vunpack.c.l.b16 %v269
      %v860 = vunpack.c.l.b16 %v270
      %v861 = vunpack.c.l.b16 %v271
      %v862 = vunpack.c.l.b16 %v272
      %v863 = vunpack.c.l.b16 %v273
      %v864 = vunpack.c.l.b16 %v274
      %v865 = vunpack.c.l.b16 %v275
      %v866 = vunpack.c.l.b16 %v276
      %v867 = vunpack.c.l.b16 %v277
      %v868 = vunpack.c.l.b16 %v278
      %v869 = vunpack.c.l.b16 %v279
      %v870 = vunpack.c.l.b16 %v280
      %v871 = vunpack.c.l.b16 %v281
      %v872 = vunpack.c.l.b16 %v282
      %v873 = vunpack.c.l.b16 %v283
      %v874 = vunpack.c.l.b16 %v284
      %v875 = vunpack.c.l.b16 %v285
      %v876 = vunpack.c.l.b16 %v286
      %v877 = vunpack.c.l.b16 %v287
      %v878 = vunpack.c.l.b16 %v288
      %v879 = vunpack.c.l.b16 %v289
      %v880 = vunpack.c.l.b16 %v290
      %v881 = vunpack.c.l.b16 %v291
      %v882 = vunpack.c.l.b16 %v292
      %v883 = vunpack.c.l.b16 %v293
      %v884 = vunpack.c.l.b16 %v294
      %v885 = vunpack.c.l.b16 %v295
      %v886 = vunpack.c.l.b16 %v296
      %v887 = vunpack.c.l.b16 %v297
      %v888 = vunpack.c.l.b16 %v298
      %v889 = vunpack.c.l.b16 %v299
      %v890 = vunpack.c.l.b16 %v300
      %v891 = vunpack.c.l.b16 %v301
      %v892 = vunpack.c.l.b16 %v302
      %v893 = vunpack.c.l.b16 %v303
      %v894 = vunpack.c.l.b16 %v304
      %v895 = vunpack.c.l.b16 %v305
      %v896 = vunpack.c.l.b16 %v306
      %v897 = vunpack.c.l.b16 %v307
      %v898 = vunpack.c.l.b16 %v308
      %v899 = vunpack.c.l.b16 %v309
      %v900 = vunpack.c.l.b16 %v310
      %v901 = vunpack.c.l.b16 %v311
      %v902 = vunpack.c.l.b16 %v312
      %v903 = vunpack.c.l.b16 %v313
      %v904 = vunpack.c.l.b16 %v314
      %v905 = vunpack.c.l.b16 %v315
      %v906 = vunpack.c.l.b16 %v316
      %v907 = vunpack.c.l.b16 %v317
      %v908 = vunpack.c.l.b16 %v318
      %v909 = vunpack.c.l.b16 %v319
      %v910 = vunpack.c.l.b16 %v320
      %v911 = vunpack.c.l.b16 %v321
      %v912 = vunpack.c.l.b16 %v322
      %v913 = vunpack.c.l.b16 %v323
      %v914 = vunpack.c.l.b16 %v324
      %v915 = vunpack.c.l.b16 %v325
      %v916 = vunpack.c.l.b16 %v326
      %v917 = vunpack.c.l.b16 %v327
      %v918 = vunpack.c.l.b16 %v328
      %v919 = vunpack.c.l.b16 %v329
      %v920 = vunpack.c.l.b16 %v330
      %v921 = vunpack.c.l.b16 %v331
      %v922 = vunpack.c.l.b16 %v332
      %v923 = vunpack.c.l.b16 %v333
      %v924 = vunpack.c.l.b16 %v334
      %v925 = vunpack.c.l.b16 %v335
      %v926 = vunpack.c.l.b16 %v336
      %v927 = vunpack.c.l.b16 %v337
      %v928 = vunpack.c.l.b16 %v338
      %v929 = vunpack.c.l.b16 %v339
      %v930 = vunpack.c.l.b16 %v340
      %v931 = vunpack.c.l.b16 %v341
      %v932 = vunpack.c.l.b16 %v342
      %v933 = vunpack.c.l.b16 %v343
      %v934 = vunpack.c.l.b16 %v344
      %v935 = vunpack.c.l.b16 %v345
      %v936 = vunpack.c.l.b16 %v346
      %v937 = vunpack.c.l.b16 %v347
      %v938 = vunpack.c.l.b16 %v348
      %v939 = vunpack.c.l.b16 %v349
      %v940 = vunpack.c.l.b16 %v350
      %v941 = vunpack.c.l.b16 %v351
      %v942 = vunpack.c.l.b16 %v352
      %v943 = vunpack.c.l.b16 %v353
      %v944 = vunpack.c.l.b16 %v354
      %v945 = vunpack.c.l.b16 %v355
      %v946 = vunpack.c.l.b16 %v356
      %v947 = vunpack.c.l.b16 %v357
      %v948 = vunpack.c.l.b16 %v358
      %v949 = vunpack.c.l.b16 %v359
      %v950 = vunpack.c.l.b16 %v360
      %v951 = vunpack.c.l.b16 %v361
      %v952 = vunpack.c.l.b16 %v362
      %v953 = vunpack.c.l.b16 %v363
      %v954 = vunpack.c.l.b16 %v364
      %v955 = vunpack.c.l.b16 %v365
      %v956 = vunpack.c.l.b16 %v366
      %v957 = vunpack.c.l.b16 %v367
      %v958 = vunpack.c.l.b16 %v368
      %v959 = vunpack.c.l.b16 %v369
      %v960 = vunpack.c.l.b16 %v370
      %v961 = vunpack.c.l.b16 %v371
      %v962 = vunpack.c.l.b16 %v372
      %v963 = vunpack.c.l.b16 %v373
      %v964 = vunpack.c.l.b16 %v374
      %v965 = vunpack.c.l.b16 %v375
      %v966 = vunpack.c.l.b16 %v376
      %v967 = vunpack.c.l.b16 %v377
      %v968 = vunpack.c.l.b16 %v378
      %v969 = vunpack.c.l.b16 %v379
      %v970 = vunpack.c.l.b16 %v380
      %v971 = vunpack.c.l.b16 %v381
      %v972 = vunpack.c.l.b16 %v382
      %v973 = vunpack.c.l.b16 %v383
      %v974 = vunpack.c.l.b16 %v384
      %v975 = vunpack.c.l.b16 %v385
      %v976 = vunpack.c.l.b16 %v386
      %v977 = vunpack.c.l.b16 %v387
      %v978 = vunpack.c.l.b16 %v388
      %v979 = vunpack.c.l.b16 %v389
      %v980 = vunpack.c.l.b16 %v390
      %v981 = vunpack.c.l.b16 %v391
      %v982 = vunpack.c.l.b16 %v392
      %v983 = vunpack.c.l.b16 %v393
      %v984 = vunpack.c.l.b16 %v394
      %v985 = vunpack.c.l.b16 %v395
      %v986 = vunpack.c.l.b16 %v396
      %v987 = vunpack.c.l.b16 %v397
      %v988 = vunpack.c.l.b16 %v398
      %v989 = vunpack.c.l.b16 %v399
      %v990 = vunpack.c.l.b16 %v400
      %v991 = vunpack.c.l.b16 %v401
      %v992 = vunpack.c.l.b16 %v402
      %v993 = vunpack.c.l.b16 %v403
      %v994 = vunpack.c.l.b16 %v404
      %v995 = vunpack.c.l.b16 %v405
      %v996 = vunpack.c.l.b16 %v406
      %v997 = vunpack.c.l.b16 %v407
      %v998 = vunpack.c.l.b16 %v408
      %v999 = vunpack.c.l.b16 %v409
      %v1000 = vunpack.c.l.b16 %v410
      %v1001 = vunpack.c.l.b16 %v411
      %v1002 = vunpack.c.l.b16 %v412
      %v1003 = vunpack.c.l.b16 %v413
      %v1004 = vunpack.c.l.b16 %v414
      %v1005 = vunpack.c.l.b16 %v415
      %v1006 = vunpack.c.l.b16 %v416
      %v1007 = vunpack.c.l.b16 %v417
      %v1008 = vunpack.c.l.b16 %v418
      %v1009 = vunpack.c.l.b16 %v419
      %v1010 = vunpack.c.l.b16 %v420
      %v1011 = vunpack.c.l.b16 %v421
      %v1012 = vunpack.c.l.b16 %v422
      %v1013 = vunpack.c.l.b16 %v423
      %v1014 = vunpack.c.l.b16 %v424
      %v1015 = vunpack.c.l.b16 %v425
      %v1016 = vunpack.c.l.b16 %v426
      %v1017 = vunpack.c.l.b16 %v427
      %v1018 = vunpack.c.l.b16 %v428
      %v1019 = vunpack.c.l.b16 %v429
      %v1020 = vunpack.c.l.b16 %v430
      %v1021 = vunpack.c.l.b16 %v431
      %v1022 = vunpack.c.l.b16 %v432
      %v1023 = vunpack.c.l.b16 %v433
      %v1024 = vunpack.c.l.b16 %v434
      %v1025 = vunpack.c.l.b16 %v435
      %v1026 = vunpack.c.l.b16 %v436
      %v1027 = vunpack.c.l.b16 %v437
      %v1028 = vunpack.c.l.b16 %v438
      %v1029 = vunpack.c.l.b16 %v439
      %v1030 = vunpack.c.l.b16 %v440
      %v1031 = vunpack.c.l.b16 %v441
      %v1032 = vunpack.c.l.b16 %v442
      %v1033 = vunpack.c.l.b16 %v443
      %v1034 = vunpack.c.l.b16 %v444
      %v1035 = vunpack.c.l.b16 %v445
      %v1036 = vunpack.c.l.b16 %v446
      %v1037 = vunpack.c.l.b16 %v447
      %v1038 = vunpack.c.l.b16 %v448
      %v1039 = vunpack.c.l.b16 %v449
      %v1040 = vunpack.c.l.b16 %v450
      %v1041 = vunpack.c.l.b16 %v451
      %v1042 = vunpack.c.l.b16 %v452
      %v1043 = vunpack.c.l.b16 %v453
      %v1044 = vunpack.c.l.b16 %v454
      %v1045 = vunpack.c.l.b16 %v455
      %v1046 = vunpack.c.l.b16 %v456
      %v1047 = vunpack.c.l.b16 %v457
      %v1048 = vunpack.c.l.b16 %v458
      %v1049 = vunpack.c.l.b16 %v459
      %v1050 = vunpack.c.l.b16 %v460
      %v1051 = vunpack.c.l.b16 %v461
      %v1052 = vunpack.c.l.b16 %v462
      %v1053 = vpack.c.b16 %v766, %v765
      %v1054 = vpack.c.b16 %v768, %v767
      %v1055 = vpack.c.b16 %v770, %v769
      %v1056 = vpack.c.b16 %v772, %v771
      %v1057 = vpack.c.b16 %v774, %v773
      %v1058 = vpack.c.b16 %v776, %v775
      %v1059 = vpack.c.b16 %v778, %v777
      %v1060 = vpack.c.b16 %v780, %v779
      %v1061 = vpack.c.b16 %v782, %v781
      %v1062 = vpack.c.b16 %v784, %v783
      %v1063 = vpack.c.b16 %v786, %v785
      %v1064 = vpack.c.b16 %v788, %v787
      %v1065 = vpack.c.b16 %v790, %v789
      %v1066 = vpack.c.b16 %v792, %v791
      %v1067 = vpack.c.b16 %v794, %v793
      %v1068 = vpack.c.b16 %v796, %v795
      %v1069 = vpack.c.b16 %v798, %v797
      %v1070 = vpack.c.b16 %v800, %v799
      %v1071 = vpack.c.b16 %v802, %v801
      %v1072 = vpack.c.b16 %v804, %v803
      %v1073 = vpack.c.b16 %v806, %v805
      %v1074 = vpack.c.b16 %v808, %v807
      %v1075 = vpack.c.b16 %v810, %v809
      %v1076 = vpack.c.b16 %v812, %v811
      %v1077 = vpack.c.b16 %v814, %v813
      %v1078 = vpack.c.b16 %v816, %v815
      %v1079 = vpack.c.b16 %v818, %v817
      %v1080 = vpack.c.b16 %v820, %v819
      %v1081 = vpack.c.b16 %v822, %v821
      %v1082 = vpack.c.b16 %v824, %v823
      %v1083 = vpack.c.b16 %v826, %v825
      %v1084 = vpack.c.b16 %v828, %v827
      %v1085 = vpack.c.b16 %v830, %v829
      %v1086 = vpack.c.b16 %v832, %v831
      %v1087 = vpack.c.b16 %v834, %v833
      %v1088 = vpack.c.b16 %v836, %v835
      %v1089 = vpack.c.b16 %v838, %v837
      %v1090 = vpack.c.b16 %v840, %v839
      %v1091 = vpack.c.b16 %v842, %v841
      %v1092 = vpack.c.b16 %v844, %v843
      %v1093 = vpack.c.b16 %v846, %v845
      %v1094 = vpack.c.b16 %v848, %v847
      %v1095 = vpack.c.b16 %v850, %v849
      %v1096 = vpack.c.b16 %v852, %v851
      %v1097 = vpack.c.b16 %v854, %v853
      %v1098 = vpack.c.b16 %v856, %v855
      %v1099 = vpack.c.b16 %v858, %v857
      %v1100 = vpack.c.b16 %v860, %v859
      %v1101 = vpack.c.b16 %v862, %v861
      %v1102 = vpack.c.b16 %v864, %v863
      %v1103 = vpack.c.b16 %v866, %v865
      %v1104 = vpack.c.b16 %v868, %v867
      %v1105 = vpack.c.b16 %v870, %v869
      %v1106 = vpack.c.b16 %v872, %v871
      %v1107 = vpack.c.b16 %v874, %v873
      %v1108 = vpack.c.b16 %v876, %v875
      %v1109 = vpack.c.b16 %v878, %v877
      %v1110 = vpack.c.b16 %v880, %v879
      %v1111 = vpack.c.b16 %v882, %v881
      %v1112 = vpack.c.b16 %v884, %v883
      %v1113 = vpack.c.b16 %v886, %v885
      %v1114 = vpack.c.b16 %v888, %v887
      %v1115 = vpack.c.b16 %v890, %v889
      %v1116 = vpack.c.b16 %v892, %v891
      %v1117 = vpack.c.b16 %v894, %v893
      %v1118 = vpack.c.b16 %v896, %v895
      %v1119 = vpack.c.b16 %v898, %v897
      %v1120 = vpack.c.b16 %v900, %v899
      %v1121 = vpack.c.b16 %v902, %v901
      %v1122 = vpack.c.b16 %v904, %v903
      %v1123 = vpack.c.b16 %v906, %v905
      %v1124 = vpack.c.b16 %v908, %v907
      %v1125 = vpack.c.b16 %v910, %v909
      %v1126 = vpack.c.b16 %v912, %v911
      %v1127 = vpack.c.b16 %v914, %v913
      %v1128 = vpack.c.b16 %v916, %v915
      %v1129 = vpack.c.b16 %v918, %v917
      %v1130 = vpack.c.b16 %v920, %v919
      %v1131 = vpack.c.b16 %v922, %v921
      %v1132 = vpack.c.b16 %v924, %v923
      %v1133 = vpack.c.b16 %v926, %v925
      %v1134 = vpack.c.b16 %v928, %v927
      %v1135 = vpack.c.b16 %v930, %v929
      %v1136 = vpack.c.b16 %v932, %v931
      %v1137 = vpack.c.b16 %v934, %v933
      %v1138 = vpack.c.b16 %v936, %v935
      %v1139 = vpack.c.b16 %v938, %v937
      %v1140 = vpack.c.b16 %v940, %v939
      %v1141 = vpack.c.b16 %v942, %v941
      %v1142 = vpack.c.b16 %v944, %v943
      %v1143 = vpack.c.b16 %v946, %v945
      %v1144 = vpack.c.b16 %v948, %v947
      %v1145 = vpack.c.b16 %v950, %v949
      %v1146 = vpack.c.b16 %v952, %v951
      %v1147 = vpack.c.b16 %v954, %v953
      %v1148 = vpack.c.b16 %v956, %v955
      %v1149 = vpack.c.b16 %v958, %v957
      %v1150 = vpack.c.b16 %v960, %v959
      %v1151 = vpack.c.b16 %v962, %v961
      %v1152 = vpack.c.b16 %v964, %v963
      %v1153 = vpack.c.b16 %v966, %v965
      %v1154 = vpack.c.b16 %v968, %v967
      %v1155 = vpack.c.b16 %v970, %v969
      %v1156 = vpack.c.b16 %v972, %v971
      %v1157 = vpack.c.b16 %v974, %v973
      %v1158 = vpack.c.b16 %v976, %v975
      %v1159 = vpack.c.b16 %v978, %v977
      %v1160 = vpack.c.b16 %v980, %v979
      %v1161 = vpack.c.b16 %v982, %v981
      %v1162 = vpack.c.b16 %v984, %v983
      %v1163 = vpack.c.b16 %v986, %v985
      %v1164 = vpack.c.b16 %v988, %v987
      %v1165 = vpack.c.b16 %v990, %v989
      %v1166 = vpack.c.b16 %v992, %v991
      %v1167 = vpack.c.b16 %v994, %v993
      %v1168 = vpack.c.b16 %v996, %v995
      %v1169 = vpack.c.b16 %v998, %v997
      %v1170 = vpack.c.b16 %v1000, %v999
      %v1171 = vpack.c.b16 %v1002, %v1001
      %v1172 = vpack.c.b16 %v1004, %v1003
      %v1173 = vpack.c.b16 %v1006, %v1005
      %v1174 = vpack.c.b16 %v1008, %v1007
      %v1175 = vpack.c.b16 %v1010, %v1009
      %v1176 = vpack.c.b16 %v1012, %v1011
      %v1177 = vpack.c.b16 %v1014, %v1013
      %v1178 = vpack.c.b16 %v1016, %v1015
      %v1179 = vpack.c.b16 %v1018, %v1017
      %v1180 = vpack.c.b16 %v1020, %v1019
      %v1181 = vpack.c.b16 %v1022, %v1021
      %v1182 = vpack.c.b16 %v1024, %v1023
      %v1183 = vpack.c.b16 %v1026, %v1025
      %v1184 = vpack.c.b16 %v1028, %v1027
      %v1185 = vpack.c.b16 %v1030, %v1029
      %v1186 = vpack.c.b16 %v1032, %v1031
      %v1187 = vpack.c.b16 %v1034, %v1033
      %v1188 = vpack.c.b16 %v1036, %v1035
      %v1189 = vpack.c.b16 %v1038, %v1037
      %v1190 = vpack.c.b16 %v1040, %v1039
      %v1191 = vpack.c.b16 %v1042, %v1041
      %v1192 = vpack.c.b16 %v1044, %v1043
      %v1193 = vpack.c.b16 %v1046, %v1045
      %v1194 = vpack.c.b16 %v1048, %v1047
      %v1195 = vpack.c.b16 %v1050, %v1049
      %v1196 = vpack.c.b16 %v1052, %v1051
      %v1204 = vunpack.c.l.b16 %v463
      %v1205 = vunpack.c.l.b16 %v464
      %v1206 = vunpack.c.l.b16 %v465
      %v1207 = vunpack.c.l.b16 %v466
      %v1208 = vunpack.c.l.b16 %v467
      %v1209 = vunpack.c.l.b16 %v468
      %v1210 = vunpack.c.l.b16 %v469
      %v1211 = vpack.c.b16 %v1205, %v1204
      %v1212 = vpack.c.b16 %v1207, %v1206
      %v1213 = vpack.c.b16 %v1209, %v1208
      %v1214 = vpack.c.b16 %v1210, %v1210
      %vm1218 = vcmask 400384
      %v1220 = vsel %vm1218, %v1053, 0
      %v1223 = vsel %vm1218, %v1054, 0
      %v1226 = vsel %vm1218, %v1055, 0
      %v1229 = vsel %vm1218, %v1056, 0
      %v1232 = vsel %vm1218, %v1057, 0
      %v1235 = vsel %vm1218, %v1058, 0
      %v1238 = vsel %vm1218, %v1059, 0
      %v1241 = vsel %vm1218, %v1060, 0
      %v1244 = vsel %vm1218, %v1061, 0
      %v1247 = vsel %vm1218, %v1062, 0
      %v1250 = vsel %vm1218, %v1063, 0
      %v1253 = vsel %vm1218, %v1064, 0
      %v1256 = vsel %vm1218, %v1065, 0
      %v1259 = vsel %vm1218, %v1066, 0
      %v1262 = vsel %vm1218, %v1067, 0
      %v1265 = vsel %vm1218, %v1068, 0
      %v1268 = vsel %vm1218, %v1069, 0
      %v1271 = vsel %vm1218, %v1070, 0
      %v1274 = vsel %vm1218, %v1071, 0
      %v1277 = vsel %vm1218, %v1072, 0
      %v1280 = vsel %vm1218, %v1073, 0
      %v1283 = vsel %vm1218, %v1074, 0
      %v1286 = vsel %vm1218, %v1075, 0
      %v1289 = vsel %vm1218, %v1076, 0
      %v1292 = vsel %vm1218, %v1077, 0
      %v1295 = vsel %vm1218, %v1078, 0
      %v1298 = vsel %vm1218, %v1079, 0
      %v1301 = vsel %vm1218, %v1080, 0
      %v1304 = vsel %vm1218, %v1081, 0
      %v1307 = vsel %vm1218, %v1082, 0
      %v1310 = vsel %vm1218, %v1083, 0
      %v1313 = vsel %vm1218, %v1084, 0
      %v1316 = vsel %vm1218, %v1085, 0
      %v1319 = vsel %vm1218, %v1086, 0
      %v1322 = vsel %vm1218, %v1087, 0
      %v1325 = vsel %vm1218, %v1088, 0
      %v1328 = vsel %vm1218, %v1089, 0
      %v1331 = vsel %vm1218, %v1090, 0
      %v1334 = vsel %vm1218, %v1091, 0
      %v1337 = vsel %vm1218, %v1092, 0
      %v1340 = vsel %vm1218, %v1093, 0
      %v1343 = vsel %vm1218, %v1094, 0
      %v1346 = vsel %vm1218, %v1095, 0
      %v1349 = vsel %vm1218, %v1096, 0
      %v1352 = vsel %vm1218, %v1097, 0
      %v1355 = vsel %vm1218, %v1098, 0
      %v1358 = vsel %vm1218, %v1099, 0
      %v1361 = vsel %vm1218, %v1100, 0
      %v1364 = vsel %vm1218, %v1101, 0
      %v1367 = vsel %vm1218, %v1102, 0
      %v1370 = vsel %vm1218, %v1103, 0
      %v1373 = vsel %vm1218, %v1104, 0
      %v1376 = vsel %vm1218, %v1105, 0
      %v1379 = vsel %vm1218, %v1106, 0
      %v1382 = vsel %vm1218, %v1107, 0
      %v1385 = vsel %vm1218, %v1108, 0
      %v1388 = vsel %vm1218, %v1109, 0
      %v1391 = vsel %vm1218, %v1110, 0
      %v1394 = vsel %vm1218, %v1111, 0
      %v1397 = vsel %vm1218, %v1112, 0
      %v1400 = vsel %vm1218, %v1113, 0
      %v1403 = vsel %vm1218, %v1114, 0
      %v1406 = vsel %vm1218, %v1115, 0
      %v1409 = vsel %vm1218, %v1116, 0
      %v1412 = vsel %vm1218, %v1117, 0
      %v1415 = vsel %vm1218, %v1118, 0
      %v1418 = vsel %vm1218, %v1119, 0
      %v1421 = vsel %vm1218, %v1120, 0
      %v1424 = vsel %vm1218, %v1121, 0
      %v1427 = vsel %vm1218, %v1122, 0
      %v1430 = vsel %vm1218, %v1123, 0
      %v1433 = vsel %vm1218, %v1124, 0
      %v1436 = vsel %vm1218, %v1125, 0
      %v1439 = vsel %vm1218, %v1126, 0
      %v1442 = vsel %vm1218, %v1127, 0
      %v1445 = vsel %vm1218, %v1128, 0
      %v1448 = vsel %vm1218, %v1129, 0
      %v1451 = vsel %vm1218, %v1130, 0
      %v1454 = vsel %vm1218, %v1131, 0
      %v1457 = vsel %vm1218, %v1132, 0
      %v1460 = vsel %vm1218, %v1133, 0
      %v1463 = vsel %vm1218, %v1134, 0
      %v1466 = vsel %vm1218, %v1135, 0
      %v1469 = vsel %vm1218, %v1136, 0
      %v1472 = vsel %vm1218, %v1137, 0
      %v1475 = vsel %vm1218, %v1138, 0
      %v1478 = vsel %vm1218, %v1139, 0
      %v1481 = vsel %vm1218, %v1140, 0
      %v1484 = vsel %vm1218, %v1141, 0
      %v1487 = vsel %vm1218, %v1142, 0
      %v1490 = vsel %vm1218, %v1143, 0
      %v1493 = vsel %vm1218, %v1144, 0
      %v1496 = vsel %vm1218, %v1145, 0
      %v1499 = vsel %vm1218, %v1146, 0
      %v1502 = vsel %vm1218, %v1147, 0
      %v1505 = vsel %vm1218, %v1148, 0
      %v1508 = vsel %vm1218, %v1149, 0
      %v1511 = vsel %vm1218, %v1150, 0
      %v1514 = vsel %vm1218, %v1151, 0
      %v1517 = vsel %vm1218, %v1152, 0
      %v1520 = vsel %vm1218, %v1153, 0
      %v1523 = vsel %vm1218, %v1154, 0
      %v1526 = vsel %vm1218, %v1155, 0
      %v1529 = vsel %vm1218, %v1156, 0
      %v1532 = vsel %vm1218, %v1157, 0
      %v1535 = vsel %vm1218, %v1158, 0
      %v1538 = vsel %vm1218, %v1159, 0
      %v1541 = vsel %vm1218, %v1160, 0
      %v1544 = vsel %vm1218, %v1161, 0
      %v1547 = vsel %vm1218, %v1162, 0
      %v1550 = vsel %vm1218, %v1163, 0
      %v1553 = vsel %vm1218, %v1164, 0
      %v1556 = vsel %vm1218, %v1165, 0
      %v1559 = vsel %vm1218, %v1166, 0
      %v1562 = vsel %vm1218, %v1167, 0
      %v1565 = vsel %vm1218, %v1168, 0
      %v1568 = vsel %vm1218, %v1169, 0
      %v1571 = vsel %vm1218, %v1170, 0
      %v1574 = vsel %vm1218, %v1171, 0
      %v1577 = vsel %vm1218, %v1172, 0
      %v1580 = vsel %vm1218, %v1173, 0
      %v1583 = vsel %vm1218, %v1174, 0
      %v1586 = vsel %vm1218, %v1175, 0
      %v1589 = vsel %vm1218, %v1176, 0
      %v1592 = vsel %vm1218, %v1177, 0
      %v1595 = vsel %vm1218, %v1178, 0
      %v1598 = vsel %vm1218, %v1179, 0
      %v1601 = vsel %vm1218, %v1180, 0
      %v1604 = vsel %vm1218, %v1181, 0
      %v1607 = vsel %vm1218, %v1182, 0
      %v1610 = vsel %vm1218, %v1183, 0
      %v1613 = vsel %vm1218, %v1184, 0
      %v1616 = vsel %vm1218, %v1185, 0
      %v1619 = vsel %vm1218, %v1186, 0
      %v1622 = vsel %vm1218, %v1187, 0
      %v1625 = vsel %vm1218, %v1188, 0
      %v1628 = vsel %vm1218, %v1189, 0
      %v1631 = vsel %vm1218, %v1190, 0
      %v1634 = vsel %vm1218, %v1191, 0
      %v1637 = vsel %vm1218, %v1192, 0
      %v1640 = vsel %vm1218, %v1193, 0
      %v1643 = vsel %vm1218, %v1194, 0
      %v1646 = vsel %vm1218, %v1195, 0
      %v1649 = vsel %vm1218, %v1196, 0
      %vm1651 = vcmask 1040384
      %v1652 = vsel 0, 4294967295, 65535
      %v1653 = vsel %vm1651, %v1652, 0
      %v1655 = vand.u32 %v1214, %v1653
      %1657 = vmatprep.subr.bf16.mxu0 0
      %1658 = vmatpush1.bf16.msra.mxu0 %v1211
      %1659 = vmatprep.subr.bf16.mxu0 0
      %1660 = vmatpush1.bf16.msra.mxu0 %v1212
      %1661 = vmatprep.subr.bf16.mxu0 0
      %1662 = vmatpush1.bf16.msra.mxu0 %v1213
      %1663 = vmatprep.subr.bf16.mxu0 0
      %1664 = vmatpush1.bf16.msra.mxu0 %v1655
      %1665 = vmatprep.subr.bf16.mxu0 0
      %1666 = vmatpush1.bf16.msra.mxu0 0
      %1667 = vmatprep.subr.bf16.mxu0 0
      %1668 = vmatpush1.bf16.msra.mxu0 0
      %1669 = vmatprep.subr.bf16.mxu0 0
      %1670 = vmatpush1.bf16.msra.mxu0 0
      %1671 = vmatprep.subr.bf16.mxu0 0
      %1672 = vmatpush1.bf16.msra.mxu0 0
      %1673 = vmatprep.subr.bf16.mxu0 0
      %1674 = vmatpush1.bf16.msra.mxu0 0
      %1675 = vmatprep.subr.bf16.mxu0 0
      %1676 = vmatpush1.bf16.msra.mxu0 0
      %1677 = vmatprep.subr.bf16.mxu0 0
      %1678 = vmatpush1.bf16.msra.mxu0 0
      %1679 = vmatprep.subr.bf16.mxu0 0
      %1680 = vmatpush1.bf16.msra.mxu0 0
      %1681 = vmatprep.subr.bf16.mxu0 0
      %1682 = vmatpush1.bf16.msra.mxu0 0
      %1683 = vmatprep.subr.bf16.mxu0 0
      %1684 = vmatpush1.bf16.msra.mxu0 0
      %1685 = vmatprep.subr.bf16.mxu0 0
      %1686 = vmatpush1.bf16.msra.mxu0 0
      %1687 = vmatprep.subr.bf16.mxu0 0
      %1688 = vmatpush1.bf16.msra.mxu0 0
      %1689 = vmatprep.mubr.bf16.mxu0 0
      %1690 = vmatmul.mubr.bf16.gmra.mrb[0].mxu0 %v1220
      %v1691 = vpop.f32.mrb[0].mxu0
      %v1692 = vadd.f32 %v475, %v1691
      %v1693 = vpop.f32.mrb[0].mxu0
      %v1694 = vpop.f32.mrb[0].mxu0
      %v1695 = vadd.f32 %v475, %v1694
      %v1696 = vpop.f32.mrb[0].mxu0
      %1697 = vmatprep.mubr.bf16.mxu0 0
      %1698 = vmatmul.mubr.bf16.gmra.mrb[0].mxu0 %v1223
      %v1699 = vpop.f32.mrb[0].mxu0
      %v1700 = vadd.f32 %v475, %v1699
      %v1701 = vpop.f32.mrb[0].mxu0
      %v1702 = vpop.f32.mrb[0].mxu0
      %v1703 = vadd.f32 %v475, %v1702
      %v1704 = vpop.f32.mrb[0].mxu0
      %1705 = vmatprep.mubr.bf16.mxu0 0
      %1706 = vmatmul.mubr.bf16.gmra.mrb[0].mxu0 %v1226
      %v1707 = vpop.f32.mrb[0].mxu0
      %v1708 = vadd.f32 %v475, %v1707
      %v1709 = vpop.f32.mrb[0].mxu0
      %v1710 = vpop.f32.mrb[0].mxu0
      %v1711 = vadd.f32 %v475, %v1710
      %v1712 = vpop.f32.mrb[0].mxu0
      %1713 = vmatprep.mubr.bf16.mxu0 0
      %1714 = vmatmul.mubr.bf16.gmra.mrb[0].mxu0 %v1229
      %v1715 = vpop.f32.mrb[0].mxu0
      %v1716 = vadd.f32 %v475, %v1715
      %v1717 = vpop.f32.mrb[0].mxu0
      %v1718 = vpop.f32.mrb[0].mxu0
      %v1719 = vadd.f32 %v475, %v1718
      %v1720 = vpop.f32.mrb[0].mxu0
      %1721 = vmatprep.mubr.bf16.mxu0 0
      %1722 = vmatmul.mubr.bf16.gmra.mrb[0].mxu0 %v1232
      %v1723 = vpop.f32.mrb[0].mxu0
      %v1724 = vadd.f32 %v475, %v1723
      %v1725 = vpop.f32.mrb[0].mxu0
      %v1726 = vpop.f32.mrb[0].mxu0
      %v1727 = vadd.f32 %v475, %v1726
      %v1728 = vpop.f32.mrb[0].mxu0
      %1729 = vmatprep.mubr.bf16.mxu0 0
      %1730 = vmatmul.mubr.bf16.gmra.mrb[0].mxu0 %v1235
      %v1731 = vpop.f32.mrb[0].mxu0
      %v1732 = vadd.f32 %v475, %v1731
      %v1733 = vpop.f32.mrb[0].mxu0
      %v1734 = vpop.f32.mrb[0].mxu0
      %v1735 = vadd.f32 %v475, %v1734
      %v1736 = vpop.f32.mrb[0].mxu0
      %1737 = vmatprep.mubr.bf16.mxu0 0
      %1738 = vmatmul.mubr.bf16.gmra.mrb[0].mxu0 %v1238
      %v1739 = vpop.f32.mrb[0].mxu0
      %v1740 = vadd.f32 %v475, %v1739
      %v1741 = vpop.f32.mrb[0].mxu0
      %v1742 = vpop.f32.mrb[0].mxu0
      %v1743 = vadd.f32 %v475, %v1742
      %v1744 = vpop.f32.mrb[0].mxu0
      %1745 = vmatprep.mubr.bf16.mxu0 0
      %1746 = vmatmul.mubr.bf16.gmra.mrb[0].mxu0 %v1241
      %v1747 = vpop.f32.mrb[0].mxu0
      %v1748 = vadd.f32 %v475, %v1747
      %v1749 = vpop.f32.mrb[0].mxu0
      %v1750 = vpop.f32.mrb[0].mxu0
      %v1751 = vadd.f32 %v475, %v1750
      %v1752 = vpop.f32.mrb[0].mxu0
      %1753 = vmatprep.mubr.bf16.mxu0 0
      %1754 = vmatmul.mubr.bf16.gmra.mrb[0].mxu0 %v1244
      %v1755 = vpop.f32.mrb[0].mxu0
      %v1756 = vadd.f32 %v475, %v1755
      %v1757 = vpop.f32.mrb[0].mxu0
      %v1758 = vpop.f32.mrb[0].mxu0
      %v1759 = vadd.f32 %v475, %v1758
      %v1760 = vpop.f32.mrb[0].mxu0
      %1761 = vmatprep.mubr.bf16.mxu0 0
      %1762 = vmatmul.mubr.bf16.gmra.mrb[0].mxu0 %v1247
      %v1763 = vpop.f32.mrb[0].mxu0
      %v1764 = vadd.f32 %v475, %v1763
      %v1765 = vpop.f32.mrb[0].mxu0
      %v1766 = vpop.f32.mrb[0].mxu0
      %v1767 = vadd.f32 %v475, %v1766
      %v1768 = vpop.f32.mrb[0].mxu0
      %1769 = vmatprep.mubr.bf16.mxu0 0
      %1770 = vmatmul.mubr.bf16.gmra.mrb[0].mxu0 %v1250
      %v1771 = vpop.f32.mrb[0].mxu0
      %v1772 = vadd.f32 %v475, %v1771
      %v1773 = vpop.f32.mrb[0].mxu0
      %v1774 = vpop.f32.mrb[0].mxu0
      %v1775 = vadd.f32 %v475, %v1774
      %v1776 = vpop.f32.mrb[0].mxu0
      %1777 = vmatprep.mubr.bf16.mxu0 0
      %1778 = vmatmul.mubr.bf16.gmra.mrb[0].mxu0 %v1253
      %v1779 = vpop.f32.mrb[0].mxu0
      %v1780 = vadd.f32 %v475, %v1779
      %v1781 = vpop.f32.mrb[0].mxu0
      %v1782 = vpop.f32.mrb[0].mxu0
      %v1783 = vadd.f32 %v475, %v1782
      %v1784 = vpop.f32.mrb[0].mxu0
      %1785 = vmatprep.mubr.bf16.mxu0 0
      %1786 = vmatmul.mubr.bf16.gmra.mrb[0].mxu0 %v1256
      %v1787 = vpop.f32.mrb[0].mxu0
      %v1788 = vadd.f32 %v475, %v1787
      %v1789 = vpop.f32.mrb[0].mxu0
      %v1790 = vpop.f32.mrb[0].mxu0
      %v1791 = vadd.f32 %v475, %v1790
      %v1792 = vpop.f32.mrb[0].mxu0
      %1793 = vmatprep.mubr.bf16.mxu0 0
      %1794 = vmatmul.mubr.bf16.gmra.mrb[0].mxu0 %v1259
      %v1795 = vpop.f32.mrb[0].mxu0
      %v1796 = vadd.f32 %v475, %v1795
      %v1797 = vpop.f32.mrb[0].mxu0
      %v1798 = vpop.f32.mrb[0].mxu0
      %v1799 = vadd.f32 %v475, %v1798
      %v1800 = vpop.f32.mrb[0].mxu0
      %1801 = vmatprep.mubr.bf16.mxu0 0
      %1802 = vmatmul.mubr.bf16.gmra.mrb[0].mxu0 %v1262
      %v1803 = vpop.f32.mrb[0].mxu0
      %v1804 = vadd.f32 %v475, %v1803
      %v1805 = vpop.f32.mrb[0].mxu0
      %v1806 = vpop.f32.mrb[0].mxu0
      %v1807 = vadd.f32 %v475, %v1806
      %v1808 = vpop.f32.mrb[0].mxu0
      %1809 = vmatprep.mubr.bf16.mxu0 0
      %1810 = vmatmul.mubr.bf16.gmra.mrb[0].mxu0 %v1265
      %v1811 = vpop.f32.mrb[0].mxu0
      %v1812 = vadd.f32 %v475, %v1811
      %v1813 = vpop.f32.mrb[0].mxu0
      %v1814 = vpop.f32.mrb[0].mxu0
      %v1815 = vadd.f32 %v475, %v1814
      %v1816 = vpop.f32.mrb[0].mxu0
      %1817 = vmatprep.mubr.bf16.mxu0 0
      %1818 = vmatmul.mubr.bf16.gmra.mrb[0].mxu0 %v1268
      %v1819 = vpop.f32.mrb[0].mxu0
      %v1820 = vadd.f32 %v475, %v1819
      %v1821 = vpop.f32.mrb[0].mxu0
      %v1822 = vpop.f32.mrb[0].mxu0
      %v1823 = vadd.f32 %v475, %v1822
      %v1824 = vpop.f32.mrb[0].mxu0
      %1825 = vmatprep.mubr.bf16.mxu0 0
      %1826 = vmatmul.mubr.bf16.gmra.mrb[0].mxu0 %v1271
      %v1827 = vpop.f32.mrb[0].mxu0
      %v1828 = vadd.f32 %v475, %v1827
      %v1829 = vpop.f32.mrb[0].mxu0
      %v1830 = vpop.f32.mrb[0].mxu0
      %v1831 = vadd.f32 %v475, %v1830
      %v1832 = vpop.f32.mrb[0].mxu0
      %1833 = vmatprep.mubr.bf16.mxu0 0
      %1834 = vmatmul.mubr.bf16.gmra.mrb[0].mxu0 %v1274
      %v1835 = vpop.f32.mrb[0].mxu0
      %v1836 = vadd.f32 %v475, %v1835
      %v1837 = vpop.f32.mrb[0].mxu0
      %v1838 = vpop.f32.mrb[0].mxu0
      %v1839 = vadd.f32 %v475, %v1838
      %v1840 = vpop.f32.mrb[0].mxu0
      %1841 = vmatprep.mubr.bf16.mxu0 0
      %1842 = vmatmul.mubr.bf16.gmra.mrb[0].mxu0 %v1277
      %v1843 = vpop.f32.mrb[0].mxu0
      %v1844 = vadd.f32 %v475, %v1843
      %v1845 = vpop.f32.mrb[0].mxu0
      %v1846 = vpop.f32.mrb[0].mxu0
      %v1847 = vadd.f32 %v475, %v1846
      %v1848 = vpop.f32.mrb[0].mxu0
      %1849 = vmatprep.mubr.bf16.mxu0 0
      %1850 = vmatmul.mubr.bf16.gmra.mrb[0].mxu0 %v1280
      %v1851 = vpop.f32.mrb[0].mxu0
      %v1852 = vadd.f32 %v475, %v1851
      %v1853 = vpop.f32.mrb[0].mxu0
      %v1854 = vpop.f32.mrb[0].mxu0
      %v1855 = vadd.f32 %v475, %v1854
      %v1856 = vpop.f32.mrb[0].mxu0
      %1857 = vmatprep.mubr.bf16.mxu0 0
      %1858 = vmatmul.mubr.bf16.gmra.mrb[0].mxu0 %v1283
      %v1859 = vpop.f32.mrb[0].mxu0
      %v1860 = vadd.f32 %v475, %v1859
      %v1861 = vpop.f32.mrb[0].mxu0
      %v1862 = vpop.f32.mrb[0].mxu0
      %v1863 = vadd.f32 %v475, %v1862
      %v1864 = vpop.f32.mrb[0].mxu0
      %1865 = vmatprep.mubr.bf16.mxu0 0
      %1866 = vmatmul.mubr.bf16.gmra.mrb[0].mxu0 %v1286
      %v1867 = vpop.f32.mrb[0].mxu0
      %v1868 = vadd.f32 %v475, %v1867
      %v1869 = vpop.f32.mrb[0].mxu0
      %v1870 = vpop.f32.mrb[0].mxu0
      %v1871 = vadd.f32 %v475, %v1870
      %v1872 = vpop.f32.mrb[0].mxu0
      %1873 = vmatprep.mubr.bf16.mxu0 0
      %1874 = vmatmul.mubr.bf16.gmra.mrb[0].mxu0 %v1289
      %v1875 = vpop.f32.mrb[0].mxu0
      %v1876 = vadd.f32 %v475, %v1875
      %v1877 = vpop.f32.mrb[0].mxu0
      %v1878 = vpop.f32.mrb[0].mxu0
      %v1879 = vadd.f32 %v475, %v1878
      %v1880 = vpop.f32.mrb[0].mxu0
      %1881 = vmatprep.mubr.bf16.mxu0 0
      %1882 = vmatmul.mubr.bf16.gmra.mrb[0].mxu0 %v1292
      %v1883 = vpop.f32.mrb[0].mxu0
      %v1884 = vadd.f32 %v475, %v1883
      %v1885 = vpop.f32.mrb[0].mxu0
      %v1886 = vpop.f32.mrb[0].mxu0
      %v1887 = vadd.f32 %v475, %v1886
      %v1888 = vpop.f32.mrb[0].mxu0
      %1889 = vmatprep.mubr.bf16.mxu0 0
      %1890 = vmatmul.mubr.bf16.gmra.mrb[0].mxu0 %v1295
      %v1891 = vpop.f32.mrb[0].mxu0
      %v1892 = vadd.f32 %v475, %v1891
      %v1893 = vpop.f32.mrb[0].mxu0
      %v1894 = vpop.f32.mrb[0].mxu0
      %v1895 = vadd.f32 %v475, %v1894
      %v1896 = vpop.f32.mrb[0].mxu0
      %1897 = vmatprep.mubr.bf16.mxu0 0
      %1898 = vmatmul.mubr.bf16.gmra.mrb[0].mxu0 %v1298
      %v1899 = vpop.f32.mrb[0].mxu0
      %v1900 = vadd.f32 %v475, %v1899
      %v1901 = vpop.f32.mrb[0].mxu0
      %v1902 = vpop.f32.mrb[0].mxu0
      %v1903 = vadd.f32 %v475, %v1902
      %v1904 = vpop.f32.mrb[0].mxu0
      %1905 = vmatprep.mubr.bf16.mxu0 0
      %1906 = vmatmul.mubr.bf16.gmra.mrb[0].mxu0 %v1301
      %v1907 = vpop.f32.mrb[0].mxu0
      %v1908 = vadd.f32 %v475, %v1907
      %v1909 = vpop.f32.mrb[0].mxu0
      %v1910 = vpop.f32.mrb[0].mxu0
      %v1911 = vadd.f32 %v475, %v1910
      %v1912 = vpop.f32.mrb[0].mxu0
      %1913 = vmatprep.mubr.bf16.mxu0 0
      %1914 = vmatmul.mubr.bf16.gmra.mrb[0].mxu0 %v1304
      %v1915 = vpop.f32.mrb[0].mxu0
      %v1916 = vadd.f32 %v475, %v1915
      %v1917 = vpop.f32.mrb[0].mxu0
      %v1918 = vpop.f32.mrb[0].mxu0
      %v1919 = vadd.f32 %v475, %v1918
      %v1920 = vpop.f32.mrb[0].mxu0
      %1921 = vmatprep.mubr.bf16.mxu0 0
      %1922 = vmatmul.mubr.bf16.gmra.mrb[0].mxu0 %v1307
      %v1923 = vpop.f32.mrb[0].mxu0
      %v1924 = vadd.f32 %v475, %v1923
      %v1925 = vpop.f32.mrb[0].mxu0
      %v1926 = vpop.f32.mrb[0].mxu0
      %v1927 = vadd.f32 %v475, %v1926
      %v1928 = vpop.f32.mrb[0].mxu0
      %1929 = vmatprep.mubr.bf16.mxu0 0
      %1930 = vmatmul.mubr.bf16.gmra.mrb[0].mxu0 %v1310
      %v1931 = vpop.f32.mrb[0].mxu0
      %v1932 = vadd.f32 %v475, %v1931
      %v1933 = vpop.f32.mrb[0].mxu0
      %v1934 = vpop.f32.mrb[0].mxu0
      %v1935 = vadd.f32 %v475, %v1934
      %v1936 = vpop.f32.mrb[0].mxu0
      %1937 = vmatprep.mubr.bf16.mxu0 0
      %1938 = vmatmul.mubr.bf16.gmra.mrb[0].mxu0 %v1313
      %v1939 = vpop.f32.mrb[0].mxu0
      %v1940 = vadd.f32 %v475, %v1939
      %v1941 = vpop.f32.mrb[0].mxu0
      %v1942 = vpop.f32.mrb[0].mxu0
      %v1943 = vadd.f32 %v475, %v1942
      %v1944 = vpop.f32.mrb[0].mxu0
      %1945 = vmatprep.mubr.bf16.mxu0 0
      %1946 = vmatmul.mubr.bf16.gmra.mrb[0].mxu0 %v1316
      %v1947 = vpop.f32.mrb[0].mxu0
      %v1948 = vadd.f32 %v475, %v1947
      %v1949 = vpop.f32.mrb[0].mxu0
      %v1950 = vpop.f32.mrb[0].mxu0
      %v1951 = vadd.f32 %v475, %v1950
      %v1952 = vpop.f32.mrb[0].mxu0
      %1953 = vmatprep.mubr.bf16.mxu0 0
      %1954 = vmatmul.mubr.bf16.gmra.mrb[0].mxu0 %v1319
      %v1955 = vpop.f32.mrb[0].mxu0
      %v1956 = vadd.f32 %v475, %v1955
      %v1957 = vpop.f32.mrb[0].mxu0
      %v1958 = vpop.f32.mrb[0].mxu0
      %v1959 = vadd.f32 %v475, %v1958
      %v1960 = vpop.f32.mrb[0].mxu0
      %1961 = vmatprep.mubr.bf16.mxu0 0
      %1962 = vmatmul.mubr.bf16.gmra.mrb[0].mxu0 %v1322
      %v1963 = vpop.f32.mrb[0].mxu0
      %v1964 = vadd.f32 %v475, %v1963
      %v1965 = vpop.f32.mrb[0].mxu0
      %v1966 = vpop.f32.mrb[0].mxu0
      %v1967 = vadd.f32 %v475, %v1966
      %v1968 = vpop.f32.mrb[0].mxu0
      %1969 = vmatprep.mubr.bf16.mxu0 0
      %1970 = vmatmul.mubr.bf16.gmra.mrb[0].mxu0 %v1325
      %v1971 = vpop.f32.mrb[0].mxu0
      %v1972 = vadd.f32 %v475, %v1971
      %v1973 = vpop.f32.mrb[0].mxu0
      %v1974 = vpop.f32.mrb[0].mxu0
      %v1975 = vadd.f32 %v475, %v1974
      %v1976 = vpop.f32.mrb[0].mxu0
      %1977 = vmatprep.mubr.bf16.mxu0 0
      %1978 = vmatmul.mubr.bf16.gmra.mrb[0].mxu0 %v1328
      %v1979 = vpop.f32.mrb[0].mxu0
      %v1980 = vadd.f32 %v475, %v1979
      %v1981 = vpop.f32.mrb[0].mxu0
      %v1982 = vpop.f32.mrb[0].mxu0
      %v1983 = vadd.f32 %v475, %v1982
      %v1984 = vpop.f32.mrb[0].mxu0
      %1985 = vmatprep.mubr.bf16.mxu0 0
      %1986 = vmatmul.mubr.bf16.gmra.mrb[0].mxu0 %v1331
      %v1987 = vpop.f32.mrb[0].mxu0
      %v1988 = vadd.f32 %v475, %v1987
      %v1989 = vpop.f32.mrb[0].mxu0
      %v1990 = vpop.f32.mrb[0].mxu0
      %v1991 = vadd.f32 %v475, %v1990
      %v1992 = vpop.f32.mrb[0].mxu0
      %1993 = vmatprep.mubr.bf16.mxu0 0
      %1994 = vmatmul.mubr.bf16.gmra.mrb[0].mxu0 %v1334
      %v1995 = vpop.f32.mrb[0].mxu0
      %v1996 = vadd.f32 %v475, %v1995
      %v1997 = vpop.f32.mrb[0].mxu0
      %v1998 = vpop.f32.mrb[0].mxu0
      %v1999 = vadd.f32 %v475, %v1998
      %v2000 = vpop.f32.mrb[0].mxu0
      %2001 = vmatprep.mubr.bf16.mxu0 0
      %2002 = vmatmul.mubr.bf16.gmra.mrb[0].mxu0 %v1337
      %v2003 = vpop.f32.mrb[0].mxu0
      %v2004 = vadd.f32 %v475, %v2003
      %v2005 = vpop.f32.mrb[0].mxu0
      %v2006 = vpop.f32.mrb[0].mxu0
      %v2007 = vadd.f32 %v475, %v2006
      %v2008 = vpop.f32.mrb[0].mxu0
      %2009 = vmatprep.mubr.bf16.mxu0 0
      %2010 = vmatmul.mubr.bf16.gmra.mrb[0].mxu0 %v1340
      %v2011 = vpop.f32.mrb[0].mxu0
      %v2012 = vadd.f32 %v475, %v2011
      %v2013 = vpop.f32.mrb[0].mxu0
      %v2014 = vpop.f32.mrb[0].mxu0
      %v2015 = vadd.f32 %v475, %v2014
      %v2016 = vpop.f32.mrb[0].mxu0
      %2017 = vmatprep.mubr.bf16.mxu0 0
      %2018 = vmatmul.mubr.bf16.gmra.mrb[0].mxu0 %v1343
      %v2019 = vpop.f32.mrb[0].mxu0
      %v2020 = vadd.f32 %v475, %v2019
      %v2021 = vpop.f32.mrb[0].mxu0
      %v2022 = vpop.f32.mrb[0].mxu0
      %v2023 = vadd.f32 %v475, %v2022
      %v2024 = vpop.f32.mrb[0].mxu0
      %2025 = vmatprep.mubr.bf16.mxu0 0
      %2026 = vmatmul.mubr.bf16.gmra.mrb[0].mxu0 %v1346
      %v2027 = vpop.f32.mrb[0].mxu0
      %v2028 = vadd.f32 %v475, %v2027
      %v2029 = vpop.f32.mrb[0].mxu0
      %v2030 = vpop.f32.mrb[0].mxu0
      %v2031 = vadd.f32 %v475, %v2030
      %v2032 = vpop.f32.mrb[0].mxu0
      %2033 = vmatprep.mubr.bf16.mxu0 0
      %2034 = vmatmul.mubr.bf16.gmra.mrb[0].mxu0 %v1349
      %v2035 = vpop.f32.mrb[0].mxu0
      %v2036 = vadd.f32 %v475, %v2035
      %v2037 = vpop.f32.mrb[0].mxu0
      %v2038 = vpop.f32.mrb[0].mxu0
      %v2039 = vadd.f32 %v475, %v2038
      %v2040 = vpop.f32.mrb[0].mxu0
      %2041 = vmatprep.mubr.bf16.mxu0 0
      %2042 = vmatmul.mubr.bf16.gmra.mrb[0].mxu0 %v1352
      %v2043 = vpop.f32.mrb[0].mxu0
      %v2044 = vadd.f32 %v475, %v2043
      %v2045 = vpop.f32.mrb[0].mxu0
      %v2046 = vpop.f32.mrb[0].mxu0
      %v2047 = vadd.f32 %v475, %v2046
      %v2048 = vpop.f32.mrb[0].mxu0
      %2049 = vmatprep.mubr.bf16.mxu0 0
      %2050 = vmatmul.mubr.bf16.gmra.mrb[0].mxu0 %v1355
      %v2051 = vpop.f32.mrb[0].mxu0
      %v2052 = vadd.f32 %v475, %v2051
      %v2053 = vpop.f32.mrb[0].mxu0
      %v2054 = vpop.f32.mrb[0].mxu0
      %v2055 = vadd.f32 %v475, %v2054
      %v2056 = vpop.f32.mrb[0].mxu0
      %2057 = vmatprep.mubr.bf16.mxu0 0
      %2058 = vmatmul.mubr.bf16.gmra.mrb[0].mxu0 %v1358
      %v2059 = vpop.f32.mrb[0].mxu0
      %v2060 = vadd.f32 %v475, %v2059
      %v2061 = vpop.f32.mrb[0].mxu0
      %v2062 = vpop.f32.mrb[0].mxu0
      %v2063 = vadd.f32 %v475, %v2062
      %v2064 = vpop.f32.mrb[0].mxu0
      %2065 = vmatprep.mubr.bf16.mxu0 0
      %2066 = vmatmul.mubr.bf16.gmra.mrb[0].mxu0 %v1361
      %v2067 = vpop.f32.mrb[0].mxu0
      %v2068 = vadd.f32 %v475, %v2067
      %v2069 = vpop.f32.mrb[0].mxu0
      %v2070 = vpop.f32.mrb[0].mxu0
      %v2071 = vadd.f32 %v475, %v2070
      %v2072 = vpop.f32.mrb[0].mxu0
      %2073 = vmatprep.mubr.bf16.mxu0 0
      %2074 = vmatmul.mubr.bf16.gmra.mrb[0].mxu0 %v1364
      %v2075 = vpop.f32.mrb[0].mxu0
      %v2076 = vadd.f32 %v475, %v2075
      %v2077 = vpop.f32.mrb[0].mxu0
      %v2078 = vpop.f32.mrb[0].mxu0
      %v2079 = vadd.f32 %v475, %v2078
      %v2080 = vpop.f32.mrb[0].mxu0
      %2081 = vmatprep.mubr.bf16.mxu0 0
      %2082 = vmatmul.mubr.bf16.gmra.mrb[0].mxu0 %v1367
      %v2083 = vpop.f32.mrb[0].mxu0
      %v2084 = vadd.f32 %v475, %v2083
      %v2085 = vpop.f32.mrb[0].mxu0
      %v2086 = vpop.f32.mrb[0].mxu0
      %v2087 = vadd.f32 %v475, %v2086
      %v2088 = vpop.f32.mrb[0].mxu0
      %2089 = vmatprep.mubr.bf16.mxu0 0
      %2090 = vmatmul.mubr.bf16.gmra.mrb[0].mxu0 %v1370
      %v2091 = vpop.f32.mrb[0].mxu0
      %v2092 = vadd.f32 %v475, %v2091
      %v2093 = vpop.f32.mrb[0].mxu0
      %v2094 = vpop.f32.mrb[0].mxu0
      %v2095 = vadd.f32 %v475, %v2094
      %v2096 = vpop.f32.mrb[0].mxu0
      %2097 = vmatprep.mubr.bf16.mxu0 0
      %2098 = vmatmul.mubr.bf16.gmra.mrb[0].mxu0 %v1373
      %v2099 = vpop.f32.mrb[0].mxu0
      %v2100 = vadd.f32 %v475, %v2099
      %v2101 = vpop.f32.mrb[0].mxu0
      %v2102 = vpop.f32.mrb[0].mxu0
      %v2103 = vadd.f32 %v475, %v2102
      %v2104 = vpop.f32.mrb[0].mxu0
      %2105 = vmatprep.mubr.bf16.mxu0 0
      %2106 = vmatmul.mubr.bf16.gmra.mrb[0].mxu0 %v1376
      %v2107 = vpop.f32.mrb[0].mxu0
      %v2108 = vadd.f32 %v475, %v2107
      %v2109 = vpop.f32.mrb[0].mxu0
      %v2110 = vpop.f32.mrb[0].mxu0
      %v2111 = vadd.f32 %v475, %v2110
      %v2112 = vpop.f32.mrb[0].mxu0
      %2113 = vmatprep.mubr.bf16.mxu0 0
      %2114 = vmatmul.mubr.bf16.gmra.mrb[0].mxu0 %v1379
      %v2115 = vpop.f32.mrb[0].mxu0
      %v2116 = vadd.f32 %v475, %v2115
      %v2117 = vpop.f32.mrb[0].mxu0
      %v2118 = vpop.f32.mrb[0].mxu0
      %v2119 = vadd.f32 %v475, %v2118
      %v2120 = vpop.f32.mrb[0].mxu0
      %2121 = vmatprep.mubr.bf16.mxu0 0
      %2122 = vmatmul.mubr.bf16.gmra.mrb[0].mxu0 %v1382
      %v2123 = vpop.f32.mrb[0].mxu0
      %v2124 = vadd.f32 %v475, %v2123
      %v2125 = vpop.f32.mrb[0].mxu0
      %v2126 = vpop.f32.mrb[0].mxu0
      %v2127 = vadd.f32 %v475, %v2126
      %v2128 = vpop.f32.mrb[0].mxu0
      %2129 = vmatprep.mubr.bf16.mxu0 0
      %2130 = vmatmul.mubr.bf16.gmra.mrb[0].mxu0 %v1385
      %v2131 = vpop.f32.mrb[0].mxu0
      %v2132 = vadd.f32 %v475, %v2131
      %v2133 = vpop.f32.mrb[0].mxu0
      %v2134 = vpop.f32.mrb[0].mxu0
      %v2135 = vadd.f32 %v475, %v2134
      %v2136 = vpop.f32.mrb[0].mxu0
      %2137 = vmatprep.mubr.bf16.mxu0 0
      %2138 = vmatmul.mubr.bf16.gmra.mrb[0].mxu0 %v1388
      %v2139 = vpop.f32.mrb[0].mxu0
      %v2140 = vadd.f32 %v475, %v2139
      %v2141 = vpop.f32.mrb[0].mxu0
      %v2142 = vpop.f32.mrb[0].mxu0
      %v2143 = vadd.f32 %v475, %v2142
      %v2144 = vpop.f32.mrb[0].mxu0
      %2145 = vmatprep.mubr.bf16.mxu0 0
      %2146 = vmatmul.mubr.bf16.gmra.mrb[0].mxu0 %v1391
      %v2147 = vpop.f32.mrb[0].mxu0
      %v2148 = vadd.f32 %v475, %v2147
      %v2149 = vpop.f32.mrb[0].mxu0
      %v2150 = vpop.f32.mrb[0].mxu0
      %v2151 = vadd.f32 %v475, %v2150
      %v2152 = vpop.f32.mrb[0].mxu0
      %2153 = vmatprep.mubr.bf16.mxu0 0
      %2154 = vmatmul.mubr.bf16.gmra.mrb[0].mxu0 %v1394
      %v2155 = vpop.f32.mrb[0].mxu0
      %v2156 = vadd.f32 %v475, %v2155
      %v2157 = vpop.f32.mrb[0].mxu0
      %v2158 = vpop.f32.mrb[0].mxu0
      %v2159 = vadd.f32 %v475, %v2158
      %v2160 = vpop.f32.mrb[0].mxu0
      %2161 = vmatprep.mubr.bf16.mxu0 0
      %2162 = vmatmul.mubr.bf16.gmra.mrb[0].mxu0 %v1397
      %v2163 = vpop.f32.mrb[0].mxu0
      %v2164 = vadd.f32 %v475, %v2163
      %v2165 = vpop.f32.mrb[0].mxu0
      %v2166 = vpop.f32.mrb[0].mxu0
      %v2167 = vadd.f32 %v475, %v2166
      %v2168 = vpop.f32.mrb[0].mxu0
      %2169 = vmatprep.mubr.bf16.mxu0 0
      %2170 = vmatmul.mubr.bf16.gmra.mrb[0].mxu0 %v1400
      %v2171 = vpop.f32.mrb[0].mxu0
      %v2172 = vadd.f32 %v475, %v2171
      %v2173 = vpop.f32.mrb[0].mxu0
      %v2174 = vpop.f32.mrb[0].mxu0
      %v2175 = vadd.f32 %v475, %v2174
      %v2176 = vpop.f32.mrb[0].mxu0
      %2177 = vmatprep.mubr.bf16.mxu0 0
      %2178 = vmatmul.mubr.bf16.gmra.mrb[0].mxu0 %v1403
      %v2179 = vpop.f32.mrb[0].mxu0
      %v2180 = vadd.f32 %v475, %v2179
      %v2181 = vpop.f32.mrb[0].mxu0
      %v2182 = vpop.f32.mrb[0].mxu0
      %v2183 = vadd.f32 %v475, %v2182
      %v2184 = vpop.f32.mrb[0].mxu0
      %2185 = vmatprep.mubr.bf16.mxu0 0
      %2186 = vmatmul.mubr.bf16.gmra.mrb[0].mxu0 %v1406
      %v2187 = vpop.f32.mrb[0].mxu0
      %v2188 = vadd.f32 %v475, %v2187
      %v2189 = vpop.f32.mrb[0].mxu0
      %v2190 = vpop.f32.mrb[0].mxu0
      %v2191 = vadd.f32 %v475, %v2190
      %v2192 = vpop.f32.mrb[0].mxu0
      %2193 = vmatprep.mubr.bf16.mxu0 0
      %2194 = vmatmul.mubr.bf16.gmra.mrb[0].mxu0 %v1409
      %v2195 = vpop.f32.mrb[0].mxu0
      %v2196 = vadd.f32 %v475, %v2195
      %v2197 = vpop.f32.mrb[0].mxu0
      %v2198 = vpop.f32.mrb[0].mxu0
      %v2199 = vadd.f32 %v475, %v2198
      %v2200 = vpop.f32.mrb[0].mxu0
      %2201 = vmatprep.mubr.bf16.mxu0 0
      %2202 = vmatmul.mubr.bf16.gmra.mrb[0].mxu0 %v1412
      %v2203 = vpop.f32.mrb[0].mxu0
      %v2204 = vadd.f32 %v475, %v2203
      %v2205 = vpop.f32.mrb[0].mxu0
      %v2206 = vpop.f32.mrb[0].mxu0
      %v2207 = vadd.f32 %v475, %v2206
      %v2208 = vpop.f32.mrb[0].mxu0
      %2209 = vmatprep.mubr.bf16.mxu0 0
      %2210 = vmatmul.mubr.bf16.gmra.mrb[0].mxu0 %v1415
      %v2211 = vpop.f32.mrb[0].mxu0
      %v2212 = vadd.f32 %v475, %v2211
      %v2213 = vpop.f32.mrb[0].mxu0
      %v2214 = vpop.f32.mrb[0].mxu0
      %v2215 = vadd.f32 %v475, %v2214
      %v2216 = vpop.f32.mrb[0].mxu0
      %2217 = vmatprep.mubr.bf16.mxu0 0
      %2218 = vmatmul.mubr.bf16.gmra.mrb[0].mxu0 %v1418
      %v2219 = vpop.f32.mrb[0].mxu0
      %v2220 = vadd.f32 %v475, %v2219
      %v2221 = vpop.f32.mrb[0].mxu0
      %v2222 = vpop.f32.mrb[0].mxu0
      %v2223 = vadd.f32 %v475, %v2222
      %v2224 = vpop.f32.mrb[0].mxu0
      %2225 = vmatprep.mubr.bf16.mxu0 0
      %2226 = vmatmul.mubr.bf16.gmra.mrb[0].mxu0 %v1421
      %v2227 = vpop.f32.mrb[0].mxu0
      %v2228 = vadd.f32 %v475, %v2227
      %v2229 = vpop.f32.mrb[0].mxu0
      %v2230 = vpop.f32.mrb[0].mxu0
      %v2231 = vadd.f32 %v475, %v2230
      %v2232 = vpop.f32.mrb[0].mxu0
      %2233 = vmatprep.mubr.bf16.mxu0 0
      %2234 = vmatmul.mubr.bf16.gmra.mrb[0].mxu0 %v1424
      %v2235 = vpop.f32.mrb[0].mxu0
      %v2236 = vadd.f32 %v475, %v2235
      %v2237 = vpop.f32.mrb[0].mxu0
      %v2238 = vpop.f32.mrb[0].mxu0
      %v2239 = vadd.f32 %v475, %v2238
      %v2240 = vpop.f32.mrb[0].mxu0
      %2241 = vmatprep.mubr.bf16.mxu0 0
      %2242 = vmatmul.mubr.bf16.gmra.mrb[0].mxu0 %v1427
      %v2243 = vpop.f32.mrb[0].mxu0
      %v2244 = vadd.f32 %v475, %v2243
      %v2245 = vpop.f32.mrb[0].mxu0
      %v2246 = vpop.f32.mrb[0].mxu0
      %v2247 = vadd.f32 %v475, %v2246
      %v2248 = vpop.f32.mrb[0].mxu0
      %2249 = vmatprep.mubr.bf16.mxu0 0
      %2250 = vmatmul.mubr.bf16.gmra.mrb[0].mxu0 %v1430
      %v2251 = vpop.f32.mrb[0].mxu0
      %v2252 = vadd.f32 %v475, %v2251
      %v2253 = vpop.f32.mrb[0].mxu0
      %v2254 = vpop.f32.mrb[0].mxu0
      %v2255 = vadd.f32 %v475, %v2254
      %v2256 = vpop.f32.mrb[0].mxu0
      %2257 = vmatprep.mubr.bf16.mxu0 0
      %2258 = vmatmul.mubr.bf16.gmra.mrb[0].mxu0 %v1433
      %v2259 = vpop.f32.mrb[0].mxu0
      %v2260 = vadd.f32 %v475, %v2259
      %v2261 = vpop.f32.mrb[0].mxu0
      %v2262 = vpop.f32.mrb[0].mxu0
      %v2263 = vadd.f32 %v475, %v2262
      %v2264 = vpop.f32.mrb[0].mxu0
      %2265 = vmatprep.mubr.bf16.mxu0 0
      %2266 = vmatmul.mubr.bf16.gmra.mrb[0].mxu0 %v1436
      %v2267 = vpop.f32.mrb[0].mxu0
      %v2268 = vadd.f32 %v475, %v2267
      %v2269 = vpop.f32.mrb[0].mxu0
      %v2270 = vpop.f32.mrb[0].mxu0
      %v2271 = vadd.f32 %v475, %v2270
      %v2272 = vpop.f32.mrb[0].mxu0
      %2273 = vmatprep.mubr.bf16.mxu0 0
      %2274 = vmatmul.mubr.bf16.gmra.mrb[0].mxu0 %v1439
      %v2275 = vpop.f32.mrb[0].mxu0
      %v2276 = vadd.f32 %v475, %v2275
      %v2277 = vpop.f32.mrb[0].mxu0
      %v2278 = vpop.f32.mrb[0].mxu0
      %v2279 = vadd.f32 %v475, %v2278
      %v2280 = vpop.f32.mrb[0].mxu0
      %2281 = vmatprep.mubr.bf16.mxu0 0
      %2282 = vmatmul.mubr.bf16.gmra.mrb[0].mxu0 %v1442
      %v2283 = vpop.f32.mrb[0].mxu0
      %v2284 = vadd.f32 %v475, %v2283
      %v2285 = vpop.f32.mrb[0].mxu0
      %v2286 = vpop.f32.mrb[0].mxu0
      %v2287 = vadd.f32 %v475, %v2286
      %v2288 = vpop.f32.mrb[0].mxu0
      %2289 = vmatprep.mubr.bf16.mxu0 0
      %2290 = vmatmul.mubr.bf16.gmra.mrb[0].mxu0 %v1445
      %v2291 = vpop.f32.mrb[0].mxu0
      %v2292 = vadd.f32 %v475, %v2291
      %v2293 = vpop.f32.mrb[0].mxu0
      %v2294 = vpop.f32.mrb[0].mxu0
      %v2295 = vadd.f32 %v475, %v2294
      %v2296 = vpop.f32.mrb[0].mxu0
      %2297 = vmatprep.mubr.bf16.mxu0 0
      %2298 = vmatmul.mubr.bf16.gmra.mrb[0].mxu0 %v1448
      %v2299 = vpop.f32.mrb[0].mxu0
      %v2300 = vadd.f32 %v475, %v2299
      %v2301 = vpop.f32.mrb[0].mxu0
      %v2302 = vpop.f32.mrb[0].mxu0
      %v2303 = vadd.f32 %v475, %v2302
      %v2304 = vpop.f32.mrb[0].mxu0
      %2305 = vmatprep.mubr.bf16.mxu0 0
      %2306 = vmatmul.mubr.bf16.gmra.mrb[0].mxu0 %v1451
      %v2307 = vpop.f32.mrb[0].mxu0
      %v2308 = vadd.f32 %v475, %v2307
      %v2309 = vpop.f32.mrb[0].mxu0
      %v2310 = vpop.f32.mrb[0].mxu0
      %v2311 = vadd.f32 %v475, %v2310
      %v2312 = vpop.f32.mrb[0].mxu0
      %2313 = vmatprep.mubr.bf16.mxu0 0
      %2314 = vmatmul.mubr.bf16.gmra.mrb[0].mxu0 %v1454
      %v2315 = vpop.f32.mrb[0].mxu0
      %v2316 = vadd.f32 %v475, %v2315
      %v2317 = vpop.f32.mrb[0].mxu0
      %v2318 = vpop.f32.mrb[0].mxu0
      %v2319 = vadd.f32 %v475, %v2318
      %v2320 = vpop.f32.mrb[0].mxu0
      %2321 = vmatprep.mubr.bf16.mxu0 0
      %2322 = vmatmul.mubr.bf16.gmra.mrb[0].mxu0 %v1457
      %v2323 = vpop.f32.mrb[0].mxu0
      %v2324 = vadd.f32 %v475, %v2323
      %v2325 = vpop.f32.mrb[0].mxu0
      %v2326 = vpop.f32.mrb[0].mxu0
      %v2327 = vadd.f32 %v475, %v2326
      %v2328 = vpop.f32.mrb[0].mxu0
      %2329 = vmatprep.mubr.bf16.mxu0 0
      %2330 = vmatmul.mubr.bf16.gmra.mrb[0].mxu0 %v1460
      %v2331 = vpop.f32.mrb[0].mxu0
      %v2332 = vadd.f32 %v475, %v2331
      %v2333 = vpop.f32.mrb[0].mxu0
      %v2334 = vpop.f32.mrb[0].mxu0
      %v2335 = vadd.f32 %v475, %v2334
      %v2336 = vpop.f32.mrb[0].mxu0
      %2337 = vmatprep.mubr.bf16.mxu0 0
      %2338 = vmatmul.mubr.bf16.gmra.mrb[0].mxu0 %v1463
      %v2339 = vpop.f32.mrb[0].mxu0
      %v2340 = vadd.f32 %v475, %v2339
      %v2341 = vpop.f32.mrb[0].mxu0
      %v2342 = vpop.f32.mrb[0].mxu0
      %v2343 = vadd.f32 %v475, %v2342
      %v2344 = vpop.f32.mrb[0].mxu0
      %2345 = vmatprep.mubr.bf16.mxu0 0
      %2346 = vmatmul.mubr.bf16.gmra.mrb[0].mxu0 %v1466
      %v2347 = vpop.f32.mrb[0].mxu0
      %v2348 = vadd.f32 %v475, %v2347
      %v2349 = vpop.f32.mrb[0].mxu0
      %v2350 = vpop.f32.mrb[0].mxu0
      %v2351 = vadd.f32 %v475, %v2350
      %v2352 = vpop.f32.mrb[0].mxu0
      %2353 = vmatprep.mubr.bf16.mxu0 0
      %2354 = vmatmul.mubr.bf16.gmra.mrb[0].mxu0 %v1469
      %v2355 = vpop.f32.mrb[0].mxu0
      %v2356 = vadd.f32 %v475, %v2355
      %v2357 = vpop.f32.mrb[0].mxu0
      %v2358 = vpop.f32.mrb[0].mxu0
      %v2359 = vadd.f32 %v475, %v2358
      %v2360 = vpop.f32.mrb[0].mxu0
      %2361 = vmatprep.mubr.bf16.mxu0 0
      %2362 = vmatmul.mubr.bf16.gmra.mrb[0].mxu0 %v1472
      %v2363 = vpop.f32.mrb[0].mxu0
      %v2364 = vadd.f32 %v475, %v2363
      %v2365 = vpop.f32.mrb[0].mxu0
      %v2366 = vpop.f32.mrb[0].mxu0
      %v2367 = vadd.f32 %v475, %v2366
      %v2368 = vpop.f32.mrb[0].mxu0
      %2369 = vmatprep.mubr.bf16.mxu0 0
      %2370 = vmatmul.mubr.bf16.gmra.mrb[0].mxu0 %v1475
      %v2371 = vpop.f32.mrb[0].mxu0
      %v2372 = vadd.f32 %v475, %v2371
      %v2373 = vpop.f32.mrb[0].mxu0
      %v2374 = vpop.f32.mrb[0].mxu0
      %v2375 = vadd.f32 %v475, %v2374
      %v2376 = vpop.f32.mrb[0].mxu0
      %2377 = vmatprep.mubr.bf16.mxu0 0
      %2378 = vmatmul.mubr.bf16.gmra.mrb[0].mxu0 %v1478
      %v2379 = vpop.f32.mrb[0].mxu0
      %v2380 = vadd.f32 %v475, %v2379
      %v2381 = vpop.f32.mrb[0].mxu0
      %v2382 = vpop.f32.mrb[0].mxu0
      %v2383 = vadd.f32 %v475, %v2382
      %v2384 = vpop.f32.mrb[0].mxu0
      %2385 = vmatprep.mubr.bf16.mxu0 0
      %2386 = vmatmul.mubr.bf16.gmra.mrb[0].mxu0 %v1481
      %v2387 = vpop.f32.mrb[0].mxu0
      %v2388 = vadd.f32 %v475, %v2387
      %v2389 = vpop.f32.mrb[0].mxu0
      %v2390 = vpop.f32.mrb[0].mxu0
      %v2391 = vadd.f32 %v475, %v2390
      %v2392 = vpop.f32.mrb[0].mxu0
      %2393 = vmatprep.mubr.bf16.mxu0 0
      %2394 = vmatmul.mubr.bf16.gmra.mrb[0].mxu0 %v1484
      %v2395 = vpop.f32.mrb[0].mxu0
      %v2396 = vadd.f32 %v475, %v2395
      %v2397 = vpop.f32.mrb[0].mxu0
      %v2398 = vpop.f32.mrb[0].mxu0
      %v2399 = vadd.f32 %v475, %v2398
      %v2400 = vpop.f32.mrb[0].mxu0
      %2401 = vmatprep.mubr.bf16.mxu0 0
      %2402 = vmatmul.mubr.bf16.gmra.mrb[0].mxu0 %v1487
      %v2403 = vpop.f32.mrb[0].mxu0
      %v2404 = vadd.f32 %v475, %v2403
      %v2405 = vpop.f32.mrb[0].mxu0
      %v2406 = vpop.f32.mrb[0].mxu0
      %v2407 = vadd.f32 %v475, %v2406
      %v2408 = vpop.f32.mrb[0].mxu0
      %2409 = vmatprep.mubr.bf16.mxu0 0
      %2410 = vmatmul.mubr.bf16.gmra.mrb[0].mxu0 %v1490
      %v2411 = vpop.f32.mrb[0].mxu0
      %v2412 = vadd.f32 %v475, %v2411
      %v2413 = vpop.f32.mrb[0].mxu0
      %v2414 = vpop.f32.mrb[0].mxu0
      %v2415 = vadd.f32 %v475, %v2414
      %v2416 = vpop.f32.mrb[0].mxu0
      %2417 = vmatprep.mubr.bf16.mxu0 0
      %2418 = vmatmul.mubr.bf16.gmra.mrb[0].mxu0 %v1493
      %v2419 = vpop.f32.mrb[0].mxu0
      %v2420 = vadd.f32 %v475, %v2419
      %v2421 = vpop.f32.mrb[0].mxu0
      %v2422 = vpop.f32.mrb[0].mxu0
      %v2423 = vadd.f32 %v475, %v2422
      %v2424 = vpop.f32.mrb[0].mxu0
      %2425 = vmatprep.mubr.bf16.mxu0 0
      %2426 = vmatmul.mubr.bf16.gmra.mrb[0].mxu0 %v1496
      %v2427 = vpop.f32.mrb[0].mxu0
      %v2428 = vadd.f32 %v475, %v2427
      %v2429 = vpop.f32.mrb[0].mxu0
      %v2430 = vpop.f32.mrb[0].mxu0
      %v2431 = vadd.f32 %v475, %v2430
      %v2432 = vpop.f32.mrb[0].mxu0
      %2433 = vmatprep.mubr.bf16.mxu0 0
      %2434 = vmatmul.mubr.bf16.gmra.mrb[0].mxu0 %v1499
      %v2435 = vpop.f32.mrb[0].mxu0
      %v2436 = vadd.f32 %v475, %v2435
      %v2437 = vpop.f32.mrb[0].mxu0
      %v2438 = vpop.f32.mrb[0].mxu0
      %v2439 = vadd.f32 %v475, %v2438
      %v2440 = vpop.f32.mrb[0].mxu0
      %2441 = vmatprep.mubr.bf16.mxu0 0
      %2442 = vmatmul.mubr.bf16.gmra.mrb[0].mxu0 %v1502
      %v2443 = vpop.f32.mrb[0].mxu0
      %v2444 = vadd.f32 %v475, %v2443
      %v2445 = vpop.f32.mrb[0].mxu0
      %v2446 = vpop.f32.mrb[0].mxu0
      %v2447 = vadd.f32 %v475, %v2446
      %v2448 = vpop.f32.mrb[0].mxu0
      %2449 = vmatprep.mubr.bf16.mxu0 0
      %2450 = vmatmul.mubr.bf16.gmra.mrb[0].mxu0 %v1505
      %v2451 = vpop.f32.mrb[0].mxu0
      %v2452 = vadd.f32 %v475, %v2451
      %v2453 = vpop.f32.mrb[0].mxu0
      %v2454 = vpop.f32.mrb[0].mxu0
      %v2455 = vadd.f32 %v475, %v2454
      %v2456 = vpop.f32.mrb[0].mxu0
      %2457 = vmatprep.mubr.bf16.mxu0 0
      %2458 = vmatmul.mubr.bf16.gmra.mrb[0].mxu0 %v1508
      %v2459 = vpop.f32.mrb[0].mxu0
      %v2460 = vadd.f32 %v475, %v2459
      %v2461 = vpop.f32.mrb[0].mxu0
      %v2462 = vpop.f32.mrb[0].mxu0
      %v2463 = vadd.f32 %v475, %v2462
      %v2464 = vpop.f32.mrb[0].mxu0
      %2465 = vmatprep.mubr.bf16.mxu0 0
      %2466 = vmatmul.mubr.bf16.gmra.mrb[0].mxu0 %v1511
      %v2467 = vpop.f32.mrb[0].mxu0
      %v2468 = vadd.f32 %v475, %v2467
      %v2469 = vpop.f32.mrb[0].mxu0
      %v2470 = vpop.f32.mrb[0].mxu0
      %v2471 = vadd.f32 %v475, %v2470
      %v2472 = vpop.f32.mrb[0].mxu0
      %2473 = vmatprep.mubr.bf16.mxu0 0
      %2474 = vmatmul.mubr.bf16.gmra.mrb[0].mxu0 %v1514
      %v2475 = vpop.f32.mrb[0].mxu0
      %v2476 = vadd.f32 %v475, %v2475
      %v2477 = vpop.f32.mrb[0].mxu0
      %v2478 = vpop.f32.mrb[0].mxu0
      %v2479 = vadd.f32 %v475, %v2478
      %v2480 = vpop.f32.mrb[0].mxu0
      %2481 = vmatprep.mubr.bf16.mxu0 0
      %2482 = vmatmul.mubr.bf16.gmra.mrb[0].mxu0 %v1517
      %v2483 = vpop.f32.mrb[0].mxu0
      %v2484 = vadd.f32 %v475, %v2483
      %v2485 = vpop.f32.mrb[0].mxu0
      %v2486 = vpop.f32.mrb[0].mxu0
      %v2487 = vadd.f32 %v475, %v2486
      %v2488 = vpop.f32.mrb[0].mxu0
      %2489 = vmatprep.mubr.bf16.mxu0 0
      %2490 = vmatmul.mubr.bf16.gmra.mrb[0].mxu0 %v1520
      %v2491 = vpop.f32.mrb[0].mxu0
      %v2492 = vadd.f32 %v475, %v2491
      %v2493 = vpop.f32.mrb[0].mxu0
      %v2494 = vpop.f32.mrb[0].mxu0
      %v2495 = vadd.f32 %v475, %v2494
      %v2496 = vpop.f32.mrb[0].mxu0
      %2497 = vmatprep.mubr.bf16.mxu0 0
      %2498 = vmatmul.mubr.bf16.gmra.mrb[0].mxu0 %v1523
      %v2499 = vpop.f32.mrb[0].mxu0
      %v2500 = vadd.f32 %v475, %v2499
      %v2501 = vpop.f32.mrb[0].mxu0
      %v2502 = vpop.f32.mrb[0].mxu0
      %v2503 = vadd.f32 %v475, %v2502
      %v2504 = vpop.f32.mrb[0].mxu0
      %2505 = vmatprep.mubr.bf16.mxu0 0
      %2506 = vmatmul.mubr.bf16.gmra.mrb[0].mxu0 %v1526
      %v2507 = vpop.f32.mrb[0].mxu0
      %v2508 = vadd.f32 %v475, %v2507
      %v2509 = vpop.f32.mrb[0].mxu0
      %v2510 = vpop.f32.mrb[0].mxu0
      %v2511 = vadd.f32 %v475, %v2510
      %v2512 = vpop.f32.mrb[0].mxu0
      %2513 = vmatprep.mubr.bf16.mxu0 0
      %2514 = vmatmul.mubr.bf16.gmra.mrb[0].mxu0 %v1529
      %v2515 = vpop.f32.mrb[0].mxu0
      %v2516 = vadd.f32 %v475, %v2515
      %v2517 = vpop.f32.mrb[0].mxu0
      %v2518 = vpop.f32.mrb[0].mxu0
      %v2519 = vadd.f32 %v475, %v2518
      %v2520 = vpop.f32.mrb[0].mxu0
      %2521 = vmatprep.mubr.bf16.mxu0 0
      %2522 = vmatmul.mubr.bf16.gmra.mrb[0].mxu0 %v1532
      %v2523 = vpop.f32.mrb[0].mxu0
      %v2524 = vadd.f32 %v475, %v2523
      %v2525 = vpop.f32.mrb[0].mxu0
      %v2526 = vpop.f32.mrb[0].mxu0
      %v2527 = vadd.f32 %v475, %v2526
      %v2528 = vpop.f32.mrb[0].mxu0
      %2529 = vmatprep.mubr.bf16.mxu0 0
      %2530 = vmatmul.mubr.bf16.gmra.mrb[0].mxu0 %v1535
      %v2531 = vpop.f32.mrb[0].mxu0
      %v2532 = vadd.f32 %v475, %v2531
      %v2533 = vpop.f32.mrb[0].mxu0
      %v2534 = vpop.f32.mrb[0].mxu0
      %v2535 = vadd.f32 %v475, %v2534
      %v2536 = vpop.f32.mrb[0].mxu0
      %2537 = vmatprep.mubr.bf16.mxu0 0
      %2538 = vmatmul.mubr.bf16.gmra.mrb[0].mxu0 %v1538
      %v2539 = vpop.f32.mrb[0].mxu0
      %v2540 = vadd.f32 %v475, %v2539
      %v2541 = vpop.f32.mrb[0].mxu0
      %v2542 = vpop.f32.mrb[0].mxu0
      %v2543 = vadd.f32 %v475, %v2542
      %v2544 = vpop.f32.mrb[0].mxu0
      %2545 = vmatprep.mubr.bf16.mxu0 0
      %2546 = vmatmul.mubr.bf16.gmra.mrb[0].mxu0 %v1541
      %v2547 = vpop.f32.mrb[0].mxu0
      %v2548 = vadd.f32 %v475, %v2547
      %v2549 = vpop.f32.mrb[0].mxu0
      %v2550 = vpop.f32.mrb[0].mxu0
      %v2551 = vadd.f32 %v475, %v2550
      %v2552 = vpop.f32.mrb[0].mxu0
      %2553 = vmatprep.mubr.bf16.mxu0 0
      %2554 = vmatmul.mubr.bf16.gmra.mrb[0].mxu0 %v1544
      %v2555 = vpop.f32.mrb[0].mxu0
      %v2556 = vadd.f32 %v475, %v2555
      %v2557 = vpop.f32.mrb[0].mxu0
      %v2558 = vpop.f32.mrb[0].mxu0
      %v2559 = vadd.f32 %v475, %v2558
      %v2560 = vpop.f32.mrb[0].mxu0
      %2561 = vmatprep.mubr.bf16.mxu0 0
      %2562 = vmatmul.mubr.bf16.gmra.mrb[0].mxu0 %v1547
      %v2563 = vpop.f32.mrb[0].mxu0
      %v2564 = vadd.f32 %v475, %v2563
      %v2565 = vpop.f32.mrb[0].mxu0
      %v2566 = vpop.f32.mrb[0].mxu0
      %v2567 = vadd.f32 %v475, %v2566
      %v2568 = vpop.f32.mrb[0].mxu0
      %2569 = vmatprep.mubr.bf16.mxu0 0
      %2570 = vmatmul.mubr.bf16.gmra.mrb[0].mxu0 %v1550
      %v2571 = vpop.f32.mrb[0].mxu0
      %v2572 = vadd.f32 %v475, %v2571
      %v2573 = vpop.f32.mrb[0].mxu0
      %v2574 = vpop.f32.mrb[0].mxu0
      %v2575 = vadd.f32 %v475, %v2574
      %v2576 = vpop.f32.mrb[0].mxu0
      %2577 = vmatprep.mubr.bf16.mxu0 0
      %2578 = vmatmul.mubr.bf16.gmra.mrb[0].mxu0 %v1553
      %v2579 = vpop.f32.mrb[0].mxu0
      %v2580 = vadd.f32 %v475, %v2579
      %v2581 = vpop.f32.mrb[0].mxu0
      %v2582 = vpop.f32.mrb[0].mxu0
      %v2583 = vadd.f32 %v475, %v2582
      %v2584 = vpop.f32.mrb[0].mxu0
      %2585 = vmatprep.mubr.bf16.mxu0 0
      %2586 = vmatmul.mubr.bf16.gmra.mrb[0].mxu0 %v1556
      %v2587 = vpop.f32.mrb[0].mxu0
      %v2588 = vadd.f32 %v475, %v2587
      %v2589 = vpop.f32.mrb[0].mxu0
      %v2590 = vpop.f32.mrb[0].mxu0
      %v2591 = vadd.f32 %v475, %v2590
      %v2592 = vpop.f32.mrb[0].mxu0
      %2593 = vmatprep.mubr.bf16.mxu0 0
      %2594 = vmatmul.mubr.bf16.gmra.mrb[0].mxu0 %v1559
      %v2595 = vpop.f32.mrb[0].mxu0
      %v2596 = vadd.f32 %v475, %v2595
      %v2597 = vpop.f32.mrb[0].mxu0
      %v2598 = vpop.f32.mrb[0].mxu0
      %v2599 = vadd.f32 %v475, %v2598
      %v2600 = vpop.f32.mrb[0].mxu0
      %2601 = vmatprep.mubr.bf16.mxu0 0
      %2602 = vmatmul.mubr.bf16.gmra.mrb[0].mxu0 %v1562
      %v2603 = vpop.f32.mrb[0].mxu0
      %v2604 = vadd.f32 %v475, %v2603
      %v2605 = vpop.f32.mrb[0].mxu0
      %v2606 = vpop.f32.mrb[0].mxu0
      %v2607 = vadd.f32 %v475, %v2606
      %v2608 = vpop.f32.mrb[0].mxu0
      %2609 = vmatprep.mubr.bf16.mxu0 0
      %2610 = vmatmul.mubr.bf16.gmra.mrb[0].mxu0 %v1565
      %v2611 = vpop.f32.mrb[0].mxu0
      %v2612 = vadd.f32 %v475, %v2611
      %v2613 = vpop.f32.mrb[0].mxu0
      %v2614 = vpop.f32.mrb[0].mxu0
      %v2615 = vadd.f32 %v475, %v2614
      %v2616 = vpop.f32.mrb[0].mxu0
      %2617 = vmatprep.mubr.bf16.mxu0 0
      %2618 = vmatmul.mubr.bf16.gmra.mrb[0].mxu0 %v1568
      %v2619 = vpop.f32.mrb[0].mxu0
      %v2620 = vadd.f32 %v475, %v2619
      %v2621 = vpop.f32.mrb[0].mxu0
      %v2622 = vpop.f32.mrb[0].mxu0
      %v2623 = vadd.f32 %v475, %v2622
      %v2624 = vpop.f32.mrb[0].mxu0
      %2625 = vmatprep.mubr.bf16.mxu0 0
      %2626 = vmatmul.mubr.bf16.gmra.mrb[0].mxu0 %v1571
      %v2627 = vpop.f32.mrb[0].mxu0
      %v2628 = vadd.f32 %v475, %v2627
      %v2629 = vpop.f32.mrb[0].mxu0
      %v2630 = vpop.f32.mrb[0].mxu0
      %v2631 = vadd.f32 %v475, %v2630
      %v2632 = vpop.f32.mrb[0].mxu0
      %2633 = vmatprep.mubr.bf16.mxu0 0
      %2634 = vmatmul.mubr.bf16.gmra.mrb[0].mxu0 %v1574
      %v2635 = vpop.f32.mrb[0].mxu0
      %v2636 = vadd.f32 %v475, %v2635
      %v2637 = vpop.f32.mrb[0].mxu0
      %v2638 = vpop.f32.mrb[0].mxu0
      %v2639 = vadd.f32 %v475, %v2638
      %v2640 = vpop.f32.mrb[0].mxu0
      %2641 = vmatprep.mubr.bf16.mxu0 0
      %2642 = vmatmul.mubr.bf16.gmra.mrb[0].mxu0 %v1577
      %v2643 = vpop.f32.mrb[0].mxu0
      %v2644 = vadd.f32 %v475, %v2643
      %v2645 = vpop.f32.mrb[0].mxu0
      %v2646 = vpop.f32.mrb[0].mxu0
      %v2647 = vadd.f32 %v475, %v2646
      %v2648 = vpop.f32.mrb[0].mxu0
      %2649 = vmatprep.mubr.bf16.mxu0 0
      %2650 = vmatmul.mubr.bf16.gmra.mrb[0].mxu0 %v1580
      %v2651 = vpop.f32.mrb[0].mxu0
      %v2652 = vadd.f32 %v475, %v2651
      %v2653 = vpop.f32.mrb[0].mxu0
      %v2654 = vpop.f32.mrb[0].mxu0
      %v2655 = vadd.f32 %v475, %v2654
      %v2656 = vpop.f32.mrb[0].mxu0
      %2657 = vmatprep.mubr.bf16.mxu0 0
      %2658 = vmatmul.mubr.bf16.gmra.mrb[0].mxu0 %v1583
      %v2659 = vpop.f32.mrb[0].mxu0
      %v2660 = vadd.f32 %v475, %v2659
      %v2661 = vpop.f32.mrb[0].mxu0
      %v2662 = vpop.f32.mrb[0].mxu0
      %v2663 = vadd.f32 %v475, %v2662
      %v2664 = vpop.f32.mrb[0].mxu0
      %2665 = vmatprep.mubr.bf16.mxu0 0
      %2666 = vmatmul.mubr.bf16.gmra.mrb[0].mxu0 %v1586
      %v2667 = vpop.f32.mrb[0].mxu0
      %v2668 = vadd.f32 %v475, %v2667
      %v2669 = vpop.f32.mrb[0].mxu0
      %v2670 = vpop.f32.mrb[0].mxu0
      %v2671 = vadd.f32 %v475, %v2670
      %v2672 = vpop.f32.mrb[0].mxu0
      %2673 = vmatprep.mubr.bf16.mxu0 0
      %2674 = vmatmul.mubr.bf16.gmra.mrb[0].mxu0 %v1589
      %v2675 = vpop.f32.mrb[0].mxu0
      %v2676 = vadd.f32 %v475, %v2675
      %v2677 = vpop.f32.mrb[0].mxu0
      %v2678 = vpop.f32.mrb[0].mxu0
      %v2679 = vadd.f32 %v475, %v2678
      %v2680 = vpop.f32.mrb[0].mxu0
      %2681 = vmatprep.mubr.bf16.mxu0 0
      %2682 = vmatmul.mubr.bf16.gmra.mrb[0].mxu0 %v1592
      %v2683 = vpop.f32.mrb[0].mxu0
      %v2684 = vadd.f32 %v475, %v2683
      %v2685 = vpop.f32.mrb[0].mxu0
      %v2686 = vpop.f32.mrb[0].mxu0
      %v2687 = vadd.f32 %v475, %v2686
      %v2688 = vpop.f32.mrb[0].mxu0
      %2689 = vmatprep.mubr.bf16.mxu0 0
      %2690 = vmatmul.mubr.bf16.gmra.mrb[0].mxu0 %v1595
      %v2691 = vpop.f32.mrb[0].mxu0
      %v2692 = vadd.f32 %v475, %v2691
      %v2693 = vpop.f32.mrb[0].mxu0
      %v2694 = vpop.f32.mrb[0].mxu0
      %v2695 = vadd.f32 %v475, %v2694
      %v2696 = vpop.f32.mrb[0].mxu0
      %2697 = vmatprep.mubr.bf16.mxu0 0
      %2698 = vmatmul.mubr.bf16.gmra.mrb[0].mxu0 %v1598
      %v2699 = vpop.f32.mrb[0].mxu0
      %v2700 = vadd.f32 %v475, %v2699
      %v2701 = vpop.f32.mrb[0].mxu0
      %v2702 = vpop.f32.mrb[0].mxu0
      %v2703 = vadd.f32 %v475, %v2702
      %v2704 = vpop.f32.mrb[0].mxu0
      %2705 = vmatprep.mubr.bf16.mxu0 0
      %2706 = vmatmul.mubr.bf16.gmra.mrb[0].mxu0 %v1601
      %v2707 = vpop.f32.mrb[0].mxu0
      %v2708 = vadd.f32 %v475, %v2707
      %v2709 = vpop.f32.mrb[0].mxu0
      %v2710 = vpop.f32.mrb[0].mxu0
      %v2711 = vadd.f32 %v475, %v2710
      %v2712 = vpop.f32.mrb[0].mxu0
      %2713 = vmatprep.mubr.bf16.mxu0 0
      %2714 = vmatmul.mubr.bf16.gmra.mrb[0].mxu0 %v1604
      %v2715 = vpop.f32.mrb[0].mxu0
      %v2716 = vadd.f32 %v475, %v2715
      %v2717 = vpop.f32.mrb[0].mxu0
      %v2718 = vpop.f32.mrb[0].mxu0
      %v2719 = vadd.f32 %v475, %v2718
      %v2720 = vpop.f32.mrb[0].mxu0
      %2721 = vmatprep.mubr.bf16.mxu0 0
      %2722 = vmatmul.mubr.bf16.gmra.mrb[0].mxu0 %v1607
      %v2723 = vpop.f32.mrb[0].mxu0
      %v2724 = vadd.f32 %v475, %v2723
      %v2725 = vpop.f32.mrb[0].mxu0
      %v2726 = vpop.f32.mrb[0].mxu0
      %v2727 = vadd.f32 %v475, %v2726
      %v2728 = vpop.f32.mrb[0].mxu0
      %2729 = vmatprep.mubr.bf16.mxu0 0
      %2730 = vmatmul.mubr.bf16.gmra.mrb[0].mxu0 %v1610
      %v2731 = vpop.f32.mrb[0].mxu0
      %v2732 = vadd.f32 %v475, %v2731
      %v2733 = vpop.f32.mrb[0].mxu0
      %v2734 = vpop.f32.mrb[0].mxu0
      %v2735 = vadd.f32 %v475, %v2734
      %v2736 = vpop.f32.mrb[0].mxu0
      %2737 = vmatprep.mubr.bf16.mxu0 0
      %2738 = vmatmul.mubr.bf16.gmra.mrb[0].mxu0 %v1613
      %v2739 = vpop.f32.mrb[0].mxu0
      %v2740 = vadd.f32 %v475, %v2739
      %v2741 = vpop.f32.mrb[0].mxu0
      %v2742 = vpop.f32.mrb[0].mxu0
      %v2743 = vadd.f32 %v475, %v2742
      %v2744 = vpop.f32.mrb[0].mxu0
      %2745 = vmatprep.mubr.bf16.mxu0 0
      %2746 = vmatmul.mubr.bf16.gmra.mrb[0].mxu0 %v1616
      %v2747 = vpop.f32.mrb[0].mxu0
      %v2748 = vadd.f32 %v475, %v2747
      %v2749 = vpop.f32.mrb[0].mxu0
      %v2750 = vpop.f32.mrb[0].mxu0
      %v2751 = vadd.f32 %v475, %v2750
      %v2752 = vpop.f32.mrb[0].mxu0
      %2753 = vmatprep.mubr.bf16.mxu0 0
      %2754 = vmatmul.mubr.bf16.gmra.mrb[0].mxu0 %v1619
      %v2755 = vpop.f32.mrb[0].mxu0
      %v2756 = vadd.f32 %v475, %v2755
      %v2757 = vpop.f32.mrb[0].mxu0
      %v2758 = vpop.f32.mrb[0].mxu0
      %v2759 = vadd.f32 %v475, %v2758
      %v2760 = vpop.f32.mrb[0].mxu0
      %2761 = vmatprep.mubr.bf16.mxu0 0
      %2762 = vmatmul.mubr.bf16.gmra.mrb[0].mxu0 %v1622
      %v2763 = vpop.f32.mrb[0].mxu0
      %v2764 = vadd.f32 %v475, %v2763
      %v2765 = vpop.f32.mrb[0].mxu0
      %v2766 = vpop.f32.mrb[0].mxu0
      %v2767 = vadd.f32 %v475, %v2766
      %v2768 = vpop.f32.mrb[0].mxu0
      %2769 = vmatprep.mubr.bf16.mxu0 0
      %2770 = vmatmul.mubr.bf16.gmra.mrb[0].mxu0 %v1625
      %v2771 = vpop.f32.mrb[0].mxu0
      %v2772 = vadd.f32 %v475, %v2771
      %v2773 = vpop.f32.mrb[0].mxu0
      %v2774 = vpop.f32.mrb[0].mxu0
      %v2775 = vadd.f32 %v475, %v2774
      %v2776 = vpop.f32.mrb[0].mxu0
      %2777 = vmatprep.mubr.bf16.mxu0 0
      %2778 = vmatmul.mubr.bf16.gmra.mrb[0].mxu0 %v1628
      %v2779 = vpop.f32.mrb[0].mxu0
      %v2780 = vadd.f32 %v475, %v2779
      %v2781 = vpop.f32.mrb[0].mxu0
      %v2782 = vpop.f32.mrb[0].mxu0
      %v2783 = vadd.f32 %v475, %v2782
      %v2784 = vpop.f32.mrb[0].mxu0
      %2785 = vmatprep.mubr.bf16.mxu0 0
      %2786 = vmatmul.mubr.bf16.gmra.mrb[0].mxu0 %v1631
      %v2787 = vpop.f32.mrb[0].mxu0
      %v2788 = vadd.f32 %v475, %v2787
      %v2789 = vpop.f32.mrb[0].mxu0
      %v2790 = vpop.f32.mrb[0].mxu0
      %v2791 = vadd.f32 %v475, %v2790
      %v2792 = vpop.f32.mrb[0].mxu0
      %2793 = vmatprep.mubr.bf16.mxu0 0
      %2794 = vmatmul.mubr.bf16.gmra.mrb[0].mxu0 %v1634
      %v2795 = vpop.f32.mrb[0].mxu0
      %v2796 = vadd.f32 %v475, %v2795
      %v2797 = vpop.f32.mrb[0].mxu0
      %v2798 = vpop.f32.mrb[0].mxu0
      %v2799 = vadd.f32 %v475, %v2798
      %v2800 = vpop.f32.mrb[0].mxu0
      %2801 = vmatprep.mubr.bf16.mxu0 0
      %2802 = vmatmul.mubr.bf16.gmra.mrb[0].mxu0 %v1637
      %v2803 = vpop.f32.mrb[0].mxu0
      %v2804 = vadd.f32 %v475, %v2803
      %v2805 = vpop.f32.mrb[0].mxu0
      %v2806 = vpop.f32.mrb[0].mxu0
      %v2807 = vadd.f32 %v475, %v2806
      %v2808 = vpop.f32.mrb[0].mxu0
      %2809 = vmatprep.mubr.bf16.mxu0 0
      %2810 = vmatmul.mubr.bf16.gmra.mrb[0].mxu0 %v1640
      %v2811 = vpop.f32.mrb[0].mxu0
      %v2812 = vadd.f32 %v475, %v2811
      %v2813 = vpop.f32.mrb[0].mxu0
      %v2814 = vpop.f32.mrb[0].mxu0
      %v2815 = vadd.f32 %v475, %v2814
      %v2816 = vpop.f32.mrb[0].mxu0
      %2817 = vmatprep.mubr.bf16.mxu0 0
      %2818 = vmatmul.mubr.bf16.gmra.mrb[0].mxu0 %v1643
      %v2819 = vpop.f32.mrb[0].mxu0
      %v2820 = vadd.f32 %v475, %v2819
      %v2821 = vpop.f32.mrb[0].mxu0
      %v2822 = vpop.f32.mrb[0].mxu0
      %v2823 = vadd.f32 %v475, %v2822
      %v2824 = vpop.f32.mrb[0].mxu0
      %2825 = vmatprep.mubr.bf16.mxu0 0
      %2826 = vmatmul.mubr.bf16.gmra.mrb[0].mxu0 %v1646
      %v2827 = vpop.f32.mrb[0].mxu0
      %v2828 = vadd.f32 %v475, %v2827
      %v2829 = vpop.f32.mrb[0].mxu0
      %v2830 = vpop.f32.mrb[0].mxu0
      %v2831 = vadd.f32 %v475, %v2830
      %v2832 = vpop.f32.mrb[0].mxu0
      %2833 = vmatprep.mubr.bf16.mxu0 0
      %2834 = vmatmul.mubr.bf16.gmra.mrb[0].mxu0 %v1649
      %v2835 = vpop.f32.mrb[0].mxu0
      %v2836 = vadd.f32 %v475, %v2835
      %v2837 = vpop.f32.mrb[0].mxu0
      %v2838 = vpop.f32.mrb[0].mxu0
      %v2839 = vadd.f32 %v475, %v2838
      %v2840 = vpop.f32.mrb[0].mxu0
      %2841 = vdwg.mxu0
      %v2842 = vmax.f32 %v1692, 0.0
      %v2843 = vmax.f32 %v1695, 0.0
      %v2844 = vmax.f32 %v1700, 0.0
      %v2845 = vmax.f32 %v1703, 0.0
      %v2846 = vmax.f32 %v1708, 0.0
      %v2847 = vmax.f32 %v1711, 0.0
      %v2848 = vmax.f32 %v1716, 0.0
      %v2849 = vmax.f32 %v1719, 0.0
      %v2850 = vmax.f32 %v1724, 0.0
      %v2851 = vmax.f32 %v1727, 0.0
      %v2852 = vmax.f32 %v1732, 0.0
      %v2853 = vmax.f32 %v1735, 0.0
      %v2854 = vmax.f32 %v1740, 0.0
      %v2855 = vmax.f32 %v1743, 0.0
      %v2856 = vmax.f32 %v1748, 0.0
      %v2857 = vmax.f32 %v1751, 0.0
      %v2858 = vmax.f32 %v1756, 0.0
      %v2859 = vmax.f32 %v1759, 0.0
      %v2860 = vmax.f32 %v1764, 0.0
      %v2861 = vmax.f32 %v1767, 0.0
      %v2862 = vmax.f32 %v1772, 0.0
      %v2863 = vmax.f32 %v1775, 0.0
      %v2864 = vmax.f32 %v1780, 0.0
      %v2865 = vmax.f32 %v1783, 0.0
      %v2866 = vmax.f32 %v1788, 0.0
      %v2867 = vmax.f32 %v1791, 0.0
      %v2868 = vmax.f32 %v1796, 0.0
      %v2869 = vmax.f32 %v1799, 0.0
      %v2870 = vmax.f32 %v1804, 0.0
      %v2871 = vmax.f32 %v1807, 0.0
      %v2872 = vmax.f32 %v1812, 0.0
      %v2873 = vmax.f32 %v1815, 0.0
      %v2874 = vmax.f32 %v1820, 0.0
      %v2875 = vmax.f32 %v1823, 0.0
      %v2876 = vmax.f32 %v1828, 0.0
      %v2877 = vmax.f32 %v1831, 0.0
      %v2878 = vmax.f32 %v1836, 0.0
      %v2879 = vmax.f32 %v1839, 0.0
      %v2880 = vmax.f32 %v1844, 0.0
      %v2881 = vmax.f32 %v1847, 0.0
      %v2882 = vmax.f32 %v1852, 0.0
      %v2883 = vmax.f32 %v1855, 0.0
      %v2884 = vmax.f32 %v1860, 0.0
      %v2885 = vmax.f32 %v1863, 0.0
      %v2886 = vmax.f32 %v1868, 0.0
      %v2887 = vmax.f32 %v1871, 0.0
      %v2888 = vmax.f32 %v1876, 0.0
      %v2889 = vmax.f32 %v1879, 0.0
      %v2890 = vmax.f32 %v1884, 0.0
      %v2891 = vmax.f32 %v1887, 0.0
      %v2892 = vmax.f32 %v1892, 0.0
      %v2893 = vmax.f32 %v1895, 0.0
      %v2894 = vmax.f32 %v1900, 0.0
      %v2895 = vmax.f32 %v1903, 0.0
      %v2896 = vmax.f32 %v1908, 0.0
      %v2897 = vmax.f32 %v1911, 0.0
      %v2898 = vmax.f32 %v1916, 0.0
      %v2899 = vmax.f32 %v1919, 0.0
      %v2900 = vmax.f32 %v1924, 0.0
      %v2901 = vmax.f32 %v1927, 0.0
      %v2902 = vmax.f32 %v1932, 0.0
      %v2903 = vmax.f32 %v1935, 0.0
      %v2904 = vmax.f32 %v1940, 0.0
      %v2905 = vmax.f32 %v1943, 0.0
      %v2906 = vmax.f32 %v1948, 0.0
      %v2907 = vmax.f32 %v1951, 0.0
      %v2908 = vmax.f32 %v1956, 0.0
      %v2909 = vmax.f32 %v1959, 0.0
      %v2910 = vmax.f32 %v1964, 0.0
      %v2911 = vmax.f32 %v1967, 0.0
      %v2912 = vmax.f32 %v1972, 0.0
      %v2913 = vmax.f32 %v1975, 0.0
      %v2914 = vmax.f32 %v1980, 0.0
      %v2915 = vmax.f32 %v1983, 0.0
      %v2916 = vmax.f32 %v1988, 0.0
      %v2917 = vmax.f32 %v1991, 0.0
      %v2918 = vmax.f32 %v1996, 0.0
      %v2919 = vmax.f32 %v1999, 0.0
      %v2920 = vmax.f32 %v2004, 0.0
      %v2921 = vmax.f32 %v2007, 0.0
      %v2922 = vmax.f32 %v2012, 0.0
      %v2923 = vmax.f32 %v2015, 0.0
      %v2924 = vmax.f32 %v2020, 0.0
      %v2925 = vmax.f32 %v2023, 0.0
      %v2926 = vmax.f32 %v2028, 0.0
      %v2927 = vmax.f32 %v2031, 0.0
      %v2928 = vmax.f32 %v2036, 0.0
      %v2929 = vmax.f32 %v2039, 0.0
      %v2930 = vmax.f32 %v2044, 0.0
      %v2931 = vmax.f32 %v2047, 0.0
      %v2932 = vmax.f32 %v2052, 0.0
      %v2933 = vmax.f32 %v2055, 0.0
      %v2934 = vmax.f32 %v2060, 0.0
      %v2935 = vmax.f32 %v2063, 0.0
      %v2936 = vmax.f32 %v2068, 0.0
      %v2937 = vmax.f32 %v2071, 0.0
      %v2938 = vmax.f32 %v2076, 0.0
      %v2939 = vmax.f32 %v2079, 0.0
      %v2940 = vmax.f32 %v2084, 0.0
      %v2941 = vmax.f32 %v2087, 0.0
      %v2942 = vmax.f32 %v2092, 0.0
      %v2943 = vmax.f32 %v2095, 0.0
      %v2944 = vmax.f32 %v2100, 0.0
      %v2945 = vmax.f32 %v2103, 0.0
      %v2946 = vmax.f32 %v2108, 0.0
      %v2947 = vmax.f32 %v2111, 0.0
      %v2948 = vmax.f32 %v2116, 0.0
      %v2949 = vmax.f32 %v2119, 0.0
      %v2950 = vmax.f32 %v2124, 0.0
      %v2951 = vmax.f32 %v2127, 0.0
      %v2952 = vmax.f32 %v2132, 0.0
      %v2953 = vmax.f32 %v2135, 0.0
      %v2954 = vmax.f32 %v2140, 0.0
      %v2955 = vmax.f32 %v2143, 0.0
      %v2956 = vmax.f32 %v2148, 0.0
      %v2957 = vmax.f32 %v2151, 0.0
      %v2958 = vmax.f32 %v2156, 0.0
      %v2959 = vmax.f32 %v2159, 0.0
      %v2960 = vmax.f32 %v2164, 0.0
      %v2961 = vmax.f32 %v2167, 0.0
      %v2962 = vmax.f32 %v2172, 0.0
      %v2963 = vmax.f32 %v2175, 0.0
      %v2964 = vmax.f32 %v2180, 0.0
      %v2965 = vmax.f32 %v2183, 0.0
      %v2966 = vmax.f32 %v2188, 0.0
      %v2967 = vmax.f32 %v2191, 0.0
      %v2968 = vmax.f32 %v2196, 0.0
      %v2969 = vmax.f32 %v2199, 0.0
      %v2970 = vmax.f32 %v2204, 0.0
      %v2971 = vmax.f32 %v2207, 0.0
      %v2972 = vmax.f32 %v2212, 0.0
      %v2973 = vmax.f32 %v2215, 0.0
      %v2974 = vmax.f32 %v2220, 0.0
      %v2975 = vmax.f32 %v2223, 0.0
      %v2976 = vmax.f32 %v2228, 0.0
      %v2977 = vmax.f32 %v2231, 0.0
      %v2978 = vmax.f32 %v2236, 0.0
      %v2979 = vmax.f32 %v2239, 0.0
      %v2980 = vmax.f32 %v2244, 0.0
      %v2981 = vmax.f32 %v2247, 0.0
      %v2982 = vmax.f32 %v2252, 0.0
      %v2983 = vmax.f32 %v2255, 0.0
      %v2984 = vmax.f32 %v2260, 0.0
      %v2985 = vmax.f32 %v2263, 0.0
      %v2986 = vmax.f32 %v2268, 0.0
      %v2987 = vmax.f32 %v2271, 0.0
      %v2988 = vmax.f32 %v2276, 0.0
      %v2989 = vmax.f32 %v2279, 0.0
      %v2990 = vmax.f32 %v2284, 0.0
      %v2991 = vmax.f32 %v2287, 0.0
      %v2992 = vmax.f32 %v2292, 0.0
      %v2993 = vmax.f32 %v2295, 0.0
      %v2994 = vmax.f32 %v2300, 0.0
      %v2995 = vmax.f32 %v2303, 0.0
      %v2996 = vmax.f32 %v2308, 0.0
      %v2997 = vmax.f32 %v2311, 0.0
      %v2998 = vmax.f32 %v2316, 0.0
      %v2999 = vmax.f32 %v2319, 0.0
      %v3000 = vmax.f32 %v2324, 0.0
      %v3001 = vmax.f32 %v2327, 0.0
      %v3002 = vmax.f32 %v2332, 0.0
      %v3003 = vmax.f32 %v2335, 0.0
      %v3004 = vmax.f32 %v2340, 0.0
      %v3005 = vmax.f32 %v2343, 0.0
      %v3006 = vmax.f32 %v2348, 0.0
      %v3007 = vmax.f32 %v2351, 0.0
      %v3008 = vmax.f32 %v2356, 0.0
      %v3009 = vmax.f32 %v2359, 0.0
      %v3010 = vmax.f32 %v2364, 0.0
      %v3011 = vmax.f32 %v2367, 0.0
      %v3012 = vmax.f32 %v2372, 0.0
      %v3013 = vmax.f32 %v2375, 0.0
      %v3014 = vmax.f32 %v2380, 0.0
      %v3015 = vmax.f32 %v2383, 0.0
      %v3016 = vmax.f32 %v2388, 0.0
      %v3017 = vmax.f32 %v2391, 0.0
      %v3018 = vmax.f32 %v2396, 0.0
      %v3019 = vmax.f32 %v2399, 0.0
      %v3020 = vmax.f32 %v2404, 0.0
      %v3021 = vmax.f32 %v2407, 0.0
      %v3022 = vmax.f32 %v2412, 0.0
      %v3023 = vmax.f32 %v2415, 0.0
      %v3024 = vmax.f32 %v2420, 0.0
      %v3025 = vmax.f32 %v2423, 0.0
      %v3026 = vmax.f32 %v2428, 0.0
      %v3027 = vmax.f32 %v2431, 0.0
      %v3028 = vmax.f32 %v2436, 0.0
      %v3029 = vmax.f32 %v2439, 0.0
      %v3030 = vmax.f32 %v2444, 0.0
      %v3031 = vmax.f32 %v2447, 0.0
      %v3032 = vmax.f32 %v2452, 0.0
      %v3033 = vmax.f32 %v2455, 0.0
      %v3034 = vmax.f32 %v2460, 0.0
      %v3035 = vmax.f32 %v2463, 0.0
      %v3036 = vmax.f32 %v2468, 0.0
      %v3037 = vmax.f32 %v2471, 0.0
      %v3038 = vmax.f32 %v2476, 0.0
      %v3039 = vmax.f32 %v2479, 0.0
      %v3040 = vmax.f32 %v2484, 0.0
      %v3041 = vmax.f32 %v2487, 0.0
      %v3042 = vmax.f32 %v2492, 0.0
      %v3043 = vmax.f32 %v2495, 0.0
      %v3044 = vmax.f32 %v2500, 0.0
      %v3045 = vmax.f32 %v2503, 0.0
      %v3046 = vmax.f32 %v2508, 0.0
      %v3047 = vmax.f32 %v2511, 0.0
      %v3048 = vmax.f32 %v2516, 0.0
      %v3049 = vmax.f32 %v2519, 0.0
      %v3050 = vmax.f32 %v2524, 0.0
      %v3051 = vmax.f32 %v2527, 0.0
      %v3052 = vmax.f32 %v2532, 0.0
      %v3053 = vmax.f32 %v2535, 0.0
      %v3054 = vmax.f32 %v2540, 0.0
      %v3055 = vmax.f32 %v2543, 0.0
      %v3056 = vmax.f32 %v2548, 0.0
      %v3057 = vmax.f32 %v2551, 0.0
      %v3058 = vmax.f32 %v2556, 0.0
      %v3059 = vmax.f32 %v2559, 0.0
      %v3060 = vmax.f32 %v2564, 0.0
      %v3061 = vmax.f32 %v2567, 0.0
      %v3062 = vmax.f32 %v2572, 0.0
      %v3063 = vmax.f32 %v2575, 0.0
      %v3064 = vmax.f32 %v2580, 0.0
      %v3065 = vmax.f32 %v2583, 0.0
      %v3066 = vmax.f32 %v2588, 0.0
      %v3067 = vmax.f32 %v2591, 0.0
      %v3068 = vmax.f32 %v2596, 0.0
      %v3069 = vmax.f32 %v2599, 0.0
      %v3070 = vmax.f32 %v2604, 0.0
      %v3071 = vmax.f32 %v2607, 0.0
      %v3072 = vmax.f32 %v2612, 0.0
      %v3073 = vmax.f32 %v2615, 0.0
      %v3074 = vmax.f32 %v2620, 0.0
      %v3075 = vmax.f32 %v2623, 0.0
      %v3076 = vmax.f32 %v2628, 0.0
      %v3077 = vmax.f32 %v2631, 0.0
      %v3078 = vmax.f32 %v2636, 0.0
      %v3079 = vmax.f32 %v2639, 0.0
      %v3080 = vmax.f32 %v2644, 0.0
      %v3081 = vmax.f32 %v2647, 0.0
      %v3082 = vmax.f32 %v2652, 0.0
      %v3083 = vmax.f32 %v2655, 0.0
      %v3084 = vmax.f32 %v2660, 0.0
      %v3085 = vmax.f32 %v2663, 0.0
      %v3086 = vmax.f32 %v2668, 0.0
      %v3087 = vmax.f32 %v2671, 0.0
      %v3088 = vmax.f32 %v2676, 0.0
      %v3089 = vmax.f32 %v2679, 0.0
      %v3090 = vmax.f32 %v2684, 0.0
      %v3091 = vmax.f32 %v2687, 0.0
      %v3092 = vmax.f32 %v2692, 0.0
      %v3093 = vmax.f32 %v2695, 0.0
      %v3094 = vmax.f32 %v2700, 0.0
      %v3095 = vmax.f32 %v2703, 0.0
      %v3096 = vmax.f32 %v2708, 0.0
      %v3097 = vmax.f32 %v2711, 0.0
      %v3098 = vmax.f32 %v2716, 0.0
      %v3099 = vmax.f32 %v2719, 0.0
      %v3100 = vmax.f32 %v2724, 0.0
      %v3101 = vmax.f32 %v2727, 0.0
      %v3102 = vmax.f32 %v2732, 0.0
      %v3103 = vmax.f32 %v2735, 0.0
      %v3104 = vmax.f32 %v2740, 0.0
      %v3105 = vmax.f32 %v2743, 0.0
      %v3106 = vmax.f32 %v2748, 0.0
      %v3107 = vmax.f32 %v2751, 0.0
      %v3108 = vmax.f32 %v2756, 0.0
      %v3109 = vmax.f32 %v2759, 0.0
      %v3110 = vmax.f32 %v2764, 0.0
      %v3111 = vmax.f32 %v2767, 0.0
      %v3112 = vmax.f32 %v2772, 0.0
      %v3113 = vmax.f32 %v2775, 0.0
      %v3114 = vmax.f32 %v2780, 0.0
      %v3115 = vmax.f32 %v2783, 0.0
      %v3116 = vmax.f32 %v2788, 0.0
      %v3117 = vmax.f32 %v2791, 0.0
      %v3118 = vmax.f32 %v2796, 0.0
      %v3119 = vmax.f32 %v2799, 0.0
      %v3120 = vmax.f32 %v2804, 0.0
      %v3121 = vmax.f32 %v2807, 0.0
      %v3122 = vmax.f32 %v2812, 0.0
      %v3123 = vmax.f32 %v2815, 0.0
      %v3124 = vmax.f32 %v2820, 0.0
      %v3125 = vmax.f32 %v2823, 0.0
      %v3126 = vmax.f32 %v2828, 0.0
      %v3127 = vmax.f32 %v2831, 0.0
      %v3128 = vmax.f32 %v2836, 0.0
      %v3129 = vmax.f32 %v2839, 0.0
      %v3130 = vpack.c.bf16 %v2843, %v2842
      %v3131 = vpack.c.bf16 %v2845, %v2844
      %v3132 = vpack.c.bf16 %v2847, %v2846
      %v3133 = vpack.c.bf16 %v2849, %v2848
      %v3134 = vpack.c.bf16 %v2851, %v2850
      %v3135 = vpack.c.bf16 %v2853, %v2852
      %v3136 = vpack.c.bf16 %v2855, %v2854
      %v3137 = vpack.c.bf16 %v2857, %v2856
      %v3138 = vpack.c.bf16 %v2859, %v2858
      %v3139 = vpack.c.bf16 %v2861, %v2860
      %v3140 = vpack.c.bf16 %v2863, %v2862
      %v3141 = vpack.c.bf16 %v2865, %v2864
      %v3142 = vpack.c.bf16 %v2867, %v2866
      %v3143 = vpack.c.bf16 %v2869, %v2868
      %v3144 = vpack.c.bf16 %v2871, %v2870
      %v3145 = vpack.c.bf16 %v2873, %v2872
      %v3146 = vpack.c.bf16 %v2875, %v2874
      %v3147 = vpack.c.bf16 %v2877, %v2876
      %v3148 = vpack.c.bf16 %v2879, %v2878
      %v3149 = vpack.c.bf16 %v2881, %v2880
      %v3150 = vpack.c.bf16 %v2883, %v2882
      %v3151 = vpack.c.bf16 %v2885, %v2884
      %v3152 = vpack.c.bf16 %v2887, %v2886
      %v3153 = vpack.c.bf16 %v2889, %v2888
      %v3154 = vpack.c.bf16 %v2891, %v2890
      %v3155 = vpack.c.bf16 %v2893, %v2892
      %v3156 = vpack.c.bf16 %v2895, %v2894
      %v3157 = vpack.c.bf16 %v2897, %v2896
      %v3158 = vpack.c.bf16 %v2899, %v2898
      %v3159 = vpack.c.bf16 %v2901, %v2900
      %v3160 = vpack.c.bf16 %v2903, %v2902
      %v3161 = vpack.c.bf16 %v2905, %v2904
      %v3162 = vpack.c.bf16 %v2907, %v2906
      %v3163 = vpack.c.bf16 %v2909, %v2908
      %v3164 = vpack.c.bf16 %v2911, %v2910
      %v3165 = vpack.c.bf16 %v2913, %v2912
      %v3166 = vpack.c.bf16 %v2915, %v2914
      %v3167 = vpack.c.bf16 %v2917, %v2916
      %v3168 = vpack.c.bf16 %v2919, %v2918
      %v3169 = vpack.c.bf16 %v2921, %v2920
      %v3170 = vpack.c.bf16 %v2923, %v2922
      %v3171 = vpack.c.bf16 %v2925, %v2924
      %v3172 = vpack.c.bf16 %v2927, %v2926
      %v3173 = vpack.c.bf16 %v2929, %v2928
      %v3174 = vpack.c.bf16 %v2931, %v2930
      %v3175 = vpack.c.bf16 %v2933, %v2932
      %v3176 = vpack.c.bf16 %v2935, %v2934
      %v3177 = vpack.c.bf16 %v2937, %v2936
      %v3178 = vpack.c.bf16 %v2939, %v2938
      %v3179 = vpack.c.bf16 %v2941, %v2940
      %v3180 = vpack.c.bf16 %v2943, %v2942
      %v3181 = vpack.c.bf16 %v2945, %v2944
      %v3182 = vpack.c.bf16 %v2947, %v2946
      %v3183 = vpack.c.bf16 %v2949, %v2948
      %v3184 = vpack.c.bf16 %v2951, %v2950
      %v3185 = vpack.c.bf16 %v2953, %v2952
      %v3186 = vpack.c.bf16 %v2955, %v2954
      %v3187 = vpack.c.bf16 %v2957, %v2956
      %v3188 = vpack.c.bf16 %v2959, %v2958
      %v3189 = vpack.c.bf16 %v2961, %v2960
      %v3190 = vpack.c.bf16 %v2963, %v2962
      %v3191 = vpack.c.bf16 %v2965, %v2964
      %v3192 = vpack.c.bf16 %v2967, %v2966
      %v3193 = vpack.c.bf16 %v2969, %v2968
      %v3194 = vpack.c.bf16 %v2971, %v2970
      %v3195 = vpack.c.bf16 %v2973, %v2972
      %v3196 = vpack.c.bf16 %v2975, %v2974
      %v3197 = vpack.c.bf16 %v2977, %v2976
      %v3198 = vpack.c.bf16 %v2979, %v2978
      %v3199 = vpack.c.bf16 %v2981, %v2980
      %v3200 = vpack.c.bf16 %v2983, %v2982
      %v3201 = vpack.c.bf16 %v2985, %v2984
      %v3202 = vpack.c.bf16 %v2987, %v2986
      %v3203 = vpack.c.bf16 %v2989, %v2988
      %v3204 = vpack.c.bf16 %v2991, %v2990
      %v3205 = vpack.c.bf16 %v2993, %v2992
      %v3206 = vpack.c.bf16 %v2995, %v2994
      %v3207 = vpack.c.bf16 %v2997, %v2996
      %v3208 = vpack.c.bf16 %v2999, %v2998
      %v3209 = vpack.c.bf16 %v3001, %v3000
      %v3210 = vpack.c.bf16 %v3003, %v3002
      %v3211 = vpack.c.bf16 %v3005, %v3004
      %v3212 = vpack.c.bf16 %v3007, %v3006
      %v3213 = vpack.c.bf16 %v3009, %v3008
      %v3214 = vpack.c.bf16 %v3011, %v3010
      %v3215 = vpack.c.bf16 %v3013, %v3012
      %v3216 = vpack.c.bf16 %v3015, %v3014
      %v3217 = vpack.c.bf16 %v3017, %v3016
      %v3218 = vpack.c.bf16 %v3019, %v3018
      %v3219 = vpack.c.bf16 %v3021, %v3020
      %v3220 = vpack.c.bf16 %v3023, %v3022
      %v3221 = vpack.c.bf16 %v3025, %v3024
      %v3222 = vpack.c.bf16 %v3027, %v3026
      %v3223 = vpack.c.bf16 %v3029, %v3028
      %v3224 = vpack.c.bf16 %v3031, %v3030
      %v3225 = vpack.c.bf16 %v3033, %v3032
      %v3226 = vpack.c.bf16 %v3035, %v3034
      %v3227 = vpack.c.bf16 %v3037, %v3036
      %v3228 = vpack.c.bf16 %v3039, %v3038
      %v3229 = vpack.c.bf16 %v3041, %v3040
      %v3230 = vpack.c.bf16 %v3043, %v3042
      %v3231 = vpack.c.bf16 %v3045, %v3044
      %v3232 = vpack.c.bf16 %v3047, %v3046
      %v3233 = vpack.c.bf16 %v3049, %v3048
      %v3234 = vpack.c.bf16 %v3051, %v3050
      %v3235 = vpack.c.bf16 %v3053, %v3052
      %v3236 = vpack.c.bf16 %v3055, %v3054
      %v3237 = vpack.c.bf16 %v3057, %v3056
      %v3238 = vpack.c.bf16 %v3059, %v3058
      %v3239 = vpack.c.bf16 %v3061, %v3060
      %v3240 = vpack.c.bf16 %v3063, %v3062
      %v3241 = vpack.c.bf16 %v3065, %v3064
      %v3242 = vpack.c.bf16 %v3067, %v3066
      %v3243 = vpack.c.bf16 %v3069, %v3068
      %v3244 = vpack.c.bf16 %v3071, %v3070
      %v3245 = vpack.c.bf16 %v3073, %v3072
      %v3246 = vpack.c.bf16 %v3075, %v3074
      %v3247 = vpack.c.bf16 %v3077, %v3076
      %v3248 = vpack.c.bf16 %v3079, %v3078
      %v3249 = vpack.c.bf16 %v3081, %v3080
      %v3250 = vpack.c.bf16 %v3083, %v3082
      %v3251 = vpack.c.bf16 %v3085, %v3084
      %v3252 = vpack.c.bf16 %v3087, %v3086
      %v3253 = vpack.c.bf16 %v3089, %v3088
      %v3254 = vpack.c.bf16 %v3091, %v3090
      %v3255 = vpack.c.bf16 %v3093, %v3092
      %v3256 = vpack.c.bf16 %v3095, %v3094
      %v3257 = vpack.c.bf16 %v3097, %v3096
      %v3258 = vpack.c.bf16 %v3099, %v3098
      %v3259 = vpack.c.bf16 %v3101, %v3100
      %v3260 = vpack.c.bf16 %v3103, %v3102
      %v3261 = vpack.c.bf16 %v3105, %v3104
      %v3262 = vpack.c.bf16 %v3107, %v3106
      %v3263 = vpack.c.bf16 %v3109, %v3108
      %v3264 = vpack.c.bf16 %v3111, %v3110
      %v3265 = vpack.c.bf16 %v3113, %v3112
      %v3266 = vpack.c.bf16 %v3115, %v3114
      %v3267 = vpack.c.bf16 %v3117, %v3116
      %v3268 = vpack.c.bf16 %v3119, %v3118
      %v3269 = vpack.c.bf16 %v3121, %v3120
      %v3270 = vpack.c.bf16 %v3123, %v3122
      %v3271 = vpack.c.bf16 %v3125, %v3124
      %v3272 = vpack.c.bf16 %v3127, %v3126
      %v3273 = vpack.c.bf16 %v3129, %v3128
      %v3418 = vunpack.c.l.b16 %v3130
      %v3419 = vunpack.c.h.b16 %v3130
      %v3420 = vunpack.c.l.b16 %v3131
      %v3421 = vunpack.c.h.b16 %v3131
      %v3422 = vunpack.c.l.b16 %v3132
      %v3423 = vunpack.c.h.b16 %v3132
      %v3424 = vunpack.c.l.b16 %v3133
      %v3425 = vunpack.c.h.b16 %v3133
      %v3426 = vunpack.c.l.b16 %v3134
      %v3427 = vunpack.c.h.b16 %v3134
      %v3428 = vunpack.c.l.b16 %v3135
      %v3429 = vunpack.c.h.b16 %v3135
      %v3430 = vunpack.c.l.b16 %v3136
      %v3431 = vunpack.c.h.b16 %v3136
      %v3432 = vunpack.c.l.b16 %v3137
      %v3433 = vunpack.c.h.b16 %v3137
      %v3434 = vunpack.c.l.b16 %v3138
      %v3435 = vunpack.c.h.b16 %v3138
      %v3436 = vunpack.c.l.b16 %v3139
      %v3437 = vunpack.c.h.b16 %v3139
      %v3438 = vunpack.c.l.b16 %v3140
      %v3439 = vunpack.c.h.b16 %v3140
      %v3440 = vunpack.c.l.b16 %v3141
      %v3441 = vunpack.c.h.b16 %v3141
      %v3442 = vunpack.c.l.b16 %v3142
      %v3443 = vunpack.c.h.b16 %v3142
      %v3444 = vunpack.c.l.b16 %v3143
      %v3445 = vunpack.c.h.b16 %v3143
      %v3446 = vunpack.c.l.b16 %v3144
      %v3447 = vunpack.c.h.b16 %v3144
      %v3448 = vunpack.c.l.b16 %v3145
      %v3449 = vunpack.c.h.b16 %v3145
      %v3450 = vunpack.c.l.b16 %v3146
      %v3451 = vunpack.c.h.b16 %v3146
      %v3452 = vunpack.c.l.b16 %v3147
      %v3453 = vunpack.c.h.b16 %v3147
      %v3454 = vunpack.c.l.b16 %v3148
      %v3455 = vunpack.c.h.b16 %v3148
      %v3456 = vunpack.c.l.b16 %v3149
      %v3457 = vunpack.c.h.b16 %v3149
      %v3458 = vunpack.c.l.b16 %v3150
      %v3459 = vunpack.c.h.b16 %v3150
      %v3460 = vunpack.c.l.b16 %v3151
      %v3461 = vunpack.c.h.b16 %v3151
      %v3462 = vunpack.c.l.b16 %v3152
      %v3463 = vunpack.c.h.b16 %v3152
      %v3464 = vunpack.c.l.b16 %v3153
      %v3465 = vunpack.c.h.b16 %v3153
      %v3466 = vunpack.c.l.b16 %v3154
      %v3467 = vunpack.c.h.b16 %v3154
      %v3468 = vunpack.c.l.b16 %v3155
      %v3469 = vunpack.c.h.b16 %v3155
      %v3470 = vunpack.c.l.b16 %v3156
      %v3471 = vunpack.c.h.b16 %v3156
      %v3472 = vunpack.c.l.b16 %v3157
      %v3473 = vunpack.c.h.b16 %v3157
      %v3474 = vunpack.c.l.b16 %v3158
      %v3475 = vunpack.c.h.b16 %v3158
      %v3476 = vunpack.c.l.b16 %v3159
      %v3477 = vunpack.c.h.b16 %v3159
      %v3478 = vunpack.c.l.b16 %v3160
      %v3479 = vunpack.c.h.b16 %v3160
      %v3480 = vunpack.c.l.b16 %v3161
      %v3481 = vunpack.c.h.b16 %v3161
      %v3482 = vunpack.c.l.b16 %v3162
      %v3483 = vunpack.c.h.b16 %v3162
      %v3484 = vunpack.c.l.b16 %v3163
      %v3485 = vunpack.c.h.b16 %v3163
      %v3486 = vunpack.c.l.b16 %v3164
      %v3487 = vunpack.c.h.b16 %v3164
      %v3488 = vunpack.c.l.b16 %v3165
      %v3489 = vunpack.c.h.b16 %v3165
      %v3490 = vunpack.c.l.b16 %v3166
      %v3491 = vunpack.c.h.b16 %v3166
      %v3492 = vunpack.c.l.b16 %v3167
      %v3493 = vunpack.c.h.b16 %v3167
      %v3494 = vunpack.c.l.b16 %v3168
      %v3495 = vunpack.c.h.b16 %v3168
      %v3496 = vunpack.c.l.b16 %v3169
      %v3497 = vunpack.c.h.b16 %v3169
      %v3498 = vunpack.c.l.b16 %v3170
      %v3499 = vunpack.c.h.b16 %v3170
      %v3500 = vunpack.c.l.b16 %v3171
      %v3501 = vunpack.c.h.b16 %v3171
      %v3502 = vunpack.c.l.b16 %v3172
      %v3503 = vunpack.c.h.b16 %v3172
      %v3504 = vunpack.c.l.b16 %v3173
      %v3505 = vunpack.c.h.b16 %v3173
      %v3506 = vunpack.c.l.b16 %v3174
      %v3507 = vunpack.c.h.b16 %v3174
      %v3508 = vunpack.c.l.b16 %v3175
      %v3509 = vunpack.c.h.b16 %v3175
      %v3510 = vunpack.c.l.b16 %v3176
      %v3511 = vunpack.c.h.b16 %v3176
      %v3512 = vunpack.c.l.b16 %v3177
      %v3513 = vunpack.c.h.b16 %v3177
      %v3514 = vunpack.c.l.b16 %v3178
      %v3515 = vunpack.c.h.b16 %v3178
      %v3516 = vunpack.c.l.b16 %v3179
      %v3517 = vunpack.c.h.b16 %v3179
      %v3518 = vunpack.c.l.b16 %v3180
      %v3519 = vunpack.c.h.b16 %v3180
      %v3520 = vunpack.c.l.b16 %v3181
      %v3521 = vunpack.c.h.b16 %v3181
      %v3522 = vunpack.c.l.b16 %v3182
      %v3523 = vunpack.c.h.b16 %v3182
      %v3524 = vunpack.c.l.b16 %v3183
      %v3525 = vunpack.c.h.b16 %v3183
      %v3526 = vunpack.c.l.b16 %v3184
      %v3527 = vunpack.c.h.b16 %v3184
      %v3528 = vunpack.c.l.b16 %v3185
      %v3529 = vunpack.c.h.b16 %v3185
      %v3530 = vunpack.c.l.b16 %v3186
      %v3531 = vunpack.c.h.b16 %v3186
      %v3532 = vunpack.c.l.b16 %v3187
      %v3533 = vunpack.c.h.b16 %v3187
      %v3534 = vunpack.c.l.b16 %v3188
      %v3535 = vunpack.c.h.b16 %v3188
      %v3536 = vunpack.c.l.b16 %v3189
      %v3537 = vunpack.c.h.b16 %v3189
      %v3538 = vunpack.c.l.b16 %v3190
      %v3539 = vunpack.c.h.b16 %v3190
      %v3540 = vunpack.c.l.b16 %v3191
      %v3541 = vunpack.c.h.b16 %v3191
      %v3542 = vunpack.c.l.b16 %v3192
      %v3543 = vunpack.c.h.b16 %v3192
      %v3544 = vunpack.c.l.b16 %v3193
      %v3545 = vunpack.c.h.b16 %v3193
      %v3546 = vunpack.c.l.b16 %v3194
      %v3547 = vunpack.c.h.b16 %v3194
      %v3548 = vunpack.c.l.b16 %v3195
      %v3549 = vunpack.c.h.b16 %v3195
      %v3550 = vunpack.c.l.b16 %v3196
      %v3551 = vunpack.c.h.b16 %v3196
      %v3552 = vunpack.c.l.b16 %v3197
      %v3553 = vunpack.c.h.b16 %v3197
      %v3554 = vunpack.c.l.b16 %v3198
      %v3555 = vunpack.c.h.b16 %v3198
      %v3556 = vunpack.c.l.b16 %v3199
      %v3557 = vunpack.c.h.b16 %v3199
      %v3558 = vunpack.c.l.b16 %v3200
      %v3559 = vunpack.c.h.b16 %v3200
      %v3560 = vunpack.c.l.b16 %v3201
      %v3561 = vunpack.c.h.b16 %v3201
      %v3562 = vunpack.c.l.b16 %v3202
      %v3563 = vunpack.c.h.b16 %v3202
      %v3564 = vunpack.c.l.b16 %v3203
      %v3565 = vunpack.c.h.b16 %v3203
      %v3566 = vunpack.c.l.b16 %v3204
      %v3567 = vunpack.c.h.b16 %v3204
      %v3568 = vunpack.c.l.b16 %v3205
      %v3569 = vunpack.c.h.b16 %v3205
      %v3570 = vunpack.c.l.b16 %v3206
      %v3571 = vunpack.c.h.b16 %v3206
      %v3572 = vunpack.c.l.b16 %v3207
      %v3573 = vunpack.c.h.b16 %v3207
      %v3574 = vunpack.c.l.b16 %v3208
      %v3575 = vunpack.c.h.b16 %v3208
      %v3576 = vunpack.c.l.b16 %v3209
      %v3577 = vunpack.c.h.b16 %v3209
      %v3578 = vunpack.c.l.b16 %v3210
      %v3579 = vunpack.c.h.b16 %v3210
      %v3580 = vunpack.c.l.b16 %v3211
      %v3581 = vunpack.c.h.b16 %v3211
      %v3582 = vunpack.c.l.b16 %v3212
      %v3583 = vunpack.c.h.b16 %v3212
      %v3584 = vunpack.c.l.b16 %v3213
      %v3585 = vunpack.c.h.b16 %v3213
      %v3586 = vunpack.c.l.b16 %v3214
      %v3587 = vunpack.c.h.b16 %v3214
      %v3588 = vunpack.c.l.b16 %v3215
      %v3589 = vunpack.c.h.b16 %v3215
      %v3590 = vunpack.c.l.b16 %v3216
      %v3591 = vunpack.c.h.b16 %v3216
      %v3592 = vunpack.c.l.b16 %v3217
      %v3593 = vunpack.c.h.b16 %v3217
      %v3594 = vunpack.c.l.b16 %v3218
      %v3595 = vunpack.c.h.b16 %v3218
      %v3596 = vunpack.c.l.b16 %v3219
      %v3597 = vunpack.c.h.b16 %v3219
      %v3598 = vunpack.c.l.b16 %v3220
      %v3599 = vunpack.c.h.b16 %v3220
      %v3600 = vunpack.c.l.b16 %v3221
      %v3601 = vunpack.c.h.b16 %v3221
      %v3602 = vunpack.c.l.b16 %v3222
      %v3603 = vunpack.c.h.b16 %v3222
      %v3604 = vunpack.c.l.b16 %v3223
      %v3605 = vunpack.c.h.b16 %v3223
      %v3606 = vunpack.c.l.b16 %v3224
      %v3607 = vunpack.c.h.b16 %v3224
      %v3608 = vunpack.c.l.b16 %v3225
      %v3609 = vunpack.c.h.b16 %v3225
      %v3610 = vunpack.c.l.b16 %v3226
      %v3611 = vunpack.c.h.b16 %v3226
      %v3612 = vunpack.c.l.b16 %v3227
      %v3613 = vunpack.c.h.b16 %v3227
      %v3614 = vunpack.c.l.b16 %v3228
      %v3615 = vunpack.c.h.b16 %v3228
      %v3616 = vunpack.c.l.b16 %v3229
      %v3617 = vunpack.c.h.b16 %v3229
      %v3618 = vunpack.c.l.b16 %v3230
      %v3619 = vunpack.c.h.b16 %v3230
      %v3620 = vunpack.c.l.b16 %v3231
      %v3621 = vunpack.c.h.b16 %v3231
      %v3622 = vunpack.c.l.b16 %v3232
      %v3623 = vunpack.c.h.b16 %v3232
      %v3624 = vunpack.c.l.b16 %v3233
      %v3625 = vunpack.c.h.b16 %v3233
      %v3626 = vunpack.c.l.b16 %v3234
      %v3627 = vunpack.c.h.b16 %v3234
      %v3628 = vunpack.c.l.b16 %v3235
      %v3629 = vunpack.c.h.b16 %v3235
      %v3630 = vunpack.c.l.b16 %v3236
      %v3631 = vunpack.c.h.b16 %v3236
      %v3632 = vunpack.c.l.b16 %v3237
      %v3633 = vunpack.c.h.b16 %v3237
      %v3634 = vunpack.c.l.b16 %v3238
      %v3635 = vunpack.c.h.b16 %v3238
      %v3636 = vunpack.c.l.b16 %v3239
      %v3637 = vunpack.c.h.b16 %v3239
      %v3638 = vunpack.c.l.b16 %v3240
      %v3639 = vunpack.c.h.b16 %v3240
      %v3640 = vunpack.c.l.b16 %v3241
      %v3641 = vunpack.c.h.b16 %v3241
      %v3642 = vunpack.c.l.b16 %v3242
      %v3643 = vunpack.c.h.b16 %v3242
      %v3644 = vunpack.c.l.b16 %v3243
      %v3645 = vunpack.c.h.b16 %v3243
      %v3646 = vunpack.c.l.b16 %v3244
      %v3647 = vunpack.c.h.b16 %v3244
      %v3648 = vunpack.c.l.b16 %v3245
      %v3649 = vunpack.c.h.b16 %v3245
      %v3650 = vunpack.c.l.b16 %v3246
      %v3651 = vunpack.c.h.b16 %v3246
      %v3652 = vunpack.c.l.b16 %v3247
      %v3653 = vunpack.c.h.b16 %v3247
      %v3654 = vunpack.c.l.b16 %v3248
      %v3655 = vunpack.c.h.b16 %v3248
      %v3656 = vunpack.c.l.b16 %v3249
      %v3657 = vunpack.c.h.b16 %v3249
      %v3658 = vunpack.c.l.b16 %v3250
      %v3659 = vunpack.c.h.b16 %v3250
      %v3660 = vunpack.c.l.b16 %v3251
      %v3661 = vunpack.c.h.b16 %v3251
      %v3662 = vunpack.c.l.b16 %v3252
      %v3663 = vunpack.c.h.b16 %v3252
      %v3664 = vunpack.c.l.b16 %v3253
      %v3665 = vunpack.c.h.b16 %v3253
      %v3666 = vunpack.c.l.b16 %v3254
      %v3667 = vunpack.c.h.b16 %v3254
      %v3668 = vunpack.c.l.b16 %v3255
      %v3669 = vunpack.c.h.b16 %v3255
      %v3670 = vunpack.c.l.b16 %v3256
      %v3671 = vunpack.c.h.b16 %v3256
      %v3672 = vunpack.c.l.b16 %v3257
      %v3673 = vunpack.c.h.b16 %v3257
      %v3674 = vunpack.c.l.b16 %v3258
      %v3675 = vunpack.c.h.b16 %v3258
      %v3676 = vunpack.c.l.b16 %v3259
      %v3677 = vunpack.c.h.b16 %v3259
      %v3678 = vunpack.c.l.b16 %v3260
      %v3679 = vunpack.c.h.b16 %v3260
      %v3680 = vunpack.c.l.b16 %v3261
      %v3681 = vunpack.c.h.b16 %v3261
      %v3682 = vunpack.c.l.b16 %v3262
      %v3683 = vunpack.c.h.b16 %v3262
      %v3684 = vunpack.c.l.b16 %v3263
      %v3685 = vunpack.c.h.b16 %v3263
      %v3686 = vunpack.c.l.b16 %v3264
      %v3687 = vunpack.c.h.b16 %v3264
      %v3688 = vunpack.c.l.b16 %v3265
      %v3689 = vunpack.c.h.b16 %v3265
      %v3690 = vunpack.c.l.b16 %v3266
      %v3691 = vunpack.c.h.b16 %v3266
      %v3692 = vunpack.c.l.b16 %v3267
      %v3693 = vunpack.c.h.b16 %v3267
      %v3694 = vunpack.c.l.b16 %v3268
      %v3695 = vunpack.c.h.b16 %v3268
      %v3696 = vunpack.c.l.b16 %v3269
      %v3697 = vunpack.c.h.b16 %v3269
      %v3698 = vunpack.c.l.b16 %v3270
      %v3699 = vunpack.c.h.b16 %v3270
      %v3700 = vunpack.c.l.b16 %v3271
      %v3701 = vunpack.c.h.b16 %v3271
      %v3702 = vunpack.c.l.b16 %v3272
      %v3703 = vunpack.c.h.b16 %v3272
      %v3704 = vunpack.c.l.b16 %v3273
      %v3705 = vunpack.c.h.b16 %v3273
      %v3706 = vpack.c.b16 %v3418, %v3418
      %v3707 = vpack.c.b16 %v3419, %v3419
      %v3708 = vpack.c.b16 %v3420, %v3420
      %v3709 = vpack.c.b16 %v3421, %v3421
      %v3710 = vpack.c.b16 %v3422, %v3422
      %v3711 = vpack.c.b16 %v3423, %v3423
      %v3712 = vpack.c.b16 %v3424, %v3424
      %v3713 = vpack.c.b16 %v3425, %v3425
      %v3714 = vpack.c.b16 %v3426, %v3426
      %v3715 = vpack.c.b16 %v3427, %v3427
      %v3716 = vpack.c.b16 %v3428, %v3428
      %v3717 = vpack.c.b16 %v3429, %v3429
      %v3718 = vpack.c.b16 %v3430, %v3430
      %v3719 = vpack.c.b16 %v3431, %v3431
      %v3720 = vpack.c.b16 %v3432, %v3432
      %v3721 = vpack.c.b16 %v3433, %v3433
      %v3722 = vpack.c.b16 %v3434, %v3434
      %v3723 = vpack.c.b16 %v3435, %v3435
      %v3724 = vpack.c.b16 %v3436, %v3436
      %v3725 = vpack.c.b16 %v3437, %v3437
      %v3726 = vpack.c.b16 %v3438, %v3438
      %v3727 = vpack.c.b16 %v3439, %v3439
      %v3728 = vpack.c.b16 %v3440, %v3440
      %v3729 = vpack.c.b16 %v3441, %v3441
      %v3730 = vpack.c.b16 %v3442, %v3442
      %v3731 = vpack.c.b16 %v3443, %v3443
      %v3732 = vpack.c.b16 %v3444, %v3444
      %v3733 = vpack.c.b16 %v3445, %v3445
      %v3734 = vpack.c.b16 %v3446, %v3446
      %v3735 = vpack.c.b16 %v3447, %v3447
      %v3736 = vpack.c.b16 %v3448, %v3448
      %v3737 = vpack.c.b16 %v3449, %v3449
      %v3738 = vpack.c.b16 %v3450, %v3450
      %v3739 = vpack.c.b16 %v3451, %v3451
      %v3740 = vpack.c.b16 %v3452, %v3452
      %v3741 = vpack.c.b16 %v3453, %v3453
      %v3742 = vpack.c.b16 %v3454, %v3454
      %v3743 = vpack.c.b16 %v3455, %v3455
      %v3744 = vpack.c.b16 %v3456, %v3456
      %v3745 = vpack.c.b16 %v3457, %v3457
      %v3746 = vpack.c.b16 %v3458, %v3458
      %v3747 = vpack.c.b16 %v3459, %v3459
      %v3748 = vpack.c.b16 %v3460, %v3460
      %v3749 = vpack.c.b16 %v3461, %v3461
      %v3750 = vpack.c.b16 %v3462, %v3462
      %v3751 = vpack.c.b16 %v3463, %v3463
      %v3752 = vpack.c.b16 %v3464, %v3464
      %v3753 = vpack.c.b16 %v3465, %v3465
      %v3754 = vpack.c.b16 %v3466, %v3466
      %v3755 = vpack.c.b16 %v3467, %v3467
      %v3756 = vpack.c.b16 %v3468, %v3468
      %v3757 = vpack.c.b16 %v3469, %v3469
      %v3758 = vpack.c.b16 %v3470, %v3470
      %v3759 = vpack.c.b16 %v3471, %v3471
      %v3760 = vpack.c.b16 %v3472, %v3472
      %v3761 = vpack.c.b16 %v3473, %v3473
      %v3762 = vpack.c.b16 %v3474, %v3474
      %v3763 = vpack.c.b16 %v3475, %v3475
      %v3764 = vpack.c.b16 %v3476, %v3476
      %v3765 = vpack.c.b16 %v3477, %v3477
      %v3766 = vpack.c.b16 %v3478, %v3478
      %v3767 = vpack.c.b16 %v3479, %v3479
      %v3768 = vpack.c.b16 %v3480, %v3480
      %v3769 = vpack.c.b16 %v3481, %v3481
      %v3770 = vpack.c.b16 %v3482, %v3482
      %v3771 = vpack.c.b16 %v3483, %v3483
      %v3772 = vpack.c.b16 %v3484, %v3484
      %v3773 = vpack.c.b16 %v3485, %v3485
      %v3774 = vpack.c.b16 %v3486, %v3486
      %v3775 = vpack.c.b16 %v3487, %v3487
      %v3776 = vpack.c.b16 %v3488, %v3488
      %v3777 = vpack.c.b16 %v3489, %v3489
      %v3778 = vpack.c.b16 %v3490, %v3490
      %v3779 = vpack.c.b16 %v3491, %v3491
      %v3780 = vpack.c.b16 %v3492, %v3492
      %v3781 = vpack.c.b16 %v3493, %v3493
      %v3782 = vpack.c.b16 %v3494, %v3494
      %v3783 = vpack.c.b16 %v3495, %v3495
      %v3784 = vpack.c.b16 %v3496, %v3496
      %v3785 = vpack.c.b16 %v3497, %v3497
      %v3786 = vpack.c.b16 %v3498, %v3498
      %v3787 = vpack.c.b16 %v3499, %v3499
      %v3788 = vpack.c.b16 %v3500, %v3500
      %v3789 = vpack.c.b16 %v3501, %v3501
      %v3790 = vpack.c.b16 %v3502, %v3502
      %v3791 = vpack.c.b16 %v3503, %v3503
      %v3792 = vpack.c.b16 %v3504, %v3504
      %v3793 = vpack.c.b16 %v3505, %v3505
      %v3794 = vpack.c.b16 %v3506, %v3506
      %v3795 = vpack.c.b16 %v3507, %v3507
      %v3796 = vpack.c.b16 %v3508, %v3508
      %v3797 = vpack.c.b16 %v3509, %v3509
      %v3798 = vpack.c.b16 %v3510, %v3510
      %v3799 = vpack.c.b16 %v3511, %v3511
      %v3800 = vpack.c.b16 %v3512, %v3512
      %v3801 = vpack.c.b16 %v3513, %v3513
      %v3802 = vpack.c.b16 %v3514, %v3514
      %v3803 = vpack.c.b16 %v3515, %v3515
      %v3804 = vpack.c.b16 %v3516, %v3516
      %v3805 = vpack.c.b16 %v3517, %v3517
      %v3806 = vpack.c.b16 %v3518, %v3518
      %v3807 = vpack.c.b16 %v3519, %v3519
      %v3808 = vpack.c.b16 %v3520, %v3520
      %v3809 = vpack.c.b16 %v3521, %v3521
      %v3810 = vpack.c.b16 %v3522, %v3522
      %v3811 = vpack.c.b16 %v3523, %v3523
      %v3812 = vpack.c.b16 %v3524, %v3524
      %v3813 = vpack.c.b16 %v3525, %v3525
      %v3814 = vpack.c.b16 %v3526, %v3526
      %v3815 = vpack.c.b16 %v3527, %v3527
      %v3816 = vpack.c.b16 %v3528, %v3528
      %v3817 = vpack.c.b16 %v3529, %v3529
      %v3818 = vpack.c.b16 %v3530, %v3530
      %v3819 = vpack.c.b16 %v3531, %v3531
      %v3820 = vpack.c.b16 %v3532, %v3532
      %v3821 = vpack.c.b16 %v3533, %v3533
      %v3822 = vpack.c.b16 %v3534, %v3534
      %v3823 = vpack.c.b16 %v3535, %v3535
      %v3824 = vpack.c.b16 %v3536, %v3536
      %v3825 = vpack.c.b16 %v3537, %v3537
      %v3826 = vpack.c.b16 %v3538, %v3538
      %v3827 = vpack.c.b16 %v3539, %v3539
      %v3828 = vpack.c.b16 %v3540, %v3540
      %v3829 = vpack.c.b16 %v3541, %v3541
      %v3830 = vpack.c.b16 %v3542, %v3542
      %v3831 = vpack.c.b16 %v3543, %v3543
      %v3832 = vpack.c.b16 %v3544, %v3544
      %v3833 = vpack.c.b16 %v3545, %v3545
      %v3834 = vpack.c.b16 %v3546, %v3546
      %v3835 = vpack.c.b16 %v3547, %v3547
      %v3836 = vpack.c.b16 %v3548, %v3548
      %v3837 = vpack.c.b16 %v3549, %v3549
      %v3838 = vpack.c.b16 %v3550, %v3550
      %v3839 = vpack.c.b16 %v3551, %v3551
      %v3840 = vpack.c.b16 %v3552, %v3552
      %v3841 = vpack.c.b16 %v3553, %v3553
      %v3842 = vpack.c.b16 %v3554, %v3554
      %v3843 = vpack.c.b16 %v3555, %v3555
      %v3844 = vpack.c.b16 %v3556, %v3556
      %v3845 = vpack.c.b16 %v3557, %v3557
      %v3846 = vpack.c.b16 %v3558, %v3558
      %v3847 = vpack.c.b16 %v3559, %v3559
      %v3848 = vpack.c.b16 %v3560, %v3560
      %v3849 = vpack.c.b16 %v3561, %v3561
      %v3850 = vpack.c.b16 %v3562, %v3562
      %v3851 = vpack.c.b16 %v3563, %v3563
      %v3852 = vpack.c.b16 %v3564, %v3564
      %v3853 = vpack.c.b16 %v3565, %v3565
      %v3854 = vpack.c.b16 %v3566, %v3566
      %v3855 = vpack.c.b16 %v3567, %v3567
      %v3856 = vpack.c.b16 %v3568, %v3568
      %v3857 = vpack.c.b16 %v3569, %v3569
      %v3858 = vpack.c.b16 %v3570, %v3570
      %v3859 = vpack.c.b16 %v3571, %v3571
      %v3860 = vpack.c.b16 %v3572, %v3572
      %v3861 = vpack.c.b16 %v3573, %v3573
      %v3862 = vpack.c.b16 %v3574, %v3574
      %v3863 = vpack.c.b16 %v3575, %v3575
      %v3864 = vpack.c.b16 %v3576, %v3576
      %v3865 = vpack.c.b16 %v3577, %v3577
      %v3866 = vpack.c.b16 %v3578, %v3578
      %v3867 = vpack.c.b16 %v3579, %v3579
      %v3868 = vpack.c.b16 %v3580, %v3580
      %v3869 = vpack.c.b16 %v3581, %v3581
      %v3870 = vpack.c.b16 %v3582, %v3582
      %v3871 = vpack.c.b16 %v3583, %v3583
      %v3872 = vpack.c.b16 %v3584, %v3584
      %v3873 = vpack.c.b16 %v3585, %v3585
      %v3874 = vpack.c.b16 %v3586, %v3586
      %v3875 = vpack.c.b16 %v3587, %v3587
      %v3876 = vpack.c.b16 %v3588, %v3588
      %v3877 = vpack.c.b16 %v3589, %v3589
      %v3878 = vpack.c.b16 %v3590, %v3590
      %v3879 = vpack.c.b16 %v3591, %v3591
      %v3880 = vpack.c.b16 %v3592, %v3592
      %v3881 = vpack.c.b16 %v3593, %v3593
      %v3882 = vpack.c.b16 %v3594, %v3594
      %v3883 = vpack.c.b16 %v3595, %v3595
      %v3884 = vpack.c.b16 %v3596, %v3596
      %v3885 = vpack.c.b16 %v3597, %v3597
      %v3886 = vpack.c.b16 %v3598, %v3598
      %v3887 = vpack.c.b16 %v3599, %v3599
      %v3888 = vpack.c.b16 %v3600, %v3600
      %v3889 = vpack.c.b16 %v3601, %v3601
      %v3890 = vpack.c.b16 %v3602, %v3602
      %v3891 = vpack.c.b16 %v3603, %v3603
      %v3892 = vpack.c.b16 %v3604, %v3604
      %v3893 = vpack.c.b16 %v3605, %v3605
      %v3894 = vpack.c.b16 %v3606, %v3606
      %v3895 = vpack.c.b16 %v3607, %v3607
      %v3896 = vpack.c.b16 %v3608, %v3608
      %v3897 = vpack.c.b16 %v3609, %v3609
      %v3898 = vpack.c.b16 %v3610, %v3610
      %v3899 = vpack.c.b16 %v3611, %v3611
      %v3900 = vpack.c.b16 %v3612, %v3612
      %v3901 = vpack.c.b16 %v3613, %v3613
      %v3902 = vpack.c.b16 %v3614, %v3614
      %v3903 = vpack.c.b16 %v3615, %v3615
      %v3904 = vpack.c.b16 %v3616, %v3616
      %v3905 = vpack.c.b16 %v3617, %v3617
      %v3906 = vpack.c.b16 %v3618, %v3618
      %v3907 = vpack.c.b16 %v3619, %v3619
      %v3908 = vpack.c.b16 %v3620, %v3620
      %v3909 = vpack.c.b16 %v3621, %v3621
      %v3910 = vpack.c.b16 %v3622, %v3622
      %v3911 = vpack.c.b16 %v3623, %v3623
      %v3912 = vpack.c.b16 %v3624, %v3624
      %v3913 = vpack.c.b16 %v3625, %v3625
      %v3914 = vpack.c.b16 %v3626, %v3626
      %v3915 = vpack.c.b16 %v3627, %v3627
      %v3916 = vpack.c.b16 %v3628, %v3628
      %v3917 = vpack.c.b16 %v3629, %v3629
      %v3918 = vpack.c.b16 %v3630, %v3630
      %v3919 = vpack.c.b16 %v3631, %v3631
      %v3920 = vpack.c.b16 %v3632, %v3632
      %v3921 = vpack.c.b16 %v3633, %v3633
      %v3922 = vpack.c.b16 %v3634, %v3634
      %v3923 = vpack.c.b16 %v3635, %v3635
      %v3924 = vpack.c.b16 %v3636, %v3636
      %v3925 = vpack.c.b16 %v3637, %v3637
      %v3926 = vpack.c.b16 %v3638, %v3638
      %v3927 = vpack.c.b16 %v3639, %v3639
      %v3928 = vpack.c.b16 %v3640, %v3640
      %v3929 = vpack.c.b16 %v3641, %v3641
      %v3930 = vpack.c.b16 %v3642, %v3642
      %v3931 = vpack.c.b16 %v3643, %v3643
      %v3932 = vpack.c.b16 %v3644, %v3644
      %v3933 = vpack.c.b16 %v3645, %v3645
      %v3934 = vpack.c.b16 %v3646, %v3646
      %v3935 = vpack.c.b16 %v3647, %v3647
      %v3936 = vpack.c.b16 %v3648, %v3648
      %v3937 = vpack.c.b16 %v3649, %v3649
      %v3938 = vpack.c.b16 %v3650, %v3650
      %v3939 = vpack.c.b16 %v3651, %v3651
      %v3940 = vpack.c.b16 %v3652, %v3652
      %v3941 = vpack.c.b16 %v3653, %v3653
      %v3942 = vpack.c.b16 %v3654, %v3654
      %v3943 = vpack.c.b16 %v3655, %v3655
      %v3944 = vpack.c.b16 %v3656, %v3656
      %v3945 = vpack.c.b16 %v3657, %v3657
      %v3946 = vpack.c.b16 %v3658, %v3658
      %v3947 = vpack.c.b16 %v3659, %v3659
      %v3948 = vpack.c.b16 %v3660, %v3660
      %v3949 = vpack.c.b16 %v3661, %v3661
      %v3950 = vpack.c.b16 %v3662, %v3662
      %v3951 = vpack.c.b16 %v3663, %v3663
      %v3952 = vpack.c.b16 %v3664, %v3664
      %v3953 = vpack.c.b16 %v3665, %v3665
      %v3954 = vpack.c.b16 %v3666, %v3666
      %v3955 = vpack.c.b16 %v3667, %v3667
      %v3956 = vpack.c.b16 %v3668, %v3668
      %v3957 = vpack.c.b16 %v3669, %v3669
      %v3958 = vpack.c.b16 %v3670, %v3670
      %v3959 = vpack.c.b16 %v3671, %v3671
      %v3960 = vpack.c.b16 %v3672, %v3672
      %v3961 = vpack.c.b16 %v3673, %v3673
      %v3962 = vpack.c.b16 %v3674, %v3674
      %v3963 = vpack.c.b16 %v3675, %v3675
      %v3964 = vpack.c.b16 %v3676, %v3676
      %v3965 = vpack.c.b16 %v3677, %v3677
      %v3966 = vpack.c.b16 %v3678, %v3678
      %v3967 = vpack.c.b16 %v3679, %v3679
      %v3968 = vpack.c.b16 %v3680, %v3680
      %v3969 = vpack.c.b16 %v3681, %v3681
      %v3970 = vpack.c.b16 %v3682, %v3682
      %v3971 = vpack.c.b16 %v3683, %v3683
      %v3972 = vpack.c.b16 %v3684, %v3684
      %v3973 = vpack.c.b16 %v3685, %v3685
      %v3974 = vpack.c.b16 %v3686, %v3686
      %v3975 = vpack.c.b16 %v3687, %v3687
      %v3976 = vpack.c.b16 %v3688, %v3688
      %v3977 = vpack.c.b16 %v3689, %v3689
      %v3978 = vpack.c.b16 %v3690, %v3690
      %v3979 = vpack.c.b16 %v3691, %v3691
      %v3980 = vpack.c.b16 %v3692, %v3692
      %v3981 = vpack.c.b16 %v3693, %v3693
      %v3982 = vpack.c.b16 %v3694, %v3694
      %v3983 = vpack.c.b16 %v3695, %v3695
      %v3984 = vpack.c.b16 %v3696, %v3696
      %v3985 = vpack.c.b16 %v3697, %v3697
      %v3986 = vpack.c.b16 %v3698, %v3698
      %v3987 = vpack.c.b16 %v3699, %v3699
      %v3988 = vpack.c.b16 %v3700, %v3700
      %v3989 = vpack.c.b16 %v3701, %v3701
      %v3990 = vpack.c.b16 %v3702, %v3702
      %v3991 = vpack.c.b16 %v3703, %v3703
      %v3992 = vpack.c.b16 %v3704, %v3704
      %v3993 = vpack.c.b16 %v3705, %v3705
      %vm4282 = vcmask 257024
      %4283 = vst.msk [vmem:[%s172] sm:$0xf] %vm4282, %v3706
      %4284 = vst.msk [vmem:[%s172 + $0x4] sm:$0xf] %vm4282, %v3707
      %4285 = vst.msk [vmem:[%s172 + $0x8] sm:$0xf] %vm4282, %v3708
      %4286 = vst.msk [vmem:[%s172 + $0xc] sm:$0xf] %vm4282, %v3709
      %4287 = vst.msk [vmem:[%s172 + $0x10] sm:$0xf] %vm4282, %v3710
      %4288 = vst.msk [vmem:[%s172 + $0x14] sm:$0xf] %vm4282, %v3711
      %4289 = vst.msk [vmem:[%s172 + $0x18] sm:$0xf] %vm4282, %v3712
      %4290 = vst.msk [vmem:[%s172 + $0x1c] sm:$0xf] %vm4282, %v3713
      %4291 = vst.msk [vmem:[%s172 + $0x20] sm:$0xf] %vm4282, %v3714
      %4292 = vst.msk [vmem:[%s172 + $0x24] sm:$0xf] %vm4282, %v3715
      %4293 = vst.msk [vmem:[%s172 + $0x28] sm:$0xf] %vm4282, %v3716
      %4294 = vst.msk [vmem:[%s172 + $0x2c] sm:$0xf] %vm4282, %v3717
      %4295 = vst.msk [vmem:[%s172 + $0x30] sm:$0xf] %vm4282, %v3718
      %4296 = vst.msk [vmem:[%s172 + $0x34] sm:$0xf] %vm4282, %v3719
      %4297 = vst.msk [vmem:[%s172 + $0x38] sm:$0xf] %vm4282, %v3720
      %4298 = vst.msk [vmem:[%s172 + $0x3c] sm:$0xf] %vm4282, %v3721
      %4299 = vst.msk [vmem:[%s172 + $0x40] sm:$0xf] %vm4282, %v3722
      %4300 = vst.msk [vmem:[%s172 + $0x44] sm:$0xf] %vm4282, %v3723
      %4301 = vst.msk [vmem:[%s172 + $0x48] sm:$0xf] %vm4282, %v3724
      %4302 = vst.msk [vmem:[%s172 + $0x4c] sm:$0xf] %vm4282, %v3725
      %4303 = vst.msk [vmem:[%s172 + $0x50] sm:$0xf] %vm4282, %v3726
      %4304 = vst.msk [vmem:[%s172 + $0x54] sm:$0xf] %vm4282, %v3727
      %4305 = vst.msk [vmem:[%s172 + $0x58] sm:$0xf] %vm4282, %v3728
      %4306 = vst.msk [vmem:[%s172 + $0x5c] sm:$0xf] %vm4282, %v3729
      %4307 = vst.msk [vmem:[%s172 + $0x60] sm:$0xf] %vm4282, %v3730
      %4308 = vst.msk [vmem:[%s172 + $0x64] sm:$0xf] %vm4282, %v3731
      %4309 = vst.msk [vmem:[%s172 + $0x68] sm:$0xf] %vm4282, %v3732
      %4310 = vst.msk [vmem:[%s172 + $0x6c] sm:$0xf] %vm4282, %v3733
      %4311 = vst.msk [vmem:[%s172 + $0x70] sm:$0xf] %vm4282, %v3734
      %4312 = vst.msk [vmem:[%s172 + $0x74] sm:$0xf] %vm4282, %v3735
      %4313 = vst.msk [vmem:[%s172 + $0x78] sm:$0xf] %vm4282, %v3736
      %4314 = vst.msk [vmem:[%s172 + $0x7c] sm:$0xf] %vm4282, %v3737
      %4315 = vst.msk [vmem:[%s172 + $0x80] sm:$0xf] %vm4282, %v3738
      %4316 = vst.msk [vmem:[%s172 + $0x84] sm:$0xf] %vm4282, %v3739
      %4317 = vst.msk [vmem:[%s172 + $0x88] sm:$0xf] %vm4282, %v3740
      %4318 = vst.msk [vmem:[%s172 + $0x8c] sm:$0xf] %vm4282, %v3741
      %4319 = vst.msk [vmem:[%s172 + $0x90] sm:$0xf] %vm4282, %v3742
      %4320 = vst.msk [vmem:[%s172 + $0x94] sm:$0xf] %vm4282, %v3743
      %4321 = vst.msk [vmem:[%s172 + $0x98] sm:$0xf] %vm4282, %v3744
      %4322 = vst.msk [vmem:[%s172 + $0x9c] sm:$0xf] %vm4282, %v3745
      %4323 = vst.msk [vmem:[%s172 + $0xa0] sm:$0xf] %vm4282, %v3746
      %4324 = vst.msk [vmem:[%s172 + $0xa4] sm:$0xf] %vm4282, %v3747
      %4325 = vst.msk [vmem:[%s172 + $0xa8] sm:$0xf] %vm4282, %v3748
      %4326 = vst.msk [vmem:[%s172 + $0xac] sm:$0xf] %vm4282, %v3749
      %4327 = vst.msk [vmem:[%s172 + $0xb0] sm:$0xf] %vm4282, %v3750
      %4328 = vst.msk [vmem:[%s172 + $0xb4] sm:$0xf] %vm4282, %v3751
      %4329 = vst.msk [vmem:[%s172 + $0xb8] sm:$0xf] %vm4282, %v3752
      %4330 = vst.msk [vmem:[%s172 + $0xbc] sm:$0xf] %vm4282, %v3753
      %4331 = vst.msk [vmem:[%s172 + $0xc0] sm:$0xf] %vm4282, %v3754
      %4332 = vst.msk [vmem:[%s172 + $0xc4] sm:$0xf] %vm4282, %v3755
      %4333 = vst.msk [vmem:[%s172 + $0xc8] sm:$0xf] %vm4282, %v3756
      %4334 = vst.msk [vmem:[%s172 + $0xcc] sm:$0xf] %vm4282, %v3757
      %4335 = vst.msk [vmem:[%s172 + $0xd0] sm:$0xf] %vm4282, %v3758
      %4336 = vst.msk [vmem:[%s172 + $0xd4] sm:$0xf] %vm4282, %v3759
      %4337 = vst.msk [vmem:[%s172 + $0xd8] sm:$0xf] %vm4282, %v3760
      %4338 = vst.msk [vmem:[%s172 + $0xdc] sm:$0xf] %vm4282, %v3761
      %4339 = vst.msk [vmem:[%s172 + $0xe0] sm:$0xf] %vm4282, %v3762
      %4340 = vst.msk [vmem:[%s172 + $0xe4] sm:$0xf] %vm4282, %v3763
      %4341 = vst.msk [vmem:[%s172 + $0xe8] sm:$0xf] %vm4282, %v3764
      %4342 = vst.msk [vmem:[%s172 + $0xec] sm:$0xf] %vm4282, %v3765
      %4343 = vst.msk [vmem:[%s172 + $0xf0] sm:$0xf] %vm4282, %v3766
      %4344 = vst.msk [vmem:[%s172 + $0xf4] sm:$0xf] %vm4282, %v3767
      %4345 = vst.msk [vmem:[%s172 + $0xf8] sm:$0xf] %vm4282, %v3768
      %4346 = vst.msk [vmem:[%s172 + $0xfc] sm:$0xf] %vm4282, %v3769
      %4347 = vst.msk [vmem:[%s172 + $0x100] sm:$0xf] %vm4282, %v3770
      %4348 = vst.msk [vmem:[%s172 + $0x104] sm:$0xf] %vm4282, %v3771
      %4349 = vst.msk [vmem:[%s172 + $0x108] sm:$0xf] %vm4282, %v3772
      %4350 = vst.msk [vmem:[%s172 + $0x10c] sm:$0xf] %vm4282, %v3773
      %4351 = vst.msk [vmem:[%s172 + $0x110] sm:$0xf] %vm4282, %v3774
      %4352 = vst.msk [vmem:[%s172 + $0x114] sm:$0xf] %vm4282, %v3775
      %4353 = vst.msk [vmem:[%s172 + $0x118] sm:$0xf] %vm4282, %v3776
      %4354 = vst.msk [vmem:[%s172 + $0x11c] sm:$0xf] %vm4282, %v3777
      %4355 = vst.msk [vmem:[%s172 + $0x120] sm:$0xf] %vm4282, %v3778
      %4356 = vst.msk [vmem:[%s172 + $0x124] sm:$0xf] %vm4282, %v3779
      %4357 = vst.msk [vmem:[%s172 + $0x128] sm:$0xf] %vm4282, %v3780
      %4358 = vst.msk [vmem:[%s172 + $0x12c] sm:$0xf] %vm4282, %v3781
      %4359 = vst.msk [vmem:[%s172 + $0x130] sm:$0xf] %vm4282, %v3782
      %4360 = vst.msk [vmem:[%s172 + $0x134] sm:$0xf] %vm4282, %v3783
      %4361 = vst.msk [vmem:[%s172 + $0x138] sm:$0xf] %vm4282, %v3784
      %4362 = vst.msk [vmem:[%s172 + $0x13c] sm:$0xf] %vm4282, %v3785
      %4363 = vst.msk [vmem:[%s172 + $0x140] sm:$0xf] %vm4282, %v3786
      %4364 = vst.msk [vmem:[%s172 + $0x144] sm:$0xf] %vm4282, %v3787
      %4365 = vst.msk [vmem:[%s172 + $0x148] sm:$0xf] %vm4282, %v3788
      %4366 = vst.msk [vmem:[%s172 + $0x14c] sm:$0xf] %vm4282, %v3789
      %4367 = vst.msk [vmem:[%s172 + $0x150] sm:$0xf] %vm4282, %v3790
      %4368 = vst.msk [vmem:[%s172 + $0x154] sm:$0xf] %vm4282, %v3791
      %4369 = vst.msk [vmem:[%s172 + $0x158] sm:$0xf] %vm4282, %v3792
      %4370 = vst.msk [vmem:[%s172 + $0x15c] sm:$0xf] %vm4282, %v3793
      %4371 = vst.msk [vmem:[%s172 + $0x160] sm:$0xf] %vm4282, %v3794
      %4372 = vst.msk [vmem:[%s172 + $0x164] sm:$0xf] %vm4282, %v3795
      %4373 = vst.msk [vmem:[%s172 + $0x168] sm:$0xf] %vm4282, %v3796
      %4374 = vst.msk [vmem:[%s172 + $0x16c] sm:$0xf] %vm4282, %v3797
      %4375 = vst.msk [vmem:[%s172 + $0x170] sm:$0xf] %vm4282, %v3798
      %4376 = vst.msk [vmem:[%s172 + $0x174] sm:$0xf] %vm4282, %v3799
      %4377 = vst.msk [vmem:[%s172 + $0x178] sm:$0xf] %vm4282, %v3800
      %4378 = vst.msk [vmem:[%s172 + $0x17c] sm:$0xf] %vm4282, %v3801
      %4379 = vst.msk [vmem:[%s172 + $0x180] sm:$0xf] %vm4282, %v3802
      %4380 = vst.msk [vmem:[%s172 + $0x184] sm:$0xf] %vm4282, %v3803
      %4381 = vst.msk [vmem:[%s172 + $0x188] sm:$0xf] %vm4282, %v3804
      %4382 = vst.msk [vmem:[%s172 + $0x18c] sm:$0xf] %vm4282, %v3805
      %4383 = vst.msk [vmem:[%s172 + $0x190] sm:$0xf] %vm4282, %v3806
      %4384 = vst.msk [vmem:[%s172 + $0x194] sm:$0xf] %vm4282, %v3807
      %4385 = vst.msk [vmem:[%s172 + $0x198] sm:$0xf] %vm4282, %v3808
      %4386 = vst.msk [vmem:[%s172 + $0x19c] sm:$0xf] %vm4282, %v3809
      %4387 = vst.msk [vmem:[%s172 + $0x1a0] sm:$0xf] %vm4282, %v3810
      %4388 = vst.msk [vmem:[%s172 + $0x1a4] sm:$0xf] %vm4282, %v3811
      %4389 = vst.msk [vmem:[%s172 + $0x1a8] sm:$0xf] %vm4282, %v3812
      %4390 = vst.msk [vmem:[%s172 + $0x1ac] sm:$0xf] %vm4282, %v3813
      %4391 = vst.msk [vmem:[%s172 + $0x1b0] sm:$0xf] %vm4282, %v3814
      %4392 = vst.msk [vmem:[%s172 + $0x1b4] sm:$0xf] %vm4282, %v3815
      %4393 = vst.msk [vmem:[%s172 + $0x1b8] sm:$0xf] %vm4282, %v3816
      %4394 = vst.msk [vmem:[%s172 + $0x1bc] sm:$0xf] %vm4282, %v3817
      %4395 = vst.msk [vmem:[%s172 + $0x1c0] sm:$0xf] %vm4282, %v3818
      %4396 = vst.msk [vmem:[%s172 + $0x1c4] sm:$0xf] %vm4282, %v3819
      %4397 = vst.msk [vmem:[%s172 + $0x1c8] sm:$0xf] %vm4282, %v3820
      %4398 = vst.msk [vmem:[%s172 + $0x1cc] sm:$0xf] %vm4282, %v3821
      %4399 = vst.msk [vmem:[%s172 + $0x1d0] sm:$0xf] %vm4282, %v3822
      %4400 = vst.msk [vmem:[%s172 + $0x1d4] sm:$0xf] %vm4282, %v3823
      %4401 = vst.msk [vmem:[%s172 + $0x1d8] sm:$0xf] %vm4282, %v3824
      %4402 = vst.msk [vmem:[%s172 + $0x1dc] sm:$0xf] %vm4282, %v3825
      %4403 = vst.msk [vmem:[%s172 + $0x1e0] sm:$0xf] %vm4282, %v3826
      %4404 = vst.msk [vmem:[%s172 + $0x1e4] sm:$0xf] %vm4282, %v3827
      %4405 = vst.msk [vmem:[%s172 + $0x1e8] sm:$0xf] %vm4282, %v3828
      %4406 = vst.msk [vmem:[%s172 + $0x1ec] sm:$0xf] %vm4282, %v3829
      %4407 = vst.msk [vmem:[%s172 + $0x1f0] sm:$0xf] %vm4282, %v3830
      %4408 = vst.msk [vmem:[%s172 + $0x1f4] sm:$0xf] %vm4282, %v3831
      %4409 = vst.msk [vmem:[%s172 + $0x1f8] sm:$0xf] %vm4282, %v3832
      %4410 = vst.msk [vmem:[%s172 + $0x1fc] sm:$0xf] %vm4282, %v3833
      %4411 = vst.msk [vmem:[%s172 + $0x200] sm:$0xf] %vm4282, %v3834
      %4412 = vst.msk [vmem:[%s172 + $0x204] sm:$0xf] %vm4282, %v3835
      %4413 = vst.msk [vmem:[%s172 + $0x208] sm:$0xf] %vm4282, %v3836
      %4414 = vst.msk [vmem:[%s172 + $0x20c] sm:$0xf] %vm4282, %v3837
      %4415 = vst.msk [vmem:[%s172 + $0x210] sm:$0xf] %vm4282, %v3838
      %4416 = vst.msk [vmem:[%s172 + $0x214] sm:$0xf] %vm4282, %v3839
      %4417 = vst.msk [vmem:[%s172 + $0x218] sm:$0xf] %vm4282, %v3840
      %4418 = vst.msk [vmem:[%s172 + $0x21c] sm:$0xf] %vm4282, %v3841
      %4419 = vst.msk [vmem:[%s172 + $0x220] sm:$0xf] %vm4282, %v3842
      %4420 = vst.msk [vmem:[%s172 + $0x224] sm:$0xf] %vm4282, %v3843
      %4421 = vst.msk [vmem:[%s172 + $0x228] sm:$0xf] %vm4282, %v3844
      %4422 = vst.msk [vmem:[%s172 + $0x22c] sm:$0xf] %vm4282, %v3845
      %4423 = vst.msk [vmem:[%s172 + $0x230] sm:$0xf] %vm4282, %v3846
      %4424 = vst.msk [vmem:[%s172 + $0x234] sm:$0xf] %vm4282, %v3847
      %4425 = vst.msk [vmem:[%s172 + $0x238] sm:$0xf] %vm4282, %v3848
      %4426 = vst.msk [vmem:[%s172 + $0x23c] sm:$0xf] %vm4282, %v3849
      %4427 = vst.msk [vmem:[%s172 + $0x240] sm:$0xf] %vm4282, %v3850
      %4428 = vst.msk [vmem:[%s172 + $0x244] sm:$0xf] %vm4282, %v3851
      %4429 = vst.msk [vmem:[%s172 + $0x248] sm:$0xf] %vm4282, %v3852
      %4430 = vst.msk [vmem:[%s172 + $0x24c] sm:$0xf] %vm4282, %v3853
      %4431 = vst.msk [vmem:[%s172 + $0x250] sm:$0xf] %vm4282, %v3854
      %4432 = vst.msk [vmem:[%s172 + $0x254] sm:$0xf] %vm4282, %v3855
      %4433 = vst.msk [vmem:[%s172 + $0x258] sm:$0xf] %vm4282, %v3856
      %4434 = vst.msk [vmem:[%s172 + $0x25c] sm:$0xf] %vm4282, %v3857
      %4435 = vst.msk [vmem:[%s172 + $0x260] sm:$0xf] %vm4282, %v3858
      %4436 = vst.msk [vmem:[%s172 + $0x264] sm:$0xf] %vm4282, %v3859
      %4437 = vst.msk [vmem:[%s172 + $0x268] sm:$0xf] %vm4282, %v3860
      %4438 = vst.msk [vmem:[%s172 + $0x26c] sm:$0xf] %vm4282, %v3861
      %4439 = vst.msk [vmem:[%s172 + $0x270] sm:$0xf] %vm4282, %v3862
      %4440 = vst.msk [vmem:[%s172 + $0x274] sm:$0xf] %vm4282, %v3863
      %4441 = vst.msk [vmem:[%s172 + $0x278] sm:$0xf] %vm4282, %v3864
      %4442 = vst.msk [vmem:[%s172 + $0x27c] sm:$0xf] %vm4282, %v3865
      %4443 = vst.msk [vmem:[%s172 + $0x280] sm:$0xf] %vm4282, %v3866
      %4444 = vst.msk [vmem:[%s172 + $0x284] sm:$0xf] %vm4282, %v3867
      %4445 = vst.msk [vmem:[%s172 + $0x288] sm:$0xf] %vm4282, %v3868
      %4446 = vst.msk [vmem:[%s172 + $0x28c] sm:$0xf] %vm4282, %v3869
      %4447 = vst.msk [vmem:[%s172 + $0x290] sm:$0xf] %vm4282, %v3870
      %4448 = vst.msk [vmem:[%s172 + $0x294] sm:$0xf] %vm4282, %v3871
      %4449 = vst.msk [vmem:[%s172 + $0x298] sm:$0xf] %vm4282, %v3872
      %4450 = vst.msk [vmem:[%s172 + $0x29c] sm:$0xf] %vm4282, %v3873
      %4451 = vst.msk [vmem:[%s172 + $0x2a0] sm:$0xf] %vm4282, %v3874
      %4452 = vst.msk [vmem:[%s172 + $0x2a4] sm:$0xf] %vm4282, %v3875
      %4453 = vst.msk [vmem:[%s172 + $0x2a8] sm:$0xf] %vm4282, %v3876
      %4454 = vst.msk [vmem:[%s172 + $0x2ac] sm:$0xf] %vm4282, %v3877
      %4455 = vst.msk [vmem:[%s172 + $0x2b0] sm:$0xf] %vm4282, %v3878
      %4456 = vst.msk [vmem:[%s172 + $0x2b4] sm:$0xf] %vm4282, %v3879
      %4457 = vst.msk [vmem:[%s172 + $0x2b8] sm:$0xf] %vm4282, %v3880
      %4458 = vst.msk [vmem:[%s172 + $0x2bc] sm:$0xf] %vm4282, %v3881
      %4459 = vst.msk [vmem:[%s172 + $0x2c0] sm:$0xf] %vm4282, %v3882
      %4460 = vst.msk [vmem:[%s172 + $0x2c4] sm:$0xf] %vm4282, %v3883
      %4461 = vst.msk [vmem:[%s172 + $0x2c8] sm:$0xf] %vm4282, %v3884
      %4462 = vst.msk [vmem:[%s172 + $0x2cc] sm:$0xf] %vm4282, %v3885
      %4463 = vst.msk [vmem:[%s172 + $0x2d0] sm:$0xf] %vm4282, %v3886
      %4464 = vst.msk [vmem:[%s172 + $0x2d4] sm:$0xf] %vm4282, %v3887
      %4465 = vst.msk [vmem:[%s172 + $0x2d8] sm:$0xf] %vm4282, %v3888
      %4466 = vst.msk [vmem:[%s172 + $0x2dc] sm:$0xf] %vm4282, %v3889
      %4467 = vst.msk [vmem:[%s172 + $0x2e0] sm:$0xf] %vm4282, %v3890
      %4468 = vst.msk [vmem:[%s172 + $0x2e4] sm:$0xf] %vm4282, %v3891
      %4469 = vst.msk [vmem:[%s172 + $0x2e8] sm:$0xf] %vm4282, %v3892
      %4470 = vst.msk [vmem:[%s172 + $0x2ec] sm:$0xf] %vm4282, %v3893
      %4471 = vst.msk [vmem:[%s172 + $0x2f0] sm:$0xf] %vm4282, %v3894
      %4472 = vst.msk [vmem:[%s172 + $0x2f4] sm:$0xf] %vm4282, %v3895
      %4473 = vst.msk [vmem:[%s172 + $0x2f8] sm:$0xf] %vm4282, %v3896
      %4474 = vst.msk [vmem:[%s172 + $0x2fc] sm:$0xf] %vm4282, %v3897
      %4475 = vst.msk [vmem:[%s172 + $0x300] sm:$0xf] %vm4282, %v3898
      %4476 = vst.msk [vmem:[%s172 + $0x304] sm:$0xf] %vm4282, %v3899
      %4477 = vst.msk [vmem:[%s172 + $0x308] sm:$0xf] %vm4282, %v3900
      %4478 = vst.msk [vmem:[%s172 + $0x30c] sm:$0xf] %vm4282, %v3901
      %4479 = vst.msk [vmem:[%s172 + $0x310] sm:$0xf] %vm4282, %v3902
      %4480 = vst.msk [vmem:[%s172 + $0x314] sm:$0xf] %vm4282, %v3903
      %4481 = vst.msk [vmem:[%s172 + $0x318] sm:$0xf] %vm4282, %v3904
      %4482 = vst.msk [vmem:[%s172 + $0x31c] sm:$0xf] %vm4282, %v3905
      %4483 = vst.msk [vmem:[%s172 + $0x320] sm:$0xf] %vm4282, %v3906
      %4484 = vst.msk [vmem:[%s172 + $0x324] sm:$0xf] %vm4282, %v3907
      %4485 = vst.msk [vmem:[%s172 + $0x328] sm:$0xf] %vm4282, %v3908
      %4486 = vst.msk [vmem:[%s172 + $0x32c] sm:$0xf] %vm4282, %v3909
      %4487 = vst.msk [vmem:[%s172 + $0x330] sm:$0xf] %vm4282, %v3910
      %4488 = vst.msk [vmem:[%s172 + $0x334] sm:$0xf] %vm4282, %v3911
      %4489 = vst.msk [vmem:[%s172 + $0x338] sm:$0xf] %vm4282, %v3912
      %4490 = vst.msk [vmem:[%s172 + $0x33c] sm:$0xf] %vm4282, %v3913
      %4491 = vst.msk [vmem:[%s172 + $0x340] sm:$0xf] %vm4282, %v3914
      %4492 = vst.msk [vmem:[%s172 + $0x344] sm:$0xf] %vm4282, %v3915
      %4493 = vst.msk [vmem:[%s172 + $0x348] sm:$0xf] %vm4282, %v3916
      %4494 = vst.msk [vmem:[%s172 + $0x34c] sm:$0xf] %vm4282, %v3917
      %4495 = vst.msk [vmem:[%s172 + $0x350] sm:$0xf] %vm4282, %v3918
      %4496 = vst.msk [vmem:[%s172 + $0x354] sm:$0xf] %vm4282, %v3919
      %4497 = vst.msk [vmem:[%s172 + $0x358] sm:$0xf] %vm4282, %v3920
      %4498 = vst.msk [vmem:[%s172 + $0x35c] sm:$0xf] %vm4282, %v3921
      %4499 = vst.msk [vmem:[%s172 + $0x360] sm:$0xf] %vm4282, %v3922
      %4500 = vst.msk [vmem:[%s172 + $0x364] sm:$0xf] %vm4282, %v3923
      %4501 = vst.msk [vmem:[%s172 + $0x368] sm:$0xf] %vm4282, %v3924
      %4502 = vst.msk [vmem:[%s172 + $0x36c] sm:$0xf] %vm4282, %v3925
      %4503 = vst.msk [vmem:[%s172 + $0x370] sm:$0xf] %vm4282, %v3926
      %4504 = vst.msk [vmem:[%s172 + $0x374] sm:$0xf] %vm4282, %v3927
      %4505 = vst.msk [vmem:[%s172 + $0x378] sm:$0xf] %vm4282, %v3928
      %4506 = vst.msk [vmem:[%s172 + $0x37c] sm:$0xf] %vm4282, %v3929
      %4507 = vst.msk [vmem:[%s172 + $0x380] sm:$0xf] %vm4282, %v3930
      %4508 = vst.msk [vmem:[%s172 + $0x384] sm:$0xf] %vm4282, %v3931
      %4509 = vst.msk [vmem:[%s172 + $0x388] sm:$0xf] %vm4282, %v3932
      %4510 = vst.msk [vmem:[%s172 + $0x38c] sm:$0xf] %vm4282, %v3933
      %4511 = vst.msk [vmem:[%s172 + $0x390] sm:$0xf] %vm4282, %v3934
      %4512 = vst.msk [vmem:[%s172 + $0x394] sm:$0xf] %vm4282, %v3935
      %4513 = vst.msk [vmem:[%s172 + $0x398] sm:$0xf] %vm4282, %v3936
      %4514 = vst.msk [vmem:[%s172 + $0x39c] sm:$0xf] %vm4282, %v3937
      %4515 = vst.msk [vmem:[%s172 + $0x3a0] sm:$0xf] %vm4282, %v3938
      %4516 = vst.msk [vmem:[%s172 + $0x3a4] sm:$0xf] %vm4282, %v3939
      %4517 = vst.msk [vmem:[%s172 + $0x3a8] sm:$0xf] %vm4282, %v3940
      %4518 = vst.msk [vmem:[%s172 + $0x3ac] sm:$0xf] %vm4282, %v3941
      %4519 = vst.msk [vmem:[%s172 + $0x3b0] sm:$0xf] %vm4282, %v3942
      %4520 = vst.msk [vmem:[%s172 + $0x3b4] sm:$0xf] %vm4282, %v3943
      %4521 = vst.msk [vmem:[%s172 + $0x3b8] sm:$0xf] %vm4282, %v3944
      %4522 = vst.msk [vmem:[%s172 + $0x3bc] sm:$0xf] %vm4282, %v3945
      %4523 = vst.msk [vmem:[%s172 + $0x3c0] sm:$0xf] %vm4282, %v3946
      %4524 = vst.msk [vmem:[%s172 + $0x3c4] sm:$0xf] %vm4282, %v3947
      %4525 = vst.msk [vmem:[%s172 + $0x3c8] sm:$0xf] %vm4282, %v3948
      %4526 = vst.msk [vmem:[%s172 + $0x3cc] sm:$0xf] %vm4282, %v3949
      %4527 = vst.msk [vmem:[%s172 + $0x3d0] sm:$0xf] %vm4282, %v3950
      %4528 = vst.msk [vmem:[%s172 + $0x3d4] sm:$0xf] %vm4282, %v3951
      %4529 = vst.msk [vmem:[%s172 + $0x3d8] sm:$0xf] %vm4282, %v3952
      %4530 = vst.msk [vmem:[%s172 + $0x3dc] sm:$0xf] %vm4282, %v3953
      %4531 = vst.msk [vmem:[%s172 + $0x3e0] sm:$0xf] %vm4282, %v3954
      %4532 = vst.msk [vmem:[%s172 + $0x3e4] sm:$0xf] %vm4282, %v3955
      %4533 = vst.msk [vmem:[%s172 + $0x3e8] sm:$0xf] %vm4282, %v3956
      %4534 = vst.msk [vmem:[%s172 + $0x3ec] sm:$0xf] %vm4282, %v3957
      %4535 = vst.msk [vmem:[%s172 + $0x3f0] sm:$0xf] %vm4282, %v3958
      %4536 = vst.msk [vmem:[%s172 + $0x3f4] sm:$0xf] %vm4282, %v3959
      %4537 = vst.msk [vmem:[%s172 + $0x3f8] sm:$0xf] %vm4282, %v3960
      %4538 = vst.msk [vmem:[%s172 + $0x3fc] sm:$0xf] %vm4282, %v3961
      %4539 = vst.msk [vmem:[%s172 + $0x400] sm:$0xf] %vm4282, %v3962
      %4540 = vst.msk [vmem:[%s172 + $0x404] sm:$0xf] %vm4282, %v3963
      %4541 = vst.msk [vmem:[%s172 + $0x408] sm:$0xf] %vm4282, %v3964
      %4542 = vst.msk [vmem:[%s172 + $0x40c] sm:$0xf] %vm4282, %v3965
      %4543 = vst.msk [vmem:[%s172 + $0x410] sm:$0xf] %vm4282, %v3966
      %4544 = vst.msk [vmem:[%s172 + $0x414] sm:$0xf] %vm4282, %v3967
      %4545 = vst.msk [vmem:[%s172 + $0x418] sm:$0xf] %vm4282, %v3968
      %4546 = vst.msk [vmem:[%s172 + $0x41c] sm:$0xf] %vm4282, %v3969
      %4547 = vst.msk [vmem:[%s172 + $0x420] sm:$0xf] %vm4282, %v3970
      %4548 = vst.msk [vmem:[%s172 + $0x424] sm:$0xf] %vm4282, %v3971
      %4549 = vst.msk [vmem:[%s172 + $0x428] sm:$0xf] %vm4282, %v3972
      %4550 = vst.msk [vmem:[%s172 + $0x42c] sm:$0xf] %vm4282, %v3973
      %4551 = vst.msk [vmem:[%s172 + $0x430] sm:$0xf] %vm4282, %v3974
      %4552 = vst.msk [vmem:[%s172 + $0x434] sm:$0xf] %vm4282, %v3975
      %4553 = vst.msk [vmem:[%s172 + $0x438] sm:$0xf] %vm4282, %v3976
      %4554 = vst.msk [vmem:[%s172 + $0x43c] sm:$0xf] %vm4282, %v3977
      %4555 = vst.msk [vmem:[%s172 + $0x440] sm:$0xf] %vm4282, %v3978
      %4556 = vst.msk [vmem:[%s172 + $0x444] sm:$0xf] %vm4282, %v3979
      %4557 = vst.msk [vmem:[%s172 + $0x448] sm:$0xf] %vm4282, %v3980
      %4558 = vst.msk [vmem:[%s172 + $0x44c] sm:$0xf] %vm4282, %v3981
      %4559 = vst.msk [vmem:[%s172 + $0x450] sm:$0xf] %vm4282, %v3982
      %4560 = vst.msk [vmem:[%s172 + $0x454] sm:$0xf] %vm4282, %v3983
      %4561 = vst.msk [vmem:[%s172 + $0x458] sm:$0xf] %vm4282, %v3984
      %4562 = vst.msk [vmem:[%s172 + $0x45c] sm:$0xf] %vm4282, %v3985
      %4563 = vst.msk [vmem:[%s172 + $0x460] sm:$0xf] %vm4282, %v3986
      %4564 = vst.msk [vmem:[%s172 + $0x464] sm:$0xf] %vm4282, %v3987
      %4565 = vst.msk [vmem:[%s172 + $0x468] sm:$0xf] %vm4282, %v3988
      %4566 = vst.msk [vmem:[%s172 + $0x46c] sm:$0xf] %vm4282, %v3989
      %4567 = vst.msk [vmem:[%s172 + $0x470] sm:$0xf] %vm4282, %v3990
      %4568 = vst.msk [vmem:[%s172 + $0x474] sm:$0xf] %vm4282, %v3991
      %4569 = vst.msk [vmem:[%s172 + $0x478] sm:$0xf] %vm4282, %v3992
      %4570 = vst.msk [vmem:[%s172 + $0x47c] sm:$0xf] %vm4282, %v3993
      %s4571 = smul.u32 288, %s14
      %p4572 = scmp.lt.s32.totalorder %s4571, 575
      %s4573 = scalar_select %p4572, %s4571, 575
      %s4574 = smul.addr %s4573, 4
      %s4575 = scalar_lea.vmem %s3, %s4574
      // Predicated region
      $region33: #{feature_extractor_forward.3} parent=31 // pred_check
        %p4576 = pneg %p100
      $region34: #{feature_extractor_forward.3} parent=31 // pred_check_branch
        %4578 = sbr.rel (%p4576) target = $region36
      $region35: #{feature_extractor_forward.3} parent=31 // pred_region
        %s4579 = smul.u32 288, %s14
      $region36: #{feature_extractor_forward.3} parent=31 // pred_fallthru
        _
    $region32: #{feature_extractor_forward.3} parent=5 // pred_fallthru
      _
    %p4580 = scmp.le.s32.totalorder 2, %s9
    // Predicated region
    $region37: #{feature_extractor_forward.3} parent=5 // pred_check
      %p4581 = pneg %p4580
    $region38: #{feature_extractor_forward.3} parent=5 // pred_check_branch
      %4583 = sbr.rel (%p4581) target = $region40
    $region39: #{feature_extractor_forward.3} parent=5 // pred_region
      %s4584 = ssub.s32 %s9, 2
      // Predicated region
      $region41: #{feature_extractor_forward.3} parent=39 // pred_check
        %p4585 = pneg %p106
      $region42: #{feature_extractor_forward.3} parent=39 // pred_check_branch
        %4587 = sbr.rel (%p4585) target = $region44
      $region43: #{feature_extractor_forward.3} parent=39 // pred_region
        %s4588 = smul.u32 288, %s15
        %p4589 = scmp.lt.s32.totalorder %s4588, 575
        %s4590 = scalar_select %p4589, %s4588, 575
        %s4591 = smul.addr %s4590, 4
        %s4592 = scalar_lea.vmem %s3, %s4591
      $region44: #{feature_extractor_forward.3} parent=39 // pred_fallthru
        _
    $region40: #{feature_extractor_forward.3} parent=5 // pred_fallthru
      _
  $region6: #{feature_extractor_forward.3} parent=0 // loop_footer
    %s13 = sadd.s32 1, %s9
  $region7: #{feature_extractor_forward.3} parent=0 // loop_footer_branch
    %8 = sbr.rel target = $region3
  $region8: #{feature_extractor_forward.3} parent=0 // loop_exit
    _

// kernel: feature_extractor_forward.4
$region0: #{feature_extractor_forward.4}
  #allocation0 [shape = 'u32[]', space=smem, size = 0x4, offset = 0x4, fixed_abs, tag = 'smem constant byte address 0x4 - core index']
  #allocation1 [shape = 'u32[144,128]{1,0:T(1,128)}', space=vmem, size = 0x12000, scoped, tag = 'internal scratch']
  %s0 = inlined_call_operand.vmem [shape: bf16[1152,800], index: 0, kind: input, shape index: {}]
  %s1 = inlined_call_operand.vmem [shape: bf16[800,64], index: 1, kind: input, shape index: {}]
  %s2 = inlined_call_operand.vmem [shape: f32[1,64], index: 2, kind: input, shape index: {}]
  %s3 = inlined_call_operand.vmem [shape: bf16[1152,64], index: 3, kind: output, shape index: {}]
  %s4 = sld [smem:[#allocation0]]
  $region45: #{feature_extractor_forward.4} parent=0
    _
  %s6 = ssub.s32 1, %s4
  %s7 = scalar_select 0, %s6, %s4
  loop: start=0, step=1, limit=4
  $region2: #{feature_extractor_forward.4} parent=0 // loop_pre_header
    _
  $region3: #{feature_extractor_forward.4} parent=0 // loop_header
    %s9 = sphi 0, %s13
    %p10 = scmp.ge.s32.totalorder %s9, 4
    %s19 = sphi 0, %s21
    %s22 = sphi 0, %s19
    %s23 = sphi 0, %s22
    %s39 = sphi 0, %s23
    %s43 = sphi 0, %s43
    %s45 = sphi 0, %s43
    %s46 = sphi 0, %s45
    %s60 = sphi 0, %s46
    %s64 = sphi 0, %s64
    %s66 = sphi 0, %s64
    %s67 = sphi 0, %s66
    %s81 = sphi 0, %s67
    %s87 = sphi 0, %s89
    %s90 = sphi 0, %s87
    %s91 = sphi 0, %s90
    %s107 = sphi 0, %s91
  $region4: #{feature_extractor_forward.4} parent=0 // loop_header_branch
    %12 = sbr.rel (%p10) target = $region8
  $region5: #{feature_extractor_forward.4} parent=0 // loop_body
    %s14 = ssub.s32 %s9, 1
    %s15 = ssub.s32 %s9, 2
    %s16 = sadd.s32 %s9, 1
    %s17 = ssub.s32 %s9, %s16
    %p18 = scmp.eq.s32.totalorder %s17, 0
    %s20 = sadd.s32 %s19, 1
    %s21 = scalar_select %p18, %s19, %s20
    %p24 = pneg %p18
    %p25 = scmp.eq.s32.totalorder %s9, 1
    %p26 = por %p24, %p25
    %p27 = scmp.ne.s32.totalorder %s19, %s22
    %p28 = scmp.eq.s32.totalorder %s9, 0
    %p29 = por %p27, %p28
    %p30 = scmp.ne.s32.totalorder %s19, %s22
    %p31 = scmp.eq.s32.totalorder %s14, 1
    %p32 = por %p30, %p31
    %p33 = scmp.ne.s32.totalorder %s22, %s23
    %p34 = scmp.eq.s32.totalorder %s14, 0
    %p35 = por %p33, %p34
    %p36 = scmp.ne.s32.totalorder %s22, %s23
    %p37 = scmp.eq.s32.totalorder %s15, 1
    %p38 = por %p36, %p37
    %p40 = scmp.ne.s32.totalorder %s23, %s39
    %p41 = scmp.eq.s32.totalorder %s15, 0
    %p42 = por %p40, %p41
    %s44 = sadd.s32 %s43, 1
    %p47 = scmp.eq.s32.totalorder %s9, 1
    %p48 = scmp.ne.s32.totalorder %s43, %s45
    %p49 = scmp.eq.s32.totalorder %s9, 0
    %p50 = por %p48, %p49
    %p51 = scmp.ne.s32.totalorder %s43, %s45
    %p52 = scmp.eq.s32.totalorder %s14, 1
    %p53 = por %p51, %p52
    %p54 = scmp.ne.s32.totalorder %s45, %s46
    %p55 = scmp.eq.s32.totalorder %s14, 0
    %p56 = por %p54, %p55
    %p57 = scmp.ne.s32.totalorder %s45, %s46
    %p58 = scmp.eq.s32.totalorder %s15, 1
    %p59 = por %p57, %p58
    %p61 = scmp.ne.s32.totalorder %s46, %s60
    %p62 = scmp.eq.s32.totalorder %s15, 0
    %p63 = por %p61, %p62
    %s65 = sadd.s32 %s64, 1
    %p68 = scmp.eq.s32.totalorder %s9, 1
    %p69 = scmp.ne.s32.totalorder %s64, %s66
    %p70 = scmp.eq.s32.totalorder %s9, 0
    %p71 = por %p69, %p70
    %p72 = scmp.ne.s32.totalorder %s64, %s66
    %p73 = scmp.eq.s32.totalorder %s14, 1
    %p74 = por %p72, %p73
    %p75 = scmp.ne.s32.totalorder %s66, %s67
    %p76 = scmp.eq.s32.totalorder %s14, 0
    %p77 = por %p75, %p76
    %p78 = scmp.ne.s32.totalorder %s66, %s67
    %p79 = scmp.eq.s32.totalorder %s15, 1
    %p80 = por %p78, %p79
    %p82 = scmp.ne.s32.totalorder %s67, %s81
    %p83 = scmp.eq.s32.totalorder %s15, 0
    %p84 = por %p82, %p83
    %s85 = ssub.s32 %s9, %s16
    %p86 = scmp.eq.s32.totalorder %s85, 0
    %s88 = sadd.s32 %s87, 1
    %s89 = scalar_select %p86, %s87, %s88
    %p92 = pneg %p86
    %p93 = scmp.eq.s32.totalorder %s9, 1
    %p94 = por %p92, %p93
    %p95 = scmp.ne.s32.totalorder %s87, %s90
    %p96 = scmp.eq.s32.totalorder %s9, 0
    %p97 = por %p95, %p96
    %p98 = scmp.ne.s32.totalorder %s87, %s90
    %p99 = scmp.eq.s32.totalorder %s14, 1
    %p100 = por %p98, %p99
    %p101 = scmp.ne.s32.totalorder %s90, %s91
    %p102 = scmp.eq.s32.totalorder %s14, 0
    %p103 = por %p101, %p102
    %p104 = scmp.ne.s32.totalorder %s90, %s91
    %p105 = scmp.eq.s32.totalorder %s15, 1
    %p106 = por %p104, %p105
    %p108 = scmp.ne.s32.totalorder %s91, %s107
    %p109 = scmp.eq.s32.totalorder %s15, 0
    %p110 = por %p108, %p109
    %p111 = scmp.le.s32.totalorder 1, %s9
    %p112 = scmp.lt.s32.totalorder %s9, 3
    %p113 = pnand %p111, %p112
    %p114 = pneg %p113
    // Predicated region
    $region9: #{feature_extractor_forward.4} parent=5 // pred_check
      _
    $region10: #{feature_extractor_forward.4} parent=5 // pred_check_branch
      %116 = sbr.rel (%p113) target = $region12
    $region11: #{feature_extractor_forward.4} parent=5 // pred_region
      %s117 = ssub.s32 %s9, 1
      // Predicated region
      $region13: #{feature_extractor_forward.4} parent=11 // pred_check
        %p118 = pneg %p56
      $region14: #{feature_extractor_forward.4} parent=11 // pred_check_branch
        %120 = sbr.rel (%p118) target = $region16
      $region15: #{feature_extractor_forward.4} parent=11 // pred_region
        _
      $region16: #{feature_extractor_forward.4} parent=11 // pred_fallthru
        _
      // Predicated region
      $region17: #{feature_extractor_forward.4} parent=11 // pred_check
        %p121 = pneg %p77
      $region18: #{feature_extractor_forward.4} parent=11 // pred_check_branch
        %123 = sbr.rel (%p121) target = $region20
      $region19: #{feature_extractor_forward.4} parent=11 // pred_region
        _
      $region20: #{feature_extractor_forward.4} parent=11 // pred_fallthru
        _
    $region12: #{feature_extractor_forward.4} parent=5 // pred_fallthru
      _
    %p124 = scmp.lt.s32.totalorder %s9, 2
    // Predicated region
    $region21: #{feature_extractor_forward.4} parent=5 // pred_check
      %p125 = pneg %p124
    $region22: #{feature_extractor_forward.4} parent=5 // pred_check_branch
      %127 = sbr.rel (%p125) target = $region24
    $region23: #{feature_extractor_forward.4} parent=5 // pred_region
      // Predicated region
      $region25: #{feature_extractor_forward.4} parent=23 // pred_check
        %p128 = pneg %p29
      $region26: #{feature_extractor_forward.4} parent=23 // pred_check_branch
        %130 = sbr.rel (%p128) target = $region28
      $region27: #{feature_extractor_forward.4} parent=23 // pred_region
        %s131 = smul.u32 72, %s9
        %p132 = scmp.lt.s32.totalorder %s131, 143
        %s133 = scalar_select %p132, %s131, 143
        %s134 = smul.addr %s133, 7
        %s135 = smul.addr %s134, 4
        %s136 = scalar_lea.vmem %s0, %s135
        %s137 = smul.u32 72, %s9
      $region28: #{feature_extractor_forward.4} parent=23 // pred_fallthru
        _
    $region24: #{feature_extractor_forward.4} parent=5 // pred_fallthru
      _
    %p138 = scmp.le.s32.totalorder 1, %s9
    %p139 = scmp.lt.s32.totalorder %s9, 3
    %p140 = pnand %p138, %p139
    %p141 = pneg %p140
    // Predicated region
    $region29: #{feature_extractor_forward.4} parent=5 // pred_check
      _
    $region30: #{feature_extractor_forward.4} parent=5 // pred_check_branch
      %143 = sbr.rel (%p140) target = $region32
    $region31: #{feature_extractor_forward.4} parent=5 // pred_region
      %s144 = ssub.s32 %s9, 1
      %s145 = smul.u32 72, %s14
      %p146 = scmp.lt.s32.totalorder %s145, 143
      %s147 = scalar_select %p146, %s145, 143
      %s148 = smul.addr %s147, 7
      %s149 = smul.addr %s148, 4
      %s150 = scalar_lea.vmem %s0, %s149
      %p151 = pneg %p35
      %p152 = pneg %p32
      %p153 = pneg %p56
      %p154 = pneg %p53
      %p155 = pneg %p77
      %p156 = pneg %p74
      %p157 = pneg %p103
      %p158 = pneg %p100
      %s159 = smul.u32 72, %s14
      %p160 = scmp.lt.s32.totalorder %s159, 143
      %s161 = scalar_select %p160, %s159, 143
      %s162 = smul.addr %s161, 4
      %s163 = scalar_lea.vmem %s3, %s162
      %s164 = smul.u32 72, %s14
      %p165 = scmp.lt.s32.totalorder %s164, 143
      %s166 = scalar_select %p165, %s164, 143
      %s167 = smul.addr %s166, 7
      %s168 = smul.addr %s167, 4
      %s169 = scalar_lea.vmem %s0, %s168
      %s170 = smul.u32 72, %s14
      %s171 = smul.u32 72, %s14
      %p172 = scmp.lt.s32.totalorder %s171, 143
      %s173 = scalar_select %p172, %s171, 143
      %s174 = smul.addr %s173, 4
      %s175 = scalar_lea.vmem %s3, %s174
      %s176 = smul.u32 72, %s14
      %v178 = vld [vmem:[%s169] sm:$0xff]
      %v179 = vld [vmem:[%s169 + $0x8] sm:$0xff]
      %v180 = vld [vmem:[%s169 + $0x10] sm:$0xff]
      %v181 = vld [vmem:[%s169 + $0x18] sm:$0xf]
      %v182 = vld [vmem:[%s169 + $0x1c] sm:$0xff]
      %v183 = vld [vmem:[%s169 + $0x24] sm:$0xff]
      %v184 = vld [vmem:[%s169 + $0x2c] sm:$0xff]
      %v185 = vld [vmem:[%s169 + $0x34] sm:$0xf]
      %v186 = vld [vmem:[%s169 + $0x38] sm:$0xff]
      %v187 = vld [vmem:[%s169 + $0x40] sm:$0xff]
      %v188 = vld [vmem:[%s169 + $0x48] sm:$0xff]
      %v189 = vld [vmem:[%s169 + $0x50] sm:$0xf]
      %v190 = vld [vmem:[%s169 + $0x54] sm:$0xff]
      %v191 = vld [vmem:[%s169 + $0x5c] sm:$0xff]
      %v192 = vld [vmem:[%s169 + $0x64] sm:$0xff]
      %v193 = vld [vmem:[%s169 + $0x6c] sm:$0xf]
      %v194 = vld [vmem:[%s169 + $0x70] sm:$0xff]
      %v195 = vld [vmem:[%s169 + $0x78] sm:$0xff]
      %v196 = vld [vmem:[%s169 + $0x80] sm:$0xff]
      %v197 = vld [vmem:[%s169 + $0x88] sm:$0xf]
      %v198 = vld [vmem:[%s169 + $0x8c] sm:$0xff]
      %v199 = vld [vmem:[%s169 + $0x94] sm:$0xff]
      %v200 = vld [vmem:[%s169 + $0x9c] sm:$0xff]
      %v201 = vld [vmem:[%s169 + $0xa4] sm:$0xf]
      %v202 = vld [vmem:[%s169 + $0xa8] sm:$0xff]
      %v203 = vld [vmem:[%s169 + $0xb0] sm:$0xff]
      %v204 = vld [vmem:[%s169 + $0xb8] sm:$0xff]
      %v205 = vld [vmem:[%s169 + $0xc0] sm:$0xf]
      %v206 = vld [vmem:[%s169 + $0xc4] sm:$0xff]
      %v207 = vld [vmem:[%s169 + $0xcc] sm:$0xff]
      %v208 = vld [vmem:[%s169 + $0xd4] sm:$0xff]
      %v209 = vld [vmem:[%s169 + $0xdc] sm:$0xf]
      %v210 = vld [vmem:[%s169 + $0xe0] sm:$0xff]
      %v211 = vld [vmem:[%s169 + $0xe8] sm:$0xff]
      %v212 = vld [vmem:[%s169 + $0xf0] sm:$0xff]
      %v213 = vld [vmem:[%s169 + $0xf8] sm:$0xf]
      %v214 = vld [vmem:[%s169 + $0xfc] sm:$0xff]
      %v215 = vld [vmem:[%s169 + $0x104] sm:$0xff]
      %v216 = vld [vmem:[%s169 + $0x10c] sm:$0xff]
      %v217 = vld [vmem:[%s169 + $0x114] sm:$0xf]
      %v218 = vld [vmem:[%s169 + $0x118] sm:$0xff]
      %v219 = vld [vmem:[%s169 + $0x120] sm:$0xff]
      %v220 = vld [vmem:[%s169 + $0x128] sm:$0xff]
      %v221 = vld [vmem:[%s169 + $0x130] sm:$0xf]
      %v222 = vld [vmem:[%s169 + $0x134] sm:$0xff]
      %v223 = vld [vmem:[%s169 + $0x13c] sm:$0xff]
      %v224 = vld [vmem:[%s169 + $0x144] sm:$0xff]
      %v225 = vld [vmem:[%s169 + $0x14c] sm:$0xf]
      %v226 = vld [vmem:[%s169 + $0x150] sm:$0xff]
      %v227 = vld [vmem:[%s169 + $0x158] sm:$0xff]
      %v228 = vld [vmem:[%s169 + $0x160] sm:$0xff]
      %v229 = vld [vmem:[%s169 + $0x168] sm:$0xf]
      %v230 = vld [vmem:[%s169 + $0x16c] sm:$0xff]
      %v231 = vld [vmem:[%s169 + $0x174] sm:$0xff]
      %v232 = vld [vmem:[%s169 + $0x17c] sm:$0xff]
      %v233 = vld [vmem:[%s169 + $0x184] sm:$0xf]
      %v234 = vld [vmem:[%s169 + $0x188] sm:$0xff]
      %v235 = vld [vmem:[%s169 + $0x190] sm:$0xff]
      %v236 = vld [vmem:[%s169 + $0x198] sm:$0xff]
      %v237 = vld [vmem:[%s169 + $0x1a0] sm:$0xf]
      %v238 = vld [vmem:[%s169 + $0x1a4] sm:$0xff]
      %v239 = vld [vmem:[%s169 + $0x1ac] sm:$0xff]
      %v240 = vld [vmem:[%s169 + $0x1b4] sm:$0xff]
      %v241 = vld [vmem:[%s169 + $0x1bc] sm:$0xf]
      %v242 = vld [vmem:[%s169 + $0x1c0] sm:$0xff]
      %v243 = vld [vmem:[%s169 + $0x1c8] sm:$0xff]
      %v244 = vld [vmem:[%s169 + $0x1d0] sm:$0xff]
      %v245 = vld [vmem:[%s169 + $0x1d8] sm:$0xf]
      %v246 = vld [vmem:[%s169 + $0x1dc] sm:$0xff]
      %v247 = vld [vmem:[%s169 + $0x1e4] sm:$0xff]
      %v248 = vld [vmem:[%s169 + $0x1ec] sm:$0xff]
      %v249 = vld [vmem:[%s169 + $0x1f4] sm:$0xf]
      %v250 = vld [vmem:[%s169 + $0x1f8] sm:$0xff]
      %v251 = vld [vmem:[%s169 + $0x200] sm:$0xff]
      %v252 = vld [vmem:[%s169 + $0x208] sm:$0xff]
      %v253 = vld [vmem:[%s169 + $0x210] sm:$0xf]
      %v254 = vld [vmem:[%s169 + $0x214] sm:$0xff]
      %v255 = vld [vmem:[%s169 + $0x21c] sm:$0xff]
      %v256 = vld [vmem:[%s169 + $0x224] sm:$0xff]
      %v257 = vld [vmem:[%s169 + $0x22c] sm:$0xf]
      %v258 = vld [vmem:[%s169 + $0x230] sm:$0xff]
      %v259 = vld [vmem:[%s169 + $0x238] sm:$0xff]
      %v260 = vld [vmem:[%s169 + $0x240] sm:$0xff]
      %v261 = vld [vmem:[%s169 + $0x248] sm:$0xf]
      %v262 = vld [vmem:[%s169 + $0x24c] sm:$0xff]
      %v263 = vld [vmem:[%s169 + $0x254] sm:$0xff]
      %v264 = vld [vmem:[%s169 + $0x25c] sm:$0xff]
      %v265 = vld [vmem:[%s169 + $0x264] sm:$0xf]
      %v266 = vld [vmem:[%s169 + $0x268] sm:$0xff]
      %v267 = vld [vmem:[%s169 + $0x270] sm:$0xff]
      %v268 = vld [vmem:[%s169 + $0x278] sm:$0xff]
      %v269 = vld [vmem:[%s169 + $0x280] sm:$0xf]
      %v270 = vld [vmem:[%s169 + $0x284] sm:$0xff]
      %v271 = vld [vmem:[%s169 + $0x28c] sm:$0xff]
      %v272 = vld [vmem:[%s169 + $0x294] sm:$0xff]
      %v273 = vld [vmem:[%s169 + $0x29c] sm:$0xf]
      %v274 = vld [vmem:[%s169 + $0x2a0] sm:$0xff]
      %v275 = vld [vmem:[%s169 + $0x2a8] sm:$0xff]
      %v276 = vld [vmem:[%s169 + $0x2b0] sm:$0xff]
      %v277 = vld [vmem:[%s169 + $0x2b8] sm:$0xf]
      %v278 = vld [vmem:[%s169 + $0x2bc] sm:$0xff]
      %v279 = vld [vmem:[%s169 + $0x2c4] sm:$0xff]
      %v280 = vld [vmem:[%s169 + $0x2cc] sm:$0xff]
      %v281 = vld [vmem:[%s169 + $0x2d4] sm:$0xf]
      %v282 = vld [vmem:[%s169 + $0x2d8] sm:$0xff]
      %v283 = vld [vmem:[%s169 + $0x2e0] sm:$0xff]
      %v284 = vld [vmem:[%s169 + $0x2e8] sm:$0xff]
      %v285 = vld [vmem:[%s169 + $0x2f0] sm:$0xf]
      %v286 = vld [vmem:[%s169 + $0x2f4] sm:$0xff]
      %v287 = vld [vmem:[%s169 + $0x2fc] sm:$0xff]
      %v288 = vld [vmem:[%s169 + $0x304] sm:$0xff]
      %v289 = vld [vmem:[%s169 + $0x30c] sm:$0xf]
      %v290 = vld [vmem:[%s169 + $0x310] sm:$0xff]
      %v291 = vld [vmem:[%s169 + $0x318] sm:$0xff]
      %v292 = vld [vmem:[%s169 + $0x320] sm:$0xff]
      %v293 = vld [vmem:[%s169 + $0x328] sm:$0xf]
      %v294 = vld [vmem:[%s169 + $0x32c] sm:$0xff]
      %v295 = vld [vmem:[%s169 + $0x334] sm:$0xff]
      %v296 = vld [vmem:[%s169 + $0x33c] sm:$0xff]
      %v297 = vld [vmem:[%s169 + $0x344] sm:$0xf]
      %v298 = vld [vmem:[%s169 + $0x348] sm:$0xff]
      %v299 = vld [vmem:[%s169 + $0x350] sm:$0xff]
      %v300 = vld [vmem:[%s169 + $0x358] sm:$0xff]
      %v301 = vld [vmem:[%s169 + $0x360] sm:$0xf]
      %v302 = vld [vmem:[%s169 + $0x364] sm:$0xff]
      %v303 = vld [vmem:[%s169 + $0x36c] sm:$0xff]
      %v304 = vld [vmem:[%s169 + $0x374] sm:$0xff]
      %v305 = vld [vmem:[%s169 + $0x37c] sm:$0xf]
      %v306 = vld [vmem:[%s169 + $0x380] sm:$0xff]
      %v307 = vld [vmem:[%s169 + $0x388] sm:$0xff]
      %v308 = vld [vmem:[%s169 + $0x390] sm:$0xff]
      %v309 = vld [vmem:[%s169 + $0x398] sm:$0xf]
      %v310 = vld [vmem:[%s169 + $0x39c] sm:$0xff]
      %v311 = vld [vmem:[%s169 + $0x3a4] sm:$0xff]
      %v312 = vld [vmem:[%s169 + $0x3ac] sm:$0xff]
      %v313 = vld [vmem:[%s169 + $0x3b4] sm:$0xf]
      %v314 = vld [vmem:[%s169 + $0x3b8] sm:$0xff]
      %v315 = vld [vmem:[%s169 + $0x3c0] sm:$0xff]
      %v316 = vld [vmem:[%s169 + $0x3c8] sm:$0xff]
      %v317 = vld [vmem:[%s169 + $0x3d0] sm:$0xf]
      %v318 = vld [vmem:[%s169 + $0x3d4] sm:$0xff]
      %v319 = vld [vmem:[%s169 + $0x3dc] sm:$0xff]
      %v320 = vld [vmem:[%s169 + $0x3e4] sm:$0xff]
      %v321 = vld [vmem:[%s169 + $0x3ec] sm:$0xf]
      %v322 = vld [vmem:[%s169 + $0x3f0] sm:$0xff]
      %v323 = vld [vmem:[%s169 + $0x3f8] sm:$0xff]
      %v324 = vld [vmem:[%s169 + $0x400] sm:$0xff]
      %v325 = vld [vmem:[%s169 + $0x408] sm:$0xf]
      %v326 = vld [vmem:[%s169 + $0x40c] sm:$0xff]
      %v327 = vld [vmem:[%s169 + $0x414] sm:$0xff]
      %v328 = vld [vmem:[%s169 + $0x41c] sm:$0xff]
      %v329 = vld [vmem:[%s169 + $0x424] sm:$0xf]
      %v330 = vld [vmem:[%s169 + $0x428] sm:$0xff]
      %v331 = vld [vmem:[%s169 + $0x430] sm:$0xff]
      %v332 = vld [vmem:[%s169 + $0x438] sm:$0xff]
      %v333 = vld [vmem:[%s169 + $0x440] sm:$0xf]
      %v334 = vld [vmem:[%s169 + $0x444] sm:$0xff]
      %v335 = vld [vmem:[%s169 + $0x44c] sm:$0xff]
      %v336 = vld [vmem:[%s169 + $0x454] sm:$0xff]
      %v337 = vld [vmem:[%s169 + $0x45c] sm:$0xf]
      %v338 = vld [vmem:[%s169 + $0x460] sm:$0xff]
      %v339 = vld [vmem:[%s169 + $0x468] sm:$0xff]
      %v340 = vld [vmem:[%s169 + $0x470] sm:$0xff]
      %v341 = vld [vmem:[%s169 + $0x478] sm:$0xf]
      %v342 = vld [vmem:[%s169 + $0x47c] sm:$0xff]
      %v343 = vld [vmem:[%s169 + $0x484] sm:$0xff]
      %v344 = vld [vmem:[%s169 + $0x48c] sm:$0xff]
      %v345 = vld [vmem:[%s169 + $0x494] sm:$0xf]
      %v346 = vld [vmem:[%s169 + $0x498] sm:$0xff]
      %v347 = vld [vmem:[%s169 + $0x4a0] sm:$0xff]
      %v348 = vld [vmem:[%s169 + $0x4a8] sm:$0xff]
      %v349 = vld [vmem:[%s169 + $0x4b0] sm:$0xf]
      %v350 = vld [vmem:[%s169 + $0x4b4] sm:$0xff]
      %v351 = vld [vmem:[%s169 + $0x4bc] sm:$0xff]
      %v352 = vld [vmem:[%s169 + $0x4c4] sm:$0xff]
      %v353 = vld [vmem:[%s169 + $0x4cc] sm:$0xf]
      %v354 = vld [vmem:[%s169 + $0x4d0] sm:$0xff]
      %v355 = vld [vmem:[%s169 + $0x4d8] sm:$0xff]
      %v356 = vld [vmem:[%s169 + $0x4e0] sm:$0xff]
      %v357 = vld [vmem:[%s169 + $0x4e8] sm:$0xf]
      %v358 = vld [vmem:[%s169 + $0x4ec] sm:$0xff]
      %v359 = vld [vmem:[%s169 + $0x4f4] sm:$0xff]
      %v360 = vld [vmem:[%s169 + $0x4fc] sm:$0xff]
      %v361 = vld [vmem:[%s169 + $0x504] sm:$0xf]
      %v362 = vld [vmem:[%s169 + $0x508] sm:$0xff]
      %v363 = vld [vmem:[%s169 + $0x510] sm:$0xff]
      %v364 = vld [vmem:[%s169 + $0x518] sm:$0xff]
      %v365 = vld [vmem:[%s169 + $0x520] sm:$0xf]
      %v366 = vld [vmem:[%s169 + $0x524] sm:$0xff]
      %v367 = vld [vmem:[%s169 + $0x52c] sm:$0xff]
      %v368 = vld [vmem:[%s169 + $0x534] sm:$0xff]
      %v369 = vld [vmem:[%s169 + $0x53c] sm:$0xf]
      %v370 = vld [vmem:[%s169 + $0x540] sm:$0xff]
      %v371 = vld [vmem:[%s169 + $0x548] sm:$0xff]
      %v372 = vld [vmem:[%s169 + $0x550] sm:$0xff]
      %v373 = vld [vmem:[%s169 + $0x558] sm:$0xf]
      %v374 = vld [vmem:[%s169 + $0x55c] sm:$0xff]
      %v375 = vld [vmem:[%s169 + $0x564] sm:$0xff]
      %v376 = vld [vmem:[%s169 + $0x56c] sm:$0xff]
      %v377 = vld [vmem:[%s169 + $0x574] sm:$0xf]
      %v378 = vld [vmem:[%s169 + $0x578] sm:$0xff]
      %v379 = vld [vmem:[%s169 + $0x580] sm:$0xff]
      %v380 = vld [vmem:[%s169 + $0x588] sm:$0xff]
      %v381 = vld [vmem:[%s169 + $0x590] sm:$0xf]
      %v382 = vld [vmem:[%s169 + $0x594] sm:$0xff]
      %v383 = vld [vmem:[%s169 + $0x59c] sm:$0xff]
      %v384 = vld [vmem:[%s169 + $0x5a4] sm:$0xff]
      %v385 = vld [vmem:[%s169 + $0x5ac] sm:$0xf]
      %v386 = vld [vmem:[%s169 + $0x5b0] sm:$0xff]
      %v387 = vld [vmem:[%s169 + $0x5b8] sm:$0xff]
      %v388 = vld [vmem:[%s169 + $0x5c0] sm:$0xff]
      %v389 = vld [vmem:[%s169 + $0x5c8] sm:$0xf]
      %v390 = vld [vmem:[%s169 + $0x5cc] sm:$0xff]
      %v391 = vld [vmem:[%s169 + $0x5d4] sm:$0xff]
      %v392 = vld [vmem:[%s169 + $0x5dc] sm:$0xff]
      %v393 = vld [vmem:[%s169 + $0x5e4] sm:$0xf]
      %v394 = vld [vmem:[%s169 + $0x5e8] sm:$0xff]
      %v395 = vld [vmem:[%s169 + $0x5f0] sm:$0xff]
      %v396 = vld [vmem:[%s169 + $0x5f8] sm:$0xff]
      %v397 = vld [vmem:[%s169 + $0x600] sm:$0xf]
      %v398 = vld [vmem:[%s169 + $0x604] sm:$0xff]
      %v399 = vld [vmem:[%s169 + $0x60c] sm:$0xff]
      %v400 = vld [vmem:[%s169 + $0x614] sm:$0xff]
      %v401 = vld [vmem:[%s169 + $0x61c] sm:$0xf]
      %v402 = vld [vmem:[%s169 + $0x620] sm:$0xff]
      %v403 = vld [vmem:[%s169 + $0x628] sm:$0xff]
      %v404 = vld [vmem:[%s169 + $0x630] sm:$0xff]
      %v405 = vld [vmem:[%s169 + $0x638] sm:$0xf]
      %v406 = vld [vmem:[%s169 + $0x63c] sm:$0xff]
      %v407 = vld [vmem:[%s169 + $0x644] sm:$0xff]
      %v408 = vld [vmem:[%s169 + $0x64c] sm:$0xff]
      %v409 = vld [vmem:[%s169 + $0x654] sm:$0xf]
      %v410 = vld [vmem:[%s169 + $0x658] sm:$0xff]
      %v411 = vld [vmem:[%s169 + $0x660] sm:$0xff]
      %v412 = vld [vmem:[%s169 + $0x668] sm:$0xff]
      %v413 = vld [vmem:[%s169 + $0x670] sm:$0xf]
      %v414 = vld [vmem:[%s169 + $0x674] sm:$0xff]
      %v415 = vld [vmem:[%s169 + $0x67c] sm:$0xff]
      %v416 = vld [vmem:[%s169 + $0x684] sm:$0xff]
      %v417 = vld [vmem:[%s169 + $0x68c] sm:$0xf]
      %v418 = vld [vmem:[%s169 + $0x690] sm:$0xff]
      %v419 = vld [vmem:[%s169 + $0x698] sm:$0xff]
      %v420 = vld [vmem:[%s169 + $0x6a0] sm:$0xff]
      %v421 = vld [vmem:[%s169 + $0x6a8] sm:$0xf]
      %v422 = vld [vmem:[%s169 + $0x6ac] sm:$0xff]
      %v423 = vld [vmem:[%s169 + $0x6b4] sm:$0xff]
      %v424 = vld [vmem:[%s169 + $0x6bc] sm:$0xff]
      %v425 = vld [vmem:[%s169 + $0x6c4] sm:$0xf]
      %v426 = vld [vmem:[%s169 + $0x6c8] sm:$0xff]
      %v427 = vld [vmem:[%s169 + $0x6d0] sm:$0xff]
      %v428 = vld [vmem:[%s169 + $0x6d8] sm:$0xff]
      %v429 = vld [vmem:[%s169 + $0x6e0] sm:$0xf]
      %v430 = vld [vmem:[%s169 + $0x6e4] sm:$0xff]
      %v431 = vld [vmem:[%s169 + $0x6ec] sm:$0xff]
      %v432 = vld [vmem:[%s169 + $0x6f4] sm:$0xff]
      %v433 = vld [vmem:[%s169 + $0x6fc] sm:$0xf]
      %v434 = vld [vmem:[%s169 + $0x700] sm:$0xff]
      %v435 = vld [vmem:[%s169 + $0x708] sm:$0xff]
      %v436 = vld [vmem:[%s169 + $0x710] sm:$0xff]
      %v437 = vld [vmem:[%s169 + $0x718] sm:$0xf]
      %v438 = vld [vmem:[%s169 + $0x71c] sm:$0xff]
      %v439 = vld [vmem:[%s169 + $0x724] sm:$0xff]
      %v440 = vld [vmem:[%s169 + $0x72c] sm:$0xff]
      %v441 = vld [vmem:[%s169 + $0x734] sm:$0xf]
      %v442 = vld [vmem:[%s169 + $0x738] sm:$0xff]
      %v443 = vld [vmem:[%s169 + $0x740] sm:$0xff]
      %v444 = vld [vmem:[%s169 + $0x748] sm:$0xff]
      %v445 = vld [vmem:[%s169 + $0x750] sm:$0xf]
      %v446 = vld [vmem:[%s169 + $0x754] sm:$0xff]
      %v447 = vld [vmem:[%s169 + $0x75c] sm:$0xff]
      %v448 = vld [vmem:[%s169 + $0x764] sm:$0xff]
      %v449 = vld [vmem:[%s169 + $0x76c] sm:$0xf]
      %v450 = vld [vmem:[%s169 + $0x770] sm:$0xff]
      %v451 = vld [vmem:[%s169 + $0x778] sm:$0xff]
      %v452 = vld [vmem:[%s169 + $0x780] sm:$0xff]
      %v453 = vld [vmem:[%s169 + $0x788] sm:$0xf]
      %v454 = vld [vmem:[%s169 + $0x78c] sm:$0xff]
      %v455 = vld [vmem:[%s169 + $0x794] sm:$0xff]
      %v456 = vld [vmem:[%s169 + $0x79c] sm:$0xff]
      %v457 = vld [vmem:[%s169 + $0x7a4] sm:$0xf]
      %v458 = vld [vmem:[%s169 + $0x7a8] sm:$0xff]
      %v459 = vld [vmem:[%s169 + $0x7b0] sm:$0xff]
      %v460 = vld [vmem:[%s169 + $0x7b8] sm:$0xff]
      %v461 = vld [vmem:[%s169 + $0x7c0] sm:$0xf]
      %v462 = vld [vmem:[%s169 + $0x7c4] sm:$0xff]
      %v463 = vld [vmem:[%s169 + $0x7cc] sm:$0xff]
      %v464 = vld [vmem:[%s169 + $0x7d4] sm:$0xff]
      %v465 = vld [vmem:[%s169 + $0x7dc] sm:$0xf]
      %v466 = vld [vmem:[%s1] sm:$0xf]
      %v467 = vld [vmem:[%s1 + $0x4] sm:$0xf]
      %v468 = vld [vmem:[%s1 + $0x8] sm:$0xf]
      %v469 = vld [vmem:[%s1 + $0xc] sm:$0xf]
      %v470 = vld [vmem:[%s1 + $0x10] sm:$0xf]
      %v471 = vld [vmem:[%s1 + $0x14] sm:$0xf]
      %v472 = vld [vmem:[%s1 + $0x18] sm:$0xf]
      %v473 = vld [vmem:[%s1 + $0x1c] sm:$0xf]
      %v474 = vld [vmem:[%s1 + $0x20] sm:$0xf]
      %v475 = vld [vmem:[%s1 + $0x24] sm:$0xf]
      %v476 = vld [vmem:[%s1 + $0x28] sm:$0xf]
      %v477 = vld [vmem:[%s1 + $0x2c] sm:$0xf]
      %v478 = vld [vmem:[%s1 + $0x30] sm:$0xf]
      %v479 = vld [vmem:[%s1 + $0x34] sm:$0xf]
      %v480 = vld [vmem:[%s1 + $0x38] sm:$0xf]
      %v481 = vld [vmem:[%s1 + $0x3c] sm:$0xf]
      %v482 = vld [vmem:[%s1 + $0x40] sm:$0xf]
      %v483 = vld [vmem:[%s1 + $0x44] sm:$0xf]
      %v484 = vld [vmem:[%s1 + $0x48] sm:$0xf]
      %v485 = vld [vmem:[%s1 + $0x4c] sm:$0xf]
      %v486 = vld [vmem:[%s1 + $0x50] sm:$0xf]
      %v487 = vld [vmem:[%s1 + $0x54] sm:$0xf]
      %v488 = vld [vmem:[%s1 + $0x58] sm:$0xf]
      %v489 = vld [vmem:[%s1 + $0x5c] sm:$0xf]
      %v490 = vld [vmem:[%s1 + $0x60] sm:$0xf]
      %v491 = vld [vmem:[%s1 + $0x64] sm:$0xf]
      %v492 = vld [vmem:[%s1 + $0x68] sm:$0xf]
      %v493 = vld [vmem:[%s1 + $0x6c] sm:$0xf]
      %v494 = vld [vmem:[%s1 + $0x70] sm:$0xf]
      %v495 = vld [vmem:[%s1 + $0x74] sm:$0xf]
      %v496 = vld [vmem:[%s1 + $0x78] sm:$0xf]
      %v497 = vld [vmem:[%s1 + $0x7c] sm:$0xf]
      %v498 = vld [vmem:[%s1 + $0x80] sm:$0xf]
      %v499 = vld [vmem:[%s1 + $0x84] sm:$0xf]
      %v500 = vld [vmem:[%s1 + $0x88] sm:$0xf]
      %v501 = vld [vmem:[%s1 + $0x8c] sm:$0xf]
      %v502 = vld [vmem:[%s1 + $0x90] sm:$0xf]
      %v503 = vld [vmem:[%s1 + $0x94] sm:$0xf]
      %v504 = vld [vmem:[%s1 + $0x98] sm:$0xf]
      %v505 = vld [vmem:[%s1 + $0x9c] sm:$0xf]
      %v506 = vld [vmem:[%s1 + $0xa0] sm:$0xf]
      %v507 = vld [vmem:[%s1 + $0xa4] sm:$0xf]
      %v508 = vld [vmem:[%s1 + $0xa8] sm:$0xf]
      %v509 = vld [vmem:[%s1 + $0xac] sm:$0xf]
      %v510 = vld [vmem:[%s1 + $0xb0] sm:$0xf]
      %v511 = vld [vmem:[%s1 + $0xb4] sm:$0xf]
      %v512 = vld [vmem:[%s1 + $0xb8] sm:$0xf]
      %v513 = vld [vmem:[%s1 + $0xbc] sm:$0xf]
      %v514 = vld [vmem:[%s1 + $0xc0] sm:$0xf]
      %v515 = vld [vmem:[%s1 + $0xc4] sm:$0xf]
      %v516 = vld [vmem:[%s1 + $0xc8] sm:$0xf]
      %v517 = vld [vmem:[%s1 + $0xcc] sm:$0xf]
      %v518 = vld [vmem:[%s1 + $0xd0] sm:$0xf]
      %v519 = vld [vmem:[%s1 + $0xd4] sm:$0xf]
      %v520 = vld [vmem:[%s1 + $0xd8] sm:$0xf]
      %v521 = vld [vmem:[%s1 + $0xdc] sm:$0xf]
      %v522 = vld [vmem:[%s1 + $0xe0] sm:$0xf]
      %v523 = vld [vmem:[%s1 + $0xe4] sm:$0xf]
      %v524 = vld [vmem:[%s1 + $0xe8] sm:$0xf]
      %v525 = vld [vmem:[%s1 + $0xec] sm:$0xf]
      %v526 = vld [vmem:[%s1 + $0xf0] sm:$0xf]
      %v527 = vld [vmem:[%s1 + $0xf4] sm:$0xf]
      %v528 = vld [vmem:[%s1 + $0xf8] sm:$0xf]
      %v529 = vld [vmem:[%s1 + $0xfc] sm:$0xf]
      %v530 = vld [vmem:[%s1 + $0x100] sm:$0xf]
      %v531 = vld [vmem:[%s1 + $0x104] sm:$0xf]
      %v532 = vld [vmem:[%s1 + $0x108] sm:$0xf]
      %v533 = vld [vmem:[%s1 + $0x10c] sm:$0xf]
      %v534 = vld [vmem:[%s1 + $0x110] sm:$0xf]
      %v535 = vld [vmem:[%s1 + $0x114] sm:$0xf]
      %v536 = vld [vmem:[%s1 + $0x118] sm:$0xf]
      %v537 = vld [vmem:[%s1 + $0x11c] sm:$0xf]
      %v538 = vld [vmem:[%s1 + $0x120] sm:$0xf]
      %v539 = vld [vmem:[%s1 + $0x124] sm:$0xf]
      %v540 = vld [vmem:[%s1 + $0x128] sm:$0xf]
      %v541 = vld [vmem:[%s1 + $0x12c] sm:$0xf]
      %v542 = vld [vmem:[%s1 + $0x130] sm:$0xf]
      %v543 = vld [vmem:[%s1 + $0x134] sm:$0xf]
      %v544 = vld [vmem:[%s1 + $0x138] sm:$0xf]
      %v545 = vld [vmem:[%s1 + $0x13c] sm:$0xf]
      %v546 = vld [vmem:[%s1 + $0x140] sm:$0xf]
      %v547 = vld [vmem:[%s1 + $0x144] sm:$0xf]
      %v548 = vld [vmem:[%s1 + $0x148] sm:$0xf]
      %v549 = vld [vmem:[%s1 + $0x14c] sm:$0xf]
      %v550 = vld [vmem:[%s1 + $0x150] sm:$0xf]
      %v551 = vld [vmem:[%s1 + $0x154] sm:$0xf]
      %v552 = vld [vmem:[%s1 + $0x158] sm:$0xf]
      %v553 = vld [vmem:[%s1 + $0x15c] sm:$0xf]
      %v554 = vld [vmem:[%s1 + $0x160] sm:$0xf]
      %v555 = vld [vmem:[%s1 + $0x164] sm:$0xf]
      %v556 = vld [vmem:[%s1 + $0x168] sm:$0xf]
      %v557 = vld [vmem:[%s1 + $0x16c] sm:$0xf]
      %v558 = vld [vmem:[%s1 + $0x170] sm:$0xf]
      %v559 = vld [vmem:[%s1 + $0x174] sm:$0xf]
      %v560 = vld [vmem:[%s1 + $0x178] sm:$0xf]
      %v561 = vld [vmem:[%s1 + $0x17c] sm:$0xf]
      %v562 = vld [vmem:[%s1 + $0x180] sm:$0xf]
      %v563 = vld [vmem:[%s1 + $0x184] sm:$0xf]
      %v564 = vld [vmem:[%s1 + $0x188] sm:$0xf]
      %v565 = vld [vmem:[%s1 + $0x18c] sm:$0xf]
      %v566 = vld [vmem:[%s2] sm:$0x1]
      %v568 = vlaneseq
      %v569 = vshrl.u32 %v568, 7
      %v570 = vsub.s32 0, %v569
      %v571 = vrot.slane %v566, %v570
      %v861 = vunpack.c.l.b16 %v178
      %v862 = vunpack.c.h.b16 %v178
      %v863 = vunpack.c.l.b16 %v179
      %v864 = vunpack.c.h.b16 %v179
      %v865 = vunpack.c.l.b16 %v180
      %v866 = vunpack.c.h.b16 %v180
      %v867 = vunpack.c.l.b16 %v181
      %v868 = vunpack.c.l.b16 %v182
      %v869 = vunpack.c.h.b16 %v182
      %v870 = vunpack.c.l.b16 %v183
      %v871 = vunpack.c.h.b16 %v183
      %v872 = vunpack.c.l.b16 %v184
      %v873 = vunpack.c.h.b16 %v184
      %v874 = vunpack.c.l.b16 %v185
      %v875 = vunpack.c.l.b16 %v186
      %v876 = vunpack.c.h.b16 %v186
      %v877 = vunpack.c.l.b16 %v187
      %v878 = vunpack.c.h.b16 %v187
      %v879 = vunpack.c.l.b16 %v188
      %v880 = vunpack.c.h.b16 %v188
      %v881 = vunpack.c.l.b16 %v189
      %v882 = vunpack.c.l.b16 %v190
      %v883 = vunpack.c.h.b16 %v190
      %v884 = vunpack.c.l.b16 %v191
      %v885 = vunpack.c.h.b16 %v191
      %v886 = vunpack.c.l.b16 %v192
      %v887 = vunpack.c.h.b16 %v192
      %v888 = vunpack.c.l.b16 %v193
      %v889 = vunpack.c.l.b16 %v194
      %v890 = vunpack.c.h.b16 %v194
      %v891 = vunpack.c.l.b16 %v195
      %v892 = vunpack.c.h.b16 %v195
      %v893 = vunpack.c.l.b16 %v196
      %v894 = vunpack.c.h.b16 %v196
      %v895 = vunpack.c.l.b16 %v197
      %v896 = vunpack.c.l.b16 %v198
      %v897 = vunpack.c.h.b16 %v198
      %v898 = vunpack.c.l.b16 %v199
      %v899 = vunpack.c.h.b16 %v199
      %v900 = vunpack.c.l.b16 %v200
      %v901 = vunpack.c.h.b16 %v200
      %v902 = vunpack.c.l.b16 %v201
      %v903 = vunpack.c.l.b16 %v202
      %v904 = vunpack.c.h.b16 %v202
      %v905 = vunpack.c.l.b16 %v203
      %v906 = vunpack.c.h.b16 %v203
      %v907 = vunpack.c.l.b16 %v204
      %v908 = vunpack.c.h.b16 %v204
      %v909 = vunpack.c.l.b16 %v205
      %v910 = vunpack.c.l.b16 %v206
      %v911 = vunpack.c.h.b16 %v206
      %v912 = vunpack.c.l.b16 %v207
      %v913 = vunpack.c.h.b16 %v207
      %v914 = vunpack.c.l.b16 %v208
      %v915 = vunpack.c.h.b16 %v208
      %v916 = vunpack.c.l.b16 %v209
      %v917 = vunpack.c.l.b16 %v210
      %v918 = vunpack.c.h.b16 %v210
      %v919 = vunpack.c.l.b16 %v211
      %v920 = vunpack.c.h.b16 %v211
      %v921 = vunpack.c.l.b16 %v212
      %v922 = vunpack.c.h.b16 %v212
      %v923 = vunpack.c.l.b16 %v213
      %v924 = vunpack.c.l.b16 %v214
      %v925 = vunpack.c.h.b16 %v214
      %v926 = vunpack.c.l.b16 %v215
      %v927 = vunpack.c.h.b16 %v215
      %v928 = vunpack.c.l.b16 %v216
      %v929 = vunpack.c.h.b16 %v216
      %v930 = vunpack.c.l.b16 %v217
      %v931 = vunpack.c.l.b16 %v218
      %v932 = vunpack.c.h.b16 %v218
      %v933 = vunpack.c.l.b16 %v219
      %v934 = vunpack.c.h.b16 %v219
      %v935 = vunpack.c.l.b16 %v220
      %v936 = vunpack.c.h.b16 %v220
      %v937 = vunpack.c.l.b16 %v221
      %v938 = vunpack.c.l.b16 %v222
      %v939 = vunpack.c.h.b16 %v222
      %v940 = vunpack.c.l.b16 %v223
      %v941 = vunpack.c.h.b16 %v223
      %v942 = vunpack.c.l.b16 %v224
      %v943 = vunpack.c.h.b16 %v224
      %v944 = vunpack.c.l.b16 %v225
      %v945 = vunpack.c.l.b16 %v226
      %v946 = vunpack.c.h.b16 %v226
      %v947 = vunpack.c.l.b16 %v227
      %v948 = vunpack.c.h.b16 %v227
      %v949 = vunpack.c.l.b16 %v228
      %v950 = vunpack.c.h.b16 %v228
      %v951 = vunpack.c.l.b16 %v229
      %v952 = vunpack.c.l.b16 %v230
      %v953 = vunpack.c.h.b16 %v230
      %v954 = vunpack.c.l.b16 %v231
      %v955 = vunpack.c.h.b16 %v231
      %v956 = vunpack.c.l.b16 %v232
      %v957 = vunpack.c.h.b16 %v232
      %v958 = vunpack.c.l.b16 %v233
      %v959 = vunpack.c.l.b16 %v234
      %v960 = vunpack.c.h.b16 %v234
      %v961 = vunpack.c.l.b16 %v235
      %v962 = vunpack.c.h.b16 %v235
      %v963 = vunpack.c.l.b16 %v236
      %v964 = vunpack.c.h.b16 %v236
      %v965 = vunpack.c.l.b16 %v237
      %v966 = vunpack.c.l.b16 %v238
      %v967 = vunpack.c.h.b16 %v238
      %v968 = vunpack.c.l.b16 %v239
      %v969 = vunpack.c.h.b16 %v239
      %v970 = vunpack.c.l.b16 %v240
      %v971 = vunpack.c.h.b16 %v240
      %v972 = vunpack.c.l.b16 %v241
      %v973 = vunpack.c.l.b16 %v242
      %v974 = vunpack.c.h.b16 %v242
      %v975 = vunpack.c.l.b16 %v243
      %v976 = vunpack.c.h.b16 %v243
      %v977 = vunpack.c.l.b16 %v244
      %v978 = vunpack.c.h.b16 %v244
      %v979 = vunpack.c.l.b16 %v245
      %v980 = vunpack.c.l.b16 %v246
      %v981 = vunpack.c.h.b16 %v246
      %v982 = vunpack.c.l.b16 %v247
      %v983 = vunpack.c.h.b16 %v247
      %v984 = vunpack.c.l.b16 %v248
      %v985 = vunpack.c.h.b16 %v248
      %v986 = vunpack.c.l.b16 %v249
      %v987 = vunpack.c.l.b16 %v250
      %v988 = vunpack.c.h.b16 %v250
      %v989 = vunpack.c.l.b16 %v251
      %v990 = vunpack.c.h.b16 %v251
      %v991 = vunpack.c.l.b16 %v252
      %v992 = vunpack.c.h.b16 %v252
      %v993 = vunpack.c.l.b16 %v253
      %v994 = vunpack.c.l.b16 %v254
      %v995 = vunpack.c.h.b16 %v254
      %v996 = vunpack.c.l.b16 %v255
      %v997 = vunpack.c.h.b16 %v255
      %v998 = vunpack.c.l.b16 %v256
      %v999 = vunpack.c.h.b16 %v256
      %v1000 = vunpack.c.l.b16 %v257
      %v1001 = vunpack.c.l.b16 %v258
      %v1002 = vunpack.c.h.b16 %v258
      %v1003 = vunpack.c.l.b16 %v259
      %v1004 = vunpack.c.h.b16 %v259
      %v1005 = vunpack.c.l.b16 %v260
      %v1006 = vunpack.c.h.b16 %v260
      %v1007 = vunpack.c.l.b16 %v261
      %v1008 = vunpack.c.l.b16 %v262
      %v1009 = vunpack.c.h.b16 %v262
      %v1010 = vunpack.c.l.b16 %v263
      %v1011 = vunpack.c.h.b16 %v263
      %v1012 = vunpack.c.l.b16 %v264
      %v1013 = vunpack.c.h.b16 %v264
      %v1014 = vunpack.c.l.b16 %v265
      %v1015 = vunpack.c.l.b16 %v266
      %v1016 = vunpack.c.h.b16 %v266
      %v1017 = vunpack.c.l.b16 %v267
      %v1018 = vunpack.c.h.b16 %v267
      %v1019 = vunpack.c.l.b16 %v268
      %v1020 = vunpack.c.h.b16 %v268
      %v1021 = vunpack.c.l.b16 %v269
      %v1022 = vunpack.c.l.b16 %v270
      %v1023 = vunpack.c.h.b16 %v270
      %v1024 = vunpack.c.l.b16 %v271
      %v1025 = vunpack.c.h.b16 %v271
      %v1026 = vunpack.c.l.b16 %v272
      %v1027 = vunpack.c.h.b16 %v272
      %v1028 = vunpack.c.l.b16 %v273
      %v1029 = vunpack.c.l.b16 %v274
      %v1030 = vunpack.c.h.b16 %v274
      %v1031 = vunpack.c.l.b16 %v275
      %v1032 = vunpack.c.h.b16 %v275
      %v1033 = vunpack.c.l.b16 %v276
      %v1034 = vunpack.c.h.b16 %v276
      %v1035 = vunpack.c.l.b16 %v277
      %v1036 = vunpack.c.l.b16 %v278
      %v1037 = vunpack.c.h.b16 %v278
      %v1038 = vunpack.c.l.b16 %v279
      %v1039 = vunpack.c.h.b16 %v279
      %v1040 = vunpack.c.l.b16 %v280
      %v1041 = vunpack.c.h.b16 %v280
      %v1042 = vunpack.c.l.b16 %v281
      %v1043 = vunpack.c.l.b16 %v282
      %v1044 = vunpack.c.h.b16 %v282
      %v1045 = vunpack.c.l.b16 %v283
      %v1046 = vunpack.c.h.b16 %v283
      %v1047 = vunpack.c.l.b16 %v284
      %v1048 = vunpack.c.h.b16 %v284
      %v1049 = vunpack.c.l.b16 %v285
      %v1050 = vunpack.c.l.b16 %v286
      %v1051 = vunpack.c.h.b16 %v286
      %v1052 = vunpack.c.l.b16 %v287
      %v1053 = vunpack.c.h.b16 %v287
      %v1054 = vunpack.c.l.b16 %v288
      %v1055 = vunpack.c.h.b16 %v288
      %v1056 = vunpack.c.l.b16 %v289
      %v1057 = vunpack.c.l.b16 %v290
      %v1058 = vunpack.c.h.b16 %v290
      %v1059 = vunpack.c.l.b16 %v291
      %v1060 = vunpack.c.h.b16 %v291
      %v1061 = vunpack.c.l.b16 %v292
      %v1062 = vunpack.c.h.b16 %v292
      %v1063 = vunpack.c.l.b16 %v293
      %v1064 = vunpack.c.l.b16 %v294
      %v1065 = vunpack.c.h.b16 %v294
      %v1066 = vunpack.c.l.b16 %v295
      %v1067 = vunpack.c.h.b16 %v295
      %v1068 = vunpack.c.l.b16 %v296
      %v1069 = vunpack.c.h.b16 %v296
      %v1070 = vunpack.c.l.b16 %v297
      %v1071 = vunpack.c.l.b16 %v298
      %v1072 = vunpack.c.h.b16 %v298
      %v1073 = vunpack.c.l.b16 %v299
      %v1074 = vunpack.c.h.b16 %v299
      %v1075 = vunpack.c.l.b16 %v300
      %v1076 = vunpack.c.h.b16 %v300
      %v1077 = vunpack.c.l.b16 %v301
      %v1078 = vunpack.c.l.b16 %v302
      %v1079 = vunpack.c.h.b16 %v302
      %v1080 = vunpack.c.l.b16 %v303
      %v1081 = vunpack.c.h.b16 %v303
      %v1082 = vunpack.c.l.b16 %v304
      %v1083 = vunpack.c.h.b16 %v304
      %v1084 = vunpack.c.l.b16 %v305
      %v1085 = vunpack.c.l.b16 %v306
      %v1086 = vunpack.c.h.b16 %v306
      %v1087 = vunpack.c.l.b16 %v307
      %v1088 = vunpack.c.h.b16 %v307
      %v1089 = vunpack.c.l.b16 %v308
      %v1090 = vunpack.c.h.b16 %v308
      %v1091 = vunpack.c.l.b16 %v309
      %v1092 = vunpack.c.l.b16 %v310
      %v1093 = vunpack.c.h.b16 %v310
      %v1094 = vunpack.c.l.b16 %v311
      %v1095 = vunpack.c.h.b16 %v311
      %v1096 = vunpack.c.l.b16 %v312
      %v1097 = vunpack.c.h.b16 %v312
      %v1098 = vunpack.c.l.b16 %v313
      %v1099 = vunpack.c.l.b16 %v314
      %v1100 = vunpack.c.h.b16 %v314
      %v1101 = vunpack.c.l.b16 %v315
      %v1102 = vunpack.c.h.b16 %v315
      %v1103 = vunpack.c.l.b16 %v316
      %v1104 = vunpack.c.h.b16 %v316
      %v1105 = vunpack.c.l.b16 %v317
      %v1106 = vunpack.c.l.b16 %v318
      %v1107 = vunpack.c.h.b16 %v318
      %v1108 = vunpack.c.l.b16 %v319
      %v1109 = vunpack.c.h.b16 %v319
      %v1110 = vunpack.c.l.b16 %v320
      %v1111 = vunpack.c.h.b16 %v320
      %v1112 = vunpack.c.l.b16 %v321
      %v1113 = vunpack.c.l.b16 %v322
      %v1114 = vunpack.c.h.b16 %v322
      %v1115 = vunpack.c.l.b16 %v323
      %v1116 = vunpack.c.h.b16 %v323
      %v1117 = vunpack.c.l.b16 %v324
      %v1118 = vunpack.c.h.b16 %v324
      %v1119 = vunpack.c.l.b16 %v325
      %v1120 = vunpack.c.l.b16 %v326
      %v1121 = vunpack.c.h.b16 %v326
      %v1122 = vunpack.c.l.b16 %v327
      %v1123 = vunpack.c.h.b16 %v327
      %v1124 = vunpack.c.l.b16 %v328
      %v1125 = vunpack.c.h.b16 %v328
      %v1126 = vunpack.c.l.b16 %v329
      %v1127 = vunpack.c.l.b16 %v330
      %v1128 = vunpack.c.h.b16 %v330
      %v1129 = vunpack.c.l.b16 %v331
      %v1130 = vunpack.c.h.b16 %v331
      %v1131 = vunpack.c.l.b16 %v332
      %v1132 = vunpack.c.h.b16 %v332
      %v1133 = vunpack.c.l.b16 %v333
      %v1134 = vunpack.c.l.b16 %v334
      %v1135 = vunpack.c.h.b16 %v334
      %v1136 = vunpack.c.l.b16 %v335
      %v1137 = vunpack.c.h.b16 %v335
      %v1138 = vunpack.c.l.b16 %v336
      %v1139 = vunpack.c.h.b16 %v336
      %v1140 = vunpack.c.l.b16 %v337
      %v1141 = vunpack.c.l.b16 %v338
      %v1142 = vunpack.c.h.b16 %v338
      %v1143 = vunpack.c.l.b16 %v339
      %v1144 = vunpack.c.h.b16 %v339
      %v1145 = vunpack.c.l.b16 %v340
      %v1146 = vunpack.c.h.b16 %v340
      %v1147 = vunpack.c.l.b16 %v341
      %v1148 = vunpack.c.l.b16 %v342
      %v1149 = vunpack.c.h.b16 %v342
      %v1150 = vunpack.c.l.b16 %v343
      %v1151 = vunpack.c.h.b16 %v343
      %v1152 = vunpack.c.l.b16 %v344
      %v1153 = vunpack.c.h.b16 %v344
      %v1154 = vunpack.c.l.b16 %v345
      %v1155 = vunpack.c.l.b16 %v346
      %v1156 = vunpack.c.h.b16 %v346
      %v1157 = vunpack.c.l.b16 %v347
      %v1158 = vunpack.c.h.b16 %v347
      %v1159 = vunpack.c.l.b16 %v348
      %v1160 = vunpack.c.h.b16 %v348
      %v1161 = vunpack.c.l.b16 %v349
      %v1162 = vunpack.c.l.b16 %v350
      %v1163 = vunpack.c.h.b16 %v350
      %v1164 = vunpack.c.l.b16 %v351
      %v1165 = vunpack.c.h.b16 %v351
      %v1166 = vunpack.c.l.b16 %v352
      %v1167 = vunpack.c.h.b16 %v352
      %v1168 = vunpack.c.l.b16 %v353
      %v1169 = vunpack.c.l.b16 %v354
      %v1170 = vunpack.c.h.b16 %v354
      %v1171 = vunpack.c.l.b16 %v355
      %v1172 = vunpack.c.h.b16 %v355
      %v1173 = vunpack.c.l.b16 %v356
      %v1174 = vunpack.c.h.b16 %v356
      %v1175 = vunpack.c.l.b16 %v357
      %v1176 = vunpack.c.l.b16 %v358
      %v1177 = vunpack.c.h.b16 %v358
      %v1178 = vunpack.c.l.b16 %v359
      %v1179 = vunpack.c.h.b16 %v359
      %v1180 = vunpack.c.l.b16 %v360
      %v1181 = vunpack.c.h.b16 %v360
      %v1182 = vunpack.c.l.b16 %v361
      %v1183 = vunpack.c.l.b16 %v362
      %v1184 = vunpack.c.h.b16 %v362
      %v1185 = vunpack.c.l.b16 %v363
      %v1186 = vunpack.c.h.b16 %v363
      %v1187 = vunpack.c.l.b16 %v364
      %v1188 = vunpack.c.h.b16 %v364
      %v1189 = vunpack.c.l.b16 %v365
      %v1190 = vunpack.c.l.b16 %v366
      %v1191 = vunpack.c.h.b16 %v366
      %v1192 = vunpack.c.l.b16 %v367
      %v1193 = vunpack.c.h.b16 %v367
      %v1194 = vunpack.c.l.b16 %v368
      %v1195 = vunpack.c.h.b16 %v368
      %v1196 = vunpack.c.l.b16 %v369
      %v1197 = vunpack.c.l.b16 %v370
      %v1198 = vunpack.c.h.b16 %v370
      %v1199 = vunpack.c.l.b16 %v371
      %v1200 = vunpack.c.h.b16 %v371
      %v1201 = vunpack.c.l.b16 %v372
      %v1202 = vunpack.c.h.b16 %v372
      %v1203 = vunpack.c.l.b16 %v373
      %v1204 = vunpack.c.l.b16 %v374
      %v1205 = vunpack.c.h.b16 %v374
      %v1206 = vunpack.c.l.b16 %v375
      %v1207 = vunpack.c.h.b16 %v375
      %v1208 = vunpack.c.l.b16 %v376
      %v1209 = vunpack.c.h.b16 %v376
      %v1210 = vunpack.c.l.b16 %v377
      %v1211 = vunpack.c.l.b16 %v378
      %v1212 = vunpack.c.h.b16 %v378
      %v1213 = vunpack.c.l.b16 %v379
      %v1214 = vunpack.c.h.b16 %v379
      %v1215 = vunpack.c.l.b16 %v380
      %v1216 = vunpack.c.h.b16 %v380
      %v1217 = vunpack.c.l.b16 %v381
      %v1218 = vunpack.c.l.b16 %v382
      %v1219 = vunpack.c.h.b16 %v382
      %v1220 = vunpack.c.l.b16 %v383
      %v1221 = vunpack.c.h.b16 %v383
      %v1222 = vunpack.c.l.b16 %v384
      %v1223 = vunpack.c.h.b16 %v384
      %v1224 = vunpack.c.l.b16 %v385
      %v1225 = vunpack.c.l.b16 %v386
      %v1226 = vunpack.c.h.b16 %v386
      %v1227 = vunpack.c.l.b16 %v387
      %v1228 = vunpack.c.h.b16 %v387
      %v1229 = vunpack.c.l.b16 %v388
      %v1230 = vunpack.c.h.b16 %v388
      %v1231 = vunpack.c.l.b16 %v389
      %v1232 = vunpack.c.l.b16 %v390
      %v1233 = vunpack.c.h.b16 %v390
      %v1234 = vunpack.c.l.b16 %v391
      %v1235 = vunpack.c.h.b16 %v391
      %v1236 = vunpack.c.l.b16 %v392
      %v1237 = vunpack.c.h.b16 %v392
      %v1238 = vunpack.c.l.b16 %v393
      %v1239 = vunpack.c.l.b16 %v394
      %v1240 = vunpack.c.h.b16 %v394
      %v1241 = vunpack.c.l.b16 %v395
      %v1242 = vunpack.c.h.b16 %v395
      %v1243 = vunpack.c.l.b16 %v396
      %v1244 = vunpack.c.h.b16 %v396
      %v1245 = vunpack.c.l.b16 %v397
      %v1246 = vunpack.c.l.b16 %v398
      %v1247 = vunpack.c.h.b16 %v398
      %v1248 = vunpack.c.l.b16 %v399
      %v1249 = vunpack.c.h.b16 %v399
      %v1250 = vunpack.c.l.b16 %v400
      %v1251 = vunpack.c.h.b16 %v400
      %v1252 = vunpack.c.l.b16 %v401
      %v1253 = vunpack.c.l.b16 %v402
      %v1254 = vunpack.c.h.b16 %v402
      %v1255 = vunpack.c.l.b16 %v403
      %v1256 = vunpack.c.h.b16 %v403
      %v1257 = vunpack.c.l.b16 %v404
      %v1258 = vunpack.c.h.b16 %v404
      %v1259 = vunpack.c.l.b16 %v405
      %v1260 = vunpack.c.l.b16 %v406
      %v1261 = vunpack.c.h.b16 %v406
      %v1262 = vunpack.c.l.b16 %v407
      %v1263 = vunpack.c.h.b16 %v407
      %v1264 = vunpack.c.l.b16 %v408
      %v1265 = vunpack.c.h.b16 %v408
      %v1266 = vunpack.c.l.b16 %v409
      %v1267 = vunpack.c.l.b16 %v410
      %v1268 = vunpack.c.h.b16 %v410
      %v1269 = vunpack.c.l.b16 %v411
      %v1270 = vunpack.c.h.b16 %v411
      %v1271 = vunpack.c.l.b16 %v412
      %v1272 = vunpack.c.h.b16 %v412
      %v1273 = vunpack.c.l.b16 %v413
      %v1274 = vunpack.c.l.b16 %v414
      %v1275 = vunpack.c.h.b16 %v414
      %v1276 = vunpack.c.l.b16 %v415
      %v1277 = vunpack.c.h.b16 %v415
      %v1278 = vunpack.c.l.b16 %v416
      %v1279 = vunpack.c.h.b16 %v416
      %v1280 = vunpack.c.l.b16 %v417
      %v1281 = vunpack.c.l.b16 %v418
      %v1282 = vunpack.c.h.b16 %v418
      %v1283 = vunpack.c.l.b16 %v419
      %v1284 = vunpack.c.h.b16 %v419
      %v1285 = vunpack.c.l.b16 %v420
      %v1286 = vunpack.c.h.b16 %v420
      %v1287 = vunpack.c.l.b16 %v421
      %v1288 = vunpack.c.l.b16 %v422
      %v1289 = vunpack.c.h.b16 %v422
      %v1290 = vunpack.c.l.b16 %v423
      %v1291 = vunpack.c.h.b16 %v423
      %v1292 = vunpack.c.l.b16 %v424
      %v1293 = vunpack.c.h.b16 %v424
      %v1294 = vunpack.c.l.b16 %v425
      %v1295 = vunpack.c.l.b16 %v426
      %v1296 = vunpack.c.h.b16 %v426
      %v1297 = vunpack.c.l.b16 %v427
      %v1298 = vunpack.c.h.b16 %v427
      %v1299 = vunpack.c.l.b16 %v428
      %v1300 = vunpack.c.h.b16 %v428
      %v1301 = vunpack.c.l.b16 %v429
      %v1302 = vunpack.c.l.b16 %v430
      %v1303 = vunpack.c.h.b16 %v430
      %v1304 = vunpack.c.l.b16 %v431
      %v1305 = vunpack.c.h.b16 %v431
      %v1306 = vunpack.c.l.b16 %v432
      %v1307 = vunpack.c.h.b16 %v432
      %v1308 = vunpack.c.l.b16 %v433
      %v1309 = vunpack.c.l.b16 %v434
      %v1310 = vunpack.c.h.b16 %v434
      %v1311 = vunpack.c.l.b16 %v435
      %v1312 = vunpack.c.h.b16 %v435
      %v1313 = vunpack.c.l.b16 %v436
      %v1314 = vunpack.c.h.b16 %v436
      %v1315 = vunpack.c.l.b16 %v437
      %v1316 = vunpack.c.l.b16 %v438
      %v1317 = vunpack.c.h.b16 %v438
      %v1318 = vunpack.c.l.b16 %v439
      %v1319 = vunpack.c.h.b16 %v439
      %v1320 = vunpack.c.l.b16 %v440
      %v1321 = vunpack.c.h.b16 %v440
      %v1322 = vunpack.c.l.b16 %v441
      %v1323 = vunpack.c.l.b16 %v442
      %v1324 = vunpack.c.h.b16 %v442
      %v1325 = vunpack.c.l.b16 %v443
      %v1326 = vunpack.c.h.b16 %v443
      %v1327 = vunpack.c.l.b16 %v444
      %v1328 = vunpack.c.h.b16 %v444
      %v1329 = vunpack.c.l.b16 %v445
      %v1330 = vunpack.c.l.b16 %v446
      %v1331 = vunpack.c.h.b16 %v446
      %v1332 = vunpack.c.l.b16 %v447
      %v1333 = vunpack.c.h.b16 %v447
      %v1334 = vunpack.c.l.b16 %v448
      %v1335 = vunpack.c.h.b16 %v448
      %v1336 = vunpack.c.l.b16 %v449
      %v1337 = vunpack.c.l.b16 %v450
      %v1338 = vunpack.c.h.b16 %v450
      %v1339 = vunpack.c.l.b16 %v451
      %v1340 = vunpack.c.h.b16 %v451
      %v1341 = vunpack.c.l.b16 %v452
      %v1342 = vunpack.c.h.b16 %v452
      %v1343 = vunpack.c.l.b16 %v453
      %v1344 = vunpack.c.l.b16 %v454
      %v1345 = vunpack.c.h.b16 %v454
      %v1346 = vunpack.c.l.b16 %v455
      %v1347 = vunpack.c.h.b16 %v455
      %v1348 = vunpack.c.l.b16 %v456
      %v1349 = vunpack.c.h.b16 %v456
      %v1350 = vunpack.c.l.b16 %v457
      %v1351 = vunpack.c.l.b16 %v458
      %v1352 = vunpack.c.h.b16 %v458
      %v1353 = vunpack.c.l.b16 %v459
      %v1354 = vunpack.c.h.b16 %v459
      %v1355 = vunpack.c.l.b16 %v460
      %v1356 = vunpack.c.h.b16 %v460
      %v1357 = vunpack.c.l.b16 %v461
      %v1358 = vunpack.c.l.b16 %v462
      %v1359 = vunpack.c.h.b16 %v462
      %v1360 = vunpack.c.l.b16 %v463
      %v1361 = vunpack.c.h.b16 %v463
      %v1362 = vunpack.c.l.b16 %v464
      %v1363 = vunpack.c.h.b16 %v464
      %v1364 = vunpack.c.l.b16 %v465
      %v1365 = vpack.c.b16 %v868, %v861
      %v1366 = vpack.c.b16 %v869, %v862
      %v1367 = vpack.c.b16 %v870, %v863
      %v1368 = vpack.c.b16 %v871, %v864
      %v1369 = vpack.c.b16 %v872, %v865
      %v1370 = vpack.c.b16 %v873, %v866
      %v1371 = vpack.c.b16 %v874, %v867
      %v1372 = vpack.c.b16 %v882, %v875
      %v1373 = vpack.c.b16 %v883, %v876
      %v1374 = vpack.c.b16 %v884, %v877
      %v1375 = vpack.c.b16 %v885, %v878
      %v1376 = vpack.c.b16 %v886, %v879
      %v1377 = vpack.c.b16 %v887, %v880
      %v1378 = vpack.c.b16 %v888, %v881
      %v1379 = vpack.c.b16 %v896, %v889
      %v1380 = vpack.c.b16 %v897, %v890
      %v1381 = vpack.c.b16 %v898, %v891
      %v1382 = vpack.c.b16 %v899, %v892
      %v1383 = vpack.c.b16 %v900, %v893
      %v1384 = vpack.c.b16 %v901, %v894
      %v1385 = vpack.c.b16 %v902, %v895
      %v1386 = vpack.c.b16 %v910, %v903
      %v1387 = vpack.c.b16 %v911, %v904
      %v1388 = vpack.c.b16 %v912, %v905
      %v1389 = vpack.c.b16 %v913, %v906
      %v1390 = vpack.c.b16 %v914, %v907
      %v1391 = vpack.c.b16 %v915, %v908
      %v1392 = vpack.c.b16 %v916, %v909
      %v1393 = vpack.c.b16 %v924, %v917
      %v1394 = vpack.c.b16 %v925, %v918
      %v1395 = vpack.c.b16 %v926, %v919
      %v1396 = vpack.c.b16 %v927, %v920
      %v1397 = vpack.c.b16 %v928, %v921
      %v1398 = vpack.c.b16 %v929, %v922
      %v1399 = vpack.c.b16 %v930, %v923
      %v1400 = vpack.c.b16 %v938, %v931
      %v1401 = vpack.c.b16 %v939, %v932
      %v1402 = vpack.c.b16 %v940, %v933
      %v1403 = vpack.c.b16 %v941, %v934
      %v1404 = vpack.c.b16 %v942, %v935
      %v1405 = vpack.c.b16 %v943, %v936
      %v1406 = vpack.c.b16 %v944, %v937
      %v1407 = vpack.c.b16 %v952, %v945
      %v1408 = vpack.c.b16 %v953, %v946
      %v1409 = vpack.c.b16 %v954, %v947
      %v1410 = vpack.c.b16 %v955, %v948
      %v1411 = vpack.c.b16 %v956, %v949
      %v1412 = vpack.c.b16 %v957, %v950
      %v1413 = vpack.c.b16 %v958, %v951
      %v1414 = vpack.c.b16 %v966, %v959
      %v1415 = vpack.c.b16 %v967, %v960
      %v1416 = vpack.c.b16 %v968, %v961
      %v1417 = vpack.c.b16 %v969, %v962
      %v1418 = vpack.c.b16 %v970, %v963
      %v1419 = vpack.c.b16 %v971, %v964
      %v1420 = vpack.c.b16 %v972, %v965
      %v1421 = vpack.c.b16 %v980, %v973
      %v1422 = vpack.c.b16 %v981, %v974
      %v1423 = vpack.c.b16 %v982, %v975
      %v1424 = vpack.c.b16 %v983, %v976
      %v1425 = vpack.c.b16 %v984, %v977
      %v1426 = vpack.c.b16 %v985, %v978
      %v1427 = vpack.c.b16 %v986, %v979
      %v1428 = vpack.c.b16 %v994, %v987
      %v1429 = vpack.c.b16 %v995, %v988
      %v1430 = vpack.c.b16 %v996, %v989
      %v1431 = vpack.c.b16 %v997, %v990
      %v1432 = vpack.c.b16 %v998, %v991
      %v1433 = vpack.c.b16 %v999, %v992
      %v1434 = vpack.c.b16 %v1000, %v993
      %v1435 = vpack.c.b16 %v1008, %v1001
      %v1436 = vpack.c.b16 %v1009, %v1002
      %v1437 = vpack.c.b16 %v1010, %v1003
      %v1438 = vpack.c.b16 %v1011, %v1004
      %v1439 = vpack.c.b16 %v1012, %v1005
      %v1440 = vpack.c.b16 %v1013, %v1006
      %v1441 = vpack.c.b16 %v1014, %v1007
      %v1442 = vpack.c.b16 %v1022, %v1015
      %v1443 = vpack.c.b16 %v1023, %v1016
      %v1444 = vpack.c.b16 %v1024, %v1017
      %v1445 = vpack.c.b16 %v1025, %v1018
      %v1446 = vpack.c.b16 %v1026, %v1019
      %v1447 = vpack.c.b16 %v1027, %v1020
      %v1448 = vpack.c.b16 %v1028, %v1021
      %v1449 = vpack.c.b16 %v1036, %v1029
      %v1450 = vpack.c.b16 %v1037, %v1030
      %v1451 = vpack.c.b16 %v1038, %v1031
      %v1452 = vpack.c.b16 %v1039, %v1032
      %v1453 = vpack.c.b16 %v1040, %v1033
      %v1454 = vpack.c.b16 %v1041, %v1034
      %v1455 = vpack.c.b16 %v1042, %v1035
      %v1456 = vpack.c.b16 %v1050, %v1043
      %v1457 = vpack.c.b16 %v1051, %v1044
      %v1458 = vpack.c.b16 %v1052, %v1045
      %v1459 = vpack.c.b16 %v1053, %v1046
      %v1460 = vpack.c.b16 %v1054, %v1047
      %v1461 = vpack.c.b16 %v1055, %v1048
      %v1462 = vpack.c.b16 %v1056, %v1049
      %v1463 = vpack.c.b16 %v1064, %v1057
      %v1464 = vpack.c.b16 %v1065, %v1058
      %v1465 = vpack.c.b16 %v1066, %v1059
      %v1466 = vpack.c.b16 %v1067, %v1060
      %v1467 = vpack.c.b16 %v1068, %v1061
      %v1468 = vpack.c.b16 %v1069, %v1062
      %v1469 = vpack.c.b16 %v1070, %v1063
      %v1470 = vpack.c.b16 %v1078, %v1071
      %v1471 = vpack.c.b16 %v1079, %v1072
      %v1472 = vpack.c.b16 %v1080, %v1073
      %v1473 = vpack.c.b16 %v1081, %v1074
      %v1474 = vpack.c.b16 %v1082, %v1075
      %v1475 = vpack.c.b16 %v1083, %v1076
      %v1476 = vpack.c.b16 %v1084, %v1077
      %v1477 = vpack.c.b16 %v1092, %v1085
      %v1478 = vpack.c.b16 %v1093, %v1086
      %v1479 = vpack.c.b16 %v1094, %v1087
      %v1480 = vpack.c.b16 %v1095, %v1088
      %v1481 = vpack.c.b16 %v1096, %v1089
      %v1482 = vpack.c.b16 %v1097, %v1090
      %v1483 = vpack.c.b16 %v1098, %v1091
      %v1484 = vpack.c.b16 %v1106, %v1099
      %v1485 = vpack.c.b16 %v1107, %v1100
      %v1486 = vpack.c.b16 %v1108, %v1101
      %v1487 = vpack.c.b16 %v1109, %v1102
      %v1488 = vpack.c.b16 %v1110, %v1103
      %v1489 = vpack.c.b16 %v1111, %v1104
      %v1490 = vpack.c.b16 %v1112, %v1105
      %v1491 = vpack.c.b16 %v1120, %v1113
      %v1492 = vpack.c.b16 %v1121, %v1114
      %v1493 = vpack.c.b16 %v1122, %v1115
      %v1494 = vpack.c.b16 %v1123, %v1116
      %v1495 = vpack.c.b16 %v1124, %v1117
      %v1496 = vpack.c.b16 %v1125, %v1118
      %v1497 = vpack.c.b16 %v1126, %v1119
      %v1498 = vpack.c.b16 %v1134, %v1127
      %v1499 = vpack.c.b16 %v1135, %v1128
      %v1500 = vpack.c.b16 %v1136, %v1129
      %v1501 = vpack.c.b16 %v1137, %v1130
      %v1502 = vpack.c.b16 %v1138, %v1131
      %v1503 = vpack.c.b16 %v1139, %v1132
      %v1504 = vpack.c.b16 %v1140, %v1133
      %v1505 = vpack.c.b16 %v1148, %v1141
      %v1506 = vpack.c.b16 %v1149, %v1142
      %v1507 = vpack.c.b16 %v1150, %v1143
      %v1508 = vpack.c.b16 %v1151, %v1144
      %v1509 = vpack.c.b16 %v1152, %v1145
      %v1510 = vpack.c.b16 %v1153, %v1146
      %v1511 = vpack.c.b16 %v1154, %v1147
      %v1512 = vpack.c.b16 %v1162, %v1155
      %v1513 = vpack.c.b16 %v1163, %v1156
      %v1514 = vpack.c.b16 %v1164, %v1157
      %v1515 = vpack.c.b16 %v1165, %v1158
      %v1516 = vpack.c.b16 %v1166, %v1159
      %v1517 = vpack.c.b16 %v1167, %v1160
      %v1518 = vpack.c.b16 %v1168, %v1161
      %v1519 = vpack.c.b16 %v1176, %v1169
      %v1520 = vpack.c.b16 %v1177, %v1170
      %v1521 = vpack.c.b16 %v1178, %v1171
      %v1522 = vpack.c.b16 %v1179, %v1172
      %v1523 = vpack.c.b16 %v1180, %v1173
      %v1524 = vpack.c.b16 %v1181, %v1174
      %v1525 = vpack.c.b16 %v1182, %v1175
      %v1526 = vpack.c.b16 %v1190, %v1183
      %v1527 = vpack.c.b16 %v1191, %v1184
      %v1528 = vpack.c.b16 %v1192, %v1185
      %v1529 = vpack.c.b16 %v1193, %v1186
      %v1530 = vpack.c.b16 %v1194, %v1187
      %v1531 = vpack.c.b16 %v1195, %v1188
      %v1532 = vpack.c.b16 %v1196, %v1189
      %v1533 = vpack.c.b16 %v1204, %v1197
      %v1534 = vpack.c.b16 %v1205, %v1198
      %v1535 = vpack.c.b16 %v1206, %v1199
      %v1536 = vpack.c.b16 %v1207, %v1200
      %v1537 = vpack.c.b16 %v1208, %v1201
      %v1538 = vpack.c.b16 %v1209, %v1202
      %v1539 = vpack.c.b16 %v1210, %v1203
      %v1540 = vpack.c.b16 %v1218, %v1211
      %v1541 = vpack.c.b16 %v1219, %v1212
      %v1542 = vpack.c.b16 %v1220, %v1213
      %v1543 = vpack.c.b16 %v1221, %v1214
      %v1544 = vpack.c.b16 %v1222, %v1215
      %v1545 = vpack.c.b16 %v1223, %v1216
      %v1546 = vpack.c.b16 %v1224, %v1217
      %v1547 = vpack.c.b16 %v1232, %v1225
      %v1548 = vpack.c.b16 %v1233, %v1226
      %v1549 = vpack.c.b16 %v1234, %v1227
      %v1550 = vpack.c.b16 %v1235, %v1228
      %v1551 = vpack.c.b16 %v1236, %v1229
      %v1552 = vpack.c.b16 %v1237, %v1230
      %v1553 = vpack.c.b16 %v1238, %v1231
      %v1554 = vpack.c.b16 %v1246, %v1239
      %v1555 = vpack.c.b16 %v1247, %v1240
      %v1556 = vpack.c.b16 %v1248, %v1241
      %v1557 = vpack.c.b16 %v1249, %v1242
      %v1558 = vpack.c.b16 %v1250, %v1243
      %v1559 = vpack.c.b16 %v1251, %v1244
      %v1560 = vpack.c.b16 %v1252, %v1245
      %v1561 = vpack.c.b16 %v1260, %v1253
      %v1562 = vpack.c.b16 %v1261, %v1254
      %v1563 = vpack.c.b16 %v1262, %v1255
      %v1564 = vpack.c.b16 %v1263, %v1256
      %v1565 = vpack.c.b16 %v1264, %v1257
      %v1566 = vpack.c.b16 %v1265, %v1258
      %v1567 = vpack.c.b16 %v1266, %v1259
      %v1568 = vpack.c.b16 %v1274, %v1267
      %v1569 = vpack.c.b16 %v1275, %v1268
      %v1570 = vpack.c.b16 %v1276, %v1269
      %v1571 = vpack.c.b16 %v1277, %v1270
      %v1572 = vpack.c.b16 %v1278, %v1271
      %v1573 = vpack.c.b16 %v1279, %v1272
      %v1574 = vpack.c.b16 %v1280, %v1273
      %v1575 = vpack.c.b16 %v1288, %v1281
      %v1576 = vpack.c.b16 %v1289, %v1282
      %v1577 = vpack.c.b16 %v1290, %v1283
      %v1578 = vpack.c.b16 %v1291, %v1284
      %v1579 = vpack.c.b16 %v1292, %v1285
      %v1580 = vpack.c.b16 %v1293, %v1286
      %v1581 = vpack.c.b16 %v1294, %v1287
      %v1582 = vpack.c.b16 %v1302, %v1295
      %v1583 = vpack.c.b16 %v1303, %v1296
      %v1584 = vpack.c.b16 %v1304, %v1297
      %v1585 = vpack.c.b16 %v1305, %v1298
      %v1586 = vpack.c.b16 %v1306, %v1299
      %v1587 = vpack.c.b16 %v1307, %v1300
      %v1588 = vpack.c.b16 %v1308, %v1301
      %v1589 = vpack.c.b16 %v1316, %v1309
      %v1590 = vpack.c.b16 %v1317, %v1310
      %v1591 = vpack.c.b16 %v1318, %v1311
      %v1592 = vpack.c.b16 %v1319, %v1312
      %v1593 = vpack.c.b16 %v1320, %v1313
      %v1594 = vpack.c.b16 %v1321, %v1314
      %v1595 = vpack.c.b16 %v1322, %v1315
      %v1596 = vpack.c.b16 %v1330, %v1323
      %v1597 = vpack.c.b16 %v1331, %v1324
      %v1598 = vpack.c.b16 %v1332, %v1325
      %v1599 = vpack.c.b16 %v1333, %v1326
      %v1600 = vpack.c.b16 %v1334, %v1327
      %v1601 = vpack.c.b16 %v1335, %v1328
      %v1602 = vpack.c.b16 %v1336, %v1329
      %v1603 = vpack.c.b16 %v1344, %v1337
      %v1604 = vpack.c.b16 %v1345, %v1338
      %v1605 = vpack.c.b16 %v1346, %v1339
      %v1606 = vpack.c.b16 %v1347, %v1340
      %v1607 = vpack.c.b16 %v1348, %v1341
      %v1608 = vpack.c.b16 %v1349, %v1342
      %v1609 = vpack.c.b16 %v1350, %v1343
      %v1610 = vpack.c.b16 %v1358, %v1351
      %v1611 = vpack.c.b16 %v1359, %v1352
      %v1612 = vpack.c.b16 %v1360, %v1353
      %v1613 = vpack.c.b16 %v1361, %v1354
      %v1614 = vpack.c.b16 %v1362, %v1355
      %v1615 = vpack.c.b16 %v1363, %v1356
      %v1616 = vpack.c.b16 %v1364, %v1357
      %v1933 = vunpack.c.l.b16 %v466
      %v1934 = vunpack.c.l.b16 %v467
      %v1935 = vunpack.c.l.b16 %v468
      %v1936 = vunpack.c.l.b16 %v469
      %v1937 = vunpack.c.l.b16 %v470
      %v1938 = vunpack.c.l.b16 %v471
      %v1939 = vunpack.c.l.b16 %v472
      %v1940 = vunpack.c.l.b16 %v473
      %v1941 = vunpack.c.l.b16 %v474
      %v1942 = vunpack.c.l.b16 %v475
      %v1943 = vunpack.c.l.b16 %v476
      %v1944 = vunpack.c.l.b16 %v477
      %v1945 = vunpack.c.l.b16 %v478
      %v1946 = vunpack.c.l.b16 %v479
      %v1947 = vunpack.c.l.b16 %v480
      %v1948 = vunpack.c.l.b16 %v481
      %v1949 = vunpack.c.l.b16 %v482
      %v1950 = vunpack.c.l.b16 %v483
      %v1951 = vunpack.c.l.b16 %v484
      %v1952 = vunpack.c.l.b16 %v485
      %v1953 = vunpack.c.l.b16 %v486
      %v1954 = vunpack.c.l.b16 %v487
      %v1955 = vunpack.c.l.b16 %v488
      %v1956 = vunpack.c.l.b16 %v489
      %v1957 = vunpack.c.l.b16 %v490
      %v1958 = vunpack.c.l.b16 %v491
      %v1959 = vunpack.c.l.b16 %v492
      %v1960 = vunpack.c.l.b16 %v493
      %v1961 = vunpack.c.l.b16 %v494
      %v1962 = vunpack.c.l.b16 %v495
      %v1963 = vunpack.c.l.b16 %v496
      %v1964 = vunpack.c.l.b16 %v497
      %v1965 = vunpack.c.l.b16 %v498
      %v1966 = vunpack.c.l.b16 %v499
      %v1967 = vunpack.c.l.b16 %v500
      %v1968 = vunpack.c.l.b16 %v501
      %v1969 = vunpack.c.l.b16 %v502
      %v1970 = vunpack.c.l.b16 %v503
      %v1971 = vunpack.c.l.b16 %v504
      %v1972 = vunpack.c.l.b16 %v505
      %v1973 = vunpack.c.l.b16 %v506
      %v1974 = vunpack.c.l.b16 %v507
      %v1975 = vunpack.c.l.b16 %v508
      %v1976 = vunpack.c.l.b16 %v509
      %v1977 = vunpack.c.l.b16 %v510
      %v1978 = vunpack.c.l.b16 %v511
      %v1979 = vunpack.c.l.b16 %v512
      %v1980 = vunpack.c.l.b16 %v513
      %v1981 = vunpack.c.l.b16 %v514
      %v1982 = vunpack.c.l.b16 %v515
      %v1983 = vunpack.c.l.b16 %v516
      %v1984 = vunpack.c.l.b16 %v517
      %v1985 = vunpack.c.l.b16 %v518
      %v1986 = vunpack.c.l.b16 %v519
      %v1987 = vunpack.c.l.b16 %v520
      %v1988 = vunpack.c.l.b16 %v521
      %v1989 = vunpack.c.l.b16 %v522
      %v1990 = vunpack.c.l.b16 %v523
      %v1991 = vunpack.c.l.b16 %v524
      %v1992 = vunpack.c.l.b16 %v525
      %v1993 = vunpack.c.l.b16 %v526
      %v1994 = vunpack.c.l.b16 %v527
      %v1995 = vunpack.c.l.b16 %v528
      %v1996 = vunpack.c.l.b16 %v529
      %v1997 = vunpack.c.l.b16 %v530
      %v1998 = vunpack.c.l.b16 %v531
      %v1999 = vunpack.c.l.b16 %v532
      %v2000 = vunpack.c.l.b16 %v533
      %v2001 = vunpack.c.l.b16 %v534
      %v2002 = vunpack.c.l.b16 %v535
      %v2003 = vunpack.c.l.b16 %v536
      %v2004 = vunpack.c.l.b16 %v537
      %v2005 = vunpack.c.l.b16 %v538
      %v2006 = vunpack.c.l.b16 %v539
      %v2007 = vunpack.c.l.b16 %v540
      %v2008 = vunpack.c.l.b16 %v541
      %v2009 = vunpack.c.l.b16 %v542
      %v2010 = vunpack.c.l.b16 %v543
      %v2011 = vunpack.c.l.b16 %v544
      %v2012 = vunpack.c.l.b16 %v545
      %v2013 = vunpack.c.l.b16 %v546
      %v2014 = vunpack.c.l.b16 %v547
      %v2015 = vunpack.c.l.b16 %v548
      %v2016 = vunpack.c.l.b16 %v549
      %v2017 = vunpack.c.l.b16 %v550
      %v2018 = vunpack.c.l.b16 %v551
      %v2019 = vunpack.c.l.b16 %v552
      %v2020 = vunpack.c.l.b16 %v553
      %v2021 = vunpack.c.l.b16 %v554
      %v2022 = vunpack.c.l.b16 %v555
      %v2023 = vunpack.c.l.b16 %v556
      %v2024 = vunpack.c.l.b16 %v557
      %v2025 = vunpack.c.l.b16 %v558
      %v2026 = vunpack.c.l.b16 %v559
      %v2027 = vunpack.c.l.b16 %v560
      %v2028 = vunpack.c.l.b16 %v561
      %v2029 = vunpack.c.l.b16 %v562
      %v2030 = vunpack.c.l.b16 %v563
      %v2031 = vunpack.c.l.b16 %v564
      %v2032 = vunpack.c.l.b16 %v565
      %v2033 = vpack.c.b16 %v1934, %v1933
      %v2034 = vpack.c.b16 %v1936, %v1935
      %v2035 = vpack.c.b16 %v1938, %v1937
      %v2036 = vpack.c.b16 %v1940, %v1939
      %v2037 = vpack.c.b16 %v1942, %v1941
      %v2038 = vpack.c.b16 %v1944, %v1943
      %v2039 = vpack.c.b16 %v1946, %v1945
      %v2040 = vpack.c.b16 %v1948, %v1947
      %v2041 = vpack.c.b16 %v1950, %v1949
      %v2042 = vpack.c.b16 %v1952, %v1951
      %v2043 = vpack.c.b16 %v1954, %v1953
      %v2044 = vpack.c.b16 %v1956, %v1955
      %v2045 = vpack.c.b16 %v1958, %v1957
      %v2046 = vpack.c.b16 %v1960, %v1959
      %v2047 = vpack.c.b16 %v1962, %v1961
      %v2048 = vpack.c.b16 %v1964, %v1963
      %v2049 = vpack.c.b16 %v1966, %v1965
      %v2050 = vpack.c.b16 %v1968, %v1967
      %v2051 = vpack.c.b16 %v1970, %v1969
      %v2052 = vpack.c.b16 %v1972, %v1971
      %v2053 = vpack.c.b16 %v1974, %v1973
      %v2054 = vpack.c.b16 %v1976, %v1975
      %v2055 = vpack.c.b16 %v1978, %v1977
      %v2056 = vpack.c.b16 %v1980, %v1979
      %v2057 = vpack.c.b16 %v1982, %v1981
      %v2058 = vpack.c.b16 %v1984, %v1983
      %v2059 = vpack.c.b16 %v1986, %v1985
      %v2060 = vpack.c.b16 %v1988, %v1987
      %v2061 = vpack.c.b16 %v1990, %v1989
      %v2062 = vpack.c.b16 %v1992, %v1991
      %v2063 = vpack.c.b16 %v1994, %v1993
      %v2064 = vpack.c.b16 %v1996, %v1995
      %v2065 = vpack.c.b16 %v1998, %v1997
      %v2066 = vpack.c.b16 %v2000, %v1999
      %v2067 = vpack.c.b16 %v2002, %v2001
      %v2068 = vpack.c.b16 %v2004, %v2003
      %v2069 = vpack.c.b16 %v2006, %v2005
      %v2070 = vpack.c.b16 %v2008, %v2007
      %v2071 = vpack.c.b16 %v2010, %v2009
      %v2072 = vpack.c.b16 %v2012, %v2011
      %v2073 = vpack.c.b16 %v2014, %v2013
      %v2074 = vpack.c.b16 %v2016, %v2015
      %v2075 = vpack.c.b16 %v2018, %v2017
      %v2076 = vpack.c.b16 %v2020, %v2019
      %v2077 = vpack.c.b16 %v2022, %v2021
      %v2078 = vpack.c.b16 %v2024, %v2023
      %v2079 = vpack.c.b16 %v2026, %v2025
      %v2080 = vpack.c.b16 %v2028, %v2027
      %v2081 = vpack.c.b16 %v2030, %v2029
      %v2082 = vpack.c.b16 %v2032, %v2031
      %vm2133 = vcmask 261120
      %v2135 = vsel %vm2133, %v1371, 0
      %v2138 = vsel %vm2133, %v1378, 0
      %v2141 = vsel %vm2133, %v1385, 0
      %v2144 = vsel %vm2133, %v1392, 0
      %v2147 = vsel %vm2133, %v1399, 0
      %v2150 = vsel %vm2133, %v1406, 0
      %v2153 = vsel %vm2133, %v1413, 0
      %v2156 = vsel %vm2133, %v1420, 0
      %v2159 = vsel %vm2133, %v1427, 0
      %v2162 = vsel %vm2133, %v1434, 0
      %v2165 = vsel %vm2133, %v1441, 0
      %v2168 = vsel %vm2133, %v1448, 0
      %v2171 = vsel %vm2133, %v1455, 0
      %v2174 = vsel %vm2133, %v1462, 0
      %v2177 = vsel %vm2133, %v1469, 0
      %v2180 = vsel %vm2133, %v1476, 0
      %v2183 = vsel %vm2133, %v1483, 0
      %v2186 = vsel %vm2133, %v1490, 0
      %v2189 = vsel %vm2133, %v1497, 0
      %v2192 = vsel %vm2133, %v1504, 0
      %v2195 = vsel %vm2133, %v1511, 0
      %v2198 = vsel %vm2133, %v1518, 0
      %v2201 = vsel %vm2133, %v1525, 0
      %v2204 = vsel %vm2133, %v1532, 0
      %v2207 = vsel %vm2133, %v1539, 0
      %v2210 = vsel %vm2133, %v1546, 0
      %v2213 = vsel %vm2133, %v1553, 0
      %v2216 = vsel %vm2133, %v1560, 0
      %v2219 = vsel %vm2133, %v1567, 0
      %v2222 = vsel %vm2133, %v1574, 0
      %v2225 = vsel %vm2133, %v1581, 0
      %v2228 = vsel %vm2133, %v1588, 0
      %v2231 = vsel %vm2133, %v1595, 0
      %v2234 = vsel %vm2133, %v1602, 0
      %v2237 = vsel %vm2133, %v1609, 0
      %v2240 = vsel %vm2133, %v1616, 0
      %2242 = vmatprep.subr.bf16.mxu0 0
      %2243 = vmatpush1.bf16.msra.mxu0 %v2033
      %2244 = vmatprep.subr.bf16.mxu0 0
      %2245 = vmatpush1.bf16.msra.mxu0 %v2034
      %2246 = vmatprep.subr.bf16.mxu0 0
      %2247 = vmatpush1.bf16.msra.mxu0 %v2035
      %2248 = vmatprep.subr.bf16.mxu0 0
      %2249 = vmatpush1.bf16.msra.mxu0 %v2036
      %2250 = vmatprep.subr.bf16.mxu0 0
      %2251 = vmatpush1.bf16.msra.mxu0 %v2037
      %2252 = vmatprep.subr.bf16.mxu0 0
      %2253 = vmatpush1.bf16.msra.mxu0 %v2038
      %2254 = vmatprep.subr.bf16.mxu0 0
      %2255 = vmatpush1.bf16.msra.mxu0 %v2039
      %2256 = vmatprep.subr.bf16.mxu0 0
      %2257 = vmatpush1.bf16.msra.mxu0 %v2040
      %2258 = vmatprep.subr.bf16.mxu0 0
      %2259 = vmatpush1.bf16.msra.mxu0 %v2041
      %2260 = vmatprep.subr.bf16.mxu0 0
      %2261 = vmatpush1.bf16.msra.mxu0 %v2042
      %2262 = vmatprep.subr.bf16.mxu0 0
      %2263 = vmatpush1.bf16.msra.mxu0 %v2043
      %2264 = vmatprep.subr.bf16.mxu0 0
      %2265 = vmatpush1.bf16.msra.mxu0 %v2044
      %2266 = vmatprep.subr.bf16.mxu0 0
      %2267 = vmatpush1.bf16.msra.mxu0 %v2045
      %2268 = vmatprep.subr.bf16.mxu0 0
      %2269 = vmatpush1.bf16.msra.mxu0 %v2046
      %2270 = vmatprep.subr.bf16.mxu0 0
      %2271 = vmatpush1.bf16.msra.mxu0 %v2047
      %2272 = vmatprep.subr.bf16.mxu0 0
      %2273 = vmatpush1.bf16.msra.mxu0 %v2048
      %2274 = vmatprep.mubr.bf16.mxu0 %v1366
      %2275 = vmatmul.mubr.bf16.gmra.mrb[0].mxu0 %v1365
      %v2276 = vpop.f32.mrb[0].mxu0
      %v2277 = vadd.f32 %v571, %v2276
      %v2278 = vpop.f32.mrb[0].mxu0
      %v2279 = vpop.f32.mrb[0].mxu0
      %v2280 = vadd.f32 %v571, %v2279
      %v2281 = vpop.f32.mrb[0].mxu0
      %2282 = vmatprep.mubr.bf16.mxu0 %v1373
      %2283 = vmatmul.mubr.bf16.gmra.mrb[0].mxu0 %v1372
      %v2284 = vpop.f32.mrb[0].mxu0
      %v2285 = vadd.f32 %v571, %v2284
      %v2286 = vpop.f32.mrb[0].mxu0
      %v2287 = vpop.f32.mrb[0].mxu0
      %v2288 = vadd.f32 %v571, %v2287
      %v2289 = vpop.f32.mrb[0].mxu0
      %2290 = vmatprep.mubr.bf16.mxu0 %v1380
      %2291 = vmatmul.mubr.bf16.gmra.mrb[0].mxu0 %v1379
      %v2292 = vpop.f32.mrb[0].mxu0
      %v2293 = vadd.f32 %v571, %v2292
      %v2294 = vpop.f32.mrb[0].mxu0
      %v2295 = vpop.f32.mrb[0].mxu0
      %v2296 = vadd.f32 %v571, %v2295
      %v2297 = vpop.f32.mrb[0].mxu0
      %2298 = vmatprep.mubr.bf16.mxu0 %v1387
      %2299 = vmatmul.mubr.bf16.gmra.mrb[0].mxu0 %v1386
      %v2300 = vpop.f32.mrb[0].mxu0
      %v2301 = vadd.f32 %v571, %v2300
      %v2302 = vpop.f32.mrb[0].mxu0
      %v2303 = vpop.f32.mrb[0].mxu0
      %v2304 = vadd.f32 %v571, %v2303
      %v2305 = vpop.f32.mrb[0].mxu0
      %2306 = vmatprep.mubr.bf16.mxu0 %v1394
      %2307 = vmatmul.mubr.bf16.gmra.mrb[0].mxu0 %v1393
      %v2308 = vpop.f32.mrb[0].mxu0
      %v2309 = vadd.f32 %v571, %v2308
      %v2310 = vpop.f32.mrb[0].mxu0
      %v2311 = vpop.f32.mrb[0].mxu0
      %v2312 = vadd.f32 %v571, %v2311
      %v2313 = vpop.f32.mrb[0].mxu0
      %2314 = vmatprep.mubr.bf16.mxu0 %v1401
      %2315 = vmatmul.mubr.bf16.gmra.mrb[0].mxu0 %v1400
      %v2316 = vpop.f32.mrb[0].mxu0
      %v2317 = vadd.f32 %v571, %v2316
      %v2318 = vpop.f32.mrb[0].mxu0
      %v2319 = vpop.f32.mrb[0].mxu0
      %v2320 = vadd.f32 %v571, %v2319
      %v2321 = vpop.f32.mrb[0].mxu0
      %2322 = vmatprep.mubr.bf16.mxu0 %v1408
      %2323 = vmatmul.mubr.bf16.gmra.mrb[0].mxu0 %v1407
      %v2324 = vpop.f32.mrb[0].mxu0
      %v2325 = vadd.f32 %v571, %v2324
      %v2326 = vpop.f32.mrb[0].mxu0
      %v2327 = vpop.f32.mrb[0].mxu0
      %v2328 = vadd.f32 %v571, %v2327
      %v2329 = vpop.f32.mrb[0].mxu0
      %2330 = vmatprep.mubr.bf16.mxu0 %v1415
      %2331 = vmatmul.mubr.bf16.gmra.mrb[0].mxu0 %v1414
      %v2332 = vpop.f32.mrb[0].mxu0
      %v2333 = vadd.f32 %v571, %v2332
      %v2334 = vpop.f32.mrb[0].mxu0
      %v2335 = vpop.f32.mrb[0].mxu0
      %v2336 = vadd.f32 %v571, %v2335
      %v2337 = vpop.f32.mrb[0].mxu0
      %2338 = vmatprep.mubr.bf16.mxu0 %v1422
      %2339 = vmatmul.mubr.bf16.gmra.mrb[0].mxu0 %v1421
      %v2340 = vpop.f32.mrb[0].mxu0
      %v2341 = vadd.f32 %v571, %v2340
      %v2342 = vpop.f32.mrb[0].mxu0
      %v2343 = vpop.f32.mrb[0].mxu0
      %v2344 = vadd.f32 %v571, %v2343
      %v2345 = vpop.f32.mrb[0].mxu0
      %2346 = vmatprep.mubr.bf16.mxu0 %v1429
      %2347 = vmatmul.mubr.bf16.gmra.mrb[0].mxu0 %v1428
      %v2348 = vpop.f32.mrb[0].mxu0
      %v2349 = vadd.f32 %v571, %v2348
      %v2350 = vpop.f32.mrb[0].mxu0
      %v2351 = vpop.f32.mrb[0].mxu0
      %v2352 = vadd.f32 %v571, %v2351
      %v2353 = vpop.f32.mrb[0].mxu0
      %2354 = vmatprep.mubr.bf16.mxu0 %v1436
      %2355 = vmatmul.mubr.bf16.gmra.mrb[0].mxu0 %v1435
      %v2356 = vpop.f32.mrb[0].mxu0
      %v2357 = vadd.f32 %v571, %v2356
      %v2358 = vpop.f32.mrb[0].mxu0
      %v2359 = vpop.f32.mrb[0].mxu0
      %v2360 = vadd.f32 %v571, %v2359
      %v2361 = vpop.f32.mrb[0].mxu0
      %2362 = vmatprep.mubr.bf16.mxu0 %v1443
      %2363 = vmatmul.mubr.bf16.gmra.mrb[0].mxu0 %v1442
      %v2364 = vpop.f32.mrb[0].mxu0
      %v2365 = vadd.f32 %v571, %v2364
      %v2366 = vpop.f32.mrb[0].mxu0
      %v2367 = vpop.f32.mrb[0].mxu0
      %v2368 = vadd.f32 %v571, %v2367
      %v2369 = vpop.f32.mrb[0].mxu0
      %2370 = vmatprep.mubr.bf16.mxu0 %v1450
      %2371 = vmatmul.mubr.bf16.gmra.mrb[0].mxu0 %v1449
      %v2372 = vpop.f32.mrb[0].mxu0
      %v2373 = vadd.f32 %v571, %v2372
      %v2374 = vpop.f32.mrb[0].mxu0
      %v2375 = vpop.f32.mrb[0].mxu0
      %v2376 = vadd.f32 %v571, %v2375
      %v2377 = vpop.f32.mrb[0].mxu0
      %2378 = vmatprep.mubr.bf16.mxu0 %v1457
      %2379 = vmatmul.mubr.bf16.gmra.mrb[0].mxu0 %v1456
      %v2380 = vpop.f32.mrb[0].mxu0
      %v2381 = vadd.f32 %v571, %v2380
      %v2382 = vpop.f32.mrb[0].mxu0
      %v2383 = vpop.f32.mrb[0].mxu0
      %v2384 = vadd.f32 %v571, %v2383
      %v2385 = vpop.f32.mrb[0].mxu0
      %2386 = vmatprep.mubr.bf16.mxu0 %v1464
      %2387 = vmatmul.mubr.bf16.gmra.mrb[0].mxu0 %v1463
      %v2388 = vpop.f32.mrb[0].mxu0
      %v2389 = vadd.f32 %v571, %v2388
      %v2390 = vpop.f32.mrb[0].mxu0
      %v2391 = vpop.f32.mrb[0].mxu0
      %v2392 = vadd.f32 %v571, %v2391
      %v2393 = vpop.f32.mrb[0].mxu0
      %2394 = vmatprep.mubr.bf16.mxu0 %v1471
      %2395 = vmatmul.mubr.bf16.gmra.mrb[0].mxu0 %v1470
      %v2396 = vpop.f32.mrb[0].mxu0
      %v2397 = vadd.f32 %v571, %v2396
      %v2398 = vpop.f32.mrb[0].mxu0
      %v2399 = vpop.f32.mrb[0].mxu0
      %v2400 = vadd.f32 %v571, %v2399
      %v2401 = vpop.f32.mrb[0].mxu0
      %2402 = vmatprep.mubr.bf16.mxu0 %v1478
      %2403 = vmatmul.mubr.bf16.gmra.mrb[0].mxu0 %v1477
      %v2404 = vpop.f32.mrb[0].mxu0
      %v2405 = vadd.f32 %v571, %v2404
      %v2406 = vpop.f32.mrb[0].mxu0
      %v2407 = vpop.f32.mrb[0].mxu0
      %v2408 = vadd.f32 %v571, %v2407
      %v2409 = vpop.f32.mrb[0].mxu0
      %2410 = vmatprep.mubr.bf16.mxu0 %v1485
      %2411 = vmatmul.mubr.bf16.gmra.mrb[0].mxu0 %v1484
      %v2412 = vpop.f32.mrb[0].mxu0
      %v2413 = vadd.f32 %v571, %v2412
      %v2414 = vpop.f32.mrb[0].mxu0
      %v2415 = vpop.f32.mrb[0].mxu0
      %v2416 = vadd.f32 %v571, %v2415
      %v2417 = vpop.f32.mrb[0].mxu0
      %2418 = vmatprep.mubr.bf16.mxu0 %v1492
      %2419 = vmatmul.mubr.bf16.gmra.mrb[0].mxu0 %v1491
      %v2420 = vpop.f32.mrb[0].mxu0
      %v2421 = vadd.f32 %v571, %v2420
      %v2422 = vpop.f32.mrb[0].mxu0
      %v2423 = vpop.f32.mrb[0].mxu0
      %v2424 = vadd.f32 %v571, %v2423
      %v2425 = vpop.f32.mrb[0].mxu0
      %2426 = vmatprep.mubr.bf16.mxu0 %v1499
      %2427 = vmatmul.mubr.bf16.gmra.mrb[0].mxu0 %v1498
      %v2428 = vpop.f32.mrb[0].mxu0
      %v2429 = vadd.f32 %v571, %v2428
      %v2430 = vpop.f32.mrb[0].mxu0
      %v2431 = vpop.f32.mrb[0].mxu0
      %v2432 = vadd.f32 %v571, %v2431
      %v2433 = vpop.f32.mrb[0].mxu0
      %2434 = vmatprep.mubr.bf16.mxu0 %v1506
      %2435 = vmatmul.mubr.bf16.gmra.mrb[0].mxu0 %v1505
      %v2436 = vpop.f32.mrb[0].mxu0
      %v2437 = vadd.f32 %v571, %v2436
      %v2438 = vpop.f32.mrb[0].mxu0
      %v2439 = vpop.f32.mrb[0].mxu0
      %v2440 = vadd.f32 %v571, %v2439
      %v2441 = vpop.f32.mrb[0].mxu0
      %2442 = vmatprep.mubr.bf16.mxu0 %v1513
      %2443 = vmatmul.mubr.bf16.gmra.mrb[0].mxu0 %v1512
      %v2444 = vpop.f32.mrb[0].mxu0
      %v2445 = vadd.f32 %v571, %v2444
      %v2446 = vpop.f32.mrb[0].mxu0
      %v2447 = vpop.f32.mrb[0].mxu0
      %v2448 = vadd.f32 %v571, %v2447
      %v2449 = vpop.f32.mrb[0].mxu0
      %2450 = vmatprep.mubr.bf16.mxu0 %v1520
      %2451 = vmatmul.mubr.bf16.gmra.mrb[0].mxu0 %v1519
      %v2452 = vpop.f32.mrb[0].mxu0
      %v2453 = vadd.f32 %v571, %v2452
      %v2454 = vpop.f32.mrb[0].mxu0
      %v2455 = vpop.f32.mrb[0].mxu0
      %v2456 = vadd.f32 %v571, %v2455
      %v2457 = vpop.f32.mrb[0].mxu0
      %2458 = vmatprep.mubr.bf16.mxu0 %v1527
      %2459 = vmatmul.mubr.bf16.gmra.mrb[0].mxu0 %v1526
      %v2460 = vpop.f32.mrb[0].mxu0
      %v2461 = vadd.f32 %v571, %v2460
      %v2462 = vpop.f32.mrb[0].mxu0
      %v2463 = vpop.f32.mrb[0].mxu0
      %v2464 = vadd.f32 %v571, %v2463
      %v2465 = vpop.f32.mrb[0].mxu0
      %2466 = vmatprep.mubr.bf16.mxu0 %v1534
      %2467 = vmatmul.mubr.bf16.gmra.mrb[0].mxu0 %v1533
      %v2468 = vpop.f32.mrb[0].mxu0
      %v2469 = vadd.f32 %v571, %v2468
      %v2470 = vpop.f32.mrb[0].mxu0
      %v2471 = vpop.f32.mrb[0].mxu0
      %v2472 = vadd.f32 %v571, %v2471
      %v2473 = vpop.f32.mrb[0].mxu0
      %2474 = vmatprep.mubr.bf16.mxu0 %v1541
      %2475 = vmatmul.mubr.bf16.gmra.mrb[0].mxu0 %v1540
      %v2476 = vpop.f32.mrb[0].mxu0
      %v2477 = vadd.f32 %v571, %v2476
      %v2478 = vpop.f32.mrb[0].mxu0
      %v2479 = vpop.f32.mrb[0].mxu0
      %v2480 = vadd.f32 %v571, %v2479
      %v2481 = vpop.f32.mrb[0].mxu0
      %2482 = vmatprep.mubr.bf16.mxu0 %v1548
      %2483 = vmatmul.mubr.bf16.gmra.mrb[0].mxu0 %v1547
      %v2484 = vpop.f32.mrb[0].mxu0
      %v2485 = vadd.f32 %v571, %v2484
      %v2486 = vpop.f32.mrb[0].mxu0
      %v2487 = vpop.f32.mrb[0].mxu0
      %v2488 = vadd.f32 %v571, %v2487
      %v2489 = vpop.f32.mrb[0].mxu0
      %2490 = vmatprep.mubr.bf16.mxu0 %v1555
      %2491 = vmatmul.mubr.bf16.gmra.mrb[0].mxu0 %v1554
      %v2492 = vpop.f32.mrb[0].mxu0
      %v2493 = vadd.f32 %v571, %v2492
      %v2494 = vpop.f32.mrb[0].mxu0
      %v2495 = vpop.f32.mrb[0].mxu0
      %v2496 = vadd.f32 %v571, %v2495
      %v2497 = vpop.f32.mrb[0].mxu0
      %2498 = vmatprep.mubr.bf16.mxu0 %v1562
      %2499 = vmatmul.mubr.bf16.gmra.mrb[0].mxu0 %v1561
      %v2500 = vpop.f32.mrb[0].mxu0
      %v2501 = vadd.f32 %v571, %v2500
      %v2502 = vpop.f32.mrb[0].mxu0
      %v2503 = vpop.f32.mrb[0].mxu0
      %v2504 = vadd.f32 %v571, %v2503
      %v2505 = vpop.f32.mrb[0].mxu0
      %2506 = vmatprep.mubr.bf16.mxu0 %v1569
      %2507 = vmatmul.mubr.bf16.gmra.mrb[0].mxu0 %v1568
      %v2508 = vpop.f32.mrb[0].mxu0
      %v2509 = vadd.f32 %v571, %v2508
      %v2510 = vpop.f32.mrb[0].mxu0
      %v2511 = vpop.f32.mrb[0].mxu0
      %v2512 = vadd.f32 %v571, %v2511
      %v2513 = vpop.f32.mrb[0].mxu0
      %2514 = vmatprep.mubr.bf16.mxu0 %v1576
      %2515 = vmatmul.mubr.bf16.gmra.mrb[0].mxu0 %v1575
      %v2516 = vpop.f32.mrb[0].mxu0
      %v2517 = vadd.f32 %v571, %v2516
      %v2518 = vpop.f32.mrb[0].mxu0
      %v2519 = vpop.f32.mrb[0].mxu0
      %v2520 = vadd.f32 %v571, %v2519
      %v2521 = vpop.f32.mrb[0].mxu0
      %2522 = vmatprep.mubr.bf16.mxu0 %v1583
      %2523 = vmatmul.mubr.bf16.gmra.mrb[0].mxu0 %v1582
      %v2524 = vpop.f32.mrb[0].mxu0
      %v2525 = vadd.f32 %v571, %v2524
      %v2526 = vpop.f32.mrb[0].mxu0
      %v2527 = vpop.f32.mrb[0].mxu0
      %v2528 = vadd.f32 %v571, %v2527
      %v2529 = vpop.f32.mrb[0].mxu0
      %2530 = vmatprep.mubr.bf16.mxu0 %v1590
      %2531 = vmatmul.mubr.bf16.gmra.mrb[0].mxu0 %v1589
      %v2532 = vpop.f32.mrb[0].mxu0
      %v2533 = vadd.f32 %v571, %v2532
      %v2534 = vpop.f32.mrb[0].mxu0
      %v2535 = vpop.f32.mrb[0].mxu0
      %v2536 = vadd.f32 %v571, %v2535
      %v2537 = vpop.f32.mrb[0].mxu0
      %2538 = vmatprep.mubr.bf16.mxu0 %v1597
      %2539 = vmatmul.mubr.bf16.gmra.mrb[0].mxu0 %v1596
      %v2540 = vpop.f32.mrb[0].mxu0
      %v2541 = vadd.f32 %v571, %v2540
      %v2542 = vpop.f32.mrb[0].mxu0
      %v2543 = vpop.f32.mrb[0].mxu0
      %v2544 = vadd.f32 %v571, %v2543
      %v2545 = vpop.f32.mrb[0].mxu0
      %2546 = vmatprep.mubr.bf16.mxu0 %v1604
      %2547 = vmatmul.mubr.bf16.gmra.mrb[0].mxu0 %v1603
      %v2548 = vpop.f32.mrb[0].mxu0
      %v2549 = vadd.f32 %v571, %v2548
      %v2550 = vpop.f32.mrb[0].mxu0
      %v2551 = vpop.f32.mrb[0].mxu0
      %v2552 = vadd.f32 %v571, %v2551
      %v2553 = vpop.f32.mrb[0].mxu0
      %2554 = vmatprep.mubr.bf16.mxu0 %v1611
      %2555 = vmatmul.mubr.bf16.gmra.mrb[0].mxu0 %v1610
      %v2556 = vpop.f32.mrb[0].mxu0
      %v2557 = vadd.f32 %v571, %v2556
      %v2558 = vpop.f32.mrb[0].mxu0
      %v2559 = vpop.f32.mrb[0].mxu0
      %v2560 = vadd.f32 %v571, %v2559
      %v2561 = vpop.f32.mrb[0].mxu0
      %2562 = vdwg.mxu0
      %2563 = vmatprep.subr.bf16.mxu0 0
      %2564 = vmatpush1.bf16.msra.mxu0 %v2049
      %2565 = vmatprep.subr.bf16.mxu0 0
      %2566 = vmatpush1.bf16.msra.mxu0 %v2050
      %2567 = vmatprep.subr.bf16.mxu0 0
      %2568 = vmatpush1.bf16.msra.mxu0 %v2051
      %2569 = vmatprep.subr.bf16.mxu0 0
      %2570 = vmatpush1.bf16.msra.mxu0 %v2052
      %2571 = vmatprep.subr.bf16.mxu0 0
      %2572 = vmatpush1.bf16.msra.mxu0 %v2053
      %2573 = vmatprep.subr.bf16.mxu0 0
      %2574 = vmatpush1.bf16.msra.mxu0 %v2054
      %2575 = vmatprep.subr.bf16.mxu0 0
      %2576 = vmatpush1.bf16.msra.mxu0 %v2055
      %2577 = vmatprep.subr.bf16.mxu0 0
      %2578 = vmatpush1.bf16.msra.mxu0 %v2056
      %2579 = vmatprep.subr.bf16.mxu0 0
      %2580 = vmatpush1.bf16.msra.mxu0 %v2057
      %2581 = vmatprep.subr.bf16.mxu0 0
      %2582 = vmatpush1.bf16.msra.mxu0 %v2058
      %2583 = vmatprep.subr.bf16.mxu0 0
      %2584 = vmatpush1.bf16.msra.mxu0 %v2059
      %2585 = vmatprep.subr.bf16.mxu0 0
      %2586 = vmatpush1.bf16.msra.mxu0 %v2060
      %2587 = vmatprep.subr.bf16.mxu0 0
      %2588 = vmatpush1.bf16.msra.mxu0 %v2061
      %2589 = vmatprep.subr.bf16.mxu0 0
      %2590 = vmatpush1.bf16.msra.mxu0 %v2062
      %2591 = vmatprep.subr.bf16.mxu0 0
      %2592 = vmatpush1.bf16.msra.mxu0 %v2063
      %2593 = vmatprep.subr.bf16.mxu0 0
      %2594 = vmatpush1.bf16.msra.mxu0 %v2064
      %2595 = vmatprep.mubr.bf16.mxu0 %v1368
      %2596 = vmatmul.mubr.bf16.gmra.mrb[0].mxu0 %v1367
      %v2597 = vpop.f32.mrb[0].mxu0
      %v2598 = vadd.f32 %v2277, %v2597
      %v2599 = vpop.f32.mrb[0].mxu0
      %v2600 = vpop.f32.mrb[0].mxu0
      %v2601 = vadd.f32 %v2280, %v2600
      %v2602 = vpop.f32.mrb[0].mxu0
      %2603 = vmatprep.mubr.bf16.mxu0 %v1375
      %2604 = vmatmul.mubr.bf16.gmra.mrb[0].mxu0 %v1374
      %v2605 = vpop.f32.mrb[0].mxu0
      %v2606 = vadd.f32 %v2285, %v2605
      %v2607 = vpop.f32.mrb[0].mxu0
      %v2608 = vpop.f32.mrb[0].mxu0
      %v2609 = vadd.f32 %v2288, %v2608
      %v2610 = vpop.f32.mrb[0].mxu0
      %2611 = vmatprep.mubr.bf16.mxu0 %v1382
      %2612 = vmatmul.mubr.bf16.gmra.mrb[0].mxu0 %v1381
      %v2613 = vpop.f32.mrb[0].mxu0
      %v2614 = vadd.f32 %v2293, %v2613
      %v2615 = vpop.f32.mrb[0].mxu0
      %v2616 = vpop.f32.mrb[0].mxu0
      %v2617 = vadd.f32 %v2296, %v2616
      %v2618 = vpop.f32.mrb[0].mxu0
      %2619 = vmatprep.mubr.bf16.mxu0 %v1389
      %2620 = vmatmul.mubr.bf16.gmra.mrb[0].mxu0 %v1388
      %v2621 = vpop.f32.mrb[0].mxu0
      %v2622 = vadd.f32 %v2301, %v2621
      %v2623 = vpop.f32.mrb[0].mxu0
      %v2624 = vpop.f32.mrb[0].mxu0
      %v2625 = vadd.f32 %v2304, %v2624
      %v2626 = vpop.f32.mrb[0].mxu0
      %2627 = vmatprep.mubr.bf16.mxu0 %v1396
      %2628 = vmatmul.mubr.bf16.gmra.mrb[0].mxu0 %v1395
      %v2629 = vpop.f32.mrb[0].mxu0
      %v2630 = vadd.f32 %v2309, %v2629
      %v2631 = vpop.f32.mrb[0].mxu0
      %v2632 = vpop.f32.mrb[0].mxu0
      %v2633 = vadd.f32 %v2312, %v2632
      %v2634 = vpop.f32.mrb[0].mxu0
      %2635 = vmatprep.mubr.bf16.mxu0 %v1403
      %2636 = vmatmul.mubr.bf16.gmra.mrb[0].mxu0 %v1402
      %v2637 = vpop.f32.mrb[0].mxu0
      %v2638 = vadd.f32 %v2317, %v2637
      %v2639 = vpop.f32.mrb[0].mxu0
      %v2640 = vpop.f32.mrb[0].mxu0
      %v2641 = vadd.f32 %v2320, %v2640
      %v2642 = vpop.f32.mrb[0].mxu0
      %2643 = vmatprep.mubr.bf16.mxu0 %v1410
      %2644 = vmatmul.mubr.bf16.gmra.mrb[0].mxu0 %v1409
      %v2645 = vpop.f32.mrb[0].mxu0
      %v2646 = vadd.f32 %v2325, %v2645
      %v2647 = vpop.f32.mrb[0].mxu0
      %v2648 = vpop.f32.mrb[0].mxu0
      %v2649 = vadd.f32 %v2328, %v2648
      %v2650 = vpop.f32.mrb[0].mxu0
      %2651 = vmatprep.mubr.bf16.mxu0 %v1417
      %2652 = vmatmul.mubr.bf16.gmra.mrb[0].mxu0 %v1416
      %v2653 = vpop.f32.mrb[0].mxu0
      %v2654 = vadd.f32 %v2333, %v2653
      %v2655 = vpop.f32.mrb[0].mxu0
      %v2656 = vpop.f32.mrb[0].mxu0
      %v2657 = vadd.f32 %v2336, %v2656
      %v2658 = vpop.f32.mrb[0].mxu0
      %2659 = vmatprep.mubr.bf16.mxu0 %v1424
      %2660 = vmatmul.mubr.bf16.gmra.mrb[0].mxu0 %v1423
      %v2661 = vpop.f32.mrb[0].mxu0
      %v2662 = vadd.f32 %v2341, %v2661
      %v2663 = vpop.f32.mrb[0].mxu0
      %v2664 = vpop.f32.mrb[0].mxu0
      %v2665 = vadd.f32 %v2344, %v2664
      %v2666 = vpop.f32.mrb[0].mxu0
      %2667 = vmatprep.mubr.bf16.mxu0 %v1431
      %2668 = vmatmul.mubr.bf16.gmra.mrb[0].mxu0 %v1430
      %v2669 = vpop.f32.mrb[0].mxu0
      %v2670 = vadd.f32 %v2349, %v2669
      %v2671 = vpop.f32.mrb[0].mxu0
      %v2672 = vpop.f32.mrb[0].mxu0
      %v2673 = vadd.f32 %v2352, %v2672
      %v2674 = vpop.f32.mrb[0].mxu0
      %2675 = vmatprep.mubr.bf16.mxu0 %v1438
      %2676 = vmatmul.mubr.bf16.gmra.mrb[0].mxu0 %v1437
      %v2677 = vpop.f32.mrb[0].mxu0
      %v2678 = vadd.f32 %v2357, %v2677
      %v2679 = vpop.f32.mrb[0].mxu0
      %v2680 = vpop.f32.mrb[0].mxu0
      %v2681 = vadd.f32 %v2360, %v2680
      %v2682 = vpop.f32.mrb[0].mxu0
      %2683 = vmatprep.mubr.bf16.mxu0 %v1445
      %2684 = vmatmul.mubr.bf16.gmra.mrb[0].mxu0 %v1444
      %v2685 = vpop.f32.mrb[0].mxu0
      %v2686 = vadd.f32 %v2365, %v2685
      %v2687 = vpop.f32.mrb[0].mxu0
      %v2688 = vpop.f32.mrb[0].mxu0
      %v2689 = vadd.f32 %v2368, %v2688
      %v2690 = vpop.f32.mrb[0].mxu0
      %2691 = vmatprep.mubr.bf16.mxu0 %v1452
      %2692 = vmatmul.mubr.bf16.gmra.mrb[0].mxu0 %v1451
      %v2693 = vpop.f32.mrb[0].mxu0
      %v2694 = vadd.f32 %v2373, %v2693
      %v2695 = vpop.f32.mrb[0].mxu0
      %v2696 = vpop.f32.mrb[0].mxu0
      %v2697 = vadd.f32 %v2376, %v2696
      %v2698 = vpop.f32.mrb[0].mxu0
      %2699 = vmatprep.mubr.bf16.mxu0 %v1459
      %2700 = vmatmul.mubr.bf16.gmra.mrb[0].mxu0 %v1458
      %v2701 = vpop.f32.mrb[0].mxu0
      %v2702 = vadd.f32 %v2381, %v2701
      %v2703 = vpop.f32.mrb[0].mxu0
      %v2704 = vpop.f32.mrb[0].mxu0
      %v2705 = vadd.f32 %v2384, %v2704
      %v2706 = vpop.f32.mrb[0].mxu0
      %2707 = vmatprep.mubr.bf16.mxu0 %v1466
      %2708 = vmatmul.mubr.bf16.gmra.mrb[0].mxu0 %v1465
      %v2709 = vpop.f32.mrb[0].mxu0
      %v2710 = vadd.f32 %v2389, %v2709
      %v2711 = vpop.f32.mrb[0].mxu0
      %v2712 = vpop.f32.mrb[0].mxu0
      %v2713 = vadd.f32 %v2392, %v2712
      %v2714 = vpop.f32.mrb[0].mxu0
      %2715 = vmatprep.mubr.bf16.mxu0 %v1473
      %2716 = vmatmul.mubr.bf16.gmra.mrb[0].mxu0 %v1472
      %v2717 = vpop.f32.mrb[0].mxu0
      %v2718 = vadd.f32 %v2397, %v2717
      %v2719 = vpop.f32.mrb[0].mxu0
      %v2720 = vpop.f32.mrb[0].mxu0
      %v2721 = vadd.f32 %v2400, %v2720
      %v2722 = vpop.f32.mrb[0].mxu0
      %2723 = vmatprep.mubr.bf16.mxu0 %v1480
      %2724 = vmatmul.mubr.bf16.gmra.mrb[0].mxu0 %v1479
      %v2725 = vpop.f32.mrb[0].mxu0
      %v2726 = vadd.f32 %v2405, %v2725
      %v2727 = vpop.f32.mrb[0].mxu0
      %v2728 = vpop.f32.mrb[0].mxu0
      %v2729 = vadd.f32 %v2408, %v2728
      %v2730 = vpop.f32.mrb[0].mxu0
      %2731 = vmatprep.mubr.bf16.mxu0 %v1487
      %2732 = vmatmul.mubr.bf16.gmra.mrb[0].mxu0 %v1486
      %v2733 = vpop.f32.mrb[0].mxu0
      %v2734 = vadd.f32 %v2413, %v2733
      %v2735 = vpop.f32.mrb[0].mxu0
      %v2736 = vpop.f32.mrb[0].mxu0
      %v2737 = vadd.f32 %v2416, %v2736
      %v2738 = vpop.f32.mrb[0].mxu0
      %2739 = vmatprep.mubr.bf16.mxu0 %v1494
      %2740 = vmatmul.mubr.bf16.gmra.mrb[0].mxu0 %v1493
      %v2741 = vpop.f32.mrb[0].mxu0
      %v2742 = vadd.f32 %v2421, %v2741
      %v2743 = vpop.f32.mrb[0].mxu0
      %v2744 = vpop.f32.mrb[0].mxu0
      %v2745 = vadd.f32 %v2424, %v2744
      %v2746 = vpop.f32.mrb[0].mxu0
      %2747 = vmatprep.mubr.bf16.mxu0 %v1501
      %2748 = vmatmul.mubr.bf16.gmra.mrb[0].mxu0 %v1500
      %v2749 = vpop.f32.mrb[0].mxu0
      %v2750 = vadd.f32 %v2429, %v2749
      %v2751 = vpop.f32.mrb[0].mxu0
      %v2752 = vpop.f32.mrb[0].mxu0
      %v2753 = vadd.f32 %v2432, %v2752
      %v2754 = vpop.f32.mrb[0].mxu0
      %2755 = vmatprep.mubr.bf16.mxu0 %v1508
      %2756 = vmatmul.mubr.bf16.gmra.mrb[0].mxu0 %v1507
      %v2757 = vpop.f32.mrb[0].mxu0
      %v2758 = vadd.f32 %v2437, %v2757
      %v2759 = vpop.f32.mrb[0].mxu0
      %v2760 = vpop.f32.mrb[0].mxu0
      %v2761 = vadd.f32 %v2440, %v2760
      %v2762 = vpop.f32.mrb[0].mxu0
      %2763 = vmatprep.mubr.bf16.mxu0 %v1515
      %2764 = vmatmul.mubr.bf16.gmra.mrb[0].mxu0 %v1514
      %v2765 = vpop.f32.mrb[0].mxu0
      %v2766 = vadd.f32 %v2445, %v2765
      %v2767 = vpop.f32.mrb[0].mxu0
      %v2768 = vpop.f32.mrb[0].mxu0
      %v2769 = vadd.f32 %v2448, %v2768
      %v2770 = vpop.f32.mrb[0].mxu0
      %2771 = vmatprep.mubr.bf16.mxu0 %v1522
      %2772 = vmatmul.mubr.bf16.gmra.mrb[0].mxu0 %v1521
      %v2773 = vpop.f32.mrb[0].mxu0
      %v2774 = vadd.f32 %v2453, %v2773
      %v2775 = vpop.f32.mrb[0].mxu0
      %v2776 = vpop.f32.mrb[0].mxu0
      %v2777 = vadd.f32 %v2456, %v2776
      %v2778 = vpop.f32.mrb[0].mxu0
      %2779 = vmatprep.mubr.bf16.mxu0 %v1529
      %2780 = vmatmul.mubr.bf16.gmra.mrb[0].mxu0 %v1528
      %v2781 = vpop.f32.mrb[0].mxu0
      %v2782 = vadd.f32 %v2461, %v2781
      %v2783 = vpop.f32.mrb[0].mxu0
      %v2784 = vpop.f32.mrb[0].mxu0
      %v2785 = vadd.f32 %v2464, %v2784
      %v2786 = vpop.f32.mrb[0].mxu0
      %2787 = vmatprep.mubr.bf16.mxu0 %v1536
      %2788 = vmatmul.mubr.bf16.gmra.mrb[0].mxu0 %v1535
      %v2789 = vpop.f32.mrb[0].mxu0
      %v2790 = vadd.f32 %v2469, %v2789
      %v2791 = vpop.f32.mrb[0].mxu0
      %v2792 = vpop.f32.mrb[0].mxu0
      %v2793 = vadd.f32 %v2472, %v2792
      %v2794 = vpop.f32.mrb[0].mxu0
      %2795 = vmatprep.mubr.bf16.mxu0 %v1543
      %2796 = vmatmul.mubr.bf16.gmra.mrb[0].mxu0 %v1542
      %v2797 = vpop.f32.mrb[0].mxu0
      %v2798 = vadd.f32 %v2477, %v2797
      %v2799 = vpop.f32.mrb[0].mxu0
      %v2800 = vpop.f32.mrb[0].mxu0
      %v2801 = vadd.f32 %v2480, %v2800
      %v2802 = vpop.f32.mrb[0].mxu0
      %2803 = vmatprep.mubr.bf16.mxu0 %v1550
      %2804 = vmatmul.mubr.bf16.gmra.mrb[0].mxu0 %v1549
      %v2805 = vpop.f32.mrb[0].mxu0
      %v2806 = vadd.f32 %v2485, %v2805
      %v2807 = vpop.f32.mrb[0].mxu0
      %v2808 = vpop.f32.mrb[0].mxu0
      %v2809 = vadd.f32 %v2488, %v2808
      %v2810 = vpop.f32.mrb[0].mxu0
      %2811 = vmatprep.mubr.bf16.mxu0 %v1557
      %2812 = vmatmul.mubr.bf16.gmra.mrb[0].mxu0 %v1556
      %v2813 = vpop.f32.mrb[0].mxu0
      %v2814 = vadd.f32 %v2493, %v2813
      %v2815 = vpop.f32.mrb[0].mxu0
      %v2816 = vpop.f32.mrb[0].mxu0
      %v2817 = vadd.f32 %v2496, %v2816
      %v2818 = vpop.f32.mrb[0].mxu0
      %2819 = vmatprep.mubr.bf16.mxu0 %v1564
      %2820 = vmatmul.mubr.bf16.gmra.mrb[0].mxu0 %v1563
      %v2821 = vpop.f32.mrb[0].mxu0
      %v2822 = vadd.f32 %v2501, %v2821
      %v2823 = vpop.f32.mrb[0].mxu0
      %v2824 = vpop.f32.mrb[0].mxu0
      %v2825 = vadd.f32 %v2504, %v2824
      %v2826 = vpop.f32.mrb[0].mxu0
      %2827 = vmatprep.mubr.bf16.mxu0 %v1571
      %2828 = vmatmul.mubr.bf16.gmra.mrb[0].mxu0 %v1570
      %v2829 = vpop.f32.mrb[0].mxu0
      %v2830 = vadd.f32 %v2509, %v2829
      %v2831 = vpop.f32.mrb[0].mxu0
      %v2832 = vpop.f32.mrb[0].mxu0
      %v2833 = vadd.f32 %v2512, %v2832
      %v2834 = vpop.f32.mrb[0].mxu0
      %2835 = vmatprep.mubr.bf16.mxu0 %v1578
      %2836 = vmatmul.mubr.bf16.gmra.mrb[0].mxu0 %v1577
      %v2837 = vpop.f32.mrb[0].mxu0
      %v2838 = vadd.f32 %v2517, %v2837
      %v2839 = vpop.f32.mrb[0].mxu0
      %v2840 = vpop.f32.mrb[0].mxu0
      %v2841 = vadd.f32 %v2520, %v2840
      %v2842 = vpop.f32.mrb[0].mxu0
      %2843 = vmatprep.mubr.bf16.mxu0 %v1585
      %2844 = vmatmul.mubr.bf16.gmra.mrb[0].mxu0 %v1584
      %v2845 = vpop.f32.mrb[0].mxu0
      %v2846 = vadd.f32 %v2525, %v2845
      %v2847 = vpop.f32.mrb[0].mxu0
      %v2848 = vpop.f32.mrb[0].mxu0
      %v2849 = vadd.f32 %v2528, %v2848
      %v2850 = vpop.f32.mrb[0].mxu0
      %2851 = vmatprep.mubr.bf16.mxu0 %v1592
      %2852 = vmatmul.mubr.bf16.gmra.mrb[0].mxu0 %v1591
      %v2853 = vpop.f32.mrb[0].mxu0
      %v2854 = vadd.f32 %v2533, %v2853
      %v2855 = vpop.f32.mrb[0].mxu0
      %v2856 = vpop.f32.mrb[0].mxu0
      %v2857 = vadd.f32 %v2536, %v2856
      %v2858 = vpop.f32.mrb[0].mxu0
      %2859 = vmatprep.mubr.bf16.mxu0 %v1599
      %2860 = vmatmul.mubr.bf16.gmra.mrb[0].mxu0 %v1598
      %v2861 = vpop.f32.mrb[0].mxu0
      %v2862 = vadd.f32 %v2541, %v2861
      %v2863 = vpop.f32.mrb[0].mxu0
      %v2864 = vpop.f32.mrb[0].mxu0
      %v2865 = vadd.f32 %v2544, %v2864
      %v2866 = vpop.f32.mrb[0].mxu0
      %2867 = vmatprep.mubr.bf16.mxu0 %v1606
      %2868 = vmatmul.mubr.bf16.gmra.mrb[0].mxu0 %v1605
      %v2869 = vpop.f32.mrb[0].mxu0
      %v2870 = vadd.f32 %v2549, %v2869
      %v2871 = vpop.f32.mrb[0].mxu0
      %v2872 = vpop.f32.mrb[0].mxu0
      %v2873 = vadd.f32 %v2552, %v2872
      %v2874 = vpop.f32.mrb[0].mxu0
      %2875 = vmatprep.mubr.bf16.mxu0 %v1613
      %2876 = vmatmul.mubr.bf16.gmra.mrb[0].mxu0 %v1612
      %v2877 = vpop.f32.mrb[0].mxu0
      %v2878 = vadd.f32 %v2557, %v2877
      %v2879 = vpop.f32.mrb[0].mxu0
      %v2880 = vpop.f32.mrb[0].mxu0
      %v2881 = vadd.f32 %v2560, %v2880
      %v2882 = vpop.f32.mrb[0].mxu0
      %2883 = vdwg.mxu0
      %2884 = vmatprep.subr.bf16.mxu0 0
      %2885 = vmatpush1.bf16.msra.mxu0 %v2065
      %2886 = vmatprep.subr.bf16.mxu0 0
      %2887 = vmatpush1.bf16.msra.mxu0 %v2066
      %2888 = vmatprep.subr.bf16.mxu0 0
      %2889 = vmatpush1.bf16.msra.mxu0 %v2067
      %2890 = vmatprep.subr.bf16.mxu0 0
      %2891 = vmatpush1.bf16.msra.mxu0 %v2068
      %2892 = vmatprep.subr.bf16.mxu0 0
      %2893 = vmatpush1.bf16.msra.mxu0 %v2069
      %2894 = vmatprep.subr.bf16.mxu0 0
      %2895 = vmatpush1.bf16.msra.mxu0 %v2070
      %2896 = vmatprep.subr.bf16.mxu0 0
      %2897 = vmatpush1.bf16.msra.mxu0 %v2071
      %2898 = vmatprep.subr.bf16.mxu0 0
      %2899 = vmatpush1.bf16.msra.mxu0 %v2072
      %2900 = vmatprep.subr.bf16.mxu0 0
      %2901 = vmatpush1.bf16.msra.mxu0 %v2073
      %2902 = vmatprep.subr.bf16.mxu0 0
      %2903 = vmatpush1.bf16.msra.mxu0 %v2074
      %2904 = vmatprep.subr.bf16.mxu0 0
      %2905 = vmatpush1.bf16.msra.mxu0 %v2075
      %2906 = vmatprep.subr.bf16.mxu0 0
      %2907 = vmatpush1.bf16.msra.mxu0 %v2076
      %2908 = vmatprep.subr.bf16.mxu0 0
      %2909 = vmatpush1.bf16.msra.mxu0 %v2077
      %2910 = vmatprep.subr.bf16.mxu0 0
      %2911 = vmatpush1.bf16.msra.mxu0 %v2078
      %2912 = vmatprep.subr.bf16.mxu0 0
      %2913 = vmatpush1.bf16.msra.mxu0 %v2079
      %2914 = vmatprep.subr.bf16.mxu0 0
      %2915 = vmatpush1.bf16.msra.mxu0 %v2080
      %2916 = vmatprep.mubr.bf16.mxu0 %v1370
      %2917 = vmatmul.mubr.bf16.gmra.mrb[0].mxu0 %v1369
      %v2918 = vpop.f32.mrb[0].mxu0
      %v2919 = vadd.f32 %v2598, %v2918
      %v2920 = vpop.f32.mrb[0].mxu0
      %v2921 = vpop.f32.mrb[0].mxu0
      %v2922 = vadd.f32 %v2601, %v2921
      %v2923 = vpop.f32.mrb[0].mxu0
      %2924 = vmatprep.mubr.bf16.mxu0 %v1377
      %2925 = vmatmul.mubr.bf16.gmra.mrb[0].mxu0 %v1376
      %v2926 = vpop.f32.mrb[0].mxu0
      %v2927 = vadd.f32 %v2606, %v2926
      %v2928 = vpop.f32.mrb[0].mxu0
      %v2929 = vpop.f32.mrb[0].mxu0
      %v2930 = vadd.f32 %v2609, %v2929
      %v2931 = vpop.f32.mrb[0].mxu0
      %2932 = vmatprep.mubr.bf16.mxu0 %v1384
      %2933 = vmatmul.mubr.bf16.gmra.mrb[0].mxu0 %v1383
      %v2934 = vpop.f32.mrb[0].mxu0
      %v2935 = vadd.f32 %v2614, %v2934
      %v2936 = vpop.f32.mrb[0].mxu0
      %v2937 = vpop.f32.mrb[0].mxu0
      %v2938 = vadd.f32 %v2617, %v2937
      %v2939 = vpop.f32.mrb[0].mxu0
      %2940 = vmatprep.mubr.bf16.mxu0 %v1391
      %2941 = vmatmul.mubr.bf16.gmra.mrb[0].mxu0 %v1390
      %v2942 = vpop.f32.mrb[0].mxu0
      %v2943 = vadd.f32 %v2622, %v2942
      %v2944 = vpop.f32.mrb[0].mxu0
      %v2945 = vpop.f32.mrb[0].mxu0
      %v2946 = vadd.f32 %v2625, %v2945
      %v2947 = vpop.f32.mrb[0].mxu0
      %2948 = vmatprep.mubr.bf16.mxu0 %v1398
      %2949 = vmatmul.mubr.bf16.gmra.mrb[0].mxu0 %v1397
      %v2950 = vpop.f32.mrb[0].mxu0
      %v2951 = vadd.f32 %v2630, %v2950
      %v2952 = vpop.f32.mrb[0].mxu0
      %v2953 = vpop.f32.mrb[0].mxu0
      %v2954 = vadd.f32 %v2633, %v2953
      %v2955 = vpop.f32.mrb[0].mxu0
      %2956 = vmatprep.mubr.bf16.mxu0 %v1405
      %2957 = vmatmul.mubr.bf16.gmra.mrb[0].mxu0 %v1404
      %v2958 = vpop.f32.mrb[0].mxu0
      %v2959 = vadd.f32 %v2638, %v2958
      %v2960 = vpop.f32.mrb[0].mxu0
      %v2961 = vpop.f32.mrb[0].mxu0
      %v2962 = vadd.f32 %v2641, %v2961
      %v2963 = vpop.f32.mrb[0].mxu0
      %2964 = vmatprep.mubr.bf16.mxu0 %v1412
      %2965 = vmatmul.mubr.bf16.gmra.mrb[0].mxu0 %v1411
      %v2966 = vpop.f32.mrb[0].mxu0
      %v2967 = vadd.f32 %v2646, %v2966
      %v2968 = vpop.f32.mrb[0].mxu0
      %v2969 = vpop.f32.mrb[0].mxu0
      %v2970 = vadd.f32 %v2649, %v2969
      %v2971 = vpop.f32.mrb[0].mxu0
      %2972 = vmatprep.mubr.bf16.mxu0 %v1419
      %2973 = vmatmul.mubr.bf16.gmra.mrb[0].mxu0 %v1418
      %v2974 = vpop.f32.mrb[0].mxu0
      %v2975 = vadd.f32 %v2654, %v2974
      %v2976 = vpop.f32.mrb[0].mxu0
      %v2977 = vpop.f32.mrb[0].mxu0
      %v2978 = vadd.f32 %v2657, %v2977
      %v2979 = vpop.f32.mrb[0].mxu0
      %2980 = vmatprep.mubr.bf16.mxu0 %v1426
      %2981 = vmatmul.mubr.bf16.gmra.mrb[0].mxu0 %v1425
      %v2982 = vpop.f32.mrb[0].mxu0
      %v2983 = vadd.f32 %v2662, %v2982
      %v2984 = vpop.f32.mrb[0].mxu0
      %v2985 = vpop.f32.mrb[0].mxu0
      %v2986 = vadd.f32 %v2665, %v2985
      %v2987 = vpop.f32.mrb[0].mxu0
      %2988 = vmatprep.mubr.bf16.mxu0 %v1433
      %2989 = vmatmul.mubr.bf16.gmra.mrb[0].mxu0 %v1432
      %v2990 = vpop.f32.mrb[0].mxu0
      %v2991 = vadd.f32 %v2670, %v2990
      %v2992 = vpop.f32.mrb[0].mxu0
      %v2993 = vpop.f32.mrb[0].mxu0
      %v2994 = vadd.f32 %v2673, %v2993
      %v2995 = vpop.f32.mrb[0].mxu0
      %2996 = vmatprep.mubr.bf16.mxu0 %v1440
      %2997 = vmatmul.mubr.bf16.gmra.mrb[0].mxu0 %v1439
      %v2998 = vpop.f32.mrb[0].mxu0
      %v2999 = vadd.f32 %v2678, %v2998
      %v3000 = vpop.f32.mrb[0].mxu0
      %v3001 = vpop.f32.mrb[0].mxu0
      %v3002 = vadd.f32 %v2681, %v3001
      %v3003 = vpop.f32.mrb[0].mxu0
      %3004 = vmatprep.mubr.bf16.mxu0 %v1447
      %3005 = vmatmul.mubr.bf16.gmra.mrb[0].mxu0 %v1446
      %v3006 = vpop.f32.mrb[0].mxu0
      %v3007 = vadd.f32 %v2686, %v3006
      %v3008 = vpop.f32.mrb[0].mxu0
      %v3009 = vpop.f32.mrb[0].mxu0
      %v3010 = vadd.f32 %v2689, %v3009
      %v3011 = vpop.f32.mrb[0].mxu0
      %3012 = vmatprep.mubr.bf16.mxu0 %v1454
      %3013 = vmatmul.mubr.bf16.gmra.mrb[0].mxu0 %v1453
      %v3014 = vpop.f32.mrb[0].mxu0
      %v3015 = vadd.f32 %v2694, %v3014
      %v3016 = vpop.f32.mrb[0].mxu0
      %v3017 = vpop.f32.mrb[0].mxu0
      %v3018 = vadd.f32 %v2697, %v3017
      %v3019 = vpop.f32.mrb[0].mxu0
      %3020 = vmatprep.mubr.bf16.mxu0 %v1461
      %3021 = vmatmul.mubr.bf16.gmra.mrb[0].mxu0 %v1460
      %v3022 = vpop.f32.mrb[0].mxu0
      %v3023 = vadd.f32 %v2702, %v3022
      %v3024 = vpop.f32.mrb[0].mxu0
      %v3025 = vpop.f32.mrb[0].mxu0
      %v3026 = vadd.f32 %v2705, %v3025
      %v3027 = vpop.f32.mrb[0].mxu0
      %3028 = vmatprep.mubr.bf16.mxu0 %v1468
      %3029 = vmatmul.mubr.bf16.gmra.mrb[0].mxu0 %v1467
      %v3030 = vpop.f32.mrb[0].mxu0
      %v3031 = vadd.f32 %v2710, %v3030
      %v3032 = vpop.f32.mrb[0].mxu0
      %v3033 = vpop.f32.mrb[0].mxu0
      %v3034 = vadd.f32 %v2713, %v3033
      %v3035 = vpop.f32.mrb[0].mxu0
      %3036 = vmatprep.mubr.bf16.mxu0 %v1475
      %3037 = vmatmul.mubr.bf16.gmra.mrb[0].mxu0 %v1474
      %v3038 = vpop.f32.mrb[0].mxu0
      %v3039 = vadd.f32 %v2718, %v3038
      %v3040 = vpop.f32.mrb[0].mxu0
      %v3041 = vpop.f32.mrb[0].mxu0
      %v3042 = vadd.f32 %v2721, %v3041
      %v3043 = vpop.f32.mrb[0].mxu0
      %3044 = vmatprep.mubr.bf16.mxu0 %v1482
      %3045 = vmatmul.mubr.bf16.gmra.mrb[0].mxu0 %v1481
      %v3046 = vpop.f32.mrb[0].mxu0
      %v3047 = vadd.f32 %v2726, %v3046
      %v3048 = vpop.f32.mrb[0].mxu0
      %v3049 = vpop.f32.mrb[0].mxu0
      %v3050 = vadd.f32 %v2729, %v3049
      %v3051 = vpop.f32.mrb[0].mxu0
      %3052 = vmatprep.mubr.bf16.mxu0 %v1489
      %3053 = vmatmul.mubr.bf16.gmra.mrb[0].mxu0 %v1488
      %v3054 = vpop.f32.mrb[0].mxu0
      %v3055 = vadd.f32 %v2734, %v3054
      %v3056 = vpop.f32.mrb[0].mxu0
      %v3057 = vpop.f32.mrb[0].mxu0
      %v3058 = vadd.f32 %v2737, %v3057
      %v3059 = vpop.f32.mrb[0].mxu0
      %3060 = vmatprep.mubr.bf16.mxu0 %v1496
      %3061 = vmatmul.mubr.bf16.gmra.mrb[0].mxu0 %v1495
      %v3062 = vpop.f32.mrb[0].mxu0
      %v3063 = vadd.f32 %v2742, %v3062
      %v3064 = vpop.f32.mrb[0].mxu0
      %v3065 = vpop.f32.mrb[0].mxu0
      %v3066 = vadd.f32 %v2745, %v3065
      %v3067 = vpop.f32.mrb[0].mxu0
      %3068 = vmatprep.mubr.bf16.mxu0 %v1503
      %3069 = vmatmul.mubr.bf16.gmra.mrb[0].mxu0 %v1502
      %v3070 = vpop.f32.mrb[0].mxu0
      %v3071 = vadd.f32 %v2750, %v3070
      %v3072 = vpop.f32.mrb[0].mxu0
      %v3073 = vpop.f32.mrb[0].mxu0
      %v3074 = vadd.f32 %v2753, %v3073
      %v3075 = vpop.f32.mrb[0].mxu0
      %3076 = vmatprep.mubr.bf16.mxu0 %v1510
      %3077 = vmatmul.mubr.bf16.gmra.mrb[0].mxu0 %v1509
      %v3078 = vpop.f32.mrb[0].mxu0
      %v3079 = vadd.f32 %v2758, %v3078
      %v3080 = vpop.f32.mrb[0].mxu0
      %v3081 = vpop.f32.mrb[0].mxu0
      %v3082 = vadd.f32 %v2761, %v3081
      %v3083 = vpop.f32.mrb[0].mxu0
      %3084 = vmatprep.mubr.bf16.mxu0 %v1517
      %3085 = vmatmul.mubr.bf16.gmra.mrb[0].mxu0 %v1516
      %v3086 = vpop.f32.mrb[0].mxu0
      %v3087 = vadd.f32 %v2766, %v3086
      %v3088 = vpop.f32.mrb[0].mxu0
      %v3089 = vpop.f32.mrb[0].mxu0
      %v3090 = vadd.f32 %v2769, %v3089
      %v3091 = vpop.f32.mrb[0].mxu0
      %3092 = vmatprep.mubr.bf16.mxu0 %v1524
      %3093 = vmatmul.mubr.bf16.gmra.mrb[0].mxu0 %v1523
      %v3094 = vpop.f32.mrb[0].mxu0
      %v3095 = vadd.f32 %v2774, %v3094
      %v3096 = vpop.f32.mrb[0].mxu0
      %v3097 = vpop.f32.mrb[0].mxu0
      %v3098 = vadd.f32 %v2777, %v3097
      %v3099 = vpop.f32.mrb[0].mxu0
      %3100 = vmatprep.mubr.bf16.mxu0 %v1531
      %3101 = vmatmul.mubr.bf16.gmra.mrb[0].mxu0 %v1530
      %v3102 = vpop.f32.mrb[0].mxu0
      %v3103 = vadd.f32 %v2782, %v3102
      %v3104 = vpop.f32.mrb[0].mxu0
      %v3105 = vpop.f32.mrb[0].mxu0
      %v3106 = vadd.f32 %v2785, %v3105
      %v3107 = vpop.f32.mrb[0].mxu0
      %3108 = vmatprep.mubr.bf16.mxu0 %v1538
      %3109 = vmatmul.mubr.bf16.gmra.mrb[0].mxu0 %v1537
      %v3110 = vpop.f32.mrb[0].mxu0
      %v3111 = vadd.f32 %v2790, %v3110
      %v3112 = vpop.f32.mrb[0].mxu0
      %v3113 = vpop.f32.mrb[0].mxu0
      %v3114 = vadd.f32 %v2793, %v3113
      %v3115 = vpop.f32.mrb[0].mxu0
      %3116 = vmatprep.mubr.bf16.mxu0 %v1545
      %3117 = vmatmul.mubr.bf16.gmra.mrb[0].mxu0 %v1544
      %v3118 = vpop.f32.mrb[0].mxu0
      %v3119 = vadd.f32 %v2798, %v3118
      %v3120 = vpop.f32.mrb[0].mxu0
      %v3121 = vpop.f32.mrb[0].mxu0
      %v3122 = vadd.f32 %v2801, %v3121
      %v3123 = vpop.f32.mrb[0].mxu0
      %3124 = vmatprep.mubr.bf16.mxu0 %v1552
      %3125 = vmatmul.mubr.bf16.gmra.mrb[0].mxu0 %v1551
      %v3126 = vpop.f32.mrb[0].mxu0
      %v3127 = vadd.f32 %v2806, %v3126
      %v3128 = vpop.f32.mrb[0].mxu0
      %v3129 = vpop.f32.mrb[0].mxu0
      %v3130 = vadd.f32 %v2809, %v3129
      %v3131 = vpop.f32.mrb[0].mxu0
      %3132 = vmatprep.mubr.bf16.mxu0 %v1559
      %3133 = vmatmul.mubr.bf16.gmra.mrb[0].mxu0 %v1558
      %v3134 = vpop.f32.mrb[0].mxu0
      %v3135 = vadd.f32 %v2814, %v3134
      %v3136 = vpop.f32.mrb[0].mxu0
      %v3137 = vpop.f32.mrb[0].mxu0
      %v3138 = vadd.f32 %v2817, %v3137
      %v3139 = vpop.f32.mrb[0].mxu0
      %3140 = vmatprep.mubr.bf16.mxu0 %v1566
      %3141 = vmatmul.mubr.bf16.gmra.mrb[0].mxu0 %v1565
      %v3142 = vpop.f32.mrb[0].mxu0
      %v3143 = vadd.f32 %v2822, %v3142
      %v3144 = vpop.f32.mrb[0].mxu0
      %v3145 = vpop.f32.mrb[0].mxu0
      %v3146 = vadd.f32 %v2825, %v3145
      %v3147 = vpop.f32.mrb[0].mxu0
      %3148 = vmatprep.mubr.bf16.mxu0 %v1573
      %3149 = vmatmul.mubr.bf16.gmra.mrb[0].mxu0 %v1572
      %v3150 = vpop.f32.mrb[0].mxu0
      %v3151 = vadd.f32 %v2830, %v3150
      %v3152 = vpop.f32.mrb[0].mxu0
      %v3153 = vpop.f32.mrb[0].mxu0
      %v3154 = vadd.f32 %v2833, %v3153
      %v3155 = vpop.f32.mrb[0].mxu0
      %3156 = vmatprep.mubr.bf16.mxu0 %v1580
      %3157 = vmatmul.mubr.bf16.gmra.mrb[0].mxu0 %v1579
      %v3158 = vpop.f32.mrb[0].mxu0
      %v3159 = vadd.f32 %v2838, %v3158
      %v3160 = vpop.f32.mrb[0].mxu0
      %v3161 = vpop.f32.mrb[0].mxu0
      %v3162 = vadd.f32 %v2841, %v3161
      %v3163 = vpop.f32.mrb[0].mxu0
      %3164 = vmatprep.mubr.bf16.mxu0 %v1587
      %3165 = vmatmul.mubr.bf16.gmra.mrb[0].mxu0 %v1586
      %v3166 = vpop.f32.mrb[0].mxu0
      %v3167 = vadd.f32 %v2846, %v3166
      %v3168 = vpop.f32.mrb[0].mxu0
      %v3169 = vpop.f32.mrb[0].mxu0
      %v3170 = vadd.f32 %v2849, %v3169
      %v3171 = vpop.f32.mrb[0].mxu0
      %3172 = vmatprep.mubr.bf16.mxu0 %v1594
      %3173 = vmatmul.mubr.bf16.gmra.mrb[0].mxu0 %v1593
      %v3174 = vpop.f32.mrb[0].mxu0
      %v3175 = vadd.f32 %v2854, %v3174
      %v3176 = vpop.f32.mrb[0].mxu0
      %v3177 = vpop.f32.mrb[0].mxu0
      %v3178 = vadd.f32 %v2857, %v3177
      %v3179 = vpop.f32.mrb[0].mxu0
      %3180 = vmatprep.mubr.bf16.mxu0 %v1601
      %3181 = vmatmul.mubr.bf16.gmra.mrb[0].mxu0 %v1600
      %v3182 = vpop.f32.mrb[0].mxu0
      %v3183 = vadd.f32 %v2862, %v3182
      %v3184 = vpop.f32.mrb[0].mxu0
      %v3185 = vpop.f32.mrb[0].mxu0
      %v3186 = vadd.f32 %v2865, %v3185
      %v3187 = vpop.f32.mrb[0].mxu0
      %3188 = vmatprep.mubr.bf16.mxu0 %v1608
      %3189 = vmatmul.mubr.bf16.gmra.mrb[0].mxu0 %v1607
      %v3190 = vpop.f32.mrb[0].mxu0
      %v3191 = vadd.f32 %v2870, %v3190
      %v3192 = vpop.f32.mrb[0].mxu0
      %v3193 = vpop.f32.mrb[0].mxu0
      %v3194 = vadd.f32 %v2873, %v3193
      %v3195 = vpop.f32.mrb[0].mxu0
      %3196 = vmatprep.mubr.bf16.mxu0 %v1615
      %3197 = vmatmul.mubr.bf16.gmra.mrb[0].mxu0 %v1614
      %v3198 = vpop.f32.mrb[0].mxu0
      %v3199 = vadd.f32 %v2878, %v3198
      %v3200 = vpop.f32.mrb[0].mxu0
      %v3201 = vpop.f32.mrb[0].mxu0
      %v3202 = vadd.f32 %v2881, %v3201
      %v3203 = vpop.f32.mrb[0].mxu0
      %3204 = vdwg.mxu0
      %3205 = vmatprep.subr.bf16.mxu0 0
      %3206 = vmatpush1.bf16.msra.mxu0 %v2081
      %3207 = vmatprep.subr.bf16.mxu0 0
      %3208 = vmatpush1.bf16.msra.mxu0 %v2082
      %3209 = vmatprep.subr.bf16.mxu0 0
      %3210 = vmatpush1.bf16.msra.mxu0 0
      %3211 = vmatprep.subr.bf16.mxu0 0
      %3212 = vmatpush1.bf16.msra.mxu0 0
      %3213 = vmatprep.subr.bf16.mxu0 0
      %3214 = vmatpush1.bf16.msra.mxu0 0
      %3215 = vmatprep.subr.bf16.mxu0 0
      %3216 = vmatpush1.bf16.msra.mxu0 0
      %3217 = vmatprep.subr.bf16.mxu0 0
      %3218 = vmatpush1.bf16.msra.mxu0 0
      %3219 = vmatprep.subr.bf16.mxu0 0
      %3220 = vmatpush1.bf16.msra.mxu0 0
      %3221 = vmatprep.subr.bf16.mxu0 0
      %3222 = vmatpush1.bf16.msra.mxu0 0
      %3223 = vmatprep.subr.bf16.mxu0 0
      %3224 = vmatpush1.bf16.msra.mxu0 0
      %3225 = vmatprep.subr.bf16.mxu0 0
      %3226 = vmatpush1.bf16.msra.mxu0 0
      %3227 = vmatprep.subr.bf16.mxu0 0
      %3228 = vmatpush1.bf16.msra.mxu0 0
      %3229 = vmatprep.subr.bf16.mxu0 0
      %3230 = vmatpush1.bf16.msra.mxu0 0
      %3231 = vmatprep.subr.bf16.mxu0 0
      %3232 = vmatpush1.bf16.msra.mxu0 0
      %3233 = vmatprep.subr.bf16.mxu0 0
      %3234 = vmatpush1.bf16.msra.mxu0 0
      %3235 = vmatprep.subr.bf16.mxu0 0
      %3236 = vmatpush1.bf16.msra.mxu0 0
      %3237 = vmatprep.mubr.bf16.mxu0 0
      %3238 = vmatmul.mubr.bf16.gmra.mrb[0].mxu0 %v2135
      %v3239 = vpop.f32.mrb[0].mxu0
      %v3240 = vadd.f32 %v2919, %v3239
      %v3241 = vpop.f32.mrb[0].mxu0
      %v3242 = vpop.f32.mrb[0].mxu0
      %v3243 = vadd.f32 %v2922, %v3242
      %v3244 = vpop.f32.mrb[0].mxu0
      %3245 = vmatprep.mubr.bf16.mxu0 0
      %3246 = vmatmul.mubr.bf16.gmra.mrb[0].mxu0 %v2138
      %v3247 = vpop.f32.mrb[0].mxu0
      %v3248 = vadd.f32 %v2927, %v3247
      %v3249 = vpop.f32.mrb[0].mxu0
      %v3250 = vpop.f32.mrb[0].mxu0
      %v3251 = vadd.f32 %v2930, %v3250
      %v3252 = vpop.f32.mrb[0].mxu0
      %3253 = vmatprep.mubr.bf16.mxu0 0
      %3254 = vmatmul.mubr.bf16.gmra.mrb[0].mxu0 %v2141
      %v3255 = vpop.f32.mrb[0].mxu0
      %v3256 = vadd.f32 %v2935, %v3255
      %v3257 = vpop.f32.mrb[0].mxu0
      %v3258 = vpop.f32.mrb[0].mxu0
      %v3259 = vadd.f32 %v2938, %v3258
      %v3260 = vpop.f32.mrb[0].mxu0
      %3261 = vmatprep.mubr.bf16.mxu0 0
      %3262 = vmatmul.mubr.bf16.gmra.mrb[0].mxu0 %v2144
      %v3263 = vpop.f32.mrb[0].mxu0
      %v3264 = vadd.f32 %v2943, %v3263
      %v3265 = vpop.f32.mrb[0].mxu0
      %v3266 = vpop.f32.mrb[0].mxu0
      %v3267 = vadd.f32 %v2946, %v3266
      %v3268 = vpop.f32.mrb[0].mxu0
      %3269 = vmatprep.mubr.bf16.mxu0 0
      %3270 = vmatmul.mubr.bf16.gmra.mrb[0].mxu0 %v2147
      %v3271 = vpop.f32.mrb[0].mxu0
      %v3272 = vadd.f32 %v2951, %v3271
      %v3273 = vpop.f32.mrb[0].mxu0
      %v3274 = vpop.f32.mrb[0].mxu0
      %v3275 = vadd.f32 %v2954, %v3274
      %v3276 = vpop.f32.mrb[0].mxu0
      %3277 = vmatprep.mubr.bf16.mxu0 0
      %3278 = vmatmul.mubr.bf16.gmra.mrb[0].mxu0 %v2150
      %v3279 = vpop.f32.mrb[0].mxu0
      %v3280 = vadd.f32 %v2959, %v3279
      %v3281 = vpop.f32.mrb[0].mxu0
      %v3282 = vpop.f32.mrb[0].mxu0
      %v3283 = vadd.f32 %v2962, %v3282
      %v3284 = vpop.f32.mrb[0].mxu0
      %3285 = vmatprep.mubr.bf16.mxu0 0
      %3286 = vmatmul.mubr.bf16.gmra.mrb[0].mxu0 %v2153
      %v3287 = vpop.f32.mrb[0].mxu0
      %v3288 = vadd.f32 %v2967, %v3287
      %v3289 = vpop.f32.mrb[0].mxu0
      %v3290 = vpop.f32.mrb[0].mxu0
      %v3291 = vadd.f32 %v2970, %v3290
      %v3292 = vpop.f32.mrb[0].mxu0
      %3293 = vmatprep.mubr.bf16.mxu0 0
      %3294 = vmatmul.mubr.bf16.gmra.mrb[0].mxu0 %v2156
      %v3295 = vpop.f32.mrb[0].mxu0
      %v3296 = vadd.f32 %v2975, %v3295
      %v3297 = vpop.f32.mrb[0].mxu0
      %v3298 = vpop.f32.mrb[0].mxu0
      %v3299 = vadd.f32 %v2978, %v3298
      %v3300 = vpop.f32.mrb[0].mxu0
      %3301 = vmatprep.mubr.bf16.mxu0 0
      %3302 = vmatmul.mubr.bf16.gmra.mrb[0].mxu0 %v2159
      %v3303 = vpop.f32.mrb[0].mxu0
      %v3304 = vadd.f32 %v2983, %v3303
      %v3305 = vpop.f32.mrb[0].mxu0
      %v3306 = vpop.f32.mrb[0].mxu0
      %v3307 = vadd.f32 %v2986, %v3306
      %v3308 = vpop.f32.mrb[0].mxu0
      %3309 = vmatprep.mubr.bf16.mxu0 0
      %3310 = vmatmul.mubr.bf16.gmra.mrb[0].mxu0 %v2162
      %v3311 = vpop.f32.mrb[0].mxu0
      %v3312 = vadd.f32 %v2991, %v3311
      %v3313 = vpop.f32.mrb[0].mxu0
      %v3314 = vpop.f32.mrb[0].mxu0
      %v3315 = vadd.f32 %v2994, %v3314
      %v3316 = vpop.f32.mrb[0].mxu0
      %3317 = vmatprep.mubr.bf16.mxu0 0
      %3318 = vmatmul.mubr.bf16.gmra.mrb[0].mxu0 %v2165
      %v3319 = vpop.f32.mrb[0].mxu0
      %v3320 = vadd.f32 %v2999, %v3319
      %v3321 = vpop.f32.mrb[0].mxu0
      %v3322 = vpop.f32.mrb[0].mxu0
      %v3323 = vadd.f32 %v3002, %v3322
      %v3324 = vpop.f32.mrb[0].mxu0
      %3325 = vmatprep.mubr.bf16.mxu0 0
      %3326 = vmatmul.mubr.bf16.gmra.mrb[0].mxu0 %v2168
      %v3327 = vpop.f32.mrb[0].mxu0
      %v3328 = vadd.f32 %v3007, %v3327
      %v3329 = vpop.f32.mrb[0].mxu0
      %v3330 = vpop.f32.mrb[0].mxu0
      %v3331 = vadd.f32 %v3010, %v3330
      %v3332 = vpop.f32.mrb[0].mxu0
      %3333 = vmatprep.mubr.bf16.mxu0 0
      %3334 = vmatmul.mubr.bf16.gmra.mrb[0].mxu0 %v2171
      %v3335 = vpop.f32.mrb[0].mxu0
      %v3336 = vadd.f32 %v3015, %v3335
      %v3337 = vpop.f32.mrb[0].mxu0
      %v3338 = vpop.f32.mrb[0].mxu0
      %v3339 = vadd.f32 %v3018, %v3338
      %v3340 = vpop.f32.mrb[0].mxu0
      %3341 = vmatprep.mubr.bf16.mxu0 0
      %3342 = vmatmul.mubr.bf16.gmra.mrb[0].mxu0 %v2174
      %v3343 = vpop.f32.mrb[0].mxu0
      %v3344 = vadd.f32 %v3023, %v3343
      %v3345 = vpop.f32.mrb[0].mxu0
      %v3346 = vpop.f32.mrb[0].mxu0
      %v3347 = vadd.f32 %v3026, %v3346
      %v3348 = vpop.f32.mrb[0].mxu0
      %3349 = vmatprep.mubr.bf16.mxu0 0
      %3350 = vmatmul.mubr.bf16.gmra.mrb[0].mxu0 %v2177
      %v3351 = vpop.f32.mrb[0].mxu0
      %v3352 = vadd.f32 %v3031, %v3351
      %v3353 = vpop.f32.mrb[0].mxu0
      %v3354 = vpop.f32.mrb[0].mxu0
      %v3355 = vadd.f32 %v3034, %v3354
      %v3356 = vpop.f32.mrb[0].mxu0
      %3357 = vmatprep.mubr.bf16.mxu0 0
      %3358 = vmatmul.mubr.bf16.gmra.mrb[0].mxu0 %v2180
      %v3359 = vpop.f32.mrb[0].mxu0
      %v3360 = vadd.f32 %v3039, %v3359
      %v3361 = vpop.f32.mrb[0].mxu0
      %v3362 = vpop.f32.mrb[0].mxu0
      %v3363 = vadd.f32 %v3042, %v3362
      %v3364 = vpop.f32.mrb[0].mxu0
      %3365 = vmatprep.mubr.bf16.mxu0 0
      %3366 = vmatmul.mubr.bf16.gmra.mrb[0].mxu0 %v2183
      %v3367 = vpop.f32.mrb[0].mxu0
      %v3368 = vadd.f32 %v3047, %v3367
      %v3369 = vpop.f32.mrb[0].mxu0
      %v3370 = vpop.f32.mrb[0].mxu0
      %v3371 = vadd.f32 %v3050, %v3370
      %v3372 = vpop.f32.mrb[0].mxu0
      %3373 = vmatprep.mubr.bf16.mxu0 0
      %3374 = vmatmul.mubr.bf16.gmra.mrb[0].mxu0 %v2186
      %v3375 = vpop.f32.mrb[0].mxu0
      %v3376 = vadd.f32 %v3055, %v3375
      %v3377 = vpop.f32.mrb[0].mxu0
      %v3378 = vpop.f32.mrb[0].mxu0
      %v3379 = vadd.f32 %v3058, %v3378
      %v3380 = vpop.f32.mrb[0].mxu0
      %3381 = vmatprep.mubr.bf16.mxu0 0
      %3382 = vmatmul.mubr.bf16.gmra.mrb[0].mxu0 %v2189
      %v3383 = vpop.f32.mrb[0].mxu0
      %v3384 = vadd.f32 %v3063, %v3383
      %v3385 = vpop.f32.mrb[0].mxu0
      %v3386 = vpop.f32.mrb[0].mxu0
      %v3387 = vadd.f32 %v3066, %v3386
      %v3388 = vpop.f32.mrb[0].mxu0
      %3389 = vmatprep.mubr.bf16.mxu0 0
      %3390 = vmatmul.mubr.bf16.gmra.mrb[0].mxu0 %v2192
      %v3391 = vpop.f32.mrb[0].mxu0
      %v3392 = vadd.f32 %v3071, %v3391
      %v3393 = vpop.f32.mrb[0].mxu0
      %v3394 = vpop.f32.mrb[0].mxu0
      %v3395 = vadd.f32 %v3074, %v3394
      %v3396 = vpop.f32.mrb[0].mxu0
      %3397 = vmatprep.mubr.bf16.mxu0 0
      %3398 = vmatmul.mubr.bf16.gmra.mrb[0].mxu0 %v2195
      %v3399 = vpop.f32.mrb[0].mxu0
      %v3400 = vadd.f32 %v3079, %v3399
      %v3401 = vpop.f32.mrb[0].mxu0
      %v3402 = vpop.f32.mrb[0].mxu0
      %v3403 = vadd.f32 %v3082, %v3402
      %v3404 = vpop.f32.mrb[0].mxu0
      %3405 = vmatprep.mubr.bf16.mxu0 0
      %3406 = vmatmul.mubr.bf16.gmra.mrb[0].mxu0 %v2198
      %v3407 = vpop.f32.mrb[0].mxu0
      %v3408 = vadd.f32 %v3087, %v3407
      %v3409 = vpop.f32.mrb[0].mxu0
      %v3410 = vpop.f32.mrb[0].mxu0
      %v3411 = vadd.f32 %v3090, %v3410
      %v3412 = vpop.f32.mrb[0].mxu0
      %3413 = vmatprep.mubr.bf16.mxu0 0
      %3414 = vmatmul.mubr.bf16.gmra.mrb[0].mxu0 %v2201
      %v3415 = vpop.f32.mrb[0].mxu0
      %v3416 = vadd.f32 %v3095, %v3415
      %v3417 = vpop.f32.mrb[0].mxu0
      %v3418 = vpop.f32.mrb[0].mxu0
      %v3419 = vadd.f32 %v3098, %v3418
      %v3420 = vpop.f32.mrb[0].mxu0
      %3421 = vmatprep.mubr.bf16.mxu0 0
      %3422 = vmatmul.mubr.bf16.gmra.mrb[0].mxu0 %v2204
      %v3423 = vpop.f32.mrb[0].mxu0
      %v3424 = vadd.f32 %v3103, %v3423
      %v3425 = vpop.f32.mrb[0].mxu0
      %v3426 = vpop.f32.mrb[0].mxu0
      %v3427 = vadd.f32 %v3106, %v3426
      %v3428 = vpop.f32.mrb[0].mxu0
      %3429 = vmatprep.mubr.bf16.mxu0 0
      %3430 = vmatmul.mubr.bf16.gmra.mrb[0].mxu0 %v2207
      %v3431 = vpop.f32.mrb[0].mxu0
      %v3432 = vadd.f32 %v3111, %v3431
      %v3433 = vpop.f32.mrb[0].mxu0
      %v3434 = vpop.f32.mrb[0].mxu0
      %v3435 = vadd.f32 %v3114, %v3434
      %v3436 = vpop.f32.mrb[0].mxu0
      %3437 = vmatprep.mubr.bf16.mxu0 0
      %3438 = vmatmul.mubr.bf16.gmra.mrb[0].mxu0 %v2210
      %v3439 = vpop.f32.mrb[0].mxu0
      %v3440 = vadd.f32 %v3119, %v3439
      %v3441 = vpop.f32.mrb[0].mxu0
      %v3442 = vpop.f32.mrb[0].mxu0
      %v3443 = vadd.f32 %v3122, %v3442
      %v3444 = vpop.f32.mrb[0].mxu0
      %3445 = vmatprep.mubr.bf16.mxu0 0
      %3446 = vmatmul.mubr.bf16.gmra.mrb[0].mxu0 %v2213
      %v3447 = vpop.f32.mrb[0].mxu0
      %v3448 = vadd.f32 %v3127, %v3447
      %v3449 = vpop.f32.mrb[0].mxu0
      %v3450 = vpop.f32.mrb[0].mxu0
      %v3451 = vadd.f32 %v3130, %v3450
      %v3452 = vpop.f32.mrb[0].mxu0
      %3453 = vmatprep.mubr.bf16.mxu0 0
      %3454 = vmatmul.mubr.bf16.gmra.mrb[0].mxu0 %v2216
      %v3455 = vpop.f32.mrb[0].mxu0
      %v3456 = vadd.f32 %v3135, %v3455
      %v3457 = vpop.f32.mrb[0].mxu0
      %v3458 = vpop.f32.mrb[0].mxu0
      %v3459 = vadd.f32 %v3138, %v3458
      %v3460 = vpop.f32.mrb[0].mxu0
      %3461 = vmatprep.mubr.bf16.mxu0 0
      %3462 = vmatmul.mubr.bf16.gmra.mrb[0].mxu0 %v2219
      %v3463 = vpop.f32.mrb[0].mxu0
      %v3464 = vadd.f32 %v3143, %v3463
      %v3465 = vpop.f32.mrb[0].mxu0
      %v3466 = vpop.f32.mrb[0].mxu0
      %v3467 = vadd.f32 %v3146, %v3466
      %v3468 = vpop.f32.mrb[0].mxu0
      %3469 = vmatprep.mubr.bf16.mxu0 0
      %3470 = vmatmul.mubr.bf16.gmra.mrb[0].mxu0 %v2222
      %v3471 = vpop.f32.mrb[0].mxu0
      %v3472 = vadd.f32 %v3151, %v3471
      %v3473 = vpop.f32.mrb[0].mxu0
      %v3474 = vpop.f32.mrb[0].mxu0
      %v3475 = vadd.f32 %v3154, %v3474
      %v3476 = vpop.f32.mrb[0].mxu0
      %3477 = vmatprep.mubr.bf16.mxu0 0
      %3478 = vmatmul.mubr.bf16.gmra.mrb[0].mxu0 %v2225
      %v3479 = vpop.f32.mrb[0].mxu0
      %v3480 = vadd.f32 %v3159, %v3479
      %v3481 = vpop.f32.mrb[0].mxu0
      %v3482 = vpop.f32.mrb[0].mxu0
      %v3483 = vadd.f32 %v3162, %v3482
      %v3484 = vpop.f32.mrb[0].mxu0
      %3485 = vmatprep.mubr.bf16.mxu0 0
      %3486 = vmatmul.mubr.bf16.gmra.mrb[0].mxu0 %v2228
      %v3487 = vpop.f32.mrb[0].mxu0
      %v3488 = vadd.f32 %v3167, %v3487
      %v3489 = vpop.f32.mrb[0].mxu0
      %v3490 = vpop.f32.mrb[0].mxu0
      %v3491 = vadd.f32 %v3170, %v3490
      %v3492 = vpop.f32.mrb[0].mxu0
      %3493 = vmatprep.mubr.bf16.mxu0 0
      %3494 = vmatmul.mubr.bf16.gmra.mrb[0].mxu0 %v2231
      %v3495 = vpop.f32.mrb[0].mxu0
      %v3496 = vadd.f32 %v3175, %v3495
      %v3497 = vpop.f32.mrb[0].mxu0
      %v3498 = vpop.f32.mrb[0].mxu0
      %v3499 = vadd.f32 %v3178, %v3498
      %v3500 = vpop.f32.mrb[0].mxu0
      %3501 = vmatprep.mubr.bf16.mxu0 0
      %3502 = vmatmul.mubr.bf16.gmra.mrb[0].mxu0 %v2234
      %v3503 = vpop.f32.mrb[0].mxu0
      %v3504 = vadd.f32 %v3183, %v3503
      %v3505 = vpop.f32.mrb[0].mxu0
      %v3506 = vpop.f32.mrb[0].mxu0
      %v3507 = vadd.f32 %v3186, %v3506
      %v3508 = vpop.f32.mrb[0].mxu0
      %3509 = vmatprep.mubr.bf16.mxu0 0
      %3510 = vmatmul.mubr.bf16.gmra.mrb[0].mxu0 %v2237
      %v3511 = vpop.f32.mrb[0].mxu0
      %v3512 = vadd.f32 %v3191, %v3511
      %v3513 = vpop.f32.mrb[0].mxu0
      %v3514 = vpop.f32.mrb[0].mxu0
      %v3515 = vadd.f32 %v3194, %v3514
      %v3516 = vpop.f32.mrb[0].mxu0
      %3517 = vmatprep.mubr.bf16.mxu0 0
      %3518 = vmatmul.mubr.bf16.gmra.mrb[0].mxu0 %v2240
      %v3519 = vpop.f32.mrb[0].mxu0
      %v3520 = vadd.f32 %v3199, %v3519
      %v3521 = vpop.f32.mrb[0].mxu0
      %v3522 = vpop.f32.mrb[0].mxu0
      %v3523 = vadd.f32 %v3202, %v3522
      %v3524 = vpop.f32.mrb[0].mxu0
      %3525 = vdwg.mxu0
      %v3526 = vmax.f32 %v3240, 0.0
      %v3527 = vmax.f32 %v3243, 0.0
      %v3528 = vmax.f32 %v3248, 0.0
      %v3529 = vmax.f32 %v3251, 0.0
      %v3530 = vmax.f32 %v3256, 0.0
      %v3531 = vmax.f32 %v3259, 0.0
      %v3532 = vmax.f32 %v3264, 0.0
      %v3533 = vmax.f32 %v3267, 0.0
      %v3534 = vmax.f32 %v3272, 0.0
      %v3535 = vmax.f32 %v3275, 0.0
      %v3536 = vmax.f32 %v3280, 0.0
      %v3537 = vmax.f32 %v3283, 0.0
      %v3538 = vmax.f32 %v3288, 0.0
      %v3539 = vmax.f32 %v3291, 0.0
      %v3540 = vmax.f32 %v3296, 0.0
      %v3541 = vmax.f32 %v3299, 0.0
      %v3542 = vmax.f32 %v3304, 0.0
      %v3543 = vmax.f32 %v3307, 0.0
      %v3544 = vmax.f32 %v3312, 0.0
      %v3545 = vmax.f32 %v3315, 0.0
      %v3546 = vmax.f32 %v3320, 0.0
      %v3547 = vmax.f32 %v3323, 0.0
      %v3548 = vmax.f32 %v3328, 0.0
      %v3549 = vmax.f32 %v3331, 0.0
      %v3550 = vmax.f32 %v3336, 0.0
      %v3551 = vmax.f32 %v3339, 0.0
      %v3552 = vmax.f32 %v3344, 0.0
      %v3553 = vmax.f32 %v3347, 0.0
      %v3554 = vmax.f32 %v3352, 0.0
      %v3555 = vmax.f32 %v3355, 0.0
      %v3556 = vmax.f32 %v3360, 0.0
      %v3557 = vmax.f32 %v3363, 0.0
      %v3558 = vmax.f32 %v3368, 0.0
      %v3559 = vmax.f32 %v3371, 0.0
      %v3560 = vmax.f32 %v3376, 0.0
      %v3561 = vmax.f32 %v3379, 0.0
      %v3562 = vmax.f32 %v3384, 0.0
      %v3563 = vmax.f32 %v3387, 0.0
      %v3564 = vmax.f32 %v3392, 0.0
      %v3565 = vmax.f32 %v3395, 0.0
      %v3566 = vmax.f32 %v3400, 0.0
      %v3567 = vmax.f32 %v3403, 0.0
      %v3568 = vmax.f32 %v3408, 0.0
      %v3569 = vmax.f32 %v3411, 0.0
      %v3570 = vmax.f32 %v3416, 0.0
      %v3571 = vmax.f32 %v3419, 0.0
      %v3572 = vmax.f32 %v3424, 0.0
      %v3573 = vmax.f32 %v3427, 0.0
      %v3574 = vmax.f32 %v3432, 0.0
      %v3575 = vmax.f32 %v3435, 0.0
      %v3576 = vmax.f32 %v3440, 0.0
      %v3577 = vmax.f32 %v3443, 0.0
      %v3578 = vmax.f32 %v3448, 0.0
      %v3579 = vmax.f32 %v3451, 0.0
      %v3580 = vmax.f32 %v3456, 0.0
      %v3581 = vmax.f32 %v3459, 0.0
      %v3582 = vmax.f32 %v3464, 0.0
      %v3583 = vmax.f32 %v3467, 0.0
      %v3584 = vmax.f32 %v3472, 0.0
      %v3585 = vmax.f32 %v3475, 0.0
      %v3586 = vmax.f32 %v3480, 0.0
      %v3587 = vmax.f32 %v3483, 0.0
      %v3588 = vmax.f32 %v3488, 0.0
      %v3589 = vmax.f32 %v3491, 0.0
      %v3590 = vmax.f32 %v3496, 0.0
      %v3591 = vmax.f32 %v3499, 0.0
      %v3592 = vmax.f32 %v3504, 0.0
      %v3593 = vmax.f32 %v3507, 0.0
      %v3594 = vmax.f32 %v3512, 0.0
      %v3595 = vmax.f32 %v3515, 0.0
      %v3596 = vmax.f32 %v3520, 0.0
      %v3597 = vmax.f32 %v3523, 0.0
      %v3598 = vpack.c.bf16 %v3527, %v3526
      %v3599 = vpack.c.bf16 %v3529, %v3528
      %v3600 = vpack.c.bf16 %v3531, %v3530
      %v3601 = vpack.c.bf16 %v3533, %v3532
      %v3602 = vpack.c.bf16 %v3535, %v3534
      %v3603 = vpack.c.bf16 %v3537, %v3536
      %v3604 = vpack.c.bf16 %v3539, %v3538
      %v3605 = vpack.c.bf16 %v3541, %v3540
      %v3606 = vpack.c.bf16 %v3543, %v3542
      %v3607 = vpack.c.bf16 %v3545, %v3544
      %v3608 = vpack.c.bf16 %v3547, %v3546
      %v3609 = vpack.c.bf16 %v3549, %v3548
      %v3610 = vpack.c.bf16 %v3551, %v3550
      %v3611 = vpack.c.bf16 %v3553, %v3552
      %v3612 = vpack.c.bf16 %v3555, %v3554
      %v3613 = vpack.c.bf16 %v3557, %v3556
      %v3614 = vpack.c.bf16 %v3559, %v3558
      %v3615 = vpack.c.bf16 %v3561, %v3560
      %v3616 = vpack.c.bf16 %v3563, %v3562
      %v3617 = vpack.c.bf16 %v3565, %v3564
      %v3618 = vpack.c.bf16 %v3567, %v3566
      %v3619 = vpack.c.bf16 %v3569, %v3568
      %v3620 = vpack.c.bf16 %v3571, %v3570
      %v3621 = vpack.c.bf16 %v3573, %v3572
      %v3622 = vpack.c.bf16 %v3575, %v3574
      %v3623 = vpack.c.bf16 %v3577, %v3576
      %v3624 = vpack.c.bf16 %v3579, %v3578
      %v3625 = vpack.c.bf16 %v3581, %v3580
      %v3626 = vpack.c.bf16 %v3583, %v3582
      %v3627 = vpack.c.bf16 %v3585, %v3584
      %v3628 = vpack.c.bf16 %v3587, %v3586
      %v3629 = vpack.c.bf16 %v3589, %v3588
      %v3630 = vpack.c.bf16 %v3591, %v3590
      %v3631 = vpack.c.bf16 %v3593, %v3592
      %v3632 = vpack.c.bf16 %v3595, %v3594
      %v3633 = vpack.c.bf16 %v3597, %v3596
      %v3670 = vunpack.c.l.b16 %v3598
      %v3671 = vunpack.c.h.b16 %v3598
      %v3672 = vunpack.c.l.b16 %v3599
      %v3673 = vunpack.c.h.b16 %v3599
      %v3674 = vunpack.c.l.b16 %v3600
      %v3675 = vunpack.c.h.b16 %v3600
      %v3676 = vunpack.c.l.b16 %v3601
      %v3677 = vunpack.c.h.b16 %v3601
      %v3678 = vunpack.c.l.b16 %v3602
      %v3679 = vunpack.c.h.b16 %v3602
      %v3680 = vunpack.c.l.b16 %v3603
      %v3681 = vunpack.c.h.b16 %v3603
      %v3682 = vunpack.c.l.b16 %v3604
      %v3683 = vunpack.c.h.b16 %v3604
      %v3684 = vunpack.c.l.b16 %v3605
      %v3685 = vunpack.c.h.b16 %v3605
      %v3686 = vunpack.c.l.b16 %v3606
      %v3687 = vunpack.c.h.b16 %v3606
      %v3688 = vunpack.c.l.b16 %v3607
      %v3689 = vunpack.c.h.b16 %v3607
      %v3690 = vunpack.c.l.b16 %v3608
      %v3691 = vunpack.c.h.b16 %v3608
      %v3692 = vunpack.c.l.b16 %v3609
      %v3693 = vunpack.c.h.b16 %v3609
      %v3694 = vunpack.c.l.b16 %v3610
      %v3695 = vunpack.c.h.b16 %v3610
      %v3696 = vunpack.c.l.b16 %v3611
      %v3697 = vunpack.c.h.b16 %v3611
      %v3698 = vunpack.c.l.b16 %v3612
      %v3699 = vunpack.c.h.b16 %v3612
      %v3700 = vunpack.c.l.b16 %v3613
      %v3701 = vunpack.c.h.b16 %v3613
      %v3702 = vunpack.c.l.b16 %v3614
      %v3703 = vunpack.c.h.b16 %v3614
      %v3704 = vunpack.c.l.b16 %v3615
      %v3705 = vunpack.c.h.b16 %v3615
      %v3706 = vunpack.c.l.b16 %v3616
      %v3707 = vunpack.c.h.b16 %v3616
      %v3708 = vunpack.c.l.b16 %v3617
      %v3709 = vunpack.c.h.b16 %v3617
      %v3710 = vunpack.c.l.b16 %v3618
      %v3711 = vunpack.c.h.b16 %v3618
      %v3712 = vunpack.c.l.b16 %v3619
      %v3713 = vunpack.c.h.b16 %v3619
      %v3714 = vunpack.c.l.b16 %v3620
      %v3715 = vunpack.c.h.b16 %v3620
      %v3716 = vunpack.c.l.b16 %v3621
      %v3717 = vunpack.c.h.b16 %v3621
      %v3718 = vunpack.c.l.b16 %v3622
      %v3719 = vunpack.c.h.b16 %v3622
      %v3720 = vunpack.c.l.b16 %v3623
      %v3721 = vunpack.c.h.b16 %v3623
      %v3722 = vunpack.c.l.b16 %v3624
      %v3723 = vunpack.c.h.b16 %v3624
      %v3724 = vunpack.c.l.b16 %v3625
      %v3725 = vunpack.c.h.b16 %v3625
      %v3726 = vunpack.c.l.b16 %v3626
      %v3727 = vunpack.c.h.b16 %v3626
      %v3728 = vunpack.c.l.b16 %v3627
      %v3729 = vunpack.c.h.b16 %v3627
      %v3730 = vunpack.c.l.b16 %v3628
      %v3731 = vunpack.c.h.b16 %v3628
      %v3732 = vunpack.c.l.b16 %v3629
      %v3733 = vunpack.c.h.b16 %v3629
      %v3734 = vunpack.c.l.b16 %v3630
      %v3735 = vunpack.c.h.b16 %v3630
      %v3736 = vunpack.c.l.b16 %v3631
      %v3737 = vunpack.c.h.b16 %v3631
      %v3738 = vunpack.c.l.b16 %v3632
      %v3739 = vunpack.c.h.b16 %v3632
      %v3740 = vunpack.c.l.b16 %v3633
      %v3741 = vunpack.c.h.b16 %v3633
      %v3742 = vpack.c.b16 %v3670, %v3670
      %v3743 = vpack.c.b16 %v3671, %v3671
      %v3744 = vpack.c.b16 %v3672, %v3672
      %v3745 = vpack.c.b16 %v3673, %v3673
      %v3746 = vpack.c.b16 %v3674, %v3674
      %v3747 = vpack.c.b16 %v3675, %v3675
      %v3748 = vpack.c.b16 %v3676, %v3676
      %v3749 = vpack.c.b16 %v3677, %v3677
      %v3750 = vpack.c.b16 %v3678, %v3678
      %v3751 = vpack.c.b16 %v3679, %v3679
      %v3752 = vpack.c.b16 %v3680, %v3680
      %v3753 = vpack.c.b16 %v3681, %v3681
      %v3754 = vpack.c.b16 %v3682, %v3682
      %v3755 = vpack.c.b16 %v3683, %v3683
      %v3756 = vpack.c.b16 %v3684, %v3684
      %v3757 = vpack.c.b16 %v3685, %v3685
      %v3758 = vpack.c.b16 %v3686, %v3686
      %v3759 = vpack.c.b16 %v3687, %v3687
      %v3760 = vpack.c.b16 %v3688, %v3688
      %v3761 = vpack.c.b16 %v3689, %v3689
      %v3762 = vpack.c.b16 %v3690, %v3690
      %v3763 = vpack.c.b16 %v3691, %v3691
      %v3764 = vpack.c.b16 %v3692, %v3692
      %v3765 = vpack.c.b16 %v3693, %v3693
      %v3766 = vpack.c.b16 %v3694, %v3694
      %v3767 = vpack.c.b16 %v3695, %v3695
      %v3768 = vpack.c.b16 %v3696, %v3696
      %v3769 = vpack.c.b16 %v3697, %v3697
      %v3770 = vpack.c.b16 %v3698, %v3698
      %v3771 = vpack.c.b16 %v3699, %v3699
      %v3772 = vpack.c.b16 %v3700, %v3700
      %v3773 = vpack.c.b16 %v3701, %v3701
      %v3774 = vpack.c.b16 %v3702, %v3702
      %v3775 = vpack.c.b16 %v3703, %v3703
      %v3776 = vpack.c.b16 %v3704, %v3704
      %v3777 = vpack.c.b16 %v3705, %v3705
      %v3778 = vpack.c.b16 %v3706, %v3706
      %v3779 = vpack.c.b16 %v3707, %v3707
      %v3780 = vpack.c.b16 %v3708, %v3708
      %v3781 = vpack.c.b16 %v3709, %v3709
      %v3782 = vpack.c.b16 %v3710, %v3710
      %v3783 = vpack.c.b16 %v3711, %v3711
      %v3784 = vpack.c.b16 %v3712, %v3712
      %v3785 = vpack.c.b16 %v3713, %v3713
      %v3786 = vpack.c.b16 %v3714, %v3714
      %v3787 = vpack.c.b16 %v3715, %v3715
      %v3788 = vpack.c.b16 %v3716, %v3716
      %v3789 = vpack.c.b16 %v3717, %v3717
      %v3790 = vpack.c.b16 %v3718, %v3718
      %v3791 = vpack.c.b16 %v3719, %v3719
      %v3792 = vpack.c.b16 %v3720, %v3720
      %v3793 = vpack.c.b16 %v3721, %v3721
      %v3794 = vpack.c.b16 %v3722, %v3722
      %v3795 = vpack.c.b16 %v3723, %v3723
      %v3796 = vpack.c.b16 %v3724, %v3724
      %v3797 = vpack.c.b16 %v3725, %v3725
      %v3798 = vpack.c.b16 %v3726, %v3726
      %v3799 = vpack.c.b16 %v3727, %v3727
      %v3800 = vpack.c.b16 %v3728, %v3728
      %v3801 = vpack.c.b16 %v3729, %v3729
      %v3802 = vpack.c.b16 %v3730, %v3730
      %v3803 = vpack.c.b16 %v3731, %v3731
      %v3804 = vpack.c.b16 %v3732, %v3732
      %v3805 = vpack.c.b16 %v3733, %v3733
      %v3806 = vpack.c.b16 %v3734, %v3734
      %v3807 = vpack.c.b16 %v3735, %v3735
      %v3808 = vpack.c.b16 %v3736, %v3736
      %v3809 = vpack.c.b16 %v3737, %v3737
      %v3810 = vpack.c.b16 %v3738, %v3738
      %v3811 = vpack.c.b16 %v3739, %v3739
      %v3812 = vpack.c.b16 %v3740, %v3740
      %v3813 = vpack.c.b16 %v3741, %v3741
      %vm3886 = vcmask 519168
      %3887 = vst.msk [vmem:[%s175] sm:$0xf] %vm3886, %v3742
      %3888 = vst.msk [vmem:[%s175 + $0x4] sm:$0xf] %vm3886, %v3743
      %3889 = vst.msk [vmem:[%s175 + $0x8] sm:$0xf] %vm3886, %v3744
      %3890 = vst.msk [vmem:[%s175 + $0xc] sm:$0xf] %vm3886, %v3745
      %3891 = vst.msk [vmem:[%s175 + $0x10] sm:$0xf] %vm3886, %v3746
      %3892 = vst.msk [vmem:[%s175 + $0x14] sm:$0xf] %vm3886, %v3747
      %3893 = vst.msk [vmem:[%s175 + $0x18] sm:$0xf] %vm3886, %v3748
      %3894 = vst.msk [vmem:[%s175 + $0x1c] sm:$0xf] %vm3886, %v3749
      %3895 = vst.msk [vmem:[%s175 + $0x20] sm:$0xf] %vm3886, %v3750
      %3896 = vst.msk [vmem:[%s175 + $0x24] sm:$0xf] %vm3886, %v3751
      %3897 = vst.msk [vmem:[%s175 + $0x28] sm:$0xf] %vm3886, %v3752
      %3898 = vst.msk [vmem:[%s175 + $0x2c] sm:$0xf] %vm3886, %v3753
      %3899 = vst.msk [vmem:[%s175 + $0x30] sm:$0xf] %vm3886, %v3754
      %3900 = vst.msk [vmem:[%s175 + $0x34] sm:$0xf] %vm3886, %v3755
      %3901 = vst.msk [vmem:[%s175 + $0x38] sm:$0xf] %vm3886, %v3756
      %3902 = vst.msk [vmem:[%s175 + $0x3c] sm:$0xf] %vm3886, %v3757
      %3903 = vst.msk [vmem:[%s175 + $0x40] sm:$0xf] %vm3886, %v3758
      %3904 = vst.msk [vmem:[%s175 + $0x44] sm:$0xf] %vm3886, %v3759
      %3905 = vst.msk [vmem:[%s175 + $0x48] sm:$0xf] %vm3886, %v3760
      %3906 = vst.msk [vmem:[%s175 + $0x4c] sm:$0xf] %vm3886, %v3761
      %3907 = vst.msk [vmem:[%s175 + $0x50] sm:$0xf] %vm3886, %v3762
      %3908 = vst.msk [vmem:[%s175 + $0x54] sm:$0xf] %vm3886, %v3763
      %3909 = vst.msk [vmem:[%s175 + $0x58] sm:$0xf] %vm3886, %v3764
      %3910 = vst.msk [vmem:[%s175 + $0x5c] sm:$0xf] %vm3886, %v3765
      %3911 = vst.msk [vmem:[%s175 + $0x60] sm:$0xf] %vm3886, %v3766
      %3912 = vst.msk [vmem:[%s175 + $0x64] sm:$0xf] %vm3886, %v3767
      %3913 = vst.msk [vmem:[%s175 + $0x68] sm:$0xf] %vm3886, %v3768
      %3914 = vst.msk [vmem:[%s175 + $0x6c] sm:$0xf] %vm3886, %v3769
      %3915 = vst.msk [vmem:[%s175 + $0x70] sm:$0xf] %vm3886, %v3770
      %3916 = vst.msk [vmem:[%s175 + $0x74] sm:$0xf] %vm3886, %v3771
      %3917 = vst.msk [vmem:[%s175 + $0x78] sm:$0xf] %vm3886, %v3772
      %3918 = vst.msk [vmem:[%s175 + $0x7c] sm:$0xf] %vm3886, %v3773
      %3919 = vst.msk [vmem:[%s175 + $0x80] sm:$0xf] %vm3886, %v3774
      %3920 = vst.msk [vmem:[%s175 + $0x84] sm:$0xf] %vm3886, %v3775
      %3921 = vst.msk [vmem:[%s175 + $0x88] sm:$0xf] %vm3886, %v3776
      %3922 = vst.msk [vmem:[%s175 + $0x8c] sm:$0xf] %vm3886, %v3777
      %3923 = vst.msk [vmem:[%s175 + $0x90] sm:$0xf] %vm3886, %v3778
      %3924 = vst.msk [vmem:[%s175 + $0x94] sm:$0xf] %vm3886, %v3779
      %3925 = vst.msk [vmem:[%s175 + $0x98] sm:$0xf] %vm3886, %v3780
      %3926 = vst.msk [vmem:[%s175 + $0x9c] sm:$0xf] %vm3886, %v3781
      %3927 = vst.msk [vmem:[%s175 + $0xa0] sm:$0xf] %vm3886, %v3782
      %3928 = vst.msk [vmem:[%s175 + $0xa4] sm:$0xf] %vm3886, %v3783
      %3929 = vst.msk [vmem:[%s175 + $0xa8] sm:$0xf] %vm3886, %v3784
      %3930 = vst.msk [vmem:[%s175 + $0xac] sm:$0xf] %vm3886, %v3785
      %3931 = vst.msk [vmem:[%s175 + $0xb0] sm:$0xf] %vm3886, %v3786
      %3932 = vst.msk [vmem:[%s175 + $0xb4] sm:$0xf] %vm3886, %v3787
      %3933 = vst.msk [vmem:[%s175 + $0xb8] sm:$0xf] %vm3886, %v3788
      %3934 = vst.msk [vmem:[%s175 + $0xbc] sm:$0xf] %vm3886, %v3789
      %3935 = vst.msk [vmem:[%s175 + $0xc0] sm:$0xf] %vm3886, %v3790
      %3936 = vst.msk [vmem:[%s175 + $0xc4] sm:$0xf] %vm3886, %v3791
      %3937 = vst.msk [vmem:[%s175 + $0xc8] sm:$0xf] %vm3886, %v3792
      %3938 = vst.msk [vmem:[%s175 + $0xcc] sm:$0xf] %vm3886, %v3793
      %3939 = vst.msk [vmem:[%s175 + $0xd0] sm:$0xf] %vm3886, %v3794
      %3940 = vst.msk [vmem:[%s175 + $0xd4] sm:$0xf] %vm3886, %v3795
      %3941 = vst.msk [vmem:[%s175 + $0xd8] sm:$0xf] %vm3886, %v3796
      %3942 = vst.msk [vmem:[%s175 + $0xdc] sm:$0xf] %vm3886, %v3797
      %3943 = vst.msk [vmem:[%s175 + $0xe0] sm:$0xf] %vm3886, %v3798
      %3944 = vst.msk [vmem:[%s175 + $0xe4] sm:$0xf] %vm3886, %v3799
      %3945 = vst.msk [vmem:[%s175 + $0xe8] sm:$0xf] %vm3886, %v3800
      %3946 = vst.msk [vmem:[%s175 + $0xec] sm:$0xf] %vm3886, %v3801
      %3947 = vst.msk [vmem:[%s175 + $0xf0] sm:$0xf] %vm3886, %v3802
      %3948 = vst.msk [vmem:[%s175 + $0xf4] sm:$0xf] %vm3886, %v3803
      %3949 = vst.msk [vmem:[%s175 + $0xf8] sm:$0xf] %vm3886, %v3804
      %3950 = vst.msk [vmem:[%s175 + $0xfc] sm:$0xf] %vm3886, %v3805
      %3951 = vst.msk [vmem:[%s175 + $0x100] sm:$0xf] %vm3886, %v3806
      %3952 = vst.msk [vmem:[%s175 + $0x104] sm:$0xf] %vm3886, %v3807
      %3953 = vst.msk [vmem:[%s175 + $0x108] sm:$0xf] %vm3886, %v3808
      %3954 = vst.msk [vmem:[%s175 + $0x10c] sm:$0xf] %vm3886, %v3809
      %3955 = vst.msk [vmem:[%s175 + $0x110] sm:$0xf] %vm3886, %v3810
      %3956 = vst.msk [vmem:[%s175 + $0x114] sm:$0xf] %vm3886, %v3811
      %3957 = vst.msk [vmem:[%s175 + $0x118] sm:$0xf] %vm3886, %v3812
      %3958 = vst.msk [vmem:[%s175 + $0x11c] sm:$0xf] %vm3886, %v3813
      %s3959 = smul.u32 72, %s14
      %p3960 = scmp.lt.s32.totalorder %s3959, 143
      %s3961 = scalar_select %p3960, %s3959, 143
      %s3962 = smul.addr %s3961, 4
      %s3963 = scalar_lea.vmem %s3, %s3962
      // Predicated region
      $region33: #{feature_extractor_forward.4} parent=31 // pred_check
        %p3964 = pneg %p100
      $region34: #{feature_extractor_forward.4} parent=31 // pred_check_branch
        %3966 = sbr.rel (%p3964) target = $region36
      $region35: #{feature_extractor_forward.4} parent=31 // pred_region
        %s3967 = smul.u32 72, %s14
      $region36: #{feature_extractor_forward.4} parent=31 // pred_fallthru
        _
    $region32: #{feature_extractor_forward.4} parent=5 // pred_fallthru
      _
    %p3968 = scmp.le.s32.totalorder 2, %s9
    // Predicated region
    $region37: #{feature_extractor_forward.4} parent=5 // pred_check
      %p3969 = pneg %p3968
    $region38: #{feature_extractor_forward.4} parent=5 // pred_check_branch
      %3971 = sbr.rel (%p3969) target = $region40
    $region39: #{feature_extractor_forward.4} parent=5 // pred_region
      %s3972 = ssub.s32 %s9, 2
      // Predicated region
      $region41: #{feature_extractor_forward.4} parent=39 // pred_check
        %p3973 = pneg %p106
      $region42: #{feature_extractor_forward.4} parent=39 // pred_check_branch
        %3975 = sbr.rel (%p3973) target = $region44
      $region43: #{feature_extractor_forward.4} parent=39 // pred_region
        %s3976 = smul.u32 72, %s15
        %p3977 = scmp.lt.s32.totalorder %s3976, 143
        %s3978 = scalar_select %p3977, %s3976, 143
        %s3979 = smul.addr %s3978, 4
        %s3980 = scalar_lea.vmem %s3, %s3979
      $region44: #{feature_extractor_forward.4} parent=39 // pred_fallthru
        _
    $region40: #{feature_extractor_forward.4} parent=5 // pred_fallthru
      _
  $region6: #{feature_extractor_forward.4} parent=0 // loop_footer
    %s13 = sadd.s32 1, %s9
  $region7: #{feature_extractor_forward.4} parent=0 // loop_footer_branch
    %8 = sbr.rel target = $region3
  $region8: #{feature_extractor_forward.4} parent=0 // loop_exit
    _

// kernel: feature_extractor_forward.5
$region0: #{feature_extractor_forward.5}
  #allocation0 [shape = 'u32[]', space=smem, size = 0x4, offset = 0x4, fixed_abs, tag = 'smem constant byte address 0x4 - core index']
  #allocation1 [shape = 'u32[144,128]{1,0:T(1,128)}', space=vmem, size = 0x12000, scoped, tag = 'internal scratch']
  %s0 = inlined_call_operand.vmem [shape: bf16[288,576], index: 0, kind: input, shape index: {}]
  %s1 = inlined_call_operand.vmem [shape: bf16[576,128], index: 1, kind: input, shape index: {}]
  %s2 = inlined_call_operand.vmem [shape: f32[1,128], index: 2, kind: input, shape index: {}]
  %s3 = inlined_call_operand.vmem [shape: bf16[648,288], index: 3, kind: input, shape index: {}]
  %s4 = inlined_call_operand.vmem [shape: bf16[9,128,256], index: 4, kind: input, shape index: {}]
  %s5 = inlined_call_operand.vmem [shape: f32[1,256], index: 5, kind: input, shape index: {}]
  %s6 = inlined_call_operand.vmem [shape: f32[2,72], index: 6, kind: input, shape index: {}]
  %s7 = inlined_call_operand.vmem [shape: bf16[256,128], index: 7, kind: input, shape index: {}]
  %s8 = inlined_call_operand.vmem [shape: f32[1,128], index: 8, kind: input, shape index: {}]
  %s9 = inlined_call_operand.hbm [shape: f32[2,128], index: 9, kind: output, shape index: {}]
  %s10 = sld [smem:[#allocation0]]
  $region46: #{feature_extractor_forward.5} parent=0
    _
  %s12 = ssub.s32 1, %s10
  %s13 = scalar_select 0, %s12, %s10
  $region1: #{feature_extractor_forward.5} parent=0
    #allocation2 [shape = 'u8[1024]{0}', space=vmem, size = 0x400, scoped, tag = 'output window, operand 0, single buffered']
    #allocation3 [shape = 's32[1]{0}', space=sflag, size = 0x4, scoped, tag = 'scoped memory for feature_extractor_forward.5']
    %14 = vsyncpa [#allocation3], 0
    // Predicated region
    $region2: #{feature_extractor_forward.5} parent=1 // pred_check
      _
    $region3: #{feature_extractor_forward.5} parent=1 // pred_check_branch
      %16 = sbr.rel (0) target = $region5
    $region4: #{feature_extractor_forward.5} parent=1 // pred_region
      _
    $region5: #{feature_extractor_forward.5} parent=1 // pred_fallthru
      _
    // Predicated region
    $region6: #{feature_extractor_forward.5} parent=1 // pred_check
      _
    $region7: #{feature_extractor_forward.5} parent=1 // pred_check_branch
      %18 = sbr.rel (0) target = $region9
    $region8: #{feature_extractor_forward.5} parent=1 // pred_region
      _
    $region9: #{feature_extractor_forward.5} parent=1 // pred_fallthru
      _
    // Predicated region
    $region10: #{feature_extractor_forward.5} parent=1 // pred_check
      _
    $region11: #{feature_extractor_forward.5} parent=1 // pred_check_branch
      %20 = sbr.rel (0) target = $region13
    $region12: #{feature_extractor_forward.5} parent=1 // pred_region
      _
    $region13: #{feature_extractor_forward.5} parent=1 // pred_fallthru
      _
    // Predicated region
    $region14: #{feature_extractor_forward.5} parent=1 // pred_check
      _
    $region15: #{feature_extractor_forward.5} parent=1 // pred_check_branch
      %22 = sbr.rel (0) target = $region17
    $region16: #{feature_extractor_forward.5} parent=1 // pred_region
      _
    $region17: #{feature_extractor_forward.5} parent=1 // pred_fallthru
      _
    // Predicated region
    $region18: #{feature_extractor_forward.5} parent=1 // pred_check
      _
    $region19: #{feature_extractor_forward.5} parent=1 // pred_check_branch
      %24 = sbr.rel (0) target = $region21
    $region20: #{feature_extractor_forward.5} parent=1 // pred_region
      _
    $region21: #{feature_extractor_forward.5} parent=1 // pred_fallthru
      _
    // Predicated region
    $region22: #{feature_extractor_forward.5} parent=1 // pred_check
      _
    $region23: #{feature_extractor_forward.5} parent=1 // pred_check_branch
      %26 = sbr.rel (0) target = $region25
    $region24: #{feature_extractor_forward.5} parent=1 // pred_region
      _
    $region25: #{feature_extractor_forward.5} parent=1 // pred_fallthru
      _
    // Predicated region
    $region26: #{feature_extractor_forward.5} parent=1 // pred_check
      _
    $region27: #{feature_extractor_forward.5} parent=1 // pred_check_branch
      %28 = sbr.rel (0) target = $region29
    $region28: #{feature_extractor_forward.5} parent=1 // pred_region
      _
    $region29: #{feature_extractor_forward.5} parent=1 // pred_fallthru
      _
    // Predicated region
    $region30: #{feature_extractor_forward.5} parent=1 // pred_check
      _
    $region31: #{feature_extractor_forward.5} parent=1 // pred_check_branch
      %30 = sbr.rel (0) target = $region33
    $region32: #{feature_extractor_forward.5} parent=1 // pred_region
      _
    $region33: #{feature_extractor_forward.5} parent=1 // pred_fallthru
      _
    // Predicated region
    $region34: #{feature_extractor_forward.5} parent=1 // pred_check
      _
    $region35: #{feature_extractor_forward.5} parent=1 // pred_check_branch
      %32 = sbr.rel (0) target = $region37
    $region36: #{feature_extractor_forward.5} parent=1 // pred_region
      _
    $region37: #{feature_extractor_forward.5} parent=1 // pred_fallthru
      _
    %v34 = vld [vmem:[%s0] sm:$0xff]
    %v35 = vld [vmem:[%s0 + $0x8] sm:$0xff]
    %v36 = vld [vmem:[%s0 + $0x10] sm:$0xf]
    %v37 = vld [vmem:[%s0 + $0x14] sm:$0xff]
    %v38 = vld [vmem:[%s0 + $0x1c] sm:$0xff]
    %v39 = vld [vmem:[%s0 + $0x24] sm:$0xf]
    %v40 = vld [vmem:[%s0 + $0x28] sm:$0xff]
    %v41 = vld [vmem:[%s0 + $0x30] sm:$0xff]
    %v42 = vld [vmem:[%s0 + $0x38] sm:$0xf]
    %v43 = vld [vmem:[%s0 + $0x3c] sm:$0xff]
    %v44 = vld [vmem:[%s0 + $0x44] sm:$0xff]
    %v45 = vld [vmem:[%s0 + $0x4c] sm:$0xf]
    %v46 = vld [vmem:[%s0 + $0x50] sm:$0xff]
    %v47 = vld [vmem:[%s0 + $0x58] sm:$0xff]
    %v48 = vld [vmem:[%s0 + $0x60] sm:$0xf]
    %v49 = vld [vmem:[%s0 + $0x64] sm:$0xff]
    %v50 = vld [vmem:[%s0 + $0x6c] sm:$0xff]
    %v51 = vld [vmem:[%s0 + $0x74] sm:$0xf]
    %v52 = vld [vmem:[%s0 + $0x78] sm:$0xff]
    %v53 = vld [vmem:[%s0 + $0x80] sm:$0xff]
    %v54 = vld [vmem:[%s0 + $0x88] sm:$0xf]
    %v55 = vld [vmem:[%s0 + $0x8c] sm:$0xff]
    %v56 = vld [vmem:[%s0 + $0x94] sm:$0xff]
    %v57 = vld [vmem:[%s0 + $0x9c] sm:$0xf]
    %v58 = vld [vmem:[%s0 + $0xa0] sm:$0xff]
    %v59 = vld [vmem:[%s0 + $0xa8] sm:$0xff]
    %v60 = vld [vmem:[%s0 + $0xb0] sm:$0xf]
    %v61 = vld [vmem:[%s0 + $0xb4] sm:$0xff]
    %v62 = vld [vmem:[%s0 + $0xbc] sm:$0xff]
    %v63 = vld [vmem:[%s0 + $0xc4] sm:$0xf]
    %v64 = vld [vmem:[%s0 + $0xc8] sm:$0xff]
    %v65 = vld [vmem:[%s0 + $0xd0] sm:$0xff]
    %v66 = vld [vmem:[%s0 + $0xd8] sm:$0xf]
    %v67 = vld [vmem:[%s0 + $0xdc] sm:$0xff]
    %v68 = vld [vmem:[%s0 + $0xe4] sm:$0xff]
    %v69 = vld [vmem:[%s0 + $0xec] sm:$0xf]
    %v70 = vld [vmem:[%s0 + $0xf0] sm:$0xff]
    %v71 = vld [vmem:[%s0 + $0xf8] sm:$0xff]
    %v72 = vld [vmem:[%s0 + $0x100] sm:$0xf]
    %v73 = vld [vmem:[%s0 + $0x104] sm:$0xff]
    %v74 = vld [vmem:[%s0 + $0x10c] sm:$0xff]
    %v75 = vld [vmem:[%s0 + $0x114] sm:$0xf]
    %v76 = vld [vmem:[%s0 + $0x118] sm:$0xff]
    %v77 = vld [vmem:[%s0 + $0x120] sm:$0xff]
    %v78 = vld [vmem:[%s0 + $0x128] sm:$0xf]
    %v79 = vld [vmem:[%s0 + $0x12c] sm:$0xff]
    %v80 = vld [vmem:[%s0 + $0x134] sm:$0xff]
    %v81 = vld [vmem:[%s0 + $0x13c] sm:$0xf]
    %v82 = vld [vmem:[%s0 + $0x140] sm:$0xff]
    %v83 = vld [vmem:[%s0 + $0x148] sm:$0xff]
    %v84 = vld [vmem:[%s0 + $0x150] sm:$0xf]
    %v85 = vld [vmem:[%s0 + $0x154] sm:$0xff]
    %v86 = vld [vmem:[%s0 + $0x15c] sm:$0xff]
    %v87 = vld [vmem:[%s0 + $0x164] sm:$0xf]
    %v88 = vld [vmem:[%s0 + $0x168] sm:$0xff]
    %v89 = vld [vmem:[%s0 + $0x170] sm:$0xff]
    %v90 = vld [vmem:[%s0 + $0x178] sm:$0xf]
    %v91 = vld [vmem:[%s0 + $0x17c] sm:$0xff]
    %v92 = vld [vmem:[%s0 + $0x184] sm:$0xff]
    %v93 = vld [vmem:[%s0 + $0x18c] sm:$0xf]
    %v94 = vld [vmem:[%s0 + $0x190] sm:$0xff]
    %v95 = vld [vmem:[%s0 + $0x198] sm:$0xff]
    %v96 = vld [vmem:[%s0 + $0x1a0] sm:$0xf]
    %v97 = vld [vmem:[%s0 + $0x1a4] sm:$0xff]
    %v98 = vld [vmem:[%s0 + $0x1ac] sm:$0xff]
    %v99 = vld [vmem:[%s0 + $0x1b4] sm:$0xf]
    %v100 = vld [vmem:[%s0 + $0x1b8] sm:$0xff]
    %v101 = vld [vmem:[%s0 + $0x1c0] sm:$0xff]
    %v102 = vld [vmem:[%s0 + $0x1c8] sm:$0xf]
    %v103 = vld [vmem:[%s0 + $0x1cc] sm:$0xff]
    %v104 = vld [vmem:[%s0 + $0x1d4] sm:$0xff]
    %v105 = vld [vmem:[%s0 + $0x1dc] sm:$0xf]
    %v106 = vld [vmem:[%s0 + $0x1e0] sm:$0xff]
    %v107 = vld [vmem:[%s0 + $0x1e8] sm:$0xff]
    %v108 = vld [vmem:[%s0 + $0x1f0] sm:$0xf]
    %v109 = vld [vmem:[%s0 + $0x1f4] sm:$0xff]
    %v110 = vld [vmem:[%s0 + $0x1fc] sm:$0xff]
    %v111 = vld [vmem:[%s0 + $0x204] sm:$0xf]
    %v112 = vld [vmem:[%s0 + $0x208] sm:$0xff]
    %v113 = vld [vmem:[%s0 + $0x210] sm:$0xff]
    %v114 = vld [vmem:[%s0 + $0x218] sm:$0xf]
    %v115 = vld [vmem:[%s0 + $0x21c] sm:$0xff]
    %v116 = vld [vmem:[%s0 + $0x224] sm:$0xff]
    %v117 = vld [vmem:[%s0 + $0x22c] sm:$0xf]
    %v118 = vld [vmem:[%s0 + $0x230] sm:$0xff]
    %v119 = vld [vmem:[%s0 + $0x238] sm:$0xff]
    %v120 = vld [vmem:[%s0 + $0x240] sm:$0xf]
    %v121 = vld [vmem:[%s0 + $0x244] sm:$0xff]
    %v122 = vld [vmem:[%s0 + $0x24c] sm:$0xff]
    %v123 = vld [vmem:[%s0 + $0x254] sm:$0xf]
    %v124 = vld [vmem:[%s0 + $0x258] sm:$0xff]
    %v125 = vld [vmem:[%s0 + $0x260] sm:$0xff]
    %v126 = vld [vmem:[%s0 + $0x268] sm:$0xf]
    %v127 = vld [vmem:[%s0 + $0x26c] sm:$0xff]
    %v128 = vld [vmem:[%s0 + $0x274] sm:$0xff]
    %v129 = vld [vmem:[%s0 + $0x27c] sm:$0xf]
    %v130 = vld [vmem:[%s0 + $0x280] sm:$0xff]
    %v131 = vld [vmem:[%s0 + $0x288] sm:$0xff]
    %v132 = vld [vmem:[%s0 + $0x290] sm:$0xf]
    %v133 = vld [vmem:[%s0 + $0x294] sm:$0xff]
    %v134 = vld [vmem:[%s0 + $0x29c] sm:$0xff]
    %v135 = vld [vmem:[%s0 + $0x2a4] sm:$0xf]
    %v136 = vld [vmem:[%s0 + $0x2a8] sm:$0xff]
    %v137 = vld [vmem:[%s0 + $0x2b0] sm:$0xff]
    %v138 = vld [vmem:[%s0 + $0x2b8] sm:$0xf]
    %v139 = vld [vmem:[%s0 + $0x2bc] sm:$0xff]
    %v140 = vld [vmem:[%s0 + $0x2c4] sm:$0xff]
    %v141 = vld [vmem:[%s0 + $0x2cc] sm:$0xf]
    %v142 = vld [vmem:[%s1] sm:$0xf]
    %v143 = vld [vmem:[%s1 + $0x4] sm:$0xf]
    %v144 = vld [vmem:[%s1 + $0x8] sm:$0xf]
    %v145 = vld [vmem:[%s1 + $0xc] sm:$0xf]
    %v146 = vld [vmem:[%s1 + $0x10] sm:$0xf]
    %v147 = vld [vmem:[%s1 + $0x14] sm:$0xf]
    %v148 = vld [vmem:[%s1 + $0x18] sm:$0xf]
    %v149 = vld [vmem:[%s1 + $0x1c] sm:$0xf]
    %v150 = vld [vmem:[%s1 + $0x20] sm:$0xf]
    %v151 = vld [vmem:[%s1 + $0x24] sm:$0xf]
    %v152 = vld [vmem:[%s1 + $0x28] sm:$0xf]
    %v153 = vld [vmem:[%s1 + $0x2c] sm:$0xf]
    %v154 = vld [vmem:[%s1 + $0x30] sm:$0xf]
    %v155 = vld [vmem:[%s1 + $0x34] sm:$0xf]
    %v156 = vld [vmem:[%s1 + $0x38] sm:$0xf]
    %v157 = vld [vmem:[%s1 + $0x3c] sm:$0xf]
    %v158 = vld [vmem:[%s1 + $0x40] sm:$0xf]
    %v159 = vld [vmem:[%s1 + $0x44] sm:$0xf]
    %v160 = vld [vmem:[%s1 + $0x48] sm:$0xf]
    %v161 = vld [vmem:[%s1 + $0x4c] sm:$0xf]
    %v162 = vld [vmem:[%s1 + $0x50] sm:$0xf]
    %v163 = vld [vmem:[%s1 + $0x54] sm:$0xf]
    %v164 = vld [vmem:[%s1 + $0x58] sm:$0xf]
    %v165 = vld [vmem:[%s1 + $0x5c] sm:$0xf]
    %v166 = vld [vmem:[%s1 + $0x60] sm:$0xf]
    %v167 = vld [vmem:[%s1 + $0x64] sm:$0xf]
    %v168 = vld [vmem:[%s1 + $0x68] sm:$0xf]
    %v169 = vld [vmem:[%s1 + $0x6c] sm:$0xf]
    %v170 = vld [vmem:[%s1 + $0x70] sm:$0xf]
    %v171 = vld [vmem:[%s1 + $0x74] sm:$0xf]
    %v172 = vld [vmem:[%s1 + $0x78] sm:$0xf]
    %v173 = vld [vmem:[%s1 + $0x7c] sm:$0xf]
    %v174 = vld [vmem:[%s1 + $0x80] sm:$0xf]
    %v175 = vld [vmem:[%s1 + $0x84] sm:$0xf]
    %v176 = vld [vmem:[%s1 + $0x88] sm:$0xf]
    %v177 = vld [vmem:[%s1 + $0x8c] sm:$0xf]
    %v178 = vld [vmem:[%s1 + $0x90] sm:$0xf]
    %v179 = vld [vmem:[%s1 + $0x94] sm:$0xf]
    %v180 = vld [vmem:[%s1 + $0x98] sm:$0xf]
    %v181 = vld [vmem:[%s1 + $0x9c] sm:$0xf]
    %v182 = vld [vmem:[%s1 + $0xa0] sm:$0xf]
    %v183 = vld [vmem:[%s1 + $0xa4] sm:$0xf]
    %v184 = vld [vmem:[%s1 + $0xa8] sm:$0xf]
    %v185 = vld [vmem:[%s1 + $0xac] sm:$0xf]
    %v186 = vld [vmem:[%s1 + $0xb0] sm:$0xf]
    %v187 = vld [vmem:[%s1 + $0xb4] sm:$0xf]
    %v188 = vld [vmem:[%s1 + $0xb8] sm:$0xf]
    %v189 = vld [vmem:[%s1 + $0xbc] sm:$0xf]
    %v190 = vld [vmem:[%s1 + $0xc0] sm:$0xf]
    %v191 = vld [vmem:[%s1 + $0xc4] sm:$0xf]
    %v192 = vld [vmem:[%s1 + $0xc8] sm:$0xf]
    %v193 = vld [vmem:[%s1 + $0xcc] sm:$0xf]
    %v194 = vld [vmem:[%s1 + $0xd0] sm:$0xf]
    %v195 = vld [vmem:[%s1 + $0xd4] sm:$0xf]
    %v196 = vld [vmem:[%s1 + $0xd8] sm:$0xf]
    %v197 = vld [vmem:[%s1 + $0xdc] sm:$0xf]
    %v198 = vld [vmem:[%s1 + $0xe0] sm:$0xf]
    %v199 = vld [vmem:[%s1 + $0xe4] sm:$0xf]
    %v200 = vld [vmem:[%s1 + $0xe8] sm:$0xf]
    %v201 = vld [vmem:[%s1 + $0xec] sm:$0xf]
    %v202 = vld [vmem:[%s1 + $0xf0] sm:$0xf]
    %v203 = vld [vmem:[%s1 + $0xf4] sm:$0xf]
    %v204 = vld [vmem:[%s1 + $0xf8] sm:$0xf]
    %v205 = vld [vmem:[%s1 + $0xfc] sm:$0xf]
    %v206 = vld [vmem:[%s1 + $0x100] sm:$0xf]
    %v207 = vld [vmem:[%s1 + $0x104] sm:$0xf]
    %v208 = vld [vmem:[%s1 + $0x108] sm:$0xf]
    %v209 = vld [vmem:[%s1 + $0x10c] sm:$0xf]
    %v210 = vld [vmem:[%s1 + $0x110] sm:$0xf]
    %v211 = vld [vmem:[%s1 + $0x114] sm:$0xf]
    %v212 = vld [vmem:[%s1 + $0x118] sm:$0xf]
    %v213 = vld [vmem:[%s1 + $0x11c] sm:$0xf]
    %v214 = vld [vmem:[%s2] sm:$0x1]
    %v216 = vlaneseq
    %v217 = vshrl.u32 %v216, 7
    %v218 = vsub.s32 0, %v217
    %v219 = vrot.slane %v214, %v218
    %v329 = vunpack.c.l.b16 %v34
    %v330 = vunpack.c.h.b16 %v34
    %v331 = vunpack.c.l.b16 %v35
    %v332 = vunpack.c.h.b16 %v35
    %v333 = vunpack.c.l.b16 %v36
    %v334 = vunpack.c.l.b16 %v37
    %v335 = vunpack.c.h.b16 %v37
    %v336 = vunpack.c.l.b16 %v38
    %v337 = vunpack.c.h.b16 %v38
    %v338 = vunpack.c.l.b16 %v39
    %v339 = vunpack.c.l.b16 %v40
    %v340 = vunpack.c.h.b16 %v40
    %v341 = vunpack.c.l.b16 %v41
    %v342 = vunpack.c.h.b16 %v41
    %v343 = vunpack.c.l.b16 %v42
    %v344 = vunpack.c.l.b16 %v43
    %v345 = vunpack.c.h.b16 %v43
    %v346 = vunpack.c.l.b16 %v44
    %v347 = vunpack.c.h.b16 %v44
    %v348 = vunpack.c.l.b16 %v45
    %v349 = vunpack.c.l.b16 %v46
    %v350 = vunpack.c.h.b16 %v46
    %v351 = vunpack.c.l.b16 %v47
    %v352 = vunpack.c.h.b16 %v47
    %v353 = vunpack.c.l.b16 %v48
    %v354 = vunpack.c.l.b16 %v49
    %v355 = vunpack.c.h.b16 %v49
    %v356 = vunpack.c.l.b16 %v50
    %v357 = vunpack.c.h.b16 %v50
    %v358 = vunpack.c.l.b16 %v51
    %v359 = vunpack.c.l.b16 %v52
    %v360 = vunpack.c.h.b16 %v52
    %v361 = vunpack.c.l.b16 %v53
    %v362 = vunpack.c.h.b16 %v53
    %v363 = vunpack.c.l.b16 %v54
    %v364 = vunpack.c.l.b16 %v55
    %v365 = vunpack.c.h.b16 %v55
    %v366 = vunpack.c.l.b16 %v56
    %v367 = vunpack.c.h.b16 %v56
    %v368 = vunpack.c.l.b16 %v57
    %v369 = vunpack.c.l.b16 %v58
    %v370 = vunpack.c.h.b16 %v58
    %v371 = vunpack.c.l.b16 %v59
    %v372 = vunpack.c.h.b16 %v59
    %v373 = vunpack.c.l.b16 %v60
    %v374 = vunpack.c.l.b16 %v61
    %v375 = vunpack.c.h.b16 %v61
    %v376 = vunpack.c.l.b16 %v62
    %v377 = vunpack.c.h.b16 %v62
    %v378 = vunpack.c.l.b16 %v63
    %v379 = vunpack.c.l.b16 %v64
    %v380 = vunpack.c.h.b16 %v64
    %v381 = vunpack.c.l.b16 %v65
    %v382 = vunpack.c.h.b16 %v65
    %v383 = vunpack.c.l.b16 %v66
    %v384 = vunpack.c.l.b16 %v67
    %v385 = vunpack.c.h.b16 %v67
    %v386 = vunpack.c.l.b16 %v68
    %v387 = vunpack.c.h.b16 %v68
    %v388 = vunpack.c.l.b16 %v69
    %v389 = vunpack.c.l.b16 %v70
    %v390 = vunpack.c.h.b16 %v70
    %v391 = vunpack.c.l.b16 %v71
    %v392 = vunpack.c.h.b16 %v71
    %v393 = vunpack.c.l.b16 %v72
    %v394 = vunpack.c.l.b16 %v73
    %v395 = vunpack.c.h.b16 %v73
    %v396 = vunpack.c.l.b16 %v74
    %v397 = vunpack.c.h.b16 %v74
    %v398 = vunpack.c.l.b16 %v75
    %v399 = vunpack.c.l.b16 %v76
    %v400 = vunpack.c.h.b16 %v76
    %v401 = vunpack.c.l.b16 %v77
    %v402 = vunpack.c.h.b16 %v77
    %v403 = vunpack.c.l.b16 %v78
    %v404 = vunpack.c.l.b16 %v79
    %v405 = vunpack.c.h.b16 %v79
    %v406 = vunpack.c.l.b16 %v80
    %v407 = vunpack.c.h.b16 %v80
    %v408 = vunpack.c.l.b16 %v81
    %v409 = vunpack.c.l.b16 %v82
    %v410 = vunpack.c.h.b16 %v82
    %v411 = vunpack.c.l.b16 %v83
    %v412 = vunpack.c.h.b16 %v83
    %v413 = vunpack.c.l.b16 %v84
    %v414 = vunpack.c.l.b16 %v85
    %v415 = vunpack.c.h.b16 %v85
    %v416 = vunpack.c.l.b16 %v86
    %v417 = vunpack.c.h.b16 %v86
    %v418 = vunpack.c.l.b16 %v87
    %v419 = vunpack.c.l.b16 %v88
    %v420 = vunpack.c.h.b16 %v88
    %v421 = vunpack.c.l.b16 %v89
    %v422 = vunpack.c.h.b16 %v89
    %v423 = vunpack.c.l.b16 %v90
    %v424 = vunpack.c.l.b16 %v91
    %v425 = vunpack.c.h.b16 %v91
    %v426 = vunpack.c.l.b16 %v92
    %v427 = vunpack.c.h.b16 %v92
    %v428 = vunpack.c.l.b16 %v93
    %v429 = vunpack.c.l.b16 %v94
    %v430 = vunpack.c.h.b16 %v94
    %v431 = vunpack.c.l.b16 %v95
    %v432 = vunpack.c.h.b16 %v95
    %v433 = vunpack.c.l.b16 %v96
    %v434 = vunpack.c.l.b16 %v97
    %v435 = vunpack.c.h.b16 %v97
    %v436 = vunpack.c.l.b16 %v98
    %v437 = vunpack.c.h.b16 %v98
    %v438 = vunpack.c.l.b16 %v99
    %v439 = vunpack.c.l.b16 %v100
    %v440 = vunpack.c.h.b16 %v100
    %v441 = vunpack.c.l.b16 %v101
    %v442 = vunpack.c.h.b16 %v101
    %v443 = vunpack.c.l.b16 %v102
    %v444 = vunpack.c.l.b16 %v103
    %v445 = vunpack.c.h.b16 %v103
    %v446 = vunpack.c.l.b16 %v104
    %v447 = vunpack.c.h.b16 %v104
    %v448 = vunpack.c.l.b16 %v105
    %v449 = vunpack.c.l.b16 %v106
    %v450 = vunpack.c.h.b16 %v106
    %v451 = vunpack.c.l.b16 %v107
    %v452 = vunpack.c.h.b16 %v107
    %v453 = vunpack.c.l.b16 %v108
    %v454 = vunpack.c.l.b16 %v109
    %v455 = vunpack.c.h.b16 %v109
    %v456 = vunpack.c.l.b16 %v110
    %v457 = vunpack.c.h.b16 %v110
    %v458 = vunpack.c.l.b16 %v111
    %v459 = vunpack.c.l.b16 %v112
    %v460 = vunpack.c.h.b16 %v112
    %v461 = vunpack.c.l.b16 %v113
    %v462 = vunpack.c.h.b16 %v113
    %v463 = vunpack.c.l.b16 %v114
    %v464 = vunpack.c.l.b16 %v115
    %v465 = vunpack.c.h.b16 %v115
    %v466 = vunpack.c.l.b16 %v116
    %v467 = vunpack.c.h.b16 %v116
    %v468 = vunpack.c.l.b16 %v117
    %v469 = vunpack.c.l.b16 %v118
    %v470 = vunpack.c.h.b16 %v118
    %v471 = vunpack.c.l.b16 %v119
    %v472 = vunpack.c.h.b16 %v119
    %v473 = vunpack.c.l.b16 %v120
    %v474 = vunpack.c.l.b16 %v121
    %v475 = vunpack.c.h.b16 %v121
    %v476 = vunpack.c.l.b16 %v122
    %v477 = vunpack.c.h.b16 %v122
    %v478 = vunpack.c.l.b16 %v123
    %v479 = vunpack.c.l.b16 %v124
    %v480 = vunpack.c.h.b16 %v124
    %v481 = vunpack.c.l.b16 %v125
    %v482 = vunpack.c.h.b16 %v125
    %v483 = vunpack.c.l.b16 %v126
    %v484 = vunpack.c.l.b16 %v127
    %v485 = vunpack.c.h.b16 %v127
    %v486 = vunpack.c.l.b16 %v128
    %v487 = vunpack.c.h.b16 %v128
    %v488 = vunpack.c.l.b16 %v129
    %v489 = vunpack.c.l.b16 %v130
    %v490 = vunpack.c.h.b16 %v130
    %v491 = vunpack.c.l.b16 %v131
    %v492 = vunpack.c.h.b16 %v131
    %v493 = vunpack.c.l.b16 %v132
    %v494 = vunpack.c.l.b16 %v133
    %v495 = vunpack.c.h.b16 %v133
    %v496 = vunpack.c.l.b16 %v134
    %v497 = vunpack.c.h.b16 %v134
    %v498 = vunpack.c.l.b16 %v135
    %v499 = vunpack.c.l.b16 %v136
    %v500 = vunpack.c.h.b16 %v136
    %v501 = vunpack.c.l.b16 %v137
    %v502 = vunpack.c.h.b16 %v137
    %v503 = vunpack.c.l.b16 %v138
    %v504 = vunpack.c.l.b16 %v139
    %v505 = vunpack.c.h.b16 %v139
    %v506 = vunpack.c.l.b16 %v140
    %v507 = vunpack.c.h.b16 %v140
    %v508 = vunpack.c.l.b16 %v141
    %v509 = vpack.c.b16 %v334, %v329
    %v510 = vpack.c.b16 %v335, %v330
    %v511 = vpack.c.b16 %v336, %v331
    %v512 = vpack.c.b16 %v337, %v332
    %v513 = vpack.c.b16 %v338, %v333
    %v514 = vpack.c.b16 %v344, %v339
    %v515 = vpack.c.b16 %v345, %v340
    %v516 = vpack.c.b16 %v346, %v341
    %v517 = vpack.c.b16 %v347, %v342
    %v518 = vpack.c.b16 %v348, %v343
    %v519 = vpack.c.b16 %v354, %v349
    %v520 = vpack.c.b16 %v355, %v350
    %v521 = vpack.c.b16 %v356, %v351
    %v522 = vpack.c.b16 %v357, %v352
    %v523 = vpack.c.b16 %v358, %v353
    %v524 = vpack.c.b16 %v364, %v359
    %v525 = vpack.c.b16 %v365, %v360
    %v526 = vpack.c.b16 %v366, %v361
    %v527 = vpack.c.b16 %v367, %v362
    %v528 = vpack.c.b16 %v368, %v363
    %v529 = vpack.c.b16 %v374, %v369
    %v530 = vpack.c.b16 %v375, %v370
    %v531 = vpack.c.b16 %v376, %v371
    %v532 = vpack.c.b16 %v377, %v372
    %v533 = vpack.c.b16 %v378, %v373
    %v534 = vpack.c.b16 %v384, %v379
    %v535 = vpack.c.b16 %v385, %v380
    %v536 = vpack.c.b16 %v386, %v381
    %v537 = vpack.c.b16 %v387, %v382
    %v538 = vpack.c.b16 %v388, %v383
    %v539 = vpack.c.b16 %v394, %v389
    %v540 = vpack.c.b16 %v395, %v390
    %v541 = vpack.c.b16 %v396, %v391
    %v542 = vpack.c.b16 %v397, %v392
    %v543 = vpack.c.b16 %v398, %v393
    %v544 = vpack.c.b16 %v404, %v399
    %v545 = vpack.c.b16 %v405, %v400
    %v546 = vpack.c.b16 %v406, %v401
    %v547 = vpack.c.b16 %v407, %v402
    %v548 = vpack.c.b16 %v408, %v403
    %v549 = vpack.c.b16 %v414, %v409
    %v550 = vpack.c.b16 %v415, %v410
    %v551 = vpack.c.b16 %v416, %v411
    %v552 = vpack.c.b16 %v417, %v412
    %v553 = vpack.c.b16 %v418, %v413
    %v554 = vpack.c.b16 %v424, %v419
    %v555 = vpack.c.b16 %v425, %v420
    %v556 = vpack.c.b16 %v426, %v421
    %v557 = vpack.c.b16 %v427, %v422
    %v558 = vpack.c.b16 %v428, %v423
    %v559 = vpack.c.b16 %v434, %v429
    %v560 = vpack.c.b16 %v435, %v430
    %v561 = vpack.c.b16 %v436, %v431
    %v562 = vpack.c.b16 %v437, %v432
    %v563 = vpack.c.b16 %v438, %v433
    %v564 = vpack.c.b16 %v444, %v439
    %v565 = vpack.c.b16 %v445, %v440
    %v566 = vpack.c.b16 %v446, %v441
    %v567 = vpack.c.b16 %v447, %v442
    %v568 = vpack.c.b16 %v448, %v443
    %v569 = vpack.c.b16 %v454, %v449
    %v570 = vpack.c.b16 %v455, %v450
    %v571 = vpack.c.b16 %v456, %v451
    %v572 = vpack.c.b16 %v457, %v452
    %v573 = vpack.c.b16 %v458, %v453
    %v574 = vpack.c.b16 %v464, %v459
    %v575 = vpack.c.b16 %v465, %v460
    %v576 = vpack.c.b16 %v466, %v461
    %v577 = vpack.c.b16 %v467, %v462
    %v578 = vpack.c.b16 %v468, %v463
    %v579 = vpack.c.b16 %v474, %v469
    %v580 = vpack.c.b16 %v475, %v470
    %v581 = vpack.c.b16 %v476, %v471
    %v582 = vpack.c.b16 %v477, %v472
    %v583 = vpack.c.b16 %v478, %v473
    %v584 = vpack.c.b16 %v484, %v479
    %v585 = vpack.c.b16 %v485, %v480
    %v586 = vpack.c.b16 %v486, %v481
    %v587 = vpack.c.b16 %v487, %v482
    %v588 = vpack.c.b16 %v488, %v483
    %v589 = vpack.c.b16 %v494, %v489
    %v590 = vpack.c.b16 %v495, %v490
    %v591 = vpack.c.b16 %v496, %v491
    %v592 = vpack.c.b16 %v497, %v492
    %v593 = vpack.c.b16 %v498, %v493
    %v594 = vpack.c.b16 %v504, %v499
    %v595 = vpack.c.b16 %v505, %v500
    %v596 = vpack.c.b16 %v506, %v501
    %v597 = vpack.c.b16 %v507, %v502
    %v598 = vpack.c.b16 %v508, %v503
    %v743 = vunpack.c.l.b16 %v142
    %v744 = vunpack.c.l.b16 %v143
    %v745 = vunpack.c.l.b16 %v144
    %v746 = vunpack.c.l.b16 %v145
    %v747 = vunpack.c.l.b16 %v146
    %v748 = vunpack.c.l.b16 %v147
    %v749 = vunpack.c.l.b16 %v148
    %v750 = vunpack.c.l.b16 %v149
    %v751 = vunpack.c.l.b16 %v150
    %v752 = vunpack.c.l.b16 %v151
    %v753 = vunpack.c.l.b16 %v152
    %v754 = vunpack.c.l.b16 %v153
    %v755 = vunpack.c.l.b16 %v154
    %v756 = vunpack.c.l.b16 %v155
    %v757 = vunpack.c.l.b16 %v156
    %v758 = vunpack.c.l.b16 %v157
    %v759 = vunpack.c.l.b16 %v158
    %v760 = vunpack.c.l.b16 %v159
    %v761 = vunpack.c.l.b16 %v160
    %v762 = vunpack.c.l.b16 %v161
    %v763 = vunpack.c.l.b16 %v162
    %v764 = vunpack.c.l.b16 %v163
    %v765 = vunpack.c.l.b16 %v164
    %v766 = vunpack.c.l.b16 %v165
    %v767 = vunpack.c.l.b16 %v166
    %v768 = vunpack.c.l.b16 %v167
    %v769 = vunpack.c.l.b16 %v168
    %v770 = vunpack.c.l.b16 %v169
    %v771 = vunpack.c.l.b16 %v170
    %v772 = vunpack.c.l.b16 %v171
    %v773 = vunpack.c.l.b16 %v172
    %v774 = vunpack.c.l.b16 %v173
    %v775 = vunpack.c.l.b16 %v174
    %v776 = vunpack.c.l.b16 %v175
    %v777 = vunpack.c.l.b16 %v176
    %v778 = vunpack.c.l.b16 %v177
    %v779 = vunpack.c.l.b16 %v178
    %v780 = vunpack.c.l.b16 %v179
    %v781 = vunpack.c.l.b16 %v180
    %v782 = vunpack.c.l.b16 %v181
    %v783 = vunpack.c.l.b16 %v182
    %v784 = vunpack.c.l.b16 %v183
    %v785 = vunpack.c.l.b16 %v184
    %v786 = vunpack.c.l.b16 %v185
    %v787 = vunpack.c.l.b16 %v186
    %v788 = vunpack.c.l.b16 %v187
    %v789 = vunpack.c.l.b16 %v188
    %v790 = vunpack.c.l.b16 %v189
    %v791 = vunpack.c.l.b16 %v190
    %v792 = vunpack.c.l.b16 %v191
    %v793 = vunpack.c.l.b16 %v192
    %v794 = vunpack.c.l.b16 %v193
    %v795 = vunpack.c.l.b16 %v194
    %v796 = vunpack.c.l.b16 %v195
    %v797 = vunpack.c.l.b16 %v196
    %v798 = vunpack.c.l.b16 %v197
    %v799 = vunpack.c.l.b16 %v198
    %v800 = vunpack.c.l.b16 %v199
    %v801 = vunpack.c.l.b16 %v200
    %v802 = vunpack.c.l.b16 %v201
    %v803 = vunpack.c.l.b16 %v202
    %v804 = vunpack.c.l.b16 %v203
    %v805 = vunpack.c.l.b16 %v204
    %v806 = vunpack.c.l.b16 %v205
    %v807 = vunpack.c.l.b16 %v206
    %v808 = vunpack.c.l.b16 %v207
    %v809 = vunpack.c.l.b16 %v208
    %v810 = vunpack.c.l.b16 %v209
    %v811 = vunpack.c.l.b16 %v210
    %v812 = vunpack.c.l.b16 %v211
    %v813 = vunpack.c.l.b16 %v212
    %v814 = vunpack.c.l.b16 %v213
    %v815 = vpack.c.b16 %v744, %v743
    %v816 = vpack.c.b16 %v746, %v745
    %v817 = vpack.c.b16 %v748, %v747
    %v818 = vpack.c.b16 %v750, %v749
    %v819 = vpack.c.b16 %v752, %v751
    %v820 = vpack.c.b16 %v754, %v753
    %v821 = vpack.c.b16 %v756, %v755
    %v822 = vpack.c.b16 %v758, %v757
    %v823 = vpack.c.b16 %v760, %v759
    %v824 = vpack.c.b16 %v762, %v761
    %v825 = vpack.c.b16 %v764, %v763
    %v826 = vpack.c.b16 %v766, %v765
    %v827 = vpack.c.b16 %v768, %v767
    %v828 = vpack.c.b16 %v770, %v769
    %v829 = vpack.c.b16 %v772, %v771
    %v830 = vpack.c.b16 %v774, %v773
    %v831 = vpack.c.b16 %v776, %v775
    %v832 = vpack.c.b16 %v778, %v777
    %v833 = vpack.c.b16 %v780, %v779
    %v834 = vpack.c.b16 %v782, %v781
    %v835 = vpack.c.b16 %v784, %v783
    %v836 = vpack.c.b16 %v786, %v785
    %v837 = vpack.c.b16 %v788, %v787
    %v838 = vpack.c.b16 %v790, %v789
    %v839 = vpack.c.b16 %v792, %v791
    %v840 = vpack.c.b16 %v794, %v793
    %v841 = vpack.c.b16 %v796, %v795
    %v842 = vpack.c.b16 %v798, %v797
    %v843 = vpack.c.b16 %v800, %v799
    %v844 = vpack.c.b16 %v802, %v801
    %v845 = vpack.c.b16 %v804, %v803
    %v846 = vpack.c.b16 %v806, %v805
    %v847 = vpack.c.b16 %v808, %v807
    %v848 = vpack.c.b16 %v810, %v809
    %v849 = vpack.c.b16 %v812, %v811
    %v850 = vpack.c.b16 %v814, %v813
    %vm887 = vcmask 523264
    %v889 = vsel %vm887, %v513, 0
    %v892 = vsel %vm887, %v518, 0
    %v895 = vsel %vm887, %v523, 0
    %v898 = vsel %vm887, %v528, 0
    %v901 = vsel %vm887, %v533, 0
    %v904 = vsel %vm887, %v538, 0
    %v907 = vsel %vm887, %v543, 0
    %v910 = vsel %vm887, %v548, 0
    %v913 = vsel %vm887, %v553, 0
    %v916 = vsel %vm887, %v558, 0
    %v919 = vsel %vm887, %v563, 0
    %v922 = vsel %vm887, %v568, 0
    %v925 = vsel %vm887, %v573, 0
    %v928 = vsel %vm887, %v578, 0
    %v931 = vsel %vm887, %v583, 0
    %v934 = vsel %vm887, %v588, 0
    %v937 = vsel %vm887, %v593, 0
    %v940 = vsel %vm887, %v598, 0
    %942 = vmatprep.subr.bf16.mxu0 0
    %943 = vmatpush1.bf16.msra.mxu0 %v815
    %944 = vmatprep.subr.bf16.mxu0 0
    %945 = vmatpush1.bf16.msra.mxu0 %v816
    %946 = vmatprep.subr.bf16.mxu0 0
    %947 = vmatpush1.bf16.msra.mxu0 %v817
    %948 = vmatprep.subr.bf16.mxu0 0
    %949 = vmatpush1.bf16.msra.mxu0 %v818
    %950 = vmatprep.subr.bf16.mxu0 0
    %951 = vmatpush1.bf16.msra.mxu0 %v819
    %952 = vmatprep.subr.bf16.mxu0 0
    %953 = vmatpush1.bf16.msra.mxu0 %v820
    %954 = vmatprep.subr.bf16.mxu0 0
    %955 = vmatpush1.bf16.msra.mxu0 %v821
    %956 = vmatprep.subr.bf16.mxu0 0
    %957 = vmatpush1.bf16.msra.mxu0 %v822
    %958 = vmatprep.subr.bf16.mxu0 0
    %959 = vmatpush1.bf16.msra.mxu0 %v823
    %960 = vmatprep.subr.bf16.mxu0 0
    %961 = vmatpush1.bf16.msra.mxu0 %v824
    %962 = vmatprep.subr.bf16.mxu0 0
    %963 = vmatpush1.bf16.msra.mxu0 %v825
    %964 = vmatprep.subr.bf16.mxu0 0
    %965 = vmatpush1.bf16.msra.mxu0 %v826
    %966 = vmatprep.subr.bf16.mxu0 0
    %967 = vmatpush1.bf16.msra.mxu0 %v827
    %968 = vmatprep.subr.bf16.mxu0 0
    %969 = vmatpush1.bf16.msra.mxu0 %v828
    %970 = vmatprep.subr.bf16.mxu0 0
    %971 = vmatpush1.bf16.msra.mxu0 %v829
    %972 = vmatprep.subr.bf16.mxu0 0
    %973 = vmatpush1.bf16.msra.mxu0 %v830
    %974 = vmatprep.mubr.bf16.mxu0 %v510
    %975 = vmatmul.mubr.bf16.gmra.mrb[0].mxu0 %v509
    %v976 = vpop.f32.mrb[0].mxu0
    %v977 = vadd.f32 %v219, %v976
    %v978 = vpop.f32.mrb[0].mxu0
    %v979 = vpop.f32.mrb[0].mxu0
    %v980 = vadd.f32 %v219, %v979
    %v981 = vpop.f32.mrb[0].mxu0
    %982 = vmatprep.mubr.bf16.mxu0 %v515
    %983 = vmatmul.mubr.bf16.gmra.mrb[0].mxu0 %v514
    %v984 = vpop.f32.mrb[0].mxu0
    %v985 = vadd.f32 %v219, %v984
    %v986 = vpop.f32.mrb[0].mxu0
    %v987 = vpop.f32.mrb[0].mxu0
    %v988 = vadd.f32 %v219, %v987
    %v989 = vpop.f32.mrb[0].mxu0
    %990 = vmatprep.mubr.bf16.mxu0 %v520
    %991 = vmatmul.mubr.bf16.gmra.mrb[0].mxu0 %v519
    %v992 = vpop.f32.mrb[0].mxu0
    %v993 = vadd.f32 %v219, %v992
    %v994 = vpop.f32.mrb[0].mxu0
    %v995 = vpop.f32.mrb[0].mxu0
    %v996 = vadd.f32 %v219, %v995
    %v997 = vpop.f32.mrb[0].mxu0
    %998 = vmatprep.mubr.bf16.mxu0 %v525
    %999 = vmatmul.mubr.bf16.gmra.mrb[0].mxu0 %v524
    %v1000 = vpop.f32.mrb[0].mxu0
    %v1001 = vadd.f32 %v219, %v1000
    %v1002 = vpop.f32.mrb[0].mxu0
    %v1003 = vpop.f32.mrb[0].mxu0
    %v1004 = vadd.f32 %v219, %v1003
    %v1005 = vpop.f32.mrb[0].mxu0
    %1006 = vmatprep.mubr.bf16.mxu0 %v530
    %1007 = vmatmul.mubr.bf16.gmra.mrb[0].mxu0 %v529
    %v1008 = vpop.f32.mrb[0].mxu0
    %v1009 = vadd.f32 %v219, %v1008
    %v1010 = vpop.f32.mrb[0].mxu0
    %v1011 = vpop.f32.mrb[0].mxu0
    %v1012 = vadd.f32 %v219, %v1011
    %v1013 = vpop.f32.mrb[0].mxu0
    %1014 = vmatprep.mubr.bf16.mxu0 %v535
    %1015 = vmatmul.mubr.bf16.gmra.mrb[0].mxu0 %v534
    %v1016 = vpop.f32.mrb[0].mxu0
    %v1017 = vadd.f32 %v219, %v1016
    %v1018 = vpop.f32.mrb[0].mxu0
    %v1019 = vpop.f32.mrb[0].mxu0
    %v1020 = vadd.f32 %v219, %v1019
    %v1021 = vpop.f32.mrb[0].mxu0
    %1022 = vmatprep.mubr.bf16.mxu0 %v540
    %1023 = vmatmul.mubr.bf16.gmra.mrb[0].mxu0 %v539
    %v1024 = vpop.f32.mrb[0].mxu0
    %v1025 = vadd.f32 %v219, %v1024
    %v1026 = vpop.f32.mrb[0].mxu0
    %v1027 = vpop.f32.mrb[0].mxu0
    %v1028 = vadd.f32 %v219, %v1027
    %v1029 = vpop.f32.mrb[0].mxu0
    %1030 = vmatprep.mubr.bf16.mxu0 %v545
    %1031 = vmatmul.mubr.bf16.gmra.mrb[0].mxu0 %v544
    %v1032 = vpop.f32.mrb[0].mxu0
    %v1033 = vadd.f32 %v219, %v1032
    %v1034 = vpop.f32.mrb[0].mxu0
    %v1035 = vpop.f32.mrb[0].mxu0
    %v1036 = vadd.f32 %v219, %v1035
    %v1037 = vpop.f32.mrb[0].mxu0
    %1038 = vmatprep.mubr.bf16.mxu0 %v550
    %1039 = vmatmul.mubr.bf16.gmra.mrb[0].mxu0 %v549
    %v1040 = vpop.f32.mrb[0].mxu0
    %v1041 = vadd.f32 %v219, %v1040
    %v1042 = vpop.f32.mrb[0].mxu0
    %v1043 = vpop.f32.mrb[0].mxu0
    %v1044 = vadd.f32 %v219, %v1043
    %v1045 = vpop.f32.mrb[0].mxu0
    %1046 = vmatprep.mubr.bf16.mxu0 %v555
    %1047 = vmatmul.mubr.bf16.gmra.mrb[0].mxu0 %v554
    %v1048 = vpop.f32.mrb[0].mxu0
    %v1049 = vadd.f32 %v219, %v1048
    %v1050 = vpop.f32.mrb[0].mxu0
    %v1051 = vpop.f32.mrb[0].mxu0
    %v1052 = vadd.f32 %v219, %v1051
    %v1053 = vpop.f32.mrb[0].mxu0
    %1054 = vmatprep.mubr.bf16.mxu0 %v560
    %1055 = vmatmul.mubr.bf16.gmra.mrb[0].mxu0 %v559
    %v1056 = vpop.f32.mrb[0].mxu0
    %v1057 = vadd.f32 %v219, %v1056
    %v1058 = vpop.f32.mrb[0].mxu0
    %v1059 = vpop.f32.mrb[0].mxu0
    %v1060 = vadd.f32 %v219, %v1059
    %v1061 = vpop.f32.mrb[0].mxu0
    %1062 = vmatprep.mubr.bf16.mxu0 %v565
    %1063 = vmatmul.mubr.bf16.gmra.mrb[0].mxu0 %v564
    %v1064 = vpop.f32.mrb[0].mxu0
    %v1065 = vadd.f32 %v219, %v1064
    %v1066 = vpop.f32.mrb[0].mxu0
    %v1067 = vpop.f32.mrb[0].mxu0
    %v1068 = vadd.f32 %v219, %v1067
    %v1069 = vpop.f32.mrb[0].mxu0
    %1070 = vmatprep.mubr.bf16.mxu0 %v570
    %1071 = vmatmul.mubr.bf16.gmra.mrb[0].mxu0 %v569
    %v1072 = vpop.f32.mrb[0].mxu0
    %v1073 = vadd.f32 %v219, %v1072
    %v1074 = vpop.f32.mrb[0].mxu0
    %v1075 = vpop.f32.mrb[0].mxu0
    %v1076 = vadd.f32 %v219, %v1075
    %v1077 = vpop.f32.mrb[0].mxu0
    %1078 = vmatprep.mubr.bf16.mxu0 %v575
    %1079 = vmatmul.mubr.bf16.gmra.mrb[0].mxu0 %v574
    %v1080 = vpop.f32.mrb[0].mxu0
    %v1081 = vadd.f32 %v219, %v1080
    %v1082 = vpop.f32.mrb[0].mxu0
    %v1083 = vpop.f32.mrb[0].mxu0
    %v1084 = vadd.f32 %v219, %v1083
    %v1085 = vpop.f32.mrb[0].mxu0
    %1086 = vmatprep.mubr.bf16.mxu0 %v580
    %1087 = vmatmul.mubr.bf16.gmra.mrb[0].mxu0 %v579
    %v1088 = vpop.f32.mrb[0].mxu0
    %v1089 = vadd.f32 %v219, %v1088
    %v1090 = vpop.f32.mrb[0].mxu0
    %v1091 = vpop.f32.mrb[0].mxu0
    %v1092 = vadd.f32 %v219, %v1091
    %v1093 = vpop.f32.mrb[0].mxu0
    %1094 = vmatprep.mubr.bf16.mxu0 %v585
    %1095 = vmatmul.mubr.bf16.gmra.mrb[0].mxu0 %v584
    %v1096 = vpop.f32.mrb[0].mxu0
    %v1097 = vadd.f32 %v219, %v1096
    %v1098 = vpop.f32.mrb[0].mxu0
    %v1099 = vpop.f32.mrb[0].mxu0
    %v1100 = vadd.f32 %v219, %v1099
    %v1101 = vpop.f32.mrb[0].mxu0
    %1102 = vmatprep.mubr.bf16.mxu0 %v590
    %1103 = vmatmul.mubr.bf16.gmra.mrb[0].mxu0 %v589
    %v1104 = vpop.f32.mrb[0].mxu0
    %v1105 = vadd.f32 %v219, %v1104
    %v1106 = vpop.f32.mrb[0].mxu0
    %v1107 = vpop.f32.mrb[0].mxu0
    %v1108 = vadd.f32 %v219, %v1107
    %v1109 = vpop.f32.mrb[0].mxu0
    %1110 = vmatprep.mubr.bf16.mxu0 %v595
    %1111 = vmatmul.mubr.bf16.gmra.mrb[0].mxu0 %v594
    %v1112 = vpop.f32.mrb[0].mxu0
    %v1113 = vadd.f32 %v219, %v1112
    %v1114 = vpop.f32.mrb[0].mxu0
    %v1115 = vpop.f32.mrb[0].mxu0
    %v1116 = vadd.f32 %v219, %v1115
    %v1117 = vpop.f32.mrb[0].mxu0
    %1118 = vdwg.mxu0
    %1119 = vmatprep.subr.bf16.mxu0 0
    %1120 = vmatpush1.bf16.msra.mxu0 %v831
    %1121 = vmatprep.subr.bf16.mxu0 0
    %1122 = vmatpush1.bf16.msra.mxu0 %v832
    %1123 = vmatprep.subr.bf16.mxu0 0
    %1124 = vmatpush1.bf16.msra.mxu0 %v833
    %1125 = vmatprep.subr.bf16.mxu0 0
    %1126 = vmatpush1.bf16.msra.mxu0 %v834
    %1127 = vmatprep.subr.bf16.mxu0 0
    %1128 = vmatpush1.bf16.msra.mxu0 %v835
    %1129 = vmatprep.subr.bf16.mxu0 0
    %1130 = vmatpush1.bf16.msra.mxu0 %v836
    %1131 = vmatprep.subr.bf16.mxu0 0
    %1132 = vmatpush1.bf16.msra.mxu0 %v837
    %1133 = vmatprep.subr.bf16.mxu0 0
    %1134 = vmatpush1.bf16.msra.mxu0 %v838
    %1135 = vmatprep.subr.bf16.mxu0 0
    %1136 = vmatpush1.bf16.msra.mxu0 %v839
    %1137 = vmatprep.subr.bf16.mxu0 0
    %1138 = vmatpush1.bf16.msra.mxu0 %v840
    %1139 = vmatprep.subr.bf16.mxu0 0
    %1140 = vmatpush1.bf16.msra.mxu0 %v841
    %1141 = vmatprep.subr.bf16.mxu0 0
    %1142 = vmatpush1.bf16.msra.mxu0 %v842
    %1143 = vmatprep.subr.bf16.mxu0 0
    %1144 = vmatpush1.bf16.msra.mxu0 %v843
    %1145 = vmatprep.subr.bf16.mxu0 0
    %1146 = vmatpush1.bf16.msra.mxu0 %v844
    %1147 = vmatprep.subr.bf16.mxu0 0
    %1148 = vmatpush1.bf16.msra.mxu0 %v845
    %1149 = vmatprep.subr.bf16.mxu0 0
    %1150 = vmatpush1.bf16.msra.mxu0 %v846
    %1151 = vmatprep.mubr.bf16.mxu0 %v512
    %1152 = vmatmul.mubr.bf16.gmra.mrb[0].mxu0 %v511
    %v1153 = vpop.f32.mrb[0].mxu0
    %v1154 = vadd.f32 %v977, %v1153
    %v1155 = vpop.f32.mrb[0].mxu0
    %v1156 = vpop.f32.mrb[0].mxu0
    %v1157 = vadd.f32 %v980, %v1156
    %v1158 = vpop.f32.mrb[0].mxu0
    %1159 = vmatprep.mubr.bf16.mxu0 %v517
    %1160 = vmatmul.mubr.bf16.gmra.mrb[0].mxu0 %v516
    %v1161 = vpop.f32.mrb[0].mxu0
    %v1162 = vadd.f32 %v985, %v1161
    %v1163 = vpop.f32.mrb[0].mxu0
    %v1164 = vpop.f32.mrb[0].mxu0
    %v1165 = vadd.f32 %v988, %v1164
    %v1166 = vpop.f32.mrb[0].mxu0
    %1167 = vmatprep.mubr.bf16.mxu0 %v522
    %1168 = vmatmul.mubr.bf16.gmra.mrb[0].mxu0 %v521
    %v1169 = vpop.f32.mrb[0].mxu0
    %v1170 = vadd.f32 %v993, %v1169
    %v1171 = vpop.f32.mrb[0].mxu0
    %v1172 = vpop.f32.mrb[0].mxu0
    %v1173 = vadd.f32 %v996, %v1172
    %v1174 = vpop.f32.mrb[0].mxu0
    %1175 = vmatprep.mubr.bf16.mxu0 %v527
    %1176 = vmatmul.mubr.bf16.gmra.mrb[0].mxu0 %v526
    %v1177 = vpop.f32.mrb[0].mxu0
    %v1178 = vadd.f32 %v1001, %v1177
    %v1179 = vpop.f32.mrb[0].mxu0
    %v1180 = vpop.f32.mrb[0].mxu0
    %v1181 = vadd.f32 %v1004, %v1180
    %v1182 = vpop.f32.mrb[0].mxu0
    %1183 = vmatprep.mubr.bf16.mxu0 %v532
    %1184 = vmatmul.mubr.bf16.gmra.mrb[0].mxu0 %v531
    %v1185 = vpop.f32.mrb[0].mxu0
    %v1186 = vadd.f32 %v1009, %v1185
    %v1187 = vpop.f32.mrb[0].mxu0
    %v1188 = vpop.f32.mrb[0].mxu0
    %v1189 = vadd.f32 %v1012, %v1188
    %v1190 = vpop.f32.mrb[0].mxu0
    %1191 = vmatprep.mubr.bf16.mxu0 %v537
    %1192 = vmatmul.mubr.bf16.gmra.mrb[0].mxu0 %v536
    %v1193 = vpop.f32.mrb[0].mxu0
    %v1194 = vadd.f32 %v1017, %v1193
    %v1195 = vpop.f32.mrb[0].mxu0
    %v1196 = vpop.f32.mrb[0].mxu0
    %v1197 = vadd.f32 %v1020, %v1196
    %v1198 = vpop.f32.mrb[0].mxu0
    %1199 = vmatprep.mubr.bf16.mxu0 %v542
    %1200 = vmatmul.mubr.bf16.gmra.mrb[0].mxu0 %v541
    %v1201 = vpop.f32.mrb[0].mxu0
    %v1202 = vadd.f32 %v1025, %v1201
    %v1203 = vpop.f32.mrb[0].mxu0
    %v1204 = vpop.f32.mrb[0].mxu0
    %v1205 = vadd.f32 %v1028, %v1204
    %v1206 = vpop.f32.mrb[0].mxu0
    %1207 = vmatprep.mubr.bf16.mxu0 %v547
    %1208 = vmatmul.mubr.bf16.gmra.mrb[0].mxu0 %v546
    %v1209 = vpop.f32.mrb[0].mxu0
    %v1210 = vadd.f32 %v1033, %v1209
    %v1211 = vpop.f32.mrb[0].mxu0
    %v1212 = vpop.f32.mrb[0].mxu0
    %v1213 = vadd.f32 %v1036, %v1212
    %v1214 = vpop.f32.mrb[0].mxu0
    %1215 = vmatprep.mubr.bf16.mxu0 %v552
    %1216 = vmatmul.mubr.bf16.gmra.mrb[0].mxu0 %v551
    %v1217 = vpop.f32.mrb[0].mxu0
    %v1218 = vadd.f32 %v1041, %v1217
    %v1219 = vpop.f32.mrb[0].mxu0
    %v1220 = vpop.f32.mrb[0].mxu0
    %v1221 = vadd.f32 %v1044, %v1220
    %v1222 = vpop.f32.mrb[0].mxu0
    %1223 = vmatprep.mubr.bf16.mxu0 %v557
    %1224 = vmatmul.mubr.bf16.gmra.mrb[0].mxu0 %v556
    %v1225 = vpop.f32.mrb[0].mxu0
    %v1226 = vadd.f32 %v1049, %v1225
    %v1227 = vpop.f32.mrb[0].mxu0
    %v1228 = vpop.f32.mrb[0].mxu0
    %v1229 = vadd.f32 %v1052, %v1228
    %v1230 = vpop.f32.mrb[0].mxu0
    %1231 = vmatprep.mubr.bf16.mxu0 %v562
    %1232 = vmatmul.mubr.bf16.gmra.mrb[0].mxu0 %v561
    %v1233 = vpop.f32.mrb[0].mxu0
    %v1234 = vadd.f32 %v1057, %v1233
    %v1235 = vpop.f32.mrb[0].mxu0
    %v1236 = vpop.f32.mrb[0].mxu0
    %v1237 = vadd.f32 %v1060, %v1236
    %v1238 = vpop.f32.mrb[0].mxu0
    %1239 = vmatprep.mubr.bf16.mxu0 %v567
    %1240 = vmatmul.mubr.bf16.gmra.mrb[0].mxu0 %v566
    %v1241 = vpop.f32.mrb[0].mxu0
    %v1242 = vadd.f32 %v1065, %v1241
    %v1243 = vpop.f32.mrb[0].mxu0
    %v1244 = vpop.f32.mrb[0].mxu0
    %v1245 = vadd.f32 %v1068, %v1244
    %v1246 = vpop.f32.mrb[0].mxu0
    %1247 = vmatprep.mubr.bf16.mxu0 %v572
    %1248 = vmatmul.mubr.bf16.gmra.mrb[0].mxu0 %v571
    %v1249 = vpop.f32.mrb[0].mxu0
    %v1250 = vadd.f32 %v1073, %v1249
    %v1251 = vpop.f32.mrb[0].mxu0
    %v1252 = vpop.f32.mrb[0].mxu0
    %v1253 = vadd.f32 %v1076, %v1252
    %v1254 = vpop.f32.mrb[0].mxu0
    %1255 = vmatprep.mubr.bf16.mxu0 %v577
    %1256 = vmatmul.mubr.bf16.gmra.mrb[0].mxu0 %v576
    %v1257 = vpop.f32.mrb[0].mxu0
    %v1258 = vadd.f32 %v1081, %v1257
    %v1259 = vpop.f32.mrb[0].mxu0
    %v1260 = vpop.f32.mrb[0].mxu0
    %v1261 = vadd.f32 %v1084, %v1260
    %v1262 = vpop.f32.mrb[0].mxu0
    %1263 = vmatprep.mubr.bf16.mxu0 %v582
    %1264 = vmatmul.mubr.bf16.gmra.mrb[0].mxu0 %v581
    %v1265 = vpop.f32.mrb[0].mxu0
    %v1266 = vadd.f32 %v1089, %v1265
    %v1267 = vpop.f32.mrb[0].mxu0
    %v1268 = vpop.f32.mrb[0].mxu0
    %v1269 = vadd.f32 %v1092, %v1268
    %v1270 = vpop.f32.mrb[0].mxu0
    %1271 = vmatprep.mubr.bf16.mxu0 %v587
    %1272 = vmatmul.mubr.bf16.gmra.mrb[0].mxu0 %v586
    %v1273 = vpop.f32.mrb[0].mxu0
    %v1274 = vadd.f32 %v1097, %v1273
    %v1275 = vpop.f32.mrb[0].mxu0
    %v1276 = vpop.f32.mrb[0].mxu0
    %v1277 = vadd.f32 %v1100, %v1276
    %v1278 = vpop.f32.mrb[0].mxu0
    %1279 = vmatprep.mubr.bf16.mxu0 %v592
    %1280 = vmatmul.mubr.bf16.gmra.mrb[0].mxu0 %v591
    %v1281 = vpop.f32.mrb[0].mxu0
    %v1282 = vadd.f32 %v1105, %v1281
    %v1283 = vpop.f32.mrb[0].mxu0
    %v1284 = vpop.f32.mrb[0].mxu0
    %v1285 = vadd.f32 %v1108, %v1284
    %v1286 = vpop.f32.mrb[0].mxu0
    %1287 = vmatprep.mubr.bf16.mxu0 %v597
    %1288 = vmatmul.mubr.bf16.gmra.mrb[0].mxu0 %v596
    %v1289 = vpop.f32.mrb[0].mxu0
    %v1290 = vadd.f32 %v1113, %v1289
    %v1291 = vpop.f32.mrb[0].mxu0
    %v1292 = vpop.f32.mrb[0].mxu0
    %v1293 = vadd.f32 %v1116, %v1292
    %v1294 = vpop.f32.mrb[0].mxu0
    %1295 = vdwg.mxu0
    %1296 = vmatprep.subr.bf16.mxu0 0
    %1297 = vmatpush1.bf16.msra.mxu0 %v847
    %1298 = vmatprep.subr.bf16.mxu0 0
    %1299 = vmatpush1.bf16.msra.mxu0 %v848
    %1300 = vmatprep.subr.bf16.mxu0 0
    %1301 = vmatpush1.bf16.msra.mxu0 %v849
    %1302 = vmatprep.subr.bf16.mxu0 0
    %1303 = vmatpush1.bf16.msra.mxu0 %v850
    %1304 = vmatprep.subr.bf16.mxu0 0
    %1305 = vmatpush1.bf16.msra.mxu0 0
    %1306 = vmatprep.subr.bf16.mxu0 0
    %1307 = vmatpush1.bf16.msra.mxu0 0
    %1308 = vmatprep.subr.bf16.mxu0 0
    %1309 = vmatpush1.bf16.msra.mxu0 0
    %1310 = vmatprep.subr.bf16.mxu0 0
    %1311 = vmatpush1.bf16.msra.mxu0 0
    %1312 = vmatprep.subr.bf16.mxu0 0
    %1313 = vmatpush1.bf16.msra.mxu0 0
    %1314 = vmatprep.subr.bf16.mxu0 0
    %1315 = vmatpush1.bf16.msra.mxu0 0
    %1316 = vmatprep.subr.bf16.mxu0 0
    %1317 = vmatpush1.bf16.msra.mxu0 0
    %1318 = vmatprep.subr.bf16.mxu0 0
    %1319 = vmatpush1.bf16.msra.mxu0 0
    %1320 = vmatprep.subr.bf16.mxu0 0
    %1321 = vmatpush1.bf16.msra.mxu0 0
    %1322 = vmatprep.subr.bf16.mxu0 0
    %1323 = vmatpush1.bf16.msra.mxu0 0
    %1324 = vmatprep.subr.bf16.mxu0 0
    %1325 = vmatpush1.bf16.msra.mxu0 0
    %1326 = vmatprep.subr.bf16.mxu0 0
    %1327 = vmatpush1.bf16.msra.mxu0 0
    %1328 = vmatprep.mubr.bf16.mxu0 0
    %1329 = vmatmul.mubr.bf16.gmra.mrb[0].mxu0 %v889
    %v1330 = vpop.f32.mrb[0].mxu0
    %v1331 = vadd.f32 %v1154, %v1330
    %v1332 = vpop.f32.mrb[0].mxu0
    %v1333 = vpop.f32.mrb[0].mxu0
    %v1334 = vadd.f32 %v1157, %v1333
    %v1335 = vpop.f32.mrb[0].mxu0
    %1336 = vmatprep.mubr.bf16.mxu0 0
    %1337 = vmatmul.mubr.bf16.gmra.mrb[0].mxu0 %v892
    %v1338 = vpop.f32.mrb[0].mxu0
    %v1339 = vadd.f32 %v1162, %v1338
    %v1340 = vpop.f32.mrb[0].mxu0
    %v1341 = vpop.f32.mrb[0].mxu0
    %v1342 = vadd.f32 %v1165, %v1341
    %v1343 = vpop.f32.mrb[0].mxu0
    %1344 = vmatprep.mubr.bf16.mxu0 0
    %1345 = vmatmul.mubr.bf16.gmra.mrb[0].mxu0 %v895
    %v1346 = vpop.f32.mrb[0].mxu0
    %v1347 = vadd.f32 %v1170, %v1346
    %v1348 = vpop.f32.mrb[0].mxu0
    %v1349 = vpop.f32.mrb[0].mxu0
    %v1350 = vadd.f32 %v1173, %v1349
    %v1351 = vpop.f32.mrb[0].mxu0
    %1352 = vmatprep.mubr.bf16.mxu0 0
    %1353 = vmatmul.mubr.bf16.gmra.mrb[0].mxu0 %v898
    %v1354 = vpop.f32.mrb[0].mxu0
    %v1355 = vadd.f32 %v1178, %v1354
    %v1356 = vpop.f32.mrb[0].mxu0
    %v1357 = vpop.f32.mrb[0].mxu0
    %v1358 = vadd.f32 %v1181, %v1357
    %v1359 = vpop.f32.mrb[0].mxu0
    %1360 = vmatprep.mubr.bf16.mxu0 0
    %1361 = vmatmul.mubr.bf16.gmra.mrb[0].mxu0 %v901
    %v1362 = vpop.f32.mrb[0].mxu0
    %v1363 = vadd.f32 %v1186, %v1362
    %v1364 = vpop.f32.mrb[0].mxu0
    %v1365 = vpop.f32.mrb[0].mxu0
    %v1366 = vadd.f32 %v1189, %v1365
    %v1367 = vpop.f32.mrb[0].mxu0
    %1368 = vmatprep.mubr.bf16.mxu0 0
    %1369 = vmatmul.mubr.bf16.gmra.mrb[0].mxu0 %v904
    %v1370 = vpop.f32.mrb[0].mxu0
    %v1371 = vadd.f32 %v1194, %v1370
    %v1372 = vpop.f32.mrb[0].mxu0
    %v1373 = vpop.f32.mrb[0].mxu0
    %v1374 = vadd.f32 %v1197, %v1373
    %v1375 = vpop.f32.mrb[0].mxu0
    %1376 = vmatprep.mubr.bf16.mxu0 0
    %1377 = vmatmul.mubr.bf16.gmra.mrb[0].mxu0 %v907
    %v1378 = vpop.f32.mrb[0].mxu0
    %v1379 = vadd.f32 %v1202, %v1378
    %v1380 = vpop.f32.mrb[0].mxu0
    %v1381 = vpop.f32.mrb[0].mxu0
    %v1382 = vadd.f32 %v1205, %v1381
    %v1383 = vpop.f32.mrb[0].mxu0
    %1384 = vmatprep.mubr.bf16.mxu0 0
    %1385 = vmatmul.mubr.bf16.gmra.mrb[0].mxu0 %v910
    %v1386 = vpop.f32.mrb[0].mxu0
    %v1387 = vadd.f32 %v1210, %v1386
    %v1388 = vpop.f32.mrb[0].mxu0
    %v1389 = vpop.f32.mrb[0].mxu0
    %v1390 = vadd.f32 %v1213, %v1389
    %v1391 = vpop.f32.mrb[0].mxu0
    %1392 = vmatprep.mubr.bf16.mxu0 0
    %1393 = vmatmul.mubr.bf16.gmra.mrb[0].mxu0 %v913
    %v1394 = vpop.f32.mrb[0].mxu0
    %v1395 = vadd.f32 %v1218, %v1394
    %v1396 = vpop.f32.mrb[0].mxu0
    %v1397 = vpop.f32.mrb[0].mxu0
    %v1398 = vadd.f32 %v1221, %v1397
    %v1399 = vpop.f32.mrb[0].mxu0
    %1400 = vmatprep.mubr.bf16.mxu0 0
    %1401 = vmatmul.mubr.bf16.gmra.mrb[0].mxu0 %v916
    %v1402 = vpop.f32.mrb[0].mxu0
    %v1403 = vadd.f32 %v1226, %v1402
    %v1404 = vpop.f32.mrb[0].mxu0
    %v1405 = vpop.f32.mrb[0].mxu0
    %v1406 = vadd.f32 %v1229, %v1405
    %v1407 = vpop.f32.mrb[0].mxu0
    %1408 = vmatprep.mubr.bf16.mxu0 0
    %1409 = vmatmul.mubr.bf16.gmra.mrb[0].mxu0 %v919
    %v1410 = vpop.f32.mrb[0].mxu0
    %v1411 = vadd.f32 %v1234, %v1410
    %v1412 = vpop.f32.mrb[0].mxu0
    %v1413 = vpop.f32.mrb[0].mxu0
    %v1414 = vadd.f32 %v1237, %v1413
    %v1415 = vpop.f32.mrb[0].mxu0
    %1416 = vmatprep.mubr.bf16.mxu0 0
    %1417 = vmatmul.mubr.bf16.gmra.mrb[0].mxu0 %v922
    %v1418 = vpop.f32.mrb[0].mxu0
    %v1419 = vadd.f32 %v1242, %v1418
    %v1420 = vpop.f32.mrb[0].mxu0
    %v1421 = vpop.f32.mrb[0].mxu0
    %v1422 = vadd.f32 %v1245, %v1421
    %v1423 = vpop.f32.mrb[0].mxu0
    %1424 = vmatprep.mubr.bf16.mxu0 0
    %1425 = vmatmul.mubr.bf16.gmra.mrb[0].mxu0 %v925
    %v1426 = vpop.f32.mrb[0].mxu0
    %v1427 = vadd.f32 %v1250, %v1426
    %v1428 = vpop.f32.mrb[0].mxu0
    %v1429 = vpop.f32.mrb[0].mxu0
    %v1430 = vadd.f32 %v1253, %v1429
    %v1431 = vpop.f32.mrb[0].mxu0
    %1432 = vmatprep.mubr.bf16.mxu0 0
    %1433 = vmatmul.mubr.bf16.gmra.mrb[0].mxu0 %v928
    %v1434 = vpop.f32.mrb[0].mxu0
    %v1435 = vadd.f32 %v1258, %v1434
    %v1436 = vpop.f32.mrb[0].mxu0
    %v1437 = vpop.f32.mrb[0].mxu0
    %v1438 = vadd.f32 %v1261, %v1437
    %v1439 = vpop.f32.mrb[0].mxu0
    %1440 = vmatprep.mubr.bf16.mxu0 0
    %1441 = vmatmul.mubr.bf16.gmra.mrb[0].mxu0 %v931
    %v1442 = vpop.f32.mrb[0].mxu0
    %v1443 = vadd.f32 %v1266, %v1442
    %v1444 = vpop.f32.mrb[0].mxu0
    %v1445 = vpop.f32.mrb[0].mxu0
    %v1446 = vadd.f32 %v1269, %v1445
    %v1447 = vpop.f32.mrb[0].mxu0
    %1448 = vmatprep.mubr.bf16.mxu0 0
    %1449 = vmatmul.mubr.bf16.gmra.mrb[0].mxu0 %v934
    %v1450 = vpop.f32.mrb[0].mxu0
    %v1451 = vadd.f32 %v1274, %v1450
    %v1452 = vpop.f32.mrb[0].mxu0
    %v1453 = vpop.f32.mrb[0].mxu0
    %v1454 = vadd.f32 %v1277, %v1453
    %v1455 = vpop.f32.mrb[0].mxu0
    %1456 = vmatprep.mubr.bf16.mxu0 0
    %1457 = vmatmul.mubr.bf16.gmra.mrb[0].mxu0 %v937
    %v1458 = vpop.f32.mrb[0].mxu0
    %v1459 = vadd.f32 %v1282, %v1458
    %v1460 = vpop.f32.mrb[0].mxu0
    %v1461 = vpop.f32.mrb[0].mxu0
    %v1462 = vadd.f32 %v1285, %v1461
    %v1463 = vpop.f32.mrb[0].mxu0
    %1464 = vmatprep.mubr.bf16.mxu0 0
    %1465 = vmatmul.mubr.bf16.gmra.mrb[0].mxu0 %v940
    %v1466 = vpop.f32.mrb[0].mxu0
    %v1467 = vadd.f32 %v1290, %v1466
    %v1468 = vpop.f32.mrb[0].mxu0
    %v1469 = vpop.f32.mrb[0].mxu0
    %v1470 = vadd.f32 %v1293, %v1469
    %v1471 = vpop.f32.mrb[0].mxu0
    %1472 = vdwg.mxu0
    %v1473 = vmax.f32 %v1331, 0.0
    %v1474 = vmax.f32 %v1334, 0.0
    %v1475 = vmax.f32 %v1339, 0.0
    %v1476 = vmax.f32 %v1342, 0.0
    %v1477 = vmax.f32 %v1347, 0.0
    %v1478 = vmax.f32 %v1350, 0.0
    %v1479 = vmax.f32 %v1355, 0.0
    %v1480 = vmax.f32 %v1358, 0.0
    %v1481 = vmax.f32 %v1363, 0.0
    %v1482 = vmax.f32 %v1366, 0.0
    %v1483 = vmax.f32 %v1371, 0.0
    %v1484 = vmax.f32 %v1374, 0.0
    %v1485 = vmax.f32 %v1379, 0.0
    %v1486 = vmax.f32 %v1382, 0.0
    %v1487 = vmax.f32 %v1387, 0.0
    %v1488 = vmax.f32 %v1390, 0.0
    %v1489 = vmax.f32 %v1395, 0.0
    %v1490 = vmax.f32 %v1398, 0.0
    %v1491 = vmax.f32 %v1403, 0.0
    %v1492 = vmax.f32 %v1406, 0.0
    %v1493 = vmax.f32 %v1411, 0.0
    %v1494 = vmax.f32 %v1414, 0.0
    %v1495 = vmax.f32 %v1419, 0.0
    %v1496 = vmax.f32 %v1422, 0.0
    %v1497 = vmax.f32 %v1427, 0.0
    %v1498 = vmax.f32 %v1430, 0.0
    %v1499 = vmax.f32 %v1435, 0.0
    %v1500 = vmax.f32 %v1438, 0.0
    %v1501 = vmax.f32 %v1443, 0.0
    %v1502 = vmax.f32 %v1446, 0.0
    %v1503 = vmax.f32 %v1451, 0.0
    %v1504 = vmax.f32 %v1454, 0.0
    %v1505 = vmax.f32 %v1459, 0.0
    %v1506 = vmax.f32 %v1462, 0.0
    %v1507 = vmax.f32 %v1467, 0.0
    %v1508 = vmax.f32 %v1470, 0.0
    %v1509 = vpack.c.bf16 %v1474, %v1473
    %v1510 = vpack.c.bf16 %v1476, %v1475
    %v1511 = vpack.c.bf16 %v1478, %v1477
    %v1512 = vpack.c.bf16 %v1480, %v1479
    %v1513 = vpack.c.bf16 %v1482, %v1481
    %v1514 = vpack.c.bf16 %v1484, %v1483
    %v1515 = vpack.c.bf16 %v1486, %v1485
    %v1516 = vpack.c.bf16 %v1488, %v1487
    %v1517 = vpack.c.bf16 %v1490, %v1489
    %v1518 = vpack.c.bf16 %v1492, %v1491
    %v1519 = vpack.c.bf16 %v1494, %v1493
    %v1520 = vpack.c.bf16 %v1496, %v1495
    %v1521 = vpack.c.bf16 %v1498, %v1497
    %v1522 = vpack.c.bf16 %v1500, %v1499
    %v1523 = vpack.c.bf16 %v1502, %v1501
    %v1524 = vpack.c.bf16 %v1504, %v1503
    %v1525 = vpack.c.bf16 %v1506, %v1505
    %v1526 = vpack.c.bf16 %v1508, %v1507
    %v1527 = vld [vmem:[%s3] sm:$0xff]
    %v1528 = vld [vmem:[%s3 + $0x8] sm:$0xf]
    %v1529 = vld [vmem:[%s3 + $0xc] sm:$0xff]
    %v1530 = vld [vmem:[%s3 + $0x14] sm:$0xf]
    %v1531 = vld [vmem:[%s3 + $0x18] sm:$0xff]
    %v1532 = vld [vmem:[%s3 + $0x20] sm:$0xf]
    %v1533 = vld [vmem:[%s3 + $0x24] sm:$0xff]
    %v1534 = vld [vmem:[%s3 + $0x2c] sm:$0xf]
    %v1535 = vld [vmem:[%s3 + $0x30] sm:$0xff]
    %v1536 = vld [vmem:[%s3 + $0x38] sm:$0xf]
    %v1537 = vld [vmem:[%s3 + $0x3c] sm:$0xff]
    %v1538 = vld [vmem:[%s3 + $0x44] sm:$0xf]
    %v1539 = vld [vmem:[%s3 + $0x48] sm:$0xff]
    %v1540 = vld [vmem:[%s3 + $0x50] sm:$0xf]
    %v1541 = vld [vmem:[%s3 + $0x54] sm:$0xff]
    %v1542 = vld [vmem:[%s3 + $0x5c] sm:$0xf]
    %v1543 = vld [vmem:[%s3 + $0x60] sm:$0xff]
    %v1544 = vld [vmem:[%s3 + $0x68] sm:$0xf]
    %v1545 = vld [vmem:[%s3 + $0x6c] sm:$0xff]
    %v1546 = vld [vmem:[%s3 + $0x74] sm:$0xf]
    %v1547 = vld [vmem:[%s3 + $0x78] sm:$0xff]
    %v1548 = vld [vmem:[%s3 + $0x80] sm:$0xf]
    %v1549 = vld [vmem:[%s3 + $0x84] sm:$0xff]
    %v1550 = vld [vmem:[%s3 + $0x8c] sm:$0xf]
    %v1551 = vld [vmem:[%s3 + $0x90] sm:$0xff]
    %v1552 = vld [vmem:[%s3 + $0x98] sm:$0xf]
    %v1553 = vld [vmem:[%s3 + $0x9c] sm:$0xff]
    %v1554 = vld [vmem:[%s3 + $0xa4] sm:$0xf]
    %v1555 = vld [vmem:[%s3 + $0xa8] sm:$0xff]
    %v1556 = vld [vmem:[%s3 + $0xb0] sm:$0xf]
    %v1557 = vld [vmem:[%s3 + $0xb4] sm:$0xff]
    %v1558 = vld [vmem:[%s3 + $0xbc] sm:$0xf]
    %v1559 = vld [vmem:[%s3 + $0xc0] sm:$0xff]
    %v1560 = vld [vmem:[%s3 + $0xc8] sm:$0xf]
    %v1561 = vld [vmem:[%s3 + $0xcc] sm:$0xff]
    %v1562 = vld [vmem:[%s3 + $0xd4] sm:$0xf]
    %v1563 = vld [vmem:[%s3 + $0xd8] sm:$0xff]
    %v1564 = vld [vmem:[%s3 + $0xe0] sm:$0xf]
    %v1565 = vld [vmem:[%s3 + $0xe4] sm:$0xff]
    %v1566 = vld [vmem:[%s3 + $0xec] sm:$0xf]
    %v1567 = vld [vmem:[%s3 + $0xf0] sm:$0xff]
    %v1568 = vld [vmem:[%s3 + $0xf8] sm:$0xf]
    %v1569 = vld [vmem:[%s3 + $0xfc] sm:$0xff]
    %v1570 = vld [vmem:[%s3 + $0x104] sm:$0xf]
    %v1571 = vld [vmem:[%s3 + $0x108] sm:$0xff]
    %v1572 = vld [vmem:[%s3 + $0x110] sm:$0xf]
    %v1573 = vld [vmem:[%s3 + $0x114] sm:$0xff]
    %v1574 = vld [vmem:[%s3 + $0x11c] sm:$0xf]
    %v1575 = vld [vmem:[%s3 + $0x120] sm:$0xff]
    %v1576 = vld [vmem:[%s3 + $0x128] sm:$0xf]
    %v1577 = vld [vmem:[%s3 + $0x12c] sm:$0xff]
    %v1578 = vld [vmem:[%s3 + $0x134] sm:$0xf]
    %v1579 = vld [vmem:[%s3 + $0x138] sm:$0xff]
    %v1580 = vld [vmem:[%s3 + $0x140] sm:$0xf]
    %v1581 = vld [vmem:[%s3 + $0x144] sm:$0xff]
    %v1582 = vld [vmem:[%s3 + $0x14c] sm:$0xf]
    %v1583 = vld [vmem:[%s3 + $0x150] sm:$0xff]
    %v1584 = vld [vmem:[%s3 + $0x158] sm:$0xf]
    %v1585 = vld [vmem:[%s3 + $0x15c] sm:$0xff]
    %v1586 = vld [vmem:[%s3 + $0x164] sm:$0xf]
    %v1587 = vld [vmem:[%s3 + $0x168] sm:$0xff]
    %v1588 = vld [vmem:[%s3 + $0x170] sm:$0xf]
    %v1589 = vld [vmem:[%s3 + $0x174] sm:$0xff]
    %v1590 = vld [vmem:[%s3 + $0x17c] sm:$0xf]
    %v1591 = vld [vmem:[%s3 + $0x180] sm:$0xff]
    %v1592 = vld [vmem:[%s3 + $0x188] sm:$0xf]
    %v1593 = vld [vmem:[%s3 + $0x18c] sm:$0xff]
    %v1594 = vld [vmem:[%s3 + $0x194] sm:$0xf]
    %v1595 = vld [vmem:[%s3 + $0x198] sm:$0xff]
    %v1596 = vld [vmem:[%s3 + $0x1a0] sm:$0xf]
    %v1597 = vld [vmem:[%s3 + $0x1a4] sm:$0xff]
    %v1598 = vld [vmem:[%s3 + $0x1ac] sm:$0xf]
    %v1599 = vld [vmem:[%s3 + $0x1b0] sm:$0xff]
    %v1600 = vld [vmem:[%s3 + $0x1b8] sm:$0xf]
    %v1601 = vld [vmem:[%s3 + $0x1bc] sm:$0xff]
    %v1602 = vld [vmem:[%s3 + $0x1c4] sm:$0xf]
    %v1603 = vld [vmem:[%s3 + $0x1c8] sm:$0xff]
    %v1604 = vld [vmem:[%s3 + $0x1d0] sm:$0xf]
    %v1605 = vld [vmem:[%s3 + $0x1d4] sm:$0xff]
    %v1606 = vld [vmem:[%s3 + $0x1dc] sm:$0xf]
    %v1607 = vld [vmem:[%s3 + $0x1e0] sm:$0xff]
    %v1608 = vld [vmem:[%s3 + $0x1e8] sm:$0xf]
    %v1609 = vld [vmem:[%s3 + $0x1ec] sm:$0xff]
    %v1610 = vld [vmem:[%s3 + $0x1f4] sm:$0xf]
    %v1611 = vld [vmem:[%s3 + $0x1f8] sm:$0xff]
    %v1612 = vld [vmem:[%s3 + $0x200] sm:$0xf]
    %v1613 = vld [vmem:[%s3 + $0x204] sm:$0xff]
    %v1614 = vld [vmem:[%s3 + $0x20c] sm:$0xf]
    %v1615 = vld [vmem:[%s3 + $0x210] sm:$0xff]
    %v1616 = vld [vmem:[%s3 + $0x218] sm:$0xf]
    %v1617 = vld [vmem:[%s3 + $0x21c] sm:$0xff]
    %v1618 = vld [vmem:[%s3 + $0x224] sm:$0xf]
    %v1619 = vld [vmem:[%s3 + $0x228] sm:$0xff]
    %v1620 = vld [vmem:[%s3 + $0x230] sm:$0xf]
    %v1621 = vld [vmem:[%s3 + $0x234] sm:$0xff]
    %v1622 = vld [vmem:[%s3 + $0x23c] sm:$0xf]
    %v1623 = vld [vmem:[%s3 + $0x240] sm:$0xff]
    %v1624 = vld [vmem:[%s3 + $0x248] sm:$0xf]
    %v1625 = vld [vmem:[%s3 + $0x24c] sm:$0xff]
    %v1626 = vld [vmem:[%s3 + $0x254] sm:$0xf]
    %v1627 = vld [vmem:[%s3 + $0x258] sm:$0xff]
    %v1628 = vld [vmem:[%s3 + $0x260] sm:$0xf]
    %v1629 = vld [vmem:[%s3 + $0x264] sm:$0xff]
    %v1630 = vld [vmem:[%s3 + $0x26c] sm:$0xf]
    %v1631 = vld [vmem:[%s3 + $0x270] sm:$0xff]
    %v1632 = vld [vmem:[%s3 + $0x278] sm:$0xf]
    %v1633 = vld [vmem:[%s3 + $0x27c] sm:$0xff]
    %v1634 = vld [vmem:[%s3 + $0x284] sm:$0xf]
    %v1635 = vld [vmem:[%s3 + $0x288] sm:$0xff]
    %v1636 = vld [vmem:[%s3 + $0x290] sm:$0xf]
    %v1637 = vld [vmem:[%s3 + $0x294] sm:$0xff]
    %v1638 = vld [vmem:[%s3 + $0x29c] sm:$0xf]
    %v1639 = vld [vmem:[%s3 + $0x2a0] sm:$0xff]
    %v1640 = vld [vmem:[%s3 + $0x2a8] sm:$0xf]
    %v1641 = vld [vmem:[%s3 + $0x2ac] sm:$0xff]
    %v1642 = vld [vmem:[%s3 + $0x2b4] sm:$0xf]
    %v1643 = vld [vmem:[%s3 + $0x2b8] sm:$0xff]
    %v1644 = vld [vmem:[%s3 + $0x2c0] sm:$0xf]
    %v1645 = vld [vmem:[%s3 + $0x2c4] sm:$0xff]
    %v1646 = vld [vmem:[%s3 + $0x2cc] sm:$0xf]
    %v1647 = vld [vmem:[%s3 + $0x2d0] sm:$0xff]
    %v1648 = vld [vmem:[%s3 + $0x2d8] sm:$0xf]
    %v1649 = vld [vmem:[%s3 + $0x2dc] sm:$0xff]
    %v1650 = vld [vmem:[%s3 + $0x2e4] sm:$0xf]
    %v1651 = vld [vmem:[%s3 + $0x2e8] sm:$0xff]
    %v1652 = vld [vmem:[%s3 + $0x2f0] sm:$0xf]
    %v1653 = vld [vmem:[%s3 + $0x2f4] sm:$0xff]
    %v1654 = vld [vmem:[%s3 + $0x2fc] sm:$0xf]
    %v1655 = vld [vmem:[%s3 + $0x300] sm:$0xff]
    %v1656 = vld [vmem:[%s3 + $0x308] sm:$0xf]
    %v1657 = vld [vmem:[%s3 + $0x30c] sm:$0xff]
    %v1658 = vld [vmem:[%s3 + $0x314] sm:$0xf]
    %v1659 = vld [vmem:[%s3 + $0x318] sm:$0xff]
    %v1660 = vld [vmem:[%s3 + $0x320] sm:$0xf]
    %v1661 = vld [vmem:[%s3 + $0x324] sm:$0xff]
    %v1662 = vld [vmem:[%s3 + $0x32c] sm:$0xf]
    %v1663 = vld [vmem:[%s3 + $0x330] sm:$0xff]
    %v1664 = vld [vmem:[%s3 + $0x338] sm:$0xf]
    %v1665 = vld [vmem:[%s3 + $0x33c] sm:$0xff]
    %v1666 = vld [vmem:[%s3 + $0x344] sm:$0xf]
    %v1667 = vld [vmem:[%s3 + $0x348] sm:$0xff]
    %v1668 = vld [vmem:[%s3 + $0x350] sm:$0xf]
    %v1669 = vld [vmem:[%s3 + $0x354] sm:$0xff]
    %v1670 = vld [vmem:[%s3 + $0x35c] sm:$0xf]
    %v1671 = vld [vmem:[%s3 + $0x360] sm:$0xff]
    %v1672 = vld [vmem:[%s3 + $0x368] sm:$0xf]
    %v1673 = vld [vmem:[%s3 + $0x36c] sm:$0xff]
    %v1674 = vld [vmem:[%s3 + $0x374] sm:$0xf]
    %v1675 = vld [vmem:[%s3 + $0x378] sm:$0xff]
    %v1676 = vld [vmem:[%s3 + $0x380] sm:$0xf]
    %v1677 = vld [vmem:[%s3 + $0x384] sm:$0xff]
    %v1678 = vld [vmem:[%s3 + $0x38c] sm:$0xf]
    %v1679 = vld [vmem:[%s3 + $0x390] sm:$0xff]
    %v1680 = vld [vmem:[%s3 + $0x398] sm:$0xf]
    %v1681 = vld [vmem:[%s3 + $0x39c] sm:$0xff]
    %v1682 = vld [vmem:[%s3 + $0x3a4] sm:$0xf]
    %v1683 = vld [vmem:[%s3 + $0x3a8] sm:$0xff]
    %v1684 = vld [vmem:[%s3 + $0x3b0] sm:$0xf]
    %v1685 = vld [vmem:[%s3 + $0x3b4] sm:$0xff]
    %v1686 = vld [vmem:[%s3 + $0x3bc] sm:$0xf]
    %v1687 = vld [vmem:[%s3 + $0x3c0] sm:$0xff]
    %v1688 = vld [vmem:[%s3 + $0x3c8] sm:$0xf]
    %v1851 = vunpack.c.l.b16 %v1527
    %v1852 = vunpack.c.h.b16 %v1527
    %v1853 = vunpack.c.l.b16 %v1528
    %v1854 = vunpack.c.l.b16 %v1529
    %v1855 = vunpack.c.h.b16 %v1529
    %v1856 = vunpack.c.l.b16 %v1530
    %v1857 = vunpack.c.l.b16 %v1531
    %v1858 = vunpack.c.h.b16 %v1531
    %v1859 = vunpack.c.l.b16 %v1532
    %v1860 = vunpack.c.l.b16 %v1533
    %v1861 = vunpack.c.h.b16 %v1533
    %v1862 = vunpack.c.l.b16 %v1534
    %v1863 = vunpack.c.l.b16 %v1535
    %v1864 = vunpack.c.h.b16 %v1535
    %v1865 = vunpack.c.l.b16 %v1536
    %v1866 = vunpack.c.l.b16 %v1537
    %v1867 = vunpack.c.h.b16 %v1537
    %v1868 = vunpack.c.l.b16 %v1538
    %v1869 = vunpack.c.l.b16 %v1539
    %v1870 = vunpack.c.h.b16 %v1539
    %v1871 = vunpack.c.l.b16 %v1540
    %v1872 = vunpack.c.l.b16 %v1541
    %v1873 = vunpack.c.h.b16 %v1541
    %v1874 = vunpack.c.l.b16 %v1542
    %v1875 = vunpack.c.l.b16 %v1543
    %v1876 = vunpack.c.h.b16 %v1543
    %v1877 = vunpack.c.l.b16 %v1544
    %v1878 = vunpack.c.l.b16 %v1545
    %v1879 = vunpack.c.h.b16 %v1545
    %v1880 = vunpack.c.l.b16 %v1546
    %v1881 = vunpack.c.l.b16 %v1547
    %v1882 = vunpack.c.h.b16 %v1547
    %v1883 = vunpack.c.l.b16 %v1548
    %v1884 = vunpack.c.l.b16 %v1549
    %v1885 = vunpack.c.h.b16 %v1549
    %v1886 = vunpack.c.l.b16 %v1550
    %v1887 = vunpack.c.l.b16 %v1551
    %v1888 = vunpack.c.h.b16 %v1551
    %v1889 = vunpack.c.l.b16 %v1552
    %v1890 = vunpack.c.l.b16 %v1553
    %v1891 = vunpack.c.h.b16 %v1553
    %v1892 = vunpack.c.l.b16 %v1554
    %v1893 = vunpack.c.l.b16 %v1555
    %v1894 = vunpack.c.h.b16 %v1555
    %v1895 = vunpack.c.l.b16 %v1556
    %v1896 = vunpack.c.l.b16 %v1557
    %v1897 = vunpack.c.h.b16 %v1557
    %v1898 = vunpack.c.l.b16 %v1558
    %v1899 = vunpack.c.l.b16 %v1559
    %v1900 = vunpack.c.h.b16 %v1559
    %v1901 = vunpack.c.l.b16 %v1560
    %v1902 = vunpack.c.l.b16 %v1561
    %v1903 = vunpack.c.h.b16 %v1561
    %v1904 = vunpack.c.l.b16 %v1562
    %v1905 = vunpack.c.l.b16 %v1563
    %v1906 = vunpack.c.h.b16 %v1563
    %v1907 = vunpack.c.l.b16 %v1564
    %v1908 = vunpack.c.l.b16 %v1565
    %v1909 = vunpack.c.h.b16 %v1565
    %v1910 = vunpack.c.l.b16 %v1566
    %v1911 = vunpack.c.l.b16 %v1567
    %v1912 = vunpack.c.h.b16 %v1567
    %v1913 = vunpack.c.l.b16 %v1568
    %v1914 = vunpack.c.l.b16 %v1569
    %v1915 = vunpack.c.h.b16 %v1569
    %v1916 = vunpack.c.l.b16 %v1570
    %v1917 = vunpack.c.l.b16 %v1571
    %v1918 = vunpack.c.h.b16 %v1571
    %v1919 = vunpack.c.l.b16 %v1572
    %v1920 = vunpack.c.l.b16 %v1573
    %v1921 = vunpack.c.h.b16 %v1573
    %v1922 = vunpack.c.l.b16 %v1574
    %v1923 = vunpack.c.l.b16 %v1575
    %v1924 = vunpack.c.h.b16 %v1575
    %v1925 = vunpack.c.l.b16 %v1576
    %v1926 = vunpack.c.l.b16 %v1577
    %v1927 = vunpack.c.h.b16 %v1577
    %v1928 = vunpack.c.l.b16 %v1578
    %v1929 = vunpack.c.l.b16 %v1579
    %v1930 = vunpack.c.h.b16 %v1579
    %v1931 = vunpack.c.l.b16 %v1580
    %v1932 = vunpack.c.l.b16 %v1581
    %v1933 = vunpack.c.h.b16 %v1581
    %v1934 = vunpack.c.l.b16 %v1582
    %v1935 = vunpack.c.l.b16 %v1583
    %v1936 = vunpack.c.h.b16 %v1583
    %v1937 = vunpack.c.l.b16 %v1584
    %v1938 = vunpack.c.l.b16 %v1585
    %v1939 = vunpack.c.h.b16 %v1585
    %v1940 = vunpack.c.l.b16 %v1586
    %v1941 = vunpack.c.l.b16 %v1587
    %v1942 = vunpack.c.h.b16 %v1587
    %v1943 = vunpack.c.l.b16 %v1588
    %v1944 = vunpack.c.l.b16 %v1589
    %v1945 = vunpack.c.h.b16 %v1589
    %v1946 = vunpack.c.l.b16 %v1590
    %v1947 = vunpack.c.l.b16 %v1591
    %v1948 = vunpack.c.h.b16 %v1591
    %v1949 = vunpack.c.l.b16 %v1592
    %v1950 = vunpack.c.l.b16 %v1593
    %v1951 = vunpack.c.h.b16 %v1593
    %v1952 = vunpack.c.l.b16 %v1594
    %v1953 = vunpack.c.l.b16 %v1595
    %v1954 = vunpack.c.h.b16 %v1595
    %v1955 = vunpack.c.l.b16 %v1596
    %v1956 = vunpack.c.l.b16 %v1597
    %v1957 = vunpack.c.h.b16 %v1597
    %v1958 = vunpack.c.l.b16 %v1598
    %v1959 = vunpack.c.l.b16 %v1599
    %v1960 = vunpack.c.h.b16 %v1599
    %v1961 = vunpack.c.l.b16 %v1600
    %v1962 = vunpack.c.l.b16 %v1601
    %v1963 = vunpack.c.h.b16 %v1601
    %v1964 = vunpack.c.l.b16 %v1602
    %v1965 = vunpack.c.l.b16 %v1603
    %v1966 = vunpack.c.h.b16 %v1603
    %v1967 = vunpack.c.l.b16 %v1604
    %v1968 = vunpack.c.l.b16 %v1605
    %v1969 = vunpack.c.h.b16 %v1605
    %v1970 = vunpack.c.l.b16 %v1606
    %v1971 = vunpack.c.l.b16 %v1607
    %v1972 = vunpack.c.h.b16 %v1607
    %v1973 = vunpack.c.l.b16 %v1608
    %v1974 = vunpack.c.l.b16 %v1609
    %v1975 = vunpack.c.h.b16 %v1609
    %v1976 = vunpack.c.l.b16 %v1610
    %v1977 = vunpack.c.l.b16 %v1611
    %v1978 = vunpack.c.h.b16 %v1611
    %v1979 = vunpack.c.l.b16 %v1612
    %v1980 = vunpack.c.l.b16 %v1613
    %v1981 = vunpack.c.h.b16 %v1613
    %v1982 = vunpack.c.l.b16 %v1614
    %v1983 = vunpack.c.l.b16 %v1615
    %v1984 = vunpack.c.h.b16 %v1615
    %v1985 = vunpack.c.l.b16 %v1616
    %v1986 = vunpack.c.l.b16 %v1617
    %v1987 = vunpack.c.h.b16 %v1617
    %v1988 = vunpack.c.l.b16 %v1618
    %v1989 = vunpack.c.l.b16 %v1619
    %v1990 = vunpack.c.h.b16 %v1619
    %v1991 = vunpack.c.l.b16 %v1620
    %v1992 = vunpack.c.l.b16 %v1621
    %v1993 = vunpack.c.h.b16 %v1621
    %v1994 = vunpack.c.l.b16 %v1622
    %v1995 = vunpack.c.l.b16 %v1623
    %v1996 = vunpack.c.h.b16 %v1623
    %v1997 = vunpack.c.l.b16 %v1624
    %v1998 = vunpack.c.l.b16 %v1625
    %v1999 = vunpack.c.h.b16 %v1625
    %v2000 = vunpack.c.l.b16 %v1626
    %v2001 = vunpack.c.l.b16 %v1627
    %v2002 = vunpack.c.h.b16 %v1627
    %v2003 = vunpack.c.l.b16 %v1628
    %v2004 = vunpack.c.l.b16 %v1629
    %v2005 = vunpack.c.h.b16 %v1629
    %v2006 = vunpack.c.l.b16 %v1630
    %v2007 = vunpack.c.l.b16 %v1631
    %v2008 = vunpack.c.h.b16 %v1631
    %v2009 = vunpack.c.l.b16 %v1632
    %v2010 = vunpack.c.l.b16 %v1633
    %v2011 = vunpack.c.h.b16 %v1633
    %v2012 = vunpack.c.l.b16 %v1634
    %v2013 = vunpack.c.l.b16 %v1635
    %v2014 = vunpack.c.h.b16 %v1635
    %v2015 = vunpack.c.l.b16 %v1636
    %v2016 = vunpack.c.l.b16 %v1637
    %v2017 = vunpack.c.h.b16 %v1637
    %v2018 = vunpack.c.l.b16 %v1638
    %v2019 = vunpack.c.l.b16 %v1639
    %v2020 = vunpack.c.h.b16 %v1639
    %v2021 = vunpack.c.l.b16 %v1640
    %v2022 = vunpack.c.l.b16 %v1641
    %v2023 = vunpack.c.h.b16 %v1641
    %v2024 = vunpack.c.l.b16 %v1642
    %v2025 = vunpack.c.l.b16 %v1643
    %v2026 = vunpack.c.h.b16 %v1643
    %v2027 = vunpack.c.l.b16 %v1644
    %v2028 = vunpack.c.l.b16 %v1645
    %v2029 = vunpack.c.h.b16 %v1645
    %v2030 = vunpack.c.l.b16 %v1646
    %v2031 = vunpack.c.l.b16 %v1647
    %v2032 = vunpack.c.h.b16 %v1647
    %v2033 = vunpack.c.l.b16 %v1648
    %v2034 = vunpack.c.l.b16 %v1649
    %v2035 = vunpack.c.h.b16 %v1649
    %v2036 = vunpack.c.l.b16 %v1650
    %v2037 = vunpack.c.l.b16 %v1651
    %v2038 = vunpack.c.h.b16 %v1651
    %v2039 = vunpack.c.l.b16 %v1652
    %v2040 = vunpack.c.l.b16 %v1653
    %v2041 = vunpack.c.h.b16 %v1653
    %v2042 = vunpack.c.l.b16 %v1654
    %v2043 = vunpack.c.l.b16 %v1655
    %v2044 = vunpack.c.h.b16 %v1655
    %v2045 = vunpack.c.l.b16 %v1656
    %v2046 = vunpack.c.l.b16 %v1657
    %v2047 = vunpack.c.h.b16 %v1657
    %v2048 = vunpack.c.l.b16 %v1658
    %v2049 = vunpack.c.l.b16 %v1659
    %v2050 = vunpack.c.h.b16 %v1659
    %v2051 = vunpack.c.l.b16 %v1660
    %v2052 = vunpack.c.l.b16 %v1661
    %v2053 = vunpack.c.h.b16 %v1661
    %v2054 = vunpack.c.l.b16 %v1662
    %v2055 = vunpack.c.l.b16 %v1663
    %v2056 = vunpack.c.h.b16 %v1663
    %v2057 = vunpack.c.l.b16 %v1664
    %v2058 = vunpack.c.l.b16 %v1665
    %v2059 = vunpack.c.h.b16 %v1665
    %v2060 = vunpack.c.l.b16 %v1666
    %v2061 = vunpack.c.l.b16 %v1667
    %v2062 = vunpack.c.h.b16 %v1667
    %v2063 = vunpack.c.l.b16 %v1668
    %v2064 = vunpack.c.l.b16 %v1669
    %v2065 = vunpack.c.h.b16 %v1669
    %v2066 = vunpack.c.l.b16 %v1670
    %v2067 = vunpack.c.l.b16 %v1671
    %v2068 = vunpack.c.h.b16 %v1671
    %v2069 = vunpack.c.l.b16 %v1672
    %v2070 = vunpack.c.l.b16 %v1673
    %v2071 = vunpack.c.h.b16 %v1673
    %v2072 = vunpack.c.l.b16 %v1674
    %v2073 = vunpack.c.l.b16 %v1675
    %v2074 = vunpack.c.h.b16 %v1675
    %v2075 = vunpack.c.l.b16 %v1676
    %v2076 = vunpack.c.l.b16 %v1677
    %v2077 = vunpack.c.h.b16 %v1677
    %v2078 = vunpack.c.l.b16 %v1678
    %v2079 = vunpack.c.l.b16 %v1679
    %v2080 = vunpack.c.h.b16 %v1679
    %v2081 = vunpack.c.l.b16 %v1680
    %v2082 = vunpack.c.l.b16 %v1681
    %v2083 = vunpack.c.h.b16 %v1681
    %v2084 = vunpack.c.l.b16 %v1682
    %v2085 = vunpack.c.l.b16 %v1683
    %v2086 = vunpack.c.h.b16 %v1683
    %v2087 = vunpack.c.l.b16 %v1684
    %v2088 = vunpack.c.l.b16 %v1685
    %v2089 = vunpack.c.h.b16 %v1685
    %v2090 = vunpack.c.l.b16 %v1686
    %v2091 = vunpack.c.l.b16 %v1687
    %v2092 = vunpack.c.h.b16 %v1687
    %v2093 = vunpack.c.l.b16 %v1688
    %v2094 = vpack.c.b16 %v1854, %v1851
    %v2095 = vpack.c.b16 %v1855, %v1852
    %v2096 = vpack.c.b16 %v1856, %v1853
    %v2097 = vpack.c.b16 %v1860, %v1857
    %v2098 = vpack.c.b16 %v1861, %v1858
    %v2099 = vpack.c.b16 %v1862, %v1859
    %v2100 = vpack.c.b16 %v1866, %v1863
    %v2101 = vpack.c.b16 %v1867, %v1864
    %v2102 = vpack.c.b16 %v1868, %v1865
    %v2103 = vpack.c.b16 %v1872, %v1869
    %v2104 = vpack.c.b16 %v1873, %v1870
    %v2105 = vpack.c.b16 %v1874, %v1871
    %v2106 = vpack.c.b16 %v1878, %v1875
    %v2107 = vpack.c.b16 %v1879, %v1876
    %v2108 = vpack.c.b16 %v1880, %v1877
    %v2109 = vpack.c.b16 %v1884, %v1881
    %v2110 = vpack.c.b16 %v1885, %v1882
    %v2111 = vpack.c.b16 %v1886, %v1883
    %v2112 = vpack.c.b16 %v1890, %v1887
    %v2113 = vpack.c.b16 %v1891, %v1888
    %v2114 = vpack.c.b16 %v1892, %v1889
    %v2115 = vpack.c.b16 %v1896, %v1893
    %v2116 = vpack.c.b16 %v1897, %v1894
    %v2117 = vpack.c.b16 %v1898, %v1895
    %v2118 = vpack.c.b16 %v1902, %v1899
    %v2119 = vpack.c.b16 %v1903, %v1900
    %v2120 = vpack.c.b16 %v1904, %v1901
    %v2121 = vpack.c.b16 %v1908, %v1905
    %v2122 = vpack.c.b16 %v1909, %v1906
    %v2123 = vpack.c.b16 %v1910, %v1907
    %v2124 = vpack.c.b16 %v1914, %v1911
    %v2125 = vpack.c.b16 %v1915, %v1912
    %v2126 = vpack.c.b16 %v1916, %v1913
    %v2127 = vpack.c.b16 %v1920, %v1917
    %v2128 = vpack.c.b16 %v1921, %v1918
    %v2129 = vpack.c.b16 %v1922, %v1919
    %v2130 = vpack.c.b16 %v1926, %v1923
    %v2131 = vpack.c.b16 %v1927, %v1924
    %v2132 = vpack.c.b16 %v1928, %v1925
    %v2133 = vpack.c.b16 %v1932, %v1929
    %v2134 = vpack.c.b16 %v1933, %v1930
    %v2135 = vpack.c.b16 %v1934, %v1931
    %v2136 = vpack.c.b16 %v1938, %v1935
    %v2137 = vpack.c.b16 %v1939, %v1936
    %v2138 = vpack.c.b16 %v1940, %v1937
    %v2139 = vpack.c.b16 %v1944, %v1941
    %v2140 = vpack.c.b16 %v1945, %v1942
    %v2141 = vpack.c.b16 %v1946, %v1943
    %v2142 = vpack.c.b16 %v1950, %v1947
    %v2143 = vpack.c.b16 %v1951, %v1948
    %v2144 = vpack.c.b16 %v1952, %v1949
    %v2145 = vpack.c.b16 %v1956, %v1953
    %v2146 = vpack.c.b16 %v1957, %v1954
    %v2147 = vpack.c.b16 %v1958, %v1955
    %v2148 = vpack.c.b16 %v1962, %v1959
    %v2149 = vpack.c.b16 %v1963, %v1960
    %v2150 = vpack.c.b16 %v1964, %v1961
    %v2151 = vpack.c.b16 %v1968, %v1965
    %v2152 = vpack.c.b16 %v1969, %v1966
    %v2153 = vpack.c.b16 %v1970, %v1967
    %v2154 = vpack.c.b16 %v1974, %v1971
    %v2155 = vpack.c.b16 %v1975, %v1972
    %v2156 = vpack.c.b16 %v1976, %v1973
    %v2157 = vpack.c.b16 %v1980, %v1977
    %v2158 = vpack.c.b16 %v1981, %v1978
    %v2159 = vpack.c.b16 %v1982, %v1979
    %v2160 = vpack.c.b16 %v1986, %v1983
    %v2161 = vpack.c.b16 %v1987, %v1984
    %v2162 = vpack.c.b16 %v1988, %v1985
    %v2163 = vpack.c.b16 %v1992, %v1989
    %v2164 = vpack.c.b16 %v1993, %v1990
    %v2165 = vpack.c.b16 %v1994, %v1991
    %v2166 = vpack.c.b16 %v1998, %v1995
    %v2167 = vpack.c.b16 %v1999, %v1996
    %v2168 = vpack.c.b16 %v2000, %v1997
    %v2169 = vpack.c.b16 %v2004, %v2001
    %v2170 = vpack.c.b16 %v2005, %v2002
    %v2171 = vpack.c.b16 %v2006, %v2003
    %v2172 = vpack.c.b16 %v2010, %v2007
    %v2173 = vpack.c.b16 %v2011, %v2008
    %v2174 = vpack.c.b16 %v2012, %v2009
    %v2175 = vpack.c.b16 %v2016, %v2013
    %v2176 = vpack.c.b16 %v2017, %v2014
    %v2177 = vpack.c.b16 %v2018, %v2015
    %v2178 = vpack.c.b16 %v2022, %v2019
    %v2179 = vpack.c.b16 %v2023, %v2020
    %v2180 = vpack.c.b16 %v2024, %v2021
    %v2181 = vpack.c.b16 %v2028, %v2025
    %v2182 = vpack.c.b16 %v2029, %v2026
    %v2183 = vpack.c.b16 %v2030, %v2027
    %v2184 = vpack.c.b16 %v2034, %v2031
    %v2185 = vpack.c.b16 %v2035, %v2032
    %v2186 = vpack.c.b16 %v2036, %v2033
    %v2187 = vpack.c.b16 %v2040, %v2037
    %v2188 = vpack.c.b16 %v2041, %v2038
    %v2189 = vpack.c.b16 %v2042, %v2039
    %v2190 = vpack.c.b16 %v2046, %v2043
    %v2191 = vpack.c.b16 %v2047, %v2044
    %v2192 = vpack.c.b16 %v2048, %v2045
    %v2193 = vpack.c.b16 %v2052, %v2049
    %v2194 = vpack.c.b16 %v2053, %v2050
    %v2195 = vpack.c.b16 %v2054, %v2051
    %v2196 = vpack.c.b16 %v2058, %v2055
    %v2197 = vpack.c.b16 %v2059, %v2056
    %v2198 = vpack.c.b16 %v2060, %v2057
    %v2199 = vpack.c.b16 %v2064, %v2061
    %v2200 = vpack.c.b16 %v2065, %v2062
    %v2201 = vpack.c.b16 %v2066, %v2063
    %v2202 = vpack.c.b16 %v2070, %v2067
    %v2203 = vpack.c.b16 %v2071, %v2068
    %v2204 = vpack.c.b16 %v2072, %v2069
    %v2205 = vpack.c.b16 %v2076, %v2073
    %v2206 = vpack.c.b16 %v2077, %v2074
    %v2207 = vpack.c.b16 %v2078, %v2075
    %v2208 = vpack.c.b16 %v2082, %v2079
    %v2209 = vpack.c.b16 %v2083, %v2080
    %v2210 = vpack.c.b16 %v2084, %v2081
    %v2211 = vpack.c.b16 %v2088, %v2085
    %v2212 = vpack.c.b16 %v2089, %v2086
    %v2213 = vpack.c.b16 %v2090, %v2087
    %v2214 = vpack.c.b16 %v2091, %v2091
    %v2215 = vpack.c.b16 %v2092, %v2092
    %v2216 = vpack.c.b16 %v2093, %v2093
    %vm2299 = vcmask 261120
    %v2301 = vsel %vm2299, %v2096, 0
    %v2304 = vsel %vm2299, %v2099, 0
    %v2307 = vsel %vm2299, %v2102, 0
    %v2310 = vsel %vm2299, %v2105, 0
    %v2313 = vsel %vm2299, %v2108, 0
    %v2316 = vsel %vm2299, %v2111, 0
    %v2319 = vsel %vm2299, %v2114, 0
    %v2322 = vsel %vm2299, %v2117, 0
    %v2325 = vsel %vm2299, %v2120, 0
    %v2328 = vsel %vm2299, %v2123, 0
    %v2331 = vsel %vm2299, %v2126, 0
    %v2334 = vsel %vm2299, %v2129, 0
    %v2337 = vsel %vm2299, %v2132, 0
    %v2340 = vsel %vm2299, %v2135, 0
    %v2343 = vsel %vm2299, %v2138, 0
    %v2346 = vsel %vm2299, %v2141, 0
    %v2349 = vsel %vm2299, %v2144, 0
    %v2352 = vsel %vm2299, %v2147, 0
    %v2355 = vsel %vm2299, %v2150, 0
    %v2358 = vsel %vm2299, %v2153, 0
    %v2361 = vsel %vm2299, %v2156, 0
    %v2364 = vsel %vm2299, %v2159, 0
    %v2367 = vsel %vm2299, %v2162, 0
    %v2370 = vsel %vm2299, %v2165, 0
    %v2373 = vsel %vm2299, %v2168, 0
    %v2376 = vsel %vm2299, %v2171, 0
    %v2379 = vsel %vm2299, %v2174, 0
    %v2382 = vsel %vm2299, %v2177, 0
    %v2385 = vsel %vm2299, %v2180, 0
    %v2388 = vsel %vm2299, %v2183, 0
    %v2391 = vsel %vm2299, %v2186, 0
    %v2394 = vsel %vm2299, %v2189, 0
    %v2397 = vsel %vm2299, %v2192, 0
    %v2400 = vsel %vm2299, %v2195, 0
    %v2403 = vsel %vm2299, %v2198, 0
    %v2406 = vsel %vm2299, %v2201, 0
    %v2409 = vsel %vm2299, %v2204, 0
    %v2412 = vsel %vm2299, %v2207, 0
    %v2415 = vsel %vm2299, %v2210, 0
    %v2418 = vsel %vm2299, %v2213, 0
    %v2421 = vsel %vm2299, %v2216, 0
    %2423 = vmatprep.subr.bf16.mxu0 0
    %2424 = vmatpush1.bf16.msra.mxu0 %v1509
    %2425 = vmatprep.subr.bf16.mxu0 0
    %2426 = vmatpush1.bf16.msra.mxu0 %v1510
    %2427 = vmatprep.subr.bf16.mxu0 0
    %2428 = vmatpush1.bf16.msra.mxu0 %v1511
    %2429 = vmatprep.subr.bf16.mxu0 0
    %2430 = vmatpush1.bf16.msra.mxu0 %v1512
    %2431 = vmatprep.subr.bf16.mxu0 0
    %2432 = vmatpush1.bf16.msra.mxu0 %v1513
    %2433 = vmatprep.subr.bf16.mxu0 0
    %2434 = vmatpush1.bf16.msra.mxu0 %v1514
    %2435 = vmatprep.subr.bf16.mxu0 0
    %2436 = vmatpush1.bf16.msra.mxu0 %v1515
    %2437 = vmatprep.subr.bf16.mxu0 0
    %2438 = vmatpush1.bf16.msra.mxu0 %v1516
    %2439 = vmatprep.subr.bf16.mxu0 0
    %2440 = vmatpush1.bf16.msra.mxu0 %v1517
    %2441 = vmatprep.subr.bf16.mxu0 0
    %2442 = vmatpush1.bf16.msra.mxu0 %v1518
    %2443 = vmatprep.subr.bf16.mxu0 0
    %2444 = vmatpush1.bf16.msra.mxu0 %v1519
    %2445 = vmatprep.subr.bf16.mxu0 0
    %2446 = vmatpush1.bf16.msra.mxu0 %v1520
    %2447 = vmatprep.subr.bf16.mxu0 0
    %2448 = vmatpush1.bf16.msra.mxu0 %v1521
    %2449 = vmatprep.subr.bf16.mxu0 0
    %2450 = vmatpush1.bf16.msra.mxu0 %v1522
    %2451 = vmatprep.subr.bf16.mxu0 0
    %2452 = vmatpush1.bf16.msra.mxu0 %v1523
    %2453 = vmatprep.subr.bf16.mxu0 0
    %2454 = vmatpush1.bf16.msra.mxu0 %v1524
    %2455 = vmatprep.mubr.bf16.mxu0 %v2095
    %2456 = vmatmul.mubr.bf16.gmra.mrb[0].mxu0 %v2094
    %v2457 = vpop.f32.mrb[0].mxu0
    %v2458 = vadd.f32 0.0, %v2457
    %v2459 = vpop.f32.mrb[0].mxu0
    %v2460 = vpop.f32.mrb[0].mxu0
    %v2461 = vadd.f32 0.0, %v2460
    %v2462 = vpop.f32.mrb[0].mxu0
    %2463 = vmatprep.mubr.bf16.mxu0 %v2098
    %2464 = vmatmul.mubr.bf16.gmra.mrb[0].mxu0 %v2097
    %v2465 = vpop.f32.mrb[0].mxu0
    %v2466 = vadd.f32 0.0, %v2465
    %v2467 = vpop.f32.mrb[0].mxu0
    %v2468 = vpop.f32.mrb[0].mxu0
    %v2469 = vadd.f32 0.0, %v2468
    %v2470 = vpop.f32.mrb[0].mxu0
    %2471 = vmatprep.mubr.bf16.mxu0 %v2101
    %2472 = vmatmul.mubr.bf16.gmra.mrb[0].mxu0 %v2100
    %v2473 = vpop.f32.mrb[0].mxu0
    %v2474 = vadd.f32 0.0, %v2473
    %v2475 = vpop.f32.mrb[0].mxu0
    %v2476 = vpop.f32.mrb[0].mxu0
    %v2477 = vadd.f32 0.0, %v2476
    %v2478 = vpop.f32.mrb[0].mxu0
    %2479 = vmatprep.mubr.bf16.mxu0 %v2104
    %2480 = vmatmul.mubr.bf16.gmra.mrb[0].mxu0 %v2103
    %v2481 = vpop.f32.mrb[0].mxu0
    %v2482 = vadd.f32 0.0, %v2481
    %v2483 = vpop.f32.mrb[0].mxu0
    %v2484 = vpop.f32.mrb[0].mxu0
    %v2485 = vadd.f32 0.0, %v2484
    %v2486 = vpop.f32.mrb[0].mxu0
    %2487 = vmatprep.mubr.bf16.mxu0 %v2107
    %2488 = vmatmul.mubr.bf16.gmra.mrb[0].mxu0 %v2106
    %v2489 = vpop.f32.mrb[0].mxu0
    %v2490 = vadd.f32 0.0, %v2489
    %v2491 = vpop.f32.mrb[0].mxu0
    %v2492 = vpop.f32.mrb[0].mxu0
    %v2493 = vadd.f32 0.0, %v2492
    %v2494 = vpop.f32.mrb[0].mxu0
    %2495 = vmatprep.mubr.bf16.mxu0 %v2110
    %2496 = vmatmul.mubr.bf16.gmra.mrb[0].mxu0 %v2109
    %v2497 = vpop.f32.mrb[0].mxu0
    %v2498 = vadd.f32 0.0, %v2497
    %v2499 = vpop.f32.mrb[0].mxu0
    %v2500 = vpop.f32.mrb[0].mxu0
    %v2501 = vadd.f32 0.0, %v2500
    %v2502 = vpop.f32.mrb[0].mxu0
    %2503 = vmatprep.mubr.bf16.mxu0 %v2113
    %2504 = vmatmul.mubr.bf16.gmra.mrb[0].mxu0 %v2112
    %v2505 = vpop.f32.mrb[0].mxu0
    %v2506 = vadd.f32 0.0, %v2505
    %v2507 = vpop.f32.mrb[0].mxu0
    %v2508 = vpop.f32.mrb[0].mxu0
    %v2509 = vadd.f32 0.0, %v2508
    %v2510 = vpop.f32.mrb[0].mxu0
    %2511 = vmatprep.mubr.bf16.mxu0 %v2116
    %2512 = vmatmul.mubr.bf16.gmra.mrb[0].mxu0 %v2115
    %v2513 = vpop.f32.mrb[0].mxu0
    %v2514 = vadd.f32 0.0, %v2513
    %v2515 = vpop.f32.mrb[0].mxu0
    %v2516 = vpop.f32.mrb[0].mxu0
    %v2517 = vadd.f32 0.0, %v2516
    %v2518 = vpop.f32.mrb[0].mxu0
    %2519 = vmatprep.mubr.bf16.mxu0 %v2119
    %2520 = vmatmul.mubr.bf16.gmra.mrb[0].mxu0 %v2118
    %v2521 = vpop.f32.mrb[0].mxu0
    %v2522 = vadd.f32 0.0, %v2521
    %v2523 = vpop.f32.mrb[0].mxu0
    %v2524 = vpop.f32.mrb[0].mxu0
    %v2525 = vadd.f32 0.0, %v2524
    %v2526 = vpop.f32.mrb[0].mxu0
    %2527 = vmatprep.mubr.bf16.mxu0 %v2122
    %2528 = vmatmul.mubr.bf16.gmra.mrb[0].mxu0 %v2121
    %v2529 = vpop.f32.mrb[0].mxu0
    %v2530 = vadd.f32 0.0, %v2529
    %v2531 = vpop.f32.mrb[0].mxu0
    %v2532 = vpop.f32.mrb[0].mxu0
    %v2533 = vadd.f32 0.0, %v2532
    %v2534 = vpop.f32.mrb[0].mxu0
    %2535 = vmatprep.mubr.bf16.mxu0 %v2125
    %2536 = vmatmul.mubr.bf16.gmra.mrb[0].mxu0 %v2124
    %v2537 = vpop.f32.mrb[0].mxu0
    %v2538 = vadd.f32 0.0, %v2537
    %v2539 = vpop.f32.mrb[0].mxu0
    %v2540 = vpop.f32.mrb[0].mxu0
    %v2541 = vadd.f32 0.0, %v2540
    %v2542 = vpop.f32.mrb[0].mxu0
    %2543 = vmatprep.mubr.bf16.mxu0 %v2128
    %2544 = vmatmul.mubr.bf16.gmra.mrb[0].mxu0 %v2127
    %v2545 = vpop.f32.mrb[0].mxu0
    %v2546 = vadd.f32 0.0, %v2545
    %v2547 = vpop.f32.mrb[0].mxu0
    %v2548 = vpop.f32.mrb[0].mxu0
    %v2549 = vadd.f32 0.0, %v2548
    %v2550 = vpop.f32.mrb[0].mxu0
    %2551 = vmatprep.mubr.bf16.mxu0 %v2131
    %2552 = vmatmul.mubr.bf16.gmra.mrb[0].mxu0 %v2130
    %v2553 = vpop.f32.mrb[0].mxu0
    %v2554 = vadd.f32 0.0, %v2553
    %v2555 = vpop.f32.mrb[0].mxu0
    %v2556 = vpop.f32.mrb[0].mxu0
    %v2557 = vadd.f32 0.0, %v2556
    %v2558 = vpop.f32.mrb[0].mxu0
    %2559 = vmatprep.mubr.bf16.mxu0 %v2134
    %2560 = vmatmul.mubr.bf16.gmra.mrb[0].mxu0 %v2133
    %v2561 = vpop.f32.mrb[0].mxu0
    %v2562 = vadd.f32 0.0, %v2561
    %v2563 = vpop.f32.mrb[0].mxu0
    %v2564 = vpop.f32.mrb[0].mxu0
    %v2565 = vadd.f32 0.0, %v2564
    %v2566 = vpop.f32.mrb[0].mxu0
    %2567 = vmatprep.mubr.bf16.mxu0 %v2137
    %2568 = vmatmul.mubr.bf16.gmra.mrb[0].mxu0 %v2136
    %v2569 = vpop.f32.mrb[0].mxu0
    %v2570 = vadd.f32 0.0, %v2569
    %v2571 = vpop.f32.mrb[0].mxu0
    %v2572 = vpop.f32.mrb[0].mxu0
    %v2573 = vadd.f32 0.0, %v2572
    %v2574 = vpop.f32.mrb[0].mxu0
    %2575 = vmatprep.mubr.bf16.mxu0 %v2140
    %2576 = vmatmul.mubr.bf16.gmra.mrb[0].mxu0 %v2139
    %v2577 = vpop.f32.mrb[0].mxu0
    %v2578 = vadd.f32 0.0, %v2577
    %v2579 = vpop.f32.mrb[0].mxu0
    %v2580 = vpop.f32.mrb[0].mxu0
    %v2581 = vadd.f32 0.0, %v2580
    %v2582 = vpop.f32.mrb[0].mxu0
    %2583 = vmatprep.mubr.bf16.mxu0 %v2143
    %2584 = vmatmul.mubr.bf16.gmra.mrb[0].mxu0 %v2142
    %v2585 = vpop.f32.mrb[0].mxu0
    %v2586 = vadd.f32 0.0, %v2585
    %v2587 = vpop.f32.mrb[0].mxu0
    %v2588 = vpop.f32.mrb[0].mxu0
    %v2589 = vadd.f32 0.0, %v2588
    %v2590 = vpop.f32.mrb[0].mxu0
    %2591 = vmatprep.mubr.bf16.mxu0 %v2146
    %2592 = vmatmul.mubr.bf16.gmra.mrb[0].mxu0 %v2145
    %v2593 = vpop.f32.mrb[0].mxu0
    %v2594 = vadd.f32 0.0, %v2593
    %v2595 = vpop.f32.mrb[0].mxu0
    %v2596 = vpop.f32.mrb[0].mxu0
    %v2597 = vadd.f32 0.0, %v2596
    %v2598 = vpop.f32.mrb[0].mxu0
    %2599 = vmatprep.mubr.bf16.mxu0 %v2149
    %2600 = vmatmul.mubr.bf16.gmra.mrb[0].mxu0 %v2148
    %v2601 = vpop.f32.mrb[0].mxu0
    %v2602 = vadd.f32 0.0, %v2601
    %v2603 = vpop.f32.mrb[0].mxu0
    %v2604 = vpop.f32.mrb[0].mxu0
    %v2605 = vadd.f32 0.0, %v2604
    %v2606 = vpop.f32.mrb[0].mxu0
    %2607 = vmatprep.mubr.bf16.mxu0 %v2152
    %2608 = vmatmul.mubr.bf16.gmra.mrb[0].mxu0 %v2151
    %v2609 = vpop.f32.mrb[0].mxu0
    %v2610 = vadd.f32 0.0, %v2609
    %v2611 = vpop.f32.mrb[0].mxu0
    %v2612 = vpop.f32.mrb[0].mxu0
    %v2613 = vadd.f32 0.0, %v2612
    %v2614 = vpop.f32.mrb[0].mxu0
    %2615 = vmatprep.mubr.bf16.mxu0 %v2155
    %2616 = vmatmul.mubr.bf16.gmra.mrb[0].mxu0 %v2154
    %v2617 = vpop.f32.mrb[0].mxu0
    %v2618 = vadd.f32 0.0, %v2617
    %v2619 = vpop.f32.mrb[0].mxu0
    %v2620 = vpop.f32.mrb[0].mxu0
    %v2621 = vadd.f32 0.0, %v2620
    %v2622 = vpop.f32.mrb[0].mxu0
    %2623 = vmatprep.mubr.bf16.mxu0 %v2158
    %2624 = vmatmul.mubr.bf16.gmra.mrb[0].mxu0 %v2157
    %v2625 = vpop.f32.mrb[0].mxu0
    %v2626 = vadd.f32 0.0, %v2625
    %v2627 = vpop.f32.mrb[0].mxu0
    %v2628 = vpop.f32.mrb[0].mxu0
    %v2629 = vadd.f32 0.0, %v2628
    %v2630 = vpop.f32.mrb[0].mxu0
    %2631 = vmatprep.mubr.bf16.mxu0 %v2161
    %2632 = vmatmul.mubr.bf16.gmra.mrb[0].mxu0 %v2160
    %v2633 = vpop.f32.mrb[0].mxu0
    %v2634 = vadd.f32 0.0, %v2633
    %v2635 = vpop.f32.mrb[0].mxu0
    %v2636 = vpop.f32.mrb[0].mxu0
    %v2637 = vadd.f32 0.0, %v2636
    %v2638 = vpop.f32.mrb[0].mxu0
    %2639 = vmatprep.mubr.bf16.mxu0 %v2164
    %2640 = vmatmul.mubr.bf16.gmra.mrb[0].mxu0 %v2163
    %v2641 = vpop.f32.mrb[0].mxu0
    %v2642 = vadd.f32 0.0, %v2641
    %v2643 = vpop.f32.mrb[0].mxu0
    %v2644 = vpop.f32.mrb[0].mxu0
    %v2645 = vadd.f32 0.0, %v2644
    %v2646 = vpop.f32.mrb[0].mxu0
    %2647 = vmatprep.mubr.bf16.mxu0 %v2167
    %2648 = vmatmul.mubr.bf16.gmra.mrb[0].mxu0 %v2166
    %v2649 = vpop.f32.mrb[0].mxu0
    %v2650 = vadd.f32 0.0, %v2649
    %v2651 = vpop.f32.mrb[0].mxu0
    %v2652 = vpop.f32.mrb[0].mxu0
    %v2653 = vadd.f32 0.0, %v2652
    %v2654 = vpop.f32.mrb[0].mxu0
    %2655 = vmatprep.mubr.bf16.mxu0 %v2170
    %2656 = vmatmul.mubr.bf16.gmra.mrb[0].mxu0 %v2169
    %v2657 = vpop.f32.mrb[0].mxu0
    %v2658 = vadd.f32 0.0, %v2657
    %v2659 = vpop.f32.mrb[0].mxu0
    %v2660 = vpop.f32.mrb[0].mxu0
    %v2661 = vadd.f32 0.0, %v2660
    %v2662 = vpop.f32.mrb[0].mxu0
    %2663 = vmatprep.mubr.bf16.mxu0 %v2173
    %2664 = vmatmul.mubr.bf16.gmra.mrb[0].mxu0 %v2172
    %v2665 = vpop.f32.mrb[0].mxu0
    %v2666 = vadd.f32 0.0, %v2665
    %v2667 = vpop.f32.mrb[0].mxu0
    %v2668 = vpop.f32.mrb[0].mxu0
    %v2669 = vadd.f32 0.0, %v2668
    %v2670 = vpop.f32.mrb[0].mxu0
    %2671 = vmatprep.mubr.bf16.mxu0 %v2176
    %2672 = vmatmul.mubr.bf16.gmra.mrb[0].mxu0 %v2175
    %v2673 = vpop.f32.mrb[0].mxu0
    %v2674 = vadd.f32 0.0, %v2673
    %v2675 = vpop.f32.mrb[0].mxu0
    %v2676 = vpop.f32.mrb[0].mxu0
    %v2677 = vadd.f32 0.0, %v2676
    %v2678 = vpop.f32.mrb[0].mxu0
    %2679 = vmatprep.mubr.bf16.mxu0 %v2179
    %2680 = vmatmul.mubr.bf16.gmra.mrb[0].mxu0 %v2178
    %v2681 = vpop.f32.mrb[0].mxu0
    %v2682 = vadd.f32 0.0, %v2681
    %v2683 = vpop.f32.mrb[0].mxu0
    %v2684 = vpop.f32.mrb[0].mxu0
    %v2685 = vadd.f32 0.0, %v2684
    %v2686 = vpop.f32.mrb[0].mxu0
    %2687 = vmatprep.mubr.bf16.mxu0 %v2182
    %2688 = vmatmul.mubr.bf16.gmra.mrb[0].mxu0 %v2181
    %v2689 = vpop.f32.mrb[0].mxu0
    %v2690 = vadd.f32 0.0, %v2689
    %v2691 = vpop.f32.mrb[0].mxu0
    %v2692 = vpop.f32.mrb[0].mxu0
    %v2693 = vadd.f32 0.0, %v2692
    %v2694 = vpop.f32.mrb[0].mxu0
    %2695 = vmatprep.mubr.bf16.mxu0 %v2185
    %2696 = vmatmul.mubr.bf16.gmra.mrb[0].mxu0 %v2184
    %v2697 = vpop.f32.mrb[0].mxu0
    %v2698 = vadd.f32 0.0, %v2697
    %v2699 = vpop.f32.mrb[0].mxu0
    %v2700 = vpop.f32.mrb[0].mxu0
    %v2701 = vadd.f32 0.0, %v2700
    %v2702 = vpop.f32.mrb[0].mxu0
    %2703 = vmatprep.mubr.bf16.mxu0 %v2188
    %2704 = vmatmul.mubr.bf16.gmra.mrb[0].mxu0 %v2187
    %v2705 = vpop.f32.mrb[0].mxu0
    %v2706 = vadd.f32 0.0, %v2705
    %v2707 = vpop.f32.mrb[0].mxu0
    %v2708 = vpop.f32.mrb[0].mxu0
    %v2709 = vadd.f32 0.0, %v2708
    %v2710 = vpop.f32.mrb[0].mxu0
    %2711 = vmatprep.mubr.bf16.mxu0 %v2191
    %2712 = vmatmul.mubr.bf16.gmra.mrb[0].mxu0 %v2190
    %v2713 = vpop.f32.mrb[0].mxu0
    %v2714 = vadd.f32 0.0, %v2713
    %v2715 = vpop.f32.mrb[0].mxu0
    %v2716 = vpop.f32.mrb[0].mxu0
    %v2717 = vadd.f32 0.0, %v2716
    %v2718 = vpop.f32.mrb[0].mxu0
    %2719 = vmatprep.mubr.bf16.mxu0 %v2194
    %2720 = vmatmul.mubr.bf16.gmra.mrb[0].mxu0 %v2193
    %v2721 = vpop.f32.mrb[0].mxu0
    %v2722 = vadd.f32 0.0, %v2721
    %v2723 = vpop.f32.mrb[0].mxu0
    %v2724 = vpop.f32.mrb[0].mxu0
    %v2725 = vadd.f32 0.0, %v2724
    %v2726 = vpop.f32.mrb[0].mxu0
    %2727 = vmatprep.mubr.bf16.mxu0 %v2197
    %2728 = vmatmul.mubr.bf16.gmra.mrb[0].mxu0 %v2196
    %v2729 = vpop.f32.mrb[0].mxu0
    %v2730 = vadd.f32 0.0, %v2729
    %v2731 = vpop.f32.mrb[0].mxu0
    %v2732 = vpop.f32.mrb[0].mxu0
    %v2733 = vadd.f32 0.0, %v2732
    %v2734 = vpop.f32.mrb[0].mxu0
    %2735 = vmatprep.mubr.bf16.mxu0 %v2200
    %2736 = vmatmul.mubr.bf16.gmra.mrb[0].mxu0 %v2199
    %v2737 = vpop.f32.mrb[0].mxu0
    %v2738 = vadd.f32 0.0, %v2737
    %v2739 = vpop.f32.mrb[0].mxu0
    %v2740 = vpop.f32.mrb[0].mxu0
    %v2741 = vadd.f32 0.0, %v2740
    %v2742 = vpop.f32.mrb[0].mxu0
    %2743 = vmatprep.mubr.bf16.mxu0 %v2203
    %2744 = vmatmul.mubr.bf16.gmra.mrb[0].mxu0 %v2202
    %v2745 = vpop.f32.mrb[0].mxu0
    %v2746 = vadd.f32 0.0, %v2745
    %v2747 = vpop.f32.mrb[0].mxu0
    %v2748 = vpop.f32.mrb[0].mxu0
    %v2749 = vadd.f32 0.0, %v2748
    %v2750 = vpop.f32.mrb[0].mxu0
    %2751 = vmatprep.mubr.bf16.mxu0 %v2206
    %2752 = vmatmul.mubr.bf16.gmra.mrb[0].mxu0 %v2205
    %v2753 = vpop.f32.mrb[0].mxu0
    %v2754 = vadd.f32 0.0, %v2753
    %v2755 = vpop.f32.mrb[0].mxu0
    %v2756 = vpop.f32.mrb[0].mxu0
    %v2757 = vadd.f32 0.0, %v2756
    %v2758 = vpop.f32.mrb[0].mxu0
    %2759 = vmatprep.mubr.bf16.mxu0 %v2209
    %2760 = vmatmul.mubr.bf16.gmra.mrb[0].mxu0 %v2208
    %v2761 = vpop.f32.mrb[0].mxu0
    %v2762 = vadd.f32 0.0, %v2761
    %v2763 = vpop.f32.mrb[0].mxu0
    %v2764 = vpop.f32.mrb[0].mxu0
    %v2765 = vadd.f32 0.0, %v2764
    %v2766 = vpop.f32.mrb[0].mxu0
    %2767 = vmatprep.mubr.bf16.mxu0 %v2212
    %2768 = vmatmul.mubr.bf16.gmra.mrb[0].mxu0 %v2211
    %v2769 = vpop.f32.mrb[0].mxu0
    %v2770 = vadd.f32 0.0, %v2769
    %v2771 = vpop.f32.mrb[0].mxu0
    %v2772 = vpop.f32.mrb[0].mxu0
    %v2773 = vadd.f32 0.0, %v2772
    %v2774 = vpop.f32.mrb[0].mxu0
    %2775 = vmatprep.mubr.bf16.mxu0 %v2215
    %2776 = vmatmul.mubr.bf16.gmra.mrb[0].mxu0 %v2214
    %v2777 = vpop.f32.mrb[0].mxu0
    %v2778 = vadd.f32 0.0, %v2777
    %v2779 = vpop.f32.mrb[0].mxu0
    %v2780 = vpop.f32.mrb[0].mxu0
    %v2781 = vpop.f32.mrb[0].mxu0
    %2782 = vdwg.mxu0
    %2783 = vmatprep.subr.bf16.mxu0 0
    %2784 = vmatpush1.bf16.msra.mxu0 %v1525
    %2785 = vmatprep.subr.bf16.mxu0 0
    %2786 = vmatpush1.bf16.msra.mxu0 %v1526
    %2787 = vmatprep.subr.bf16.mxu0 0
    %2788 = vmatpush1.bf16.msra.mxu0 0
    %2789 = vmatprep.subr.bf16.mxu0 0
    %2790 = vmatpush1.bf16.msra.mxu0 0
    %2791 = vmatprep.subr.bf16.mxu0 0
    %2792 = vmatpush1.bf16.msra.mxu0 0
    %2793 = vmatprep.subr.bf16.mxu0 0
    %2794 = vmatpush1.bf16.msra.mxu0 0
    %2795 = vmatprep.subr.bf16.mxu0 0
    %2796 = vmatpush1.bf16.msra.mxu0 0
    %2797 = vmatprep.subr.bf16.mxu0 0
    %2798 = vmatpush1.bf16.msra.mxu0 0
    %2799 = vmatprep.subr.bf16.mxu0 0
    %2800 = vmatpush1.bf16.msra.mxu0 0
    %2801 = vmatprep.subr.bf16.mxu0 0
    %2802 = vmatpush1.bf16.msra.mxu0 0
    %2803 = vmatprep.subr.bf16.mxu0 0
    %2804 = vmatpush1.bf16.msra.mxu0 0
    %2805 = vmatprep.subr.bf16.mxu0 0
    %2806 = vmatpush1.bf16.msra.mxu0 0
    %2807 = vmatprep.subr.bf16.mxu0 0
    %2808 = vmatpush1.bf16.msra.mxu0 0
    %2809 = vmatprep.subr.bf16.mxu0 0
    %2810 = vmatpush1.bf16.msra.mxu0 0
    %2811 = vmatprep.subr.bf16.mxu0 0
    %2812 = vmatpush1.bf16.msra.mxu0 0
    %2813 = vmatprep.subr.bf16.mxu0 0
    %2814 = vmatpush1.bf16.msra.mxu0 0
    %2815 = vmatprep.mubr.bf16.mxu0 0
    %2816 = vmatmul.mubr.bf16.gmra.mrb[0].mxu0 %v2301
    %v2817 = vpop.f32.mrb[0].mxu0
    %v2818 = vadd.f32 %v2458, %v2817
    %v2819 = vpop.f32.mrb[0].mxu0
    %v2820 = vpop.f32.mrb[0].mxu0
    %v2821 = vadd.f32 %v2461, %v2820
    %v2822 = vpop.f32.mrb[0].mxu0
    %2823 = vmatprep.mubr.bf16.mxu0 0
    %2824 = vmatmul.mubr.bf16.gmra.mrb[0].mxu0 %v2304
    %v2825 = vpop.f32.mrb[0].mxu0
    %v2826 = vadd.f32 %v2466, %v2825
    %v2827 = vpop.f32.mrb[0].mxu0
    %v2828 = vpop.f32.mrb[0].mxu0
    %v2829 = vadd.f32 %v2469, %v2828
    %v2830 = vpop.f32.mrb[0].mxu0
    %2831 = vmatprep.mubr.bf16.mxu0 0
    %2832 = vmatmul.mubr.bf16.gmra.mrb[0].mxu0 %v2307
    %v2833 = vpop.f32.mrb[0].mxu0
    %v2834 = vadd.f32 %v2474, %v2833
    %v2835 = vpop.f32.mrb[0].mxu0
    %v2836 = vpop.f32.mrb[0].mxu0
    %v2837 = vadd.f32 %v2477, %v2836
    %v2838 = vpop.f32.mrb[0].mxu0
    %2839 = vmatprep.mubr.bf16.mxu0 0
    %2840 = vmatmul.mubr.bf16.gmra.mrb[0].mxu0 %v2310
    %v2841 = vpop.f32.mrb[0].mxu0
    %v2842 = vadd.f32 %v2482, %v2841
    %v2843 = vpop.f32.mrb[0].mxu0
    %v2844 = vpop.f32.mrb[0].mxu0
    %v2845 = vadd.f32 %v2485, %v2844
    %v2846 = vpop.f32.mrb[0].mxu0
    %2847 = vmatprep.mubr.bf16.mxu0 0
    %2848 = vmatmul.mubr.bf16.gmra.mrb[0].mxu0 %v2313
    %v2849 = vpop.f32.mrb[0].mxu0
    %v2850 = vadd.f32 %v2490, %v2849
    %v2851 = vpop.f32.mrb[0].mxu0
    %v2852 = vpop.f32.mrb[0].mxu0
    %v2853 = vadd.f32 %v2493, %v2852
    %v2854 = vpop.f32.mrb[0].mxu0
    %2855 = vmatprep.mubr.bf16.mxu0 0
    %2856 = vmatmul.mubr.bf16.gmra.mrb[0].mxu0 %v2316
    %v2857 = vpop.f32.mrb[0].mxu0
    %v2858 = vadd.f32 %v2498, %v2857
    %v2859 = vpop.f32.mrb[0].mxu0
    %v2860 = vpop.f32.mrb[0].mxu0
    %v2861 = vadd.f32 %v2501, %v2860
    %v2862 = vpop.f32.mrb[0].mxu0
    %2863 = vmatprep.mubr.bf16.mxu0 0
    %2864 = vmatmul.mubr.bf16.gmra.mrb[0].mxu0 %v2319
    %v2865 = vpop.f32.mrb[0].mxu0
    %v2866 = vadd.f32 %v2506, %v2865
    %v2867 = vpop.f32.mrb[0].mxu0
    %v2868 = vpop.f32.mrb[0].mxu0
    %v2869 = vadd.f32 %v2509, %v2868
    %v2870 = vpop.f32.mrb[0].mxu0
    %2871 = vmatprep.mubr.bf16.mxu0 0
    %2872 = vmatmul.mubr.bf16.gmra.mrb[0].mxu0 %v2322
    %v2873 = vpop.f32.mrb[0].mxu0
    %v2874 = vadd.f32 %v2514, %v2873
    %v2875 = vpop.f32.mrb[0].mxu0
    %v2876 = vpop.f32.mrb[0].mxu0
    %v2877 = vadd.f32 %v2517, %v2876
    %v2878 = vpop.f32.mrb[0].mxu0
    %2879 = vmatprep.mubr.bf16.mxu0 0
    %2880 = vmatmul.mubr.bf16.gmra.mrb[0].mxu0 %v2325
    %v2881 = vpop.f32.mrb[0].mxu0
    %v2882 = vadd.f32 %v2522, %v2881
    %v2883 = vpop.f32.mrb[0].mxu0
    %v2884 = vpop.f32.mrb[0].mxu0
    %v2885 = vadd.f32 %v2525, %v2884
    %v2886 = vpop.f32.mrb[0].mxu0
    %2887 = vmatprep.mubr.bf16.mxu0 0
    %2888 = vmatmul.mubr.bf16.gmra.mrb[0].mxu0 %v2328
    %v2889 = vpop.f32.mrb[0].mxu0
    %v2890 = vadd.f32 %v2530, %v2889
    %v2891 = vpop.f32.mrb[0].mxu0
    %v2892 = vpop.f32.mrb[0].mxu0
    %v2893 = vadd.f32 %v2533, %v2892
    %v2894 = vpop.f32.mrb[0].mxu0
    %2895 = vmatprep.mubr.bf16.mxu0 0
    %2896 = vmatmul.mubr.bf16.gmra.mrb[0].mxu0 %v2331
    %v2897 = vpop.f32.mrb[0].mxu0
    %v2898 = vadd.f32 %v2538, %v2897
    %v2899 = vpop.f32.mrb[0].mxu0
    %v2900 = vpop.f32.mrb[0].mxu0
    %v2901 = vadd.f32 %v2541, %v2900
    %v2902 = vpop.f32.mrb[0].mxu0
    %2903 = vmatprep.mubr.bf16.mxu0 0
    %2904 = vmatmul.mubr.bf16.gmra.mrb[0].mxu0 %v2334
    %v2905 = vpop.f32.mrb[0].mxu0
    %v2906 = vadd.f32 %v2546, %v2905
    %v2907 = vpop.f32.mrb[0].mxu0
    %v2908 = vpop.f32.mrb[0].mxu0
    %v2909 = vadd.f32 %v2549, %v2908
    %v2910 = vpop.f32.mrb[0].mxu0
    %2911 = vmatprep.mubr.bf16.mxu0 0
    %2912 = vmatmul.mubr.bf16.gmra.mrb[0].mxu0 %v2337
    %v2913 = vpop.f32.mrb[0].mxu0
    %v2914 = vadd.f32 %v2554, %v2913
    %v2915 = vpop.f32.mrb[0].mxu0
    %v2916 = vpop.f32.mrb[0].mxu0
    %v2917 = vadd.f32 %v2557, %v2916
    %v2918 = vpop.f32.mrb[0].mxu0
    %2919 = vmatprep.mubr.bf16.mxu0 0
    %2920 = vmatmul.mubr.bf16.gmra.mrb[0].mxu0 %v2340
    %v2921 = vpop.f32.mrb[0].mxu0
    %v2922 = vadd.f32 %v2562, %v2921
    %v2923 = vpop.f32.mrb[0].mxu0
    %v2924 = vpop.f32.mrb[0].mxu0
    %v2925 = vadd.f32 %v2565, %v2924
    %v2926 = vpop.f32.mrb[0].mxu0
    %2927 = vmatprep.mubr.bf16.mxu0 0
    %2928 = vmatmul.mubr.bf16.gmra.mrb[0].mxu0 %v2343
    %v2929 = vpop.f32.mrb[0].mxu0
    %v2930 = vadd.f32 %v2570, %v2929
    %v2931 = vpop.f32.mrb[0].mxu0
    %v2932 = vpop.f32.mrb[0].mxu0
    %v2933 = vadd.f32 %v2573, %v2932
    %v2934 = vpop.f32.mrb[0].mxu0
    %2935 = vmatprep.mubr.bf16.mxu0 0
    %2936 = vmatmul.mubr.bf16.gmra.mrb[0].mxu0 %v2346
    %v2937 = vpop.f32.mrb[0].mxu0
    %v2938 = vadd.f32 %v2578, %v2937
    %v2939 = vpop.f32.mrb[0].mxu0
    %v2940 = vpop.f32.mrb[0].mxu0
    %v2941 = vadd.f32 %v2581, %v2940
    %v2942 = vpop.f32.mrb[0].mxu0
    %2943 = vmatprep.mubr.bf16.mxu0 0
    %2944 = vmatmul.mubr.bf16.gmra.mrb[0].mxu0 %v2349
    %v2945 = vpop.f32.mrb[0].mxu0
    %v2946 = vadd.f32 %v2586, %v2945
    %v2947 = vpop.f32.mrb[0].mxu0
    %v2948 = vpop.f32.mrb[0].mxu0
    %v2949 = vadd.f32 %v2589, %v2948
    %v2950 = vpop.f32.mrb[0].mxu0
    %2951 = vmatprep.mubr.bf16.mxu0 0
    %2952 = vmatmul.mubr.bf16.gmra.mrb[0].mxu0 %v2352
    %v2953 = vpop.f32.mrb[0].mxu0
    %v2954 = vadd.f32 %v2594, %v2953
    %v2955 = vpop.f32.mrb[0].mxu0
    %v2956 = vpop.f32.mrb[0].mxu0
    %v2957 = vadd.f32 %v2597, %v2956
    %v2958 = vpop.f32.mrb[0].mxu0
    %2959 = vmatprep.mubr.bf16.mxu0 0
    %2960 = vmatmul.mubr.bf16.gmra.mrb[0].mxu0 %v2355
    %v2961 = vpop.f32.mrb[0].mxu0
    %v2962 = vadd.f32 %v2602, %v2961
    %v2963 = vpop.f32.mrb[0].mxu0
    %v2964 = vpop.f32.mrb[0].mxu0
    %v2965 = vadd.f32 %v2605, %v2964
    %v2966 = vpop.f32.mrb[0].mxu0
    %2967 = vmatprep.mubr.bf16.mxu0 0
    %2968 = vmatmul.mubr.bf16.gmra.mrb[0].mxu0 %v2358
    %v2969 = vpop.f32.mrb[0].mxu0
    %v2970 = vadd.f32 %v2610, %v2969
    %v2971 = vpop.f32.mrb[0].mxu0
    %v2972 = vpop.f32.mrb[0].mxu0
    %v2973 = vadd.f32 %v2613, %v2972
    %v2974 = vpop.f32.mrb[0].mxu0
    %2975 = vmatprep.mubr.bf16.mxu0 0
    %2976 = vmatmul.mubr.bf16.gmra.mrb[0].mxu0 %v2361
    %v2977 = vpop.f32.mrb[0].mxu0
    %v2978 = vadd.f32 %v2618, %v2977
    %v2979 = vpop.f32.mrb[0].mxu0
    %v2980 = vpop.f32.mrb[0].mxu0
    %v2981 = vadd.f32 %v2621, %v2980
    %v2982 = vpop.f32.mrb[0].mxu0
    %2983 = vmatprep.mubr.bf16.mxu0 0
    %2984 = vmatmul.mubr.bf16.gmra.mrb[0].mxu0 %v2364
    %v2985 = vpop.f32.mrb[0].mxu0
    %v2986 = vadd.f32 %v2626, %v2985
    %v2987 = vpop.f32.mrb[0].mxu0
    %v2988 = vpop.f32.mrb[0].mxu0
    %v2989 = vadd.f32 %v2629, %v2988
    %v2990 = vpop.f32.mrb[0].mxu0
    %2991 = vmatprep.mubr.bf16.mxu0 0
    %2992 = vmatmul.mubr.bf16.gmra.mrb[0].mxu0 %v2367
    %v2993 = vpop.f32.mrb[0].mxu0
    %v2994 = vadd.f32 %v2634, %v2993
    %v2995 = vpop.f32.mrb[0].mxu0
    %v2996 = vpop.f32.mrb[0].mxu0
    %v2997 = vadd.f32 %v2637, %v2996
    %v2998 = vpop.f32.mrb[0].mxu0
    %2999 = vmatprep.mubr.bf16.mxu0 0
    %3000 = vmatmul.mubr.bf16.gmra.mrb[0].mxu0 %v2370
    %v3001 = vpop.f32.mrb[0].mxu0
    %v3002 = vadd.f32 %v2642, %v3001
    %v3003 = vpop.f32.mrb[0].mxu0
    %v3004 = vpop.f32.mrb[0].mxu0
    %v3005 = vadd.f32 %v2645, %v3004
    %v3006 = vpop.f32.mrb[0].mxu0
    %3007 = vmatprep.mubr.bf16.mxu0 0
    %3008 = vmatmul.mubr.bf16.gmra.mrb[0].mxu0 %v2373
    %v3009 = vpop.f32.mrb[0].mxu0
    %v3010 = vadd.f32 %v2650, %v3009
    %v3011 = vpop.f32.mrb[0].mxu0
    %v3012 = vpop.f32.mrb[0].mxu0
    %v3013 = vadd.f32 %v2653, %v3012
    %v3014 = vpop.f32.mrb[0].mxu0
    %3015 = vmatprep.mubr.bf16.mxu0 0
    %3016 = vmatmul.mubr.bf16.gmra.mrb[0].mxu0 %v2376
    %v3017 = vpop.f32.mrb[0].mxu0
    %v3018 = vadd.f32 %v2658, %v3017
    %v3019 = vpop.f32.mrb[0].mxu0
    %v3020 = vpop.f32.mrb[0].mxu0
    %v3021 = vadd.f32 %v2661, %v3020
    %v3022 = vpop.f32.mrb[0].mxu0
    %3023 = vmatprep.mubr.bf16.mxu0 0
    %3024 = vmatmul.mubr.bf16.gmra.mrb[0].mxu0 %v2379
    %v3025 = vpop.f32.mrb[0].mxu0
    %v3026 = vadd.f32 %v2666, %v3025
    %v3027 = vpop.f32.mrb[0].mxu0
    %v3028 = vpop.f32.mrb[0].mxu0
    %v3029 = vadd.f32 %v2669, %v3028
    %v3030 = vpop.f32.mrb[0].mxu0
    %3031 = vmatprep.mubr.bf16.mxu0 0
    %3032 = vmatmul.mubr.bf16.gmra.mrb[0].mxu0 %v2382
    %v3033 = vpop.f32.mrb[0].mxu0
    %v3034 = vadd.f32 %v2674, %v3033
    %v3035 = vpop.f32.mrb[0].mxu0
    %v3036 = vpop.f32.mrb[0].mxu0
    %v3037 = vadd.f32 %v2677, %v3036
    %v3038 = vpop.f32.mrb[0].mxu0
    %3039 = vmatprep.mubr.bf16.mxu0 0
    %3040 = vmatmul.mubr.bf16.gmra.mrb[0].mxu0 %v2385
    %v3041 = vpop.f32.mrb[0].mxu0
    %v3042 = vadd.f32 %v2682, %v3041
    %v3043 = vpop.f32.mrb[0].mxu0
    %v3044 = vpop.f32.mrb[0].mxu0
    %v3045 = vadd.f32 %v2685, %v3044
    %v3046 = vpop.f32.mrb[0].mxu0
    %3047 = vmatprep.mubr.bf16.mxu0 0
    %3048 = vmatmul.mubr.bf16.gmra.mrb[0].mxu0 %v2388
    %v3049 = vpop.f32.mrb[0].mxu0
    %v3050 = vadd.f32 %v2690, %v3049
    %v3051 = vpop.f32.mrb[0].mxu0
    %v3052 = vpop.f32.mrb[0].mxu0
    %v3053 = vadd.f32 %v2693, %v3052
    %v3054 = vpop.f32.mrb[0].mxu0
    %3055 = vmatprep.mubr.bf16.mxu0 0
    %3056 = vmatmul.mubr.bf16.gmra.mrb[0].mxu0 %v2391
    %v3057 = vpop.f32.mrb[0].mxu0
    %v3058 = vadd.f32 %v2698, %v3057
    %v3059 = vpop.f32.mrb[0].mxu0
    %v3060 = vpop.f32.mrb[0].mxu0
    %v3061 = vadd.f32 %v2701, %v3060
    %v3062 = vpop.f32.mrb[0].mxu0
    %3063 = vmatprep.mubr.bf16.mxu0 0
    %3064 = vmatmul.mubr.bf16.gmra.mrb[0].mxu0 %v2394
    %v3065 = vpop.f32.mrb[0].mxu0
    %v3066 = vadd.f32 %v2706, %v3065
    %v3067 = vpop.f32.mrb[0].mxu0
    %v3068 = vpop.f32.mrb[0].mxu0
    %v3069 = vadd.f32 %v2709, %v3068
    %v3070 = vpop.f32.mrb[0].mxu0
    %3071 = vmatprep.mubr.bf16.mxu0 0
    %3072 = vmatmul.mubr.bf16.gmra.mrb[0].mxu0 %v2397
    %v3073 = vpop.f32.mrb[0].mxu0
    %v3074 = vadd.f32 %v2714, %v3073
    %v3075 = vpop.f32.mrb[0].mxu0
    %v3076 = vpop.f32.mrb[0].mxu0
    %v3077 = vadd.f32 %v2717, %v3076
    %v3078 = vpop.f32.mrb[0].mxu0
    %3079 = vmatprep.mubr.bf16.mxu0 0
    %3080 = vmatmul.mubr.bf16.gmra.mrb[0].mxu0 %v2400
    %v3081 = vpop.f32.mrb[0].mxu0
    %v3082 = vadd.f32 %v2722, %v3081
    %v3083 = vpop.f32.mrb[0].mxu0
    %v3084 = vpop.f32.mrb[0].mxu0
    %v3085 = vadd.f32 %v2725, %v3084
    %v3086 = vpop.f32.mrb[0].mxu0
    %3087 = vmatprep.mubr.bf16.mxu0 0
    %3088 = vmatmul.mubr.bf16.gmra.mrb[0].mxu0 %v2403
    %v3089 = vpop.f32.mrb[0].mxu0
    %v3090 = vadd.f32 %v2730, %v3089
    %v3091 = vpop.f32.mrb[0].mxu0
    %v3092 = vpop.f32.mrb[0].mxu0
    %v3093 = vadd.f32 %v2733, %v3092
    %v3094 = vpop.f32.mrb[0].mxu0
    %3095 = vmatprep.mubr.bf16.mxu0 0
    %3096 = vmatmul.mubr.bf16.gmra.mrb[0].mxu0 %v2406
    %v3097 = vpop.f32.mrb[0].mxu0
    %v3098 = vadd.f32 %v2738, %v3097
    %v3099 = vpop.f32.mrb[0].mxu0
    %v3100 = vpop.f32.mrb[0].mxu0
    %v3101 = vadd.f32 %v2741, %v3100
    %v3102 = vpop.f32.mrb[0].mxu0
    %3103 = vmatprep.mubr.bf16.mxu0 0
    %3104 = vmatmul.mubr.bf16.gmra.mrb[0].mxu0 %v2409
    %v3105 = vpop.f32.mrb[0].mxu0
    %v3106 = vadd.f32 %v2746, %v3105
    %v3107 = vpop.f32.mrb[0].mxu0
    %v3108 = vpop.f32.mrb[0].mxu0
    %v3109 = vadd.f32 %v2749, %v3108
    %v3110 = vpop.f32.mrb[0].mxu0
    %3111 = vmatprep.mubr.bf16.mxu0 0
    %3112 = vmatmul.mubr.bf16.gmra.mrb[0].mxu0 %v2412
    %v3113 = vpop.f32.mrb[0].mxu0
    %v3114 = vadd.f32 %v2754, %v3113
    %v3115 = vpop.f32.mrb[0].mxu0
    %v3116 = vpop.f32.mrb[0].mxu0
    %v3117 = vadd.f32 %v2757, %v3116
    %v3118 = vpop.f32.mrb[0].mxu0
    %3119 = vmatprep.mubr.bf16.mxu0 0
    %3120 = vmatmul.mubr.bf16.gmra.mrb[0].mxu0 %v2415
    %v3121 = vpop.f32.mrb[0].mxu0
    %v3122 = vadd.f32 %v2762, %v3121
    %v3123 = vpop.f32.mrb[0].mxu0
    %v3124 = vpop.f32.mrb[0].mxu0
    %v3125 = vadd.f32 %v2765, %v3124
    %v3126 = vpop.f32.mrb[0].mxu0
    %3127 = vmatprep.mubr.bf16.mxu0 0
    %3128 = vmatmul.mubr.bf16.gmra.mrb[0].mxu0 %v2418
    %v3129 = vpop.f32.mrb[0].mxu0
    %v3130 = vadd.f32 %v2770, %v3129
    %v3131 = vpop.f32.mrb[0].mxu0
    %v3132 = vpop.f32.mrb[0].mxu0
    %v3133 = vadd.f32 %v2773, %v3132
    %v3134 = vpop.f32.mrb[0].mxu0
    %3135 = vmatprep.mubr.bf16.mxu0 0
    %3136 = vmatmul.mubr.bf16.gmra.mrb[0].mxu0 %v2421
    %v3137 = vpop.f32.mrb[0].mxu0
    %v3138 = vadd.f32 %v2778, %v3137
    %v3139 = vpop.f32.mrb[0].mxu0
    %v3140 = vpop.f32.mrb[0].mxu0
    %v3141 = vpop.f32.mrb[0].mxu0
    %3142 = vdwg.mxu0
    %v3143 = vpack.c.bf16 %v2821, %v2818
    %v3144 = vpack.c.bf16 %v2829, %v2826
    %v3145 = vpack.c.bf16 %v2837, %v2834
    %v3146 = vpack.c.bf16 %v2845, %v2842
    %v3147 = vpack.c.bf16 %v2853, %v2850
    %v3148 = vpack.c.bf16 %v2861, %v2858
    %v3149 = vpack.c.bf16 %v2869, %v2866
    %v3150 = vpack.c.bf16 %v2877, %v2874
    %v3151 = vpack.c.bf16 %v2885, %v2882
    %v3152 = vpack.c.bf16 %v2893, %v2890
    %v3153 = vpack.c.bf16 %v2901, %v2898
    %v3154 = vpack.c.bf16 %v2909, %v2906
    %v3155 = vpack.c.bf16 %v2917, %v2914
    %v3156 = vpack.c.bf16 %v2925, %v2922
    %v3157 = vpack.c.bf16 %v2933, %v2930
    %v3158 = vpack.c.bf16 %v2941, %v2938
    %v3159 = vpack.c.bf16 %v2949, %v2946
    %v3160 = vpack.c.bf16 %v2957, %v2954
    %v3161 = vpack.c.bf16 %v2965, %v2962
    %v3162 = vpack.c.bf16 %v2973, %v2970
    %v3163 = vpack.c.bf16 %v2981, %v2978
    %v3164 = vpack.c.bf16 %v2989, %v2986
    %v3165 = vpack.c.bf16 %v2997, %v2994
    %v3166 = vpack.c.bf16 %v3005, %v3002
    %v3167 = vpack.c.bf16 %v3013, %v3010
    %v3168 = vpack.c.bf16 %v3021, %v3018
    %v3169 = vpack.c.bf16 %v3029, %v3026
    %v3170 = vpack.c.bf16 %v3037, %v3034
    %v3171 = vpack.c.bf16 %v3045, %v3042
    %v3172 = vpack.c.bf16 %v3053, %v3050
    %v3173 = vpack.c.bf16 %v3061, %v3058
    %v3174 = vpack.c.bf16 %v3069, %v3066
    %v3175 = vpack.c.bf16 %v3077, %v3074
    %v3176 = vpack.c.bf16 %v3085, %v3082
    %v3177 = vpack.c.bf16 %v3093, %v3090
    %v3178 = vpack.c.bf16 %v3101, %v3098
    %v3179 = vpack.c.bf16 %v3109, %v3106
    %v3180 = vpack.c.bf16 %v3117, %v3114
    %v3181 = vpack.c.bf16 %v3125, %v3122
    %v3182 = vpack.c.bf16 %v3133, %v3130
    %v3183 = vpack.c.bf16 %v3138, %v3138
    %v3184 = vld [vmem:[%s4] sm:$0xff]
    %v3185 = vld [vmem:[%s4 + $0x8] sm:$0xff]
    %v3186 = vld [vmem:[%s4 + $0x10] sm:$0xff]
    %v3187 = vld [vmem:[%s4 + $0x18] sm:$0xff]
    %v3188 = vld [vmem:[%s4 + $0x20] sm:$0xff]
    %v3189 = vld [vmem:[%s4 + $0x28] sm:$0xff]
    %v3190 = vld [vmem:[%s4 + $0x30] sm:$0xff]
    %v3191 = vld [vmem:[%s4 + $0x38] sm:$0xff]
    %v3192 = vld [vmem:[%s4 + $0x40] sm:$0xff]
    %v3193 = vld [vmem:[%s4 + $0x48] sm:$0xff]
    %v3194 = vld [vmem:[%s4 + $0x50] sm:$0xff]
    %v3195 = vld [vmem:[%s4 + $0x58] sm:$0xff]
    %v3196 = vld [vmem:[%s4 + $0x60] sm:$0xff]
    %v3197 = vld [vmem:[%s4 + $0x68] sm:$0xff]
    %v3198 = vld [vmem:[%s4 + $0x70] sm:$0xff]
    %v3199 = vld [vmem:[%s4 + $0x78] sm:$0xff]
    %s3200 = scalar_lea.vmem %s4, 128
    %v3201 = vld [vmem:[%s3200] sm:$0xff]
    %v3202 = vld [vmem:[%s3200 + $0x8] sm:$0xff]
    %v3203 = vld [vmem:[%s3200 + $0x10] sm:$0xff]
    %v3204 = vld [vmem:[%s3200 + $0x18] sm:$0xff]
    %v3205 = vld [vmem:[%s3200 + $0x20] sm:$0xff]
    %v3206 = vld [vmem:[%s3200 + $0x28] sm:$0xff]
    %v3207 = vld [vmem:[%s3200 + $0x30] sm:$0xff]
    %v3208 = vld [vmem:[%s3200 + $0x38] sm:$0xff]
    %v3209 = vld [vmem:[%s3200 + $0x40] sm:$0xff]
    %v3210 = vld [vmem:[%s3200 + $0x48] sm:$0xff]
    %v3211 = vld [vmem:[%s3200 + $0x50] sm:$0xff]
    %v3212 = vld [vmem:[%s3200 + $0x58] sm:$0xff]
    %v3213 = vld [vmem:[%s3200 + $0x60] sm:$0xff]
    %v3214 = vld [vmem:[%s3200 + $0x68] sm:$0xff]
    %v3215 = vld [vmem:[%s3200 + $0x70] sm:$0xff]
    %v3216 = vld [vmem:[%s3200 + $0x78] sm:$0xff]
    %vm3222 = vcmask 1043456
    %v3223 = vrot.slane %v3147, 4
    %v3224 = vrot.slane %v3148, 4
    %v3225 = vsel %vm3222, %v3223, %v3224
    %v3226 = vrot.slane %v3149, 4
    %v3227 = vsel %vm3222, %v3224, %v3226
    %v3228 = vrot.slane %v3150, 4
    %v3229 = vsel %vm3222, %v3226, %v3228
    %v3230 = vrot.slane %v3151, 4
    %v3231 = vsel %vm3222, %v3228, %v3230
    %v3253 = vunpack.c.l.b16 %v3201
    %v3254 = vunpack.c.h.b16 %v3201
    %v3255 = vunpack.c.l.b16 %v3202
    %v3256 = vunpack.c.h.b16 %v3202
    %v3257 = vunpack.c.l.b16 %v3203
    %v3258 = vunpack.c.h.b16 %v3203
    %v3259 = vunpack.c.l.b16 %v3204
    %v3260 = vunpack.c.h.b16 %v3204
    %v3261 = vunpack.c.l.b16 %v3205
    %v3262 = vunpack.c.h.b16 %v3205
    %v3263 = vunpack.c.l.b16 %v3206
    %v3264 = vunpack.c.h.b16 %v3206
    %v3265 = vunpack.c.l.b16 %v3207
    %v3266 = vunpack.c.h.b16 %v3207
    %v3267 = vunpack.c.l.b16 %v3208
    %v3268 = vunpack.c.h.b16 %v3208
    %v3269 = vunpack.c.l.b16 %v3209
    %v3270 = vunpack.c.h.b16 %v3209
    %v3271 = vunpack.c.l.b16 %v3210
    %v3272 = vunpack.c.h.b16 %v3210
    %v3273 = vunpack.c.l.b16 %v3211
    %v3274 = vunpack.c.h.b16 %v3211
    %v3275 = vunpack.c.l.b16 %v3212
    %v3276 = vunpack.c.h.b16 %v3212
    %v3277 = vunpack.c.l.b16 %v3213
    %v3278 = vunpack.c.h.b16 %v3213
    %v3279 = vunpack.c.l.b16 %v3214
    %v3280 = vunpack.c.h.b16 %v3214
    %v3281 = vunpack.c.l.b16 %v3215
    %v3282 = vunpack.c.h.b16 %v3215
    %v3283 = vunpack.c.l.b16 %v3216
    %v3284 = vunpack.c.h.b16 %v3216
    %v3285 = vpack.c.b16 %v3255, %v3253
    %v3286 = vpack.c.b16 %v3256, %v3254
    %v3287 = vpack.c.b16 %v3259, %v3257
    %v3288 = vpack.c.b16 %v3260, %v3258
    %v3289 = vpack.c.b16 %v3263, %v3261
    %v3290 = vpack.c.b16 %v3264, %v3262
    %v3291 = vpack.c.b16 %v3267, %v3265
    %v3292 = vpack.c.b16 %v3268, %v3266
    %v3293 = vpack.c.b16 %v3271, %v3269
    %v3294 = vpack.c.b16 %v3272, %v3270
    %v3295 = vpack.c.b16 %v3275, %v3273
    %v3296 = vpack.c.b16 %v3276, %v3274
    %v3297 = vpack.c.b16 %v3279, %v3277
    %v3298 = vpack.c.b16 %v3280, %v3278
    %v3299 = vpack.c.b16 %v3283, %v3281
    %v3300 = vpack.c.b16 %v3284, %v3282
    %3317 = vmatprep.subr.bf16.mxu0 %v3286
    %3318 = vmatpush1.bf16.msra.mxu0 %v3285
    %3319 = vmatprep.subr.bf16.mxu0 %v3288
    %3320 = vmatpush1.bf16.msra.mxu0 %v3287
    %3321 = vmatprep.subr.bf16.mxu0 %v3290
    %3322 = vmatpush1.bf16.msra.mxu0 %v3289
    %3323 = vmatprep.subr.bf16.mxu0 %v3292
    %3324 = vmatpush1.bf16.msra.mxu0 %v3291
    %3325 = vmatprep.subr.bf16.mxu0 %v3294
    %3326 = vmatpush1.bf16.msra.mxu0 %v3293
    %3327 = vmatprep.subr.bf16.mxu0 %v3296
    %3328 = vmatpush1.bf16.msra.mxu0 %v3295
    %3329 = vmatprep.subr.bf16.mxu0 %v3298
    %3330 = vmatpush1.bf16.msra.mxu0 %v3297
    %3331 = vmatprep.subr.bf16.mxu0 %v3300
    %3332 = vmatpush1.bf16.msra.mxu0 %v3299
    %3333 = vmatprep.subr.bf16.mxu0 0
    %3334 = vmatpush1.bf16.msra.mxu0 0
    %3335 = vmatprep.subr.bf16.mxu0 0
    %3336 = vmatpush1.bf16.msra.mxu0 0
    %3337 = vmatprep.subr.bf16.mxu0 0
    %3338 = vmatpush1.bf16.msra.mxu0 0
    %3339 = vmatprep.subr.bf16.mxu0 0
    %3340 = vmatpush1.bf16.msra.mxu0 0
    %3341 = vmatprep.subr.bf16.mxu0 0
    %3342 = vmatpush1.bf16.msra.mxu0 0
    %3343 = vmatprep.subr.bf16.mxu0 0
    %3344 = vmatpush1.bf16.msra.mxu0 0
    %3345 = vmatprep.subr.bf16.mxu0 0
    %3346 = vmatpush1.bf16.msra.mxu0 0
    %3347 = vmatprep.subr.bf16.mxu0 0
    %3348 = vmatpush1.bf16.msra.mxu0 0
    %3349 = vmatprep.mubr.bf16.mxu0 0
    %3350 = vmatmul.mubr.bf16.gmra.mrb[0].mxu0 %v3225
    %v3351 = vpop.f32.mrb[0].mxu0
    %v3352 = vadd.f32 0.0, %v3351
    %v3353 = vpop.f32.mrb[0].mxu0
    %v3354 = vadd.f32 0.0, %v3353
    %v3355 = vpop.f32.mrb[0].mxu0
    %v3356 = vadd.f32 0.0, %v3355
    %v3357 = vpop.f32.mrb[0].mxu0
    %v3358 = vadd.f32 0.0, %v3357
    %3359 = vmatprep.mubr.bf16.mxu0 0
    %3360 = vmatmul.mubr.bf16.gmra.mrb[0].mxu0 %v3227
    %v3361 = vpop.f32.mrb[0].mxu0
    %v3362 = vadd.f32 0.0, %v3361
    %v3363 = vpop.f32.mrb[0].mxu0
    %v3364 = vadd.f32 0.0, %v3363
    %v3365 = vpop.f32.mrb[0].mxu0
    %v3366 = vadd.f32 0.0, %v3365
    %v3367 = vpop.f32.mrb[0].mxu0
    %v3368 = vadd.f32 0.0, %v3367
    %3369 = vmatprep.mubr.bf16.mxu0 0
    %3370 = vmatmul.mubr.bf16.gmra.mrb[0].mxu0 %v3229
    %v3371 = vpop.f32.mrb[0].mxu0
    %v3372 = vadd.f32 0.0, %v3371
    %v3373 = vpop.f32.mrb[0].mxu0
    %v3374 = vadd.f32 0.0, %v3373
    %v3375 = vpop.f32.mrb[0].mxu0
    %v3376 = vadd.f32 0.0, %v3375
    %v3377 = vpop.f32.mrb[0].mxu0
    %v3378 = vadd.f32 0.0, %v3377
    %3379 = vmatprep.mubr.bf16.mxu0 0
    %3380 = vmatmul.mubr.bf16.gmra.mrb[0].mxu0 %v3231
    %v3381 = vpop.f32.mrb[0].mxu0
    %v3382 = vadd.f32 0.0, %v3381
    %v3383 = vpop.f32.mrb[0].mxu0
    %v3384 = vadd.f32 0.0, %v3383
    %v3385 = vpop.f32.mrb[0].mxu0
    %v3386 = vadd.f32 0.0, %v3385
    %v3387 = vpop.f32.mrb[0].mxu0
    %v3388 = vadd.f32 0.0, %v3387
    %3389 = vmatprep.mubr.bf16.mxu0 0
    %3390 = vmatmul.mubr.bf16.gmra.mrb[0].mxu0 %v3230
    %v3391 = vpop.f32.mrb[0].mxu0
    %v3392 = vadd.f32 0.0, %v3391
    %v3393 = vpop.f32.mrb[0].mxu0
    %v3394 = vadd.f32 0.0, %v3393
    %v3395 = vpop.f32.mrb[0].mxu0
    %v3396 = vpop.f32.mrb[0].mxu0
    %3397 = vdwg.mxu0
    %v3414 = vunpack.c.l.b16 %v3184
    %v3415 = vunpack.c.h.b16 %v3184
    %v3416 = vunpack.c.l.b16 %v3185
    %v3417 = vunpack.c.h.b16 %v3185
    %v3418 = vunpack.c.l.b16 %v3186
    %v3419 = vunpack.c.h.b16 %v3186
    %v3420 = vunpack.c.l.b16 %v3187
    %v3421 = vunpack.c.h.b16 %v3187
    %v3422 = vunpack.c.l.b16 %v3188
    %v3423 = vunpack.c.h.b16 %v3188
    %v3424 = vunpack.c.l.b16 %v3189
    %v3425 = vunpack.c.h.b16 %v3189
    %v3426 = vunpack.c.l.b16 %v3190
    %v3427 = vunpack.c.h.b16 %v3190
    %v3428 = vunpack.c.l.b16 %v3191
    %v3429 = vunpack.c.h.b16 %v3191
    %v3430 = vunpack.c.l.b16 %v3192
    %v3431 = vunpack.c.h.b16 %v3192
    %v3432 = vunpack.c.l.b16 %v3193
    %v3433 = vunpack.c.h.b16 %v3193
    %v3434 = vunpack.c.l.b16 %v3194
    %v3435 = vunpack.c.h.b16 %v3194
    %v3436 = vunpack.c.l.b16 %v3195
    %v3437 = vunpack.c.h.b16 %v3195
    %v3438 = vunpack.c.l.b16 %v3196
    %v3439 = vunpack.c.h.b16 %v3196
    %v3440 = vunpack.c.l.b16 %v3197
    %v3441 = vunpack.c.h.b16 %v3197
    %v3442 = vunpack.c.l.b16 %v3198
    %v3443 = vunpack.c.h.b16 %v3198
    %v3444 = vunpack.c.l.b16 %v3199
    %v3445 = vunpack.c.h.b16 %v3199
    %v3446 = vpack.c.b16 %v3416, %v3414
    %v3447 = vpack.c.b16 %v3417, %v3415
    %v3448 = vpack.c.b16 %v3420, %v3418
    %v3449 = vpack.c.b16 %v3421, %v3419
    %v3450 = vpack.c.b16 %v3424, %v3422
    %v3451 = vpack.c.b16 %v3425, %v3423
    %v3452 = vpack.c.b16 %v3428, %v3426
    %v3453 = vpack.c.b16 %v3429, %v3427
    %v3454 = vpack.c.b16 %v3432, %v3430
    %v3455 = vpack.c.b16 %v3433, %v3431
    %v3456 = vpack.c.b16 %v3436, %v3434
    %v3457 = vpack.c.b16 %v3437, %v3435
    %v3458 = vpack.c.b16 %v3440, %v3438
    %v3459 = vpack.c.b16 %v3441, %v3439
    %v3460 = vpack.c.b16 %v3444, %v3442
    %v3461 = vpack.c.b16 %v3445, %v3443
    %3478 = vmatprep.subr.bf16.mxu0 %v3447
    %3479 = vmatpush1.bf16.msra.mxu0 %v3446
    %3480 = vmatprep.subr.bf16.mxu0 %v3449
    %3481 = vmatpush1.bf16.msra.mxu0 %v3448
    %3482 = vmatprep.subr.bf16.mxu0 %v3451
    %3483 = vmatpush1.bf16.msra.mxu0 %v3450
    %3484 = vmatprep.subr.bf16.mxu0 %v3453
    %3485 = vmatpush1.bf16.msra.mxu0 %v3452
    %3486 = vmatprep.subr.bf16.mxu0 %v3455
    %3487 = vmatpush1.bf16.msra.mxu0 %v3454
    %3488 = vmatprep.subr.bf16.mxu0 %v3457
    %3489 = vmatpush1.bf16.msra.mxu0 %v3456
    %3490 = vmatprep.subr.bf16.mxu0 %v3459
    %3491 = vmatpush1.bf16.msra.mxu0 %v3458
    %3492 = vmatprep.subr.bf16.mxu0 %v3461
    %3493 = vmatpush1.bf16.msra.mxu0 %v3460
    %3494 = vmatprep.subr.bf16.mxu0 0
    %3495 = vmatpush1.bf16.msra.mxu0 0
    %3496 = vmatprep.subr.bf16.mxu0 0
    %3497 = vmatpush1.bf16.msra.mxu0 0
    %3498 = vmatprep.subr.bf16.mxu0 0
    %3499 = vmatpush1.bf16.msra.mxu0 0
    %3500 = vmatprep.subr.bf16.mxu0 0
    %3501 = vmatpush1.bf16.msra.mxu0 0
    %3502 = vmatprep.subr.bf16.mxu0 0
    %3503 = vmatpush1.bf16.msra.mxu0 0
    %3504 = vmatprep.subr.bf16.mxu0 0
    %3505 = vmatpush1.bf16.msra.mxu0 0
    %3506 = vmatprep.subr.bf16.mxu0 0
    %3507 = vmatpush1.bf16.msra.mxu0 0
    %3508 = vmatprep.subr.bf16.mxu0 0
    %3509 = vmatpush1.bf16.msra.mxu0 0
    %3510 = vmatprep.mubr.bf16.mxu0 0
    %3511 = vmatmul.mubr.bf16.gmra.mrb[0].mxu0 %v3143
    %v3512 = vpop.f32.mrb[0].mxu0
    %v3513 = vadd.f32 %v3352, %v3512
    %v3514 = vpop.f32.mrb[0].mxu0
    %v3515 = vadd.f32 %v3354, %v3514
    %v3516 = vpop.f32.mrb[0].mxu0
    %v3517 = vadd.f32 %v3356, %v3516
    %v3518 = vpop.f32.mrb[0].mxu0
    %v3519 = vadd.f32 %v3358, %v3518
    %3520 = vmatprep.mubr.bf16.mxu0 0
    %3521 = vmatmul.mubr.bf16.gmra.mrb[0].mxu0 %v3144
    %v3522 = vpop.f32.mrb[0].mxu0
    %v3523 = vadd.f32 %v3362, %v3522
    %v3524 = vpop.f32.mrb[0].mxu0
    %v3525 = vadd.f32 %v3364, %v3524
    %v3526 = vpop.f32.mrb[0].mxu0
    %v3527 = vadd.f32 %v3366, %v3526
    %v3528 = vpop.f32.mrb[0].mxu0
    %v3529 = vadd.f32 %v3368, %v3528
    %3530 = vmatprep.mubr.bf16.mxu0 0
    %3531 = vmatmul.mubr.bf16.gmra.mrb[0].mxu0 %v3145
    %v3532 = vpop.f32.mrb[0].mxu0
    %v3533 = vadd.f32 %v3372, %v3532
    %v3534 = vpop.f32.mrb[0].mxu0
    %v3535 = vadd.f32 %v3374, %v3534
    %v3536 = vpop.f32.mrb[0].mxu0
    %v3537 = vadd.f32 %v3376, %v3536
    %v3538 = vpop.f32.mrb[0].mxu0
    %v3539 = vadd.f32 %v3378, %v3538
    %3540 = vmatprep.mubr.bf16.mxu0 0
    %3541 = vmatmul.mubr.bf16.gmra.mrb[0].mxu0 %v3146
    %v3542 = vpop.f32.mrb[0].mxu0
    %v3543 = vadd.f32 %v3382, %v3542
    %v3544 = vpop.f32.mrb[0].mxu0
    %v3545 = vadd.f32 %v3384, %v3544
    %v3546 = vpop.f32.mrb[0].mxu0
    %v3547 = vadd.f32 %v3386, %v3546
    %v3548 = vpop.f32.mrb[0].mxu0
    %v3549 = vadd.f32 %v3388, %v3548
    %3550 = vmatprep.mubr.bf16.mxu0 0
    %3551 = vmatmul.mubr.bf16.gmra.mrb[0].mxu0 %v3147
    %v3552 = vpop.f32.mrb[0].mxu0
    %v3553 = vadd.f32 %v3392, %v3552
    %v3554 = vpop.f32.mrb[0].mxu0
    %v3555 = vadd.f32 %v3394, %v3554
    %v3556 = vpop.f32.mrb[0].mxu0
    %v3557 = vpop.f32.mrb[0].mxu0
    %3558 = vdwg.mxu0
    %s3559 = scalar_lea.vmem %s4, 256
    %v3560 = vld [vmem:[%s3559] sm:$0xff]
    %v3561 = vld [vmem:[%s3559 + $0x8] sm:$0xff]
    %v3562 = vld [vmem:[%s3559 + $0x10] sm:$0xff]
    %v3563 = vld [vmem:[%s3559 + $0x18] sm:$0xff]
    %v3564 = vld [vmem:[%s3559 + $0x20] sm:$0xff]
    %v3565 = vld [vmem:[%s3559 + $0x28] sm:$0xff]
    %v3566 = vld [vmem:[%s3559 + $0x30] sm:$0xff]
    %v3567 = vld [vmem:[%s3559 + $0x38] sm:$0xff]
    %v3568 = vld [vmem:[%s3559 + $0x40] sm:$0xff]
    %v3569 = vld [vmem:[%s3559 + $0x48] sm:$0xff]
    %v3570 = vld [vmem:[%s3559 + $0x50] sm:$0xff]
    %v3571 = vld [vmem:[%s3559 + $0x58] sm:$0xff]
    %v3572 = vld [vmem:[%s3559 + $0x60] sm:$0xff]
    %v3573 = vld [vmem:[%s3559 + $0x68] sm:$0xff]
    %v3574 = vld [vmem:[%s3559 + $0x70] sm:$0xff]
    %v3575 = vld [vmem:[%s3559 + $0x78] sm:$0xff]
    %v3592 = vunpack.c.l.b16 %v3560
    %v3593 = vunpack.c.h.b16 %v3560
    %v3594 = vunpack.c.l.b16 %v3561
    %v3595 = vunpack.c.h.b16 %v3561
    %v3596 = vunpack.c.l.b16 %v3562
    %v3597 = vunpack.c.h.b16 %v3562
    %v3598 = vunpack.c.l.b16 %v3563
    %v3599 = vunpack.c.h.b16 %v3563
    %v3600 = vunpack.c.l.b16 %v3564
    %v3601 = vunpack.c.h.b16 %v3564
    %v3602 = vunpack.c.l.b16 %v3565
    %v3603 = vunpack.c.h.b16 %v3565
    %v3604 = vunpack.c.l.b16 %v3566
    %v3605 = vunpack.c.h.b16 %v3566
    %v3606 = vunpack.c.l.b16 %v3567
    %v3607 = vunpack.c.h.b16 %v3567
    %v3608 = vunpack.c.l.b16 %v3568
    %v3609 = vunpack.c.h.b16 %v3568
    %v3610 = vunpack.c.l.b16 %v3569
    %v3611 = vunpack.c.h.b16 %v3569
    %v3612 = vunpack.c.l.b16 %v3570
    %v3613 = vunpack.c.h.b16 %v3570
    %v3614 = vunpack.c.l.b16 %v3571
    %v3615 = vunpack.c.h.b16 %v3571
    %v3616 = vunpack.c.l.b16 %v3572
    %v3617 = vunpack.c.h.b16 %v3572
    %v3618 = vunpack.c.l.b16 %v3573
    %v3619 = vunpack.c.h.b16 %v3573
    %v3620 = vunpack.c.l.b16 %v3574
    %v3621 = vunpack.c.h.b16 %v3574
    %v3622 = vunpack.c.l.b16 %v3575
    %v3623 = vunpack.c.h.b16 %v3575
    %v3624 = vpack.c.b16 %v3594, %v3592
    %v3625 = vpack.c.b16 %v3595, %v3593
    %v3626 = vpack.c.b16 %v3598, %v3596
    %v3627 = vpack.c.b16 %v3599, %v3597
    %v3628 = vpack.c.b16 %v3602, %v3600
    %v3629 = vpack.c.b16 %v3603, %v3601
    %v3630 = vpack.c.b16 %v3606, %v3604
    %v3631 = vpack.c.b16 %v3607, %v3605
    %v3632 = vpack.c.b16 %v3610, %v3608
    %v3633 = vpack.c.b16 %v3611, %v3609
    %v3634 = vpack.c.b16 %v3614, %v3612
    %v3635 = vpack.c.b16 %v3615, %v3613
    %v3636 = vpack.c.b16 %v3618, %v3616
    %v3637 = vpack.c.b16 %v3619, %v3617
    %v3638 = vpack.c.b16 %v3622, %v3620
    %v3639 = vpack.c.b16 %v3623, %v3621
    %3656 = vmatprep.subr.bf16.mxu0 %v3625
    %3657 = vmatpush1.bf16.msra.mxu0 %v3624
    %3658 = vmatprep.subr.bf16.mxu0 %v3627
    %3659 = vmatpush1.bf16.msra.mxu0 %v3626
    %3660 = vmatprep.subr.bf16.mxu0 %v3629
    %3661 = vmatpush1.bf16.msra.mxu0 %v3628
    %3662 = vmatprep.subr.bf16.mxu0 %v3631
    %3663 = vmatpush1.bf16.msra.mxu0 %v3630
    %3664 = vmatprep.subr.bf16.mxu0 %v3633
    %3665 = vmatpush1.bf16.msra.mxu0 %v3632
    %3666 = vmatprep.subr.bf16.mxu0 %v3635
    %3667 = vmatpush1.bf16.msra.mxu0 %v3634
    %3668 = vmatprep.subr.bf16.mxu0 %v3637
    %3669 = vmatpush1.bf16.msra.mxu0 %v3636
    %3670 = vmatprep.subr.bf16.mxu0 %v3639
    %3671 = vmatpush1.bf16.msra.mxu0 %v3638
    %3672 = vmatprep.subr.bf16.mxu0 0
    %3673 = vmatpush1.bf16.msra.mxu0 0
    %3674 = vmatprep.subr.bf16.mxu0 0
    %3675 = vmatpush1.bf16.msra.mxu0 0
    %3676 = vmatprep.subr.bf16.mxu0 0
    %3677 = vmatpush1.bf16.msra.mxu0 0
    %3678 = vmatprep.subr.bf16.mxu0 0
    %3679 = vmatpush1.bf16.msra.mxu0 0
    %3680 = vmatprep.subr.bf16.mxu0 0
    %3681 = vmatpush1.bf16.msra.mxu0 0
    %3682 = vmatprep.subr.bf16.mxu0 0
    %3683 = vmatpush1.bf16.msra.mxu0 0
    %3684 = vmatprep.subr.bf16.mxu0 0
    %3685 = vmatpush1.bf16.msra.mxu0 0
    %3686 = vmatprep.subr.bf16.mxu0 0
    %3687 = vmatpush1.bf16.msra.mxu0 0
    %3688 = vmatprep.mubr.bf16.mxu0 0
    %3689 = vmatmul.mubr.bf16.gmra.mrb[0].mxu0 %v3152
    %v3690 = vpop.f32.mrb[0].mxu0
    %v3691 = vadd.f32 0.0, %v3690
    %v3692 = vpop.f32.mrb[0].mxu0
    %v3693 = vadd.f32 0.0, %v3692
    %v3694 = vpop.f32.mrb[0].mxu0
    %v3695 = vadd.f32 0.0, %v3694
    %v3696 = vpop.f32.mrb[0].mxu0
    %v3697 = vadd.f32 0.0, %v3696
    %3698 = vmatprep.mubr.bf16.mxu0 0
    %3699 = vmatmul.mubr.bf16.gmra.mrb[0].mxu0 %v3153
    %v3700 = vpop.f32.mrb[0].mxu0
    %v3701 = vadd.f32 0.0, %v3700
    %v3702 = vpop.f32.mrb[0].mxu0
    %v3703 = vadd.f32 0.0, %v3702
    %v3704 = vpop.f32.mrb[0].mxu0
    %v3705 = vadd.f32 0.0, %v3704
    %v3706 = vpop.f32.mrb[0].mxu0
    %v3707 = vadd.f32 0.0, %v3706
    %3708 = vmatprep.mubr.bf16.mxu0 0
    %3709 = vmatmul.mubr.bf16.gmra.mrb[0].mxu0 %v3154
    %v3710 = vpop.f32.mrb[0].mxu0
    %v3711 = vadd.f32 0.0, %v3710
    %v3712 = vpop.f32.mrb[0].mxu0
    %v3713 = vadd.f32 0.0, %v3712
    %v3714 = vpop.f32.mrb[0].mxu0
    %v3715 = vadd.f32 0.0, %v3714
    %v3716 = vpop.f32.mrb[0].mxu0
    %v3717 = vadd.f32 0.0, %v3716
    %3718 = vmatprep.mubr.bf16.mxu0 0
    %3719 = vmatmul.mubr.bf16.gmra.mrb[0].mxu0 %v3155
    %v3720 = vpop.f32.mrb[0].mxu0
    %v3721 = vadd.f32 0.0, %v3720
    %v3722 = vpop.f32.mrb[0].mxu0
    %v3723 = vadd.f32 0.0, %v3722
    %v3724 = vpop.f32.mrb[0].mxu0
    %v3725 = vadd.f32 0.0, %v3724
    %v3726 = vpop.f32.mrb[0].mxu0
    %v3727 = vadd.f32 0.0, %v3726
    %3728 = vmatprep.mubr.bf16.mxu0 0
    %3729 = vmatmul.mubr.bf16.gmra.mrb[0].mxu0 %v3156
    %v3730 = vpop.f32.mrb[0].mxu0
    %v3731 = vadd.f32 0.0, %v3730
    %v3732 = vpop.f32.mrb[0].mxu0
    %v3733 = vadd.f32 0.0, %v3732
    %v3734 = vpop.f32.mrb[0].mxu0
    %v3735 = vpop.f32.mrb[0].mxu0
    %3736 = vdwg.mxu0
    %v3737 = vadd.f32 %v3513, %v3691
    %v3738 = vadd.f32 %v3515, %v3693
    %v3739 = vadd.f32 %v3517, %v3695
    %v3740 = vadd.f32 %v3519, %v3697
    %v3741 = vadd.f32 %v3523, %v3701
    %v3742 = vadd.f32 %v3525, %v3703
    %v3743 = vadd.f32 %v3527, %v3705
    %v3744 = vadd.f32 %v3529, %v3707
    %v3745 = vadd.f32 %v3533, %v3711
    %v3746 = vadd.f32 %v3535, %v3713
    %v3747 = vadd.f32 %v3537, %v3715
    %v3748 = vadd.f32 %v3539, %v3717
    %v3749 = vadd.f32 %v3543, %v3721
    %v3750 = vadd.f32 %v3545, %v3723
    %v3751 = vadd.f32 %v3547, %v3725
    %v3752 = vadd.f32 %v3549, %v3727
    %v3753 = vadd.f32 %v3553, %v3731
    %v3754 = vadd.f32 %v3555, %v3733
    %s3755 = scalar_lea.vmem %s4, 384
    %v3756 = vld [vmem:[%s3755] sm:$0xff]
    %v3757 = vld [vmem:[%s3755 + $0x8] sm:$0xff]
    %v3758 = vld [vmem:[%s3755 + $0x10] sm:$0xff]
    %v3759 = vld [vmem:[%s3755 + $0x18] sm:$0xff]
    %v3760 = vld [vmem:[%s3755 + $0x20] sm:$0xff]
    %v3761 = vld [vmem:[%s3755 + $0x28] sm:$0xff]
    %v3762 = vld [vmem:[%s3755 + $0x30] sm:$0xff]
    %v3763 = vld [vmem:[%s3755 + $0x38] sm:$0xff]
    %v3764 = vld [vmem:[%s3755 + $0x40] sm:$0xff]
    %v3765 = vld [vmem:[%s3755 + $0x48] sm:$0xff]
    %v3766 = vld [vmem:[%s3755 + $0x50] sm:$0xff]
    %v3767 = vld [vmem:[%s3755 + $0x58] sm:$0xff]
    %v3768 = vld [vmem:[%s3755 + $0x60] sm:$0xff]
    %v3769 = vld [vmem:[%s3755 + $0x68] sm:$0xff]
    %v3770 = vld [vmem:[%s3755 + $0x70] sm:$0xff]
    %v3771 = vld [vmem:[%s3755 + $0x78] sm:$0xff]
    %v3777 = vrot.slane %v3156, 4
    %v3778 = vrot.slane %v3157, 4
    %v3779 = vsel %vm3222, %v3777, %v3778
    %v3780 = vrot.slane %v3158, 4
    %v3781 = vsel %vm3222, %v3778, %v3780
    %v3782 = vrot.slane %v3159, 4
    %v3783 = vsel %vm3222, %v3780, %v3782
    %v3784 = vrot.slane %v3160, 4
    %v3785 = vsel %vm3222, %v3782, %v3784
    %v3807 = vunpack.c.l.b16 %v3756
    %v3808 = vunpack.c.h.b16 %v3756
    %v3809 = vunpack.c.l.b16 %v3757
    %v3810 = vunpack.c.h.b16 %v3757
    %v3811 = vunpack.c.l.b16 %v3758
    %v3812 = vunpack.c.h.b16 %v3758
    %v3813 = vunpack.c.l.b16 %v3759
    %v3814 = vunpack.c.h.b16 %v3759
    %v3815 = vunpack.c.l.b16 %v3760
    %v3816 = vunpack.c.h.b16 %v3760
    %v3817 = vunpack.c.l.b16 %v3761
    %v3818 = vunpack.c.h.b16 %v3761
    %v3819 = vunpack.c.l.b16 %v3762
    %v3820 = vunpack.c.h.b16 %v3762
    %v3821 = vunpack.c.l.b16 %v3763
    %v3822 = vunpack.c.h.b16 %v3763
    %v3823 = vunpack.c.l.b16 %v3764
    %v3824 = vunpack.c.h.b16 %v3764
    %v3825 = vunpack.c.l.b16 %v3765
    %v3826 = vunpack.c.h.b16 %v3765
    %v3827 = vunpack.c.l.b16 %v3766
    %v3828 = vunpack.c.h.b16 %v3766
    %v3829 = vunpack.c.l.b16 %v3767
    %v3830 = vunpack.c.h.b16 %v3767
    %v3831 = vunpack.c.l.b16 %v3768
    %v3832 = vunpack.c.h.b16 %v3768
    %v3833 = vunpack.c.l.b16 %v3769
    %v3834 = vunpack.c.h.b16 %v3769
    %v3835 = vunpack.c.l.b16 %v3770
    %v3836 = vunpack.c.h.b16 %v3770
    %v3837 = vunpack.c.l.b16 %v3771
    %v3838 = vunpack.c.h.b16 %v3771
    %v3839 = vpack.c.b16 %v3809, %v3807
    %v3840 = vpack.c.b16 %v3810, %v3808
    %v3841 = vpack.c.b16 %v3813, %v3811
    %v3842 = vpack.c.b16 %v3814, %v3812
    %v3843 = vpack.c.b16 %v3817, %v3815
    %v3844 = vpack.c.b16 %v3818, %v3816
    %v3845 = vpack.c.b16 %v3821, %v3819
    %v3846 = vpack.c.b16 %v3822, %v3820
    %v3847 = vpack.c.b16 %v3825, %v3823
    %v3848 = vpack.c.b16 %v3826, %v3824
    %v3849 = vpack.c.b16 %v3829, %v3827
    %v3850 = vpack.c.b16 %v3830, %v3828
    %v3851 = vpack.c.b16 %v3833, %v3831
    %v3852 = vpack.c.b16 %v3834, %v3832
    %v3853 = vpack.c.b16 %v3837, %v3835
    %v3854 = vpack.c.b16 %v3838, %v3836
    %3871 = vmatprep.subr.bf16.mxu0 %v3840
    %3872 = vmatpush1.bf16.msra.mxu0 %v3839
    %3873 = vmatprep.subr.bf16.mxu0 %v3842
    %3874 = vmatpush1.bf16.msra.mxu0 %v3841
    %3875 = vmatprep.subr.bf16.mxu0 %v3844
    %3876 = vmatpush1.bf16.msra.mxu0 %v3843
    %3877 = vmatprep.subr.bf16.mxu0 %v3846
    %3878 = vmatpush1.bf16.msra.mxu0 %v3845
    %3879 = vmatprep.subr.bf16.mxu0 %v3848
    %3880 = vmatpush1.bf16.msra.mxu0 %v3847
    %3881 = vmatprep.subr.bf16.mxu0 %v3850
    %3882 = vmatpush1.bf16.msra.mxu0 %v3849
    %3883 = vmatprep.subr.bf16.mxu0 %v3852
    %3884 = vmatpush1.bf16.msra.mxu0 %v3851
    %3885 = vmatprep.subr.bf16.mxu0 %v3854
    %3886 = vmatpush1.bf16.msra.mxu0 %v3853
    %3887 = vmatprep.subr.bf16.mxu0 0
    %3888 = vmatpush1.bf16.msra.mxu0 0
    %3889 = vmatprep.subr.bf16.mxu0 0
    %3890 = vmatpush1.bf16.msra.mxu0 0
    %3891 = vmatprep.subr.bf16.mxu0 0
    %3892 = vmatpush1.bf16.msra.mxu0 0
    %3893 = vmatprep.subr.bf16.mxu0 0
    %3894 = vmatpush1.bf16.msra.mxu0 0
    %3895 = vmatprep.subr.bf16.mxu0 0
    %3896 = vmatpush1.bf16.msra.mxu0 0
    %3897 = vmatprep.subr.bf16.mxu0 0
    %3898 = vmatpush1.bf16.msra.mxu0 0
    %3899 = vmatprep.subr.bf16.mxu0 0
    %3900 = vmatpush1.bf16.msra.mxu0 0
    %3901 = vmatprep.subr.bf16.mxu0 0
    %3902 = vmatpush1.bf16.msra.mxu0 0
    %3903 = vmatprep.mubr.bf16.mxu0 0
    %3904 = vmatmul.mubr.bf16.gmra.mrb[0].mxu0 %v3779
    %v3905 = vpop.f32.mrb[0].mxu0
    %v3906 = vadd.f32 0.0, %v3905
    %v3907 = vpop.f32.mrb[0].mxu0
    %v3908 = vadd.f32 0.0, %v3907
    %v3909 = vpop.f32.mrb[0].mxu0
    %v3910 = vadd.f32 0.0, %v3909
    %v3911 = vpop.f32.mrb[0].mxu0
    %v3912 = vadd.f32 0.0, %v3911
    %3913 = vmatprep.mubr.bf16.mxu0 0
    %3914 = vmatmul.mubr.bf16.gmra.mrb[0].mxu0 %v3781
    %v3915 = vpop.f32.mrb[0].mxu0
    %v3916 = vadd.f32 0.0, %v3915
    %v3917 = vpop.f32.mrb[0].mxu0
    %v3918 = vadd.f32 0.0, %v3917
    %v3919 = vpop.f32.mrb[0].mxu0
    %v3920 = vadd.f32 0.0, %v3919
    %v3921 = vpop.f32.mrb[0].mxu0
    %v3922 = vadd.f32 0.0, %v3921
    %3923 = vmatprep.mubr.bf16.mxu0 0
    %3924 = vmatmul.mubr.bf16.gmra.mrb[0].mxu0 %v3783
    %v3925 = vpop.f32.mrb[0].mxu0
    %v3926 = vadd.f32 0.0, %v3925
    %v3927 = vpop.f32.mrb[0].mxu0
    %v3928 = vadd.f32 0.0, %v3927
    %v3929 = vpop.f32.mrb[0].mxu0
    %v3930 = vadd.f32 0.0, %v3929
    %v3931 = vpop.f32.mrb[0].mxu0
    %v3932 = vadd.f32 0.0, %v3931
    %3933 = vmatprep.mubr.bf16.mxu0 0
    %3934 = vmatmul.mubr.bf16.gmra.mrb[0].mxu0 %v3785
    %v3935 = vpop.f32.mrb[0].mxu0
    %v3936 = vadd.f32 0.0, %v3935
    %v3937 = vpop.f32.mrb[0].mxu0
    %v3938 = vadd.f32 0.0, %v3937
    %v3939 = vpop.f32.mrb[0].mxu0
    %v3940 = vadd.f32 0.0, %v3939
    %v3941 = vpop.f32.mrb[0].mxu0
    %v3942 = vadd.f32 0.0, %v3941
    %3943 = vmatprep.mubr.bf16.mxu0 0
    %3944 = vmatmul.mubr.bf16.gmra.mrb[0].mxu0 %v3784
    %v3945 = vpop.f32.mrb[0].mxu0
    %v3946 = vadd.f32 0.0, %v3945
    %v3947 = vpop.f32.mrb[0].mxu0
    %v3948 = vadd.f32 0.0, %v3947
    %v3949 = vpop.f32.mrb[0].mxu0
    %v3950 = vpop.f32.mrb[0].mxu0
    %3951 = vdwg.mxu0
    %v3952 = vadd.f32 %v3737, %v3906
    %v3953 = vadd.f32 %v3738, %v3908
    %v3954 = vadd.f32 %v3739, %v3910
    %v3955 = vadd.f32 %v3740, %v3912
    %v3956 = vadd.f32 %v3741, %v3916
    %v3957 = vadd.f32 %v3742, %v3918
    %v3958 = vadd.f32 %v3743, %v3920
    %v3959 = vadd.f32 %v3744, %v3922
    %v3960 = vadd.f32 %v3745, %v3926
    %v3961 = vadd.f32 %v3746, %v3928
    %v3962 = vadd.f32 %v3747, %v3930
    %v3963 = vadd.f32 %v3748, %v3932
    %v3964 = vadd.f32 %v3749, %v3936
    %v3965 = vadd.f32 %v3750, %v3938
    %v3966 = vadd.f32 %v3751, %v3940
    %v3967 = vadd.f32 %v3752, %v3942
    %v3968 = vadd.f32 %v3753, %v3946
    %v3969 = vadd.f32 %v3754, %v3948
    %s3970 = scalar_lea.vmem %s4, 512
    %v3971 = vld [vmem:[%s3970] sm:$0xff]
    %v3972 = vld [vmem:[%s3970 + $0x8] sm:$0xff]
    %v3973 = vld [vmem:[%s3970 + $0x10] sm:$0xff]
    %v3974 = vld [vmem:[%s3970 + $0x18] sm:$0xff]
    %v3975 = vld [vmem:[%s3970 + $0x20] sm:$0xff]
    %v3976 = vld [vmem:[%s3970 + $0x28] sm:$0xff]
    %v3977 = vld [vmem:[%s3970 + $0x30] sm:$0xff]
    %v3978 = vld [vmem:[%s3970 + $0x38] sm:$0xff]
    %v3979 = vld [vmem:[%s3970 + $0x40] sm:$0xff]
    %v3980 = vld [vmem:[%s3970 + $0x48] sm:$0xff]
    %v3981 = vld [vmem:[%s3970 + $0x50] sm:$0xff]
    %v3982 = vld [vmem:[%s3970 + $0x58] sm:$0xff]
    %v3983 = vld [vmem:[%s3970 + $0x60] sm:$0xff]
    %v3984 = vld [vmem:[%s3970 + $0x68] sm:$0xff]
    %v3985 = vld [vmem:[%s3970 + $0x70] sm:$0xff]
    %v3986 = vld [vmem:[%s3970 + $0x78] sm:$0xff]
    %v4003 = vunpack.c.l.b16 %v3971
    %v4004 = vunpack.c.h.b16 %v3971
    %v4005 = vunpack.c.l.b16 %v3972
    %v4006 = vunpack.c.h.b16 %v3972
    %v4007 = vunpack.c.l.b16 %v3973
    %v4008 = vunpack.c.h.b16 %v3973
    %v4009 = vunpack.c.l.b16 %v3974
    %v4010 = vunpack.c.h.b16 %v3974
    %v4011 = vunpack.c.l.b16 %v3975
    %v4012 = vunpack.c.h.b16 %v3975
    %v4013 = vunpack.c.l.b16 %v3976
    %v4014 = vunpack.c.h.b16 %v3976
    %v4015 = vunpack.c.l.b16 %v3977
    %v4016 = vunpack.c.h.b16 %v3977
    %v4017 = vunpack.c.l.b16 %v3978
    %v4018 = vunpack.c.h.b16 %v3978
    %v4019 = vunpack.c.l.b16 %v3979
    %v4020 = vunpack.c.h.b16 %v3979
    %v4021 = vunpack.c.l.b16 %v3980
    %v4022 = vunpack.c.h.b16 %v3980
    %v4023 = vunpack.c.l.b16 %v3981
    %v4024 = vunpack.c.h.b16 %v3981
    %v4025 = vunpack.c.l.b16 %v3982
    %v4026 = vunpack.c.h.b16 %v3982
    %v4027 = vunpack.c.l.b16 %v3983
    %v4028 = vunpack.c.h.b16 %v3983
    %v4029 = vunpack.c.l.b16 %v3984
    %v4030 = vunpack.c.h.b16 %v3984
    %v4031 = vunpack.c.l.b16 %v3985
    %v4032 = vunpack.c.h.b16 %v3985
    %v4033 = vunpack.c.l.b16 %v3986
    %v4034 = vunpack.c.h.b16 %v3986
    %v4035 = vpack.c.b16 %v4005, %v4003
    %v4036 = vpack.c.b16 %v4006, %v4004
    %v4037 = vpack.c.b16 %v4009, %v4007
    %v4038 = vpack.c.b16 %v4010, %v4008
    %v4039 = vpack.c.b16 %v4013, %v4011
    %v4040 = vpack.c.b16 %v4014, %v4012
    %v4041 = vpack.c.b16 %v4017, %v4015
    %v4042 = vpack.c.b16 %v4018, %v4016
    %v4043 = vpack.c.b16 %v4021, %v4019
    %v4044 = vpack.c.b16 %v4022, %v4020
    %v4045 = vpack.c.b16 %v4025, %v4023
    %v4046 = vpack.c.b16 %v4026, %v4024
    %v4047 = vpack.c.b16 %v4029, %v4027
    %v4048 = vpack.c.b16 %v4030, %v4028
    %v4049 = vpack.c.b16 %v4033, %v4031
    %v4050 = vpack.c.b16 %v4034, %v4032
    %4067 = vmatprep.subr.bf16.mxu0 %v4036
    %4068 = vmatpush1.bf16.msra.mxu0 %v4035
    %4069 = vmatprep.subr.bf16.mxu0 %v4038
    %4070 = vmatpush1.bf16.msra.mxu0 %v4037
    %4071 = vmatprep.subr.bf16.mxu0 %v4040
    %4072 = vmatpush1.bf16.msra.mxu0 %v4039
    %4073 = vmatprep.subr.bf16.mxu0 %v4042
    %4074 = vmatpush1.bf16.msra.mxu0 %v4041
    %4075 = vmatprep.subr.bf16.mxu0 %v4044
    %4076 = vmatpush1.bf16.msra.mxu0 %v4043
    %4077 = vmatprep.subr.bf16.mxu0 %v4046
    %4078 = vmatpush1.bf16.msra.mxu0 %v4045
    %4079 = vmatprep.subr.bf16.mxu0 %v4048
    %4080 = vmatpush1.bf16.msra.mxu0 %v4047
    %4081 = vmatprep.subr.bf16.mxu0 %v4050
    %4082 = vmatpush1.bf16.msra.mxu0 %v4049
    %4083 = vmatprep.subr.bf16.mxu0 0
    %4084 = vmatpush1.bf16.msra.mxu0 0
    %4085 = vmatprep.subr.bf16.mxu0 0
    %4086 = vmatpush1.bf16.msra.mxu0 0
    %4087 = vmatprep.subr.bf16.mxu0 0
    %4088 = vmatpush1.bf16.msra.mxu0 0
    %4089 = vmatprep.subr.bf16.mxu0 0
    %4090 = vmatpush1.bf16.msra.mxu0 0
    %4091 = vmatprep.subr.bf16.mxu0 0
    %4092 = vmatpush1.bf16.msra.mxu0 0
    %4093 = vmatprep.subr.bf16.mxu0 0
    %4094 = vmatpush1.bf16.msra.mxu0 0
    %4095 = vmatprep.subr.bf16.mxu0 0
    %4096 = vmatpush1.bf16.msra.mxu0 0
    %4097 = vmatprep.subr.bf16.mxu0 0
    %4098 = vmatpush1.bf16.msra.mxu0 0
    %4099 = vmatprep.mubr.bf16.mxu0 0
    %4100 = vmatmul.mubr.bf16.gmra.mrb[0].mxu0 %v3161
    %v4101 = vpop.f32.mrb[0].mxu0
    %v4102 = vadd.f32 0.0, %v4101
    %v4103 = vpop.f32.mrb[0].mxu0
    %v4104 = vadd.f32 0.0, %v4103
    %v4105 = vpop.f32.mrb[0].mxu0
    %v4106 = vadd.f32 0.0, %v4105
    %v4107 = vpop.f32.mrb[0].mxu0
    %v4108 = vadd.f32 0.0, %v4107
    %4109 = vmatprep.mubr.bf16.mxu0 0
    %4110 = vmatmul.mubr.bf16.gmra.mrb[0].mxu0 %v3162
    %v4111 = vpop.f32.mrb[0].mxu0
    %v4112 = vadd.f32 0.0, %v4111
    %v4113 = vpop.f32.mrb[0].mxu0
    %v4114 = vadd.f32 0.0, %v4113
    %v4115 = vpop.f32.mrb[0].mxu0
    %v4116 = vadd.f32 0.0, %v4115
    %v4117 = vpop.f32.mrb[0].mxu0
    %v4118 = vadd.f32 0.0, %v4117
    %4119 = vmatprep.mubr.bf16.mxu0 0
    %4120 = vmatmul.mubr.bf16.gmra.mrb[0].mxu0 %v3163
    %v4121 = vpop.f32.mrb[0].mxu0
    %v4122 = vadd.f32 0.0, %v4121
    %v4123 = vpop.f32.mrb[0].mxu0
    %v4124 = vadd.f32 0.0, %v4123
    %v4125 = vpop.f32.mrb[0].mxu0
    %v4126 = vadd.f32 0.0, %v4125
    %v4127 = vpop.f32.mrb[0].mxu0
    %v4128 = vadd.f32 0.0, %v4127
    %4129 = vmatprep.mubr.bf16.mxu0 0
    %4130 = vmatmul.mubr.bf16.gmra.mrb[0].mxu0 %v3164
    %v4131 = vpop.f32.mrb[0].mxu0
    %v4132 = vadd.f32 0.0, %v4131
    %v4133 = vpop.f32.mrb[0].mxu0
    %v4134 = vadd.f32 0.0, %v4133
    %v4135 = vpop.f32.mrb[0].mxu0
    %v4136 = vadd.f32 0.0, %v4135
    %v4137 = vpop.f32.mrb[0].mxu0
    %v4138 = vadd.f32 0.0, %v4137
    %4139 = vmatprep.mubr.bf16.mxu0 0
    %4140 = vmatmul.mubr.bf16.gmra.mrb[0].mxu0 %v3165
    %v4141 = vpop.f32.mrb[0].mxu0
    %v4142 = vadd.f32 0.0, %v4141
    %v4143 = vpop.f32.mrb[0].mxu0
    %v4144 = vadd.f32 0.0, %v4143
    %v4145 = vpop.f32.mrb[0].mxu0
    %v4146 = vpop.f32.mrb[0].mxu0
    %4147 = vdwg.mxu0
    %v4148 = vadd.f32 %v3952, %v4102
    %v4149 = vadd.f32 %v3953, %v4104
    %v4150 = vadd.f32 %v3954, %v4106
    %v4151 = vadd.f32 %v3955, %v4108
    %v4152 = vadd.f32 %v3956, %v4112
    %v4153 = vadd.f32 %v3957, %v4114
    %v4154 = vadd.f32 %v3958, %v4116
    %v4155 = vadd.f32 %v3959, %v4118
    %v4156 = vadd.f32 %v3960, %v4122
    %v4157 = vadd.f32 %v3961, %v4124
    %v4158 = vadd.f32 %v3962, %v4126
    %v4159 = vadd.f32 %v3963, %v4128
    %v4160 = vadd.f32 %v3964, %v4132
    %v4161 = vadd.f32 %v3965, %v4134
    %v4162 = vadd.f32 %v3966, %v4136
    %v4163 = vadd.f32 %v3967, %v4138
    %v4164 = vadd.f32 %v3968, %v4142
    %v4165 = vadd.f32 %v3969, %v4144
    %s4166 = scalar_lea.vmem %s4, 640
    %v4167 = vld [vmem:[%s4166] sm:$0xff]
    %v4168 = vld [vmem:[%s4166 + $0x8] sm:$0xff]
    %v4169 = vld [vmem:[%s4166 + $0x10] sm:$0xff]
    %v4170 = vld [vmem:[%s4166 + $0x18] sm:$0xff]
    %v4171 = vld [vmem:[%s4166 + $0x20] sm:$0xff]
    %v4172 = vld [vmem:[%s4166 + $0x28] sm:$0xff]
    %v4173 = vld [vmem:[%s4166 + $0x30] sm:$0xff]
    %v4174 = vld [vmem:[%s4166 + $0x38] sm:$0xff]
    %v4175 = vld [vmem:[%s4166 + $0x40] sm:$0xff]
    %v4176 = vld [vmem:[%s4166 + $0x48] sm:$0xff]
    %v4177 = vld [vmem:[%s4166 + $0x50] sm:$0xff]
    %v4178 = vld [vmem:[%s4166 + $0x58] sm:$0xff]
    %v4179 = vld [vmem:[%s4166 + $0x60] sm:$0xff]
    %v4180 = vld [vmem:[%s4166 + $0x68] sm:$0xff]
    %v4181 = vld [vmem:[%s4166 + $0x70] sm:$0xff]
    %v4182 = vld [vmem:[%s4166 + $0x78] sm:$0xff]
    %v4188 = vrot.slane %v3165, 4
    %v4189 = vrot.slane %v3166, 4
    %v4190 = vsel %vm3222, %v4188, %v4189
    %v4191 = vrot.slane %v3167, 4
    %v4192 = vsel %vm3222, %v4189, %v4191
    %v4193 = vrot.slane %v3168, 4
    %v4194 = vsel %vm3222, %v4191, %v4193
    %v4195 = vrot.slane %v3169, 4
    %v4196 = vsel %vm3222, %v4193, %v4195
    %v4218 = vunpack.c.l.b16 %v4167
    %v4219 = vunpack.c.h.b16 %v4167
    %v4220 = vunpack.c.l.b16 %v4168
    %v4221 = vunpack.c.h.b16 %v4168
    %v4222 = vunpack.c.l.b16 %v4169
    %v4223 = vunpack.c.h.b16 %v4169
    %v4224 = vunpack.c.l.b16 %v4170
    %v4225 = vunpack.c.h.b16 %v4170
    %v4226 = vunpack.c.l.b16 %v4171
    %v4227 = vunpack.c.h.b16 %v4171
    %v4228 = vunpack.c.l.b16 %v4172
    %v4229 = vunpack.c.h.b16 %v4172
    %v4230 = vunpack.c.l.b16 %v4173
    %v4231 = vunpack.c.h.b16 %v4173
    %v4232 = vunpack.c.l.b16 %v4174
    %v4233 = vunpack.c.h.b16 %v4174
    %v4234 = vunpack.c.l.b16 %v4175
    %v4235 = vunpack.c.h.b16 %v4175
    %v4236 = vunpack.c.l.b16 %v4176
    %v4237 = vunpack.c.h.b16 %v4176
    %v4238 = vunpack.c.l.b16 %v4177
    %v4239 = vunpack.c.h.b16 %v4177
    %v4240 = vunpack.c.l.b16 %v4178
    %v4241 = vunpack.c.h.b16 %v4178
    %v4242 = vunpack.c.l.b16 %v4179
    %v4243 = vunpack.c.h.b16 %v4179
    %v4244 = vunpack.c.l.b16 %v4180
    %v4245 = vunpack.c.h.b16 %v4180
    %v4246 = vunpack.c.l.b16 %v4181
    %v4247 = vunpack.c.h.b16 %v4181
    %v4248 = vunpack.c.l.b16 %v4182
    %v4249 = vunpack.c.h.b16 %v4182
    %v4250 = vpack.c.b16 %v4220, %v4218
    %v4251 = vpack.c.b16 %v4221, %v4219
    %v4252 = vpack.c.b16 %v4224, %v4222
    %v4253 = vpack.c.b16 %v4225, %v4223
    %v4254 = vpack.c.b16 %v4228, %v4226
    %v4255 = vpack.c.b16 %v4229, %v4227
    %v4256 = vpack.c.b16 %v4232, %v4230
    %v4257 = vpack.c.b16 %v4233, %v4231
    %v4258 = vpack.c.b16 %v4236, %v4234
    %v4259 = vpack.c.b16 %v4237, %v4235
    %v4260 = vpack.c.b16 %v4240, %v4238
    %v4261 = vpack.c.b16 %v4241, %v4239
    %v4262 = vpack.c.b16 %v4244, %v4242
    %v4263 = vpack.c.b16 %v4245, %v4243
    %v4264 = vpack.c.b16 %v4248, %v4246
    %v4265 = vpack.c.b16 %v4249, %v4247
    %4282 = vmatprep.subr.bf16.mxu0 %v4251
    %4283 = vmatpush1.bf16.msra.mxu0 %v4250
    %4284 = vmatprep.subr.bf16.mxu0 %v4253
    %4285 = vmatpush1.bf16.msra.mxu0 %v4252
    %4286 = vmatprep.subr.bf16.mxu0 %v4255
    %4287 = vmatpush1.bf16.msra.mxu0 %v4254
    %4288 = vmatprep.subr.bf16.mxu0 %v4257
    %4289 = vmatpush1.bf16.msra.mxu0 %v4256
    %4290 = vmatprep.subr.bf16.mxu0 %v4259
    %4291 = vmatpush1.bf16.msra.mxu0 %v4258
    %4292 = vmatprep.subr.bf16.mxu0 %v4261
    %4293 = vmatpush1.bf16.msra.mxu0 %v4260
    %4294 = vmatprep.subr.bf16.mxu0 %v4263
    %4295 = vmatpush1.bf16.msra.mxu0 %v4262
    %4296 = vmatprep.subr.bf16.mxu0 %v4265
    %4297 = vmatpush1.bf16.msra.mxu0 %v4264
    %4298 = vmatprep.subr.bf16.mxu0 0
    %4299 = vmatpush1.bf16.msra.mxu0 0
    %4300 = vmatprep.subr.bf16.mxu0 0
    %4301 = vmatpush1.bf16.msra.mxu0 0
    %4302 = vmatprep.subr.bf16.mxu0 0
    %4303 = vmatpush1.bf16.msra.mxu0 0
    %4304 = vmatprep.subr.bf16.mxu0 0
    %4305 = vmatpush1.bf16.msra.mxu0 0
    %4306 = vmatprep.subr.bf16.mxu0 0
    %4307 = vmatpush1.bf16.msra.mxu0 0
    %4308 = vmatprep.subr.bf16.mxu0 0
    %4309 = vmatpush1.bf16.msra.mxu0 0
    %4310 = vmatprep.subr.bf16.mxu0 0
    %4311 = vmatpush1.bf16.msra.mxu0 0
    %4312 = vmatprep.subr.bf16.mxu0 0
    %4313 = vmatpush1.bf16.msra.mxu0 0
    %4314 = vmatprep.mubr.bf16.mxu0 0
    %4315 = vmatmul.mubr.bf16.gmra.mrb[0].mxu0 %v4190
    %v4316 = vpop.f32.mrb[0].mxu0
    %v4317 = vadd.f32 0.0, %v4316
    %v4318 = vpop.f32.mrb[0].mxu0
    %v4319 = vadd.f32 0.0, %v4318
    %v4320 = vpop.f32.mrb[0].mxu0
    %v4321 = vadd.f32 0.0, %v4320
    %v4322 = vpop.f32.mrb[0].mxu0
    %v4323 = vadd.f32 0.0, %v4322
    %4324 = vmatprep.mubr.bf16.mxu0 0
    %4325 = vmatmul.mubr.bf16.gmra.mrb[0].mxu0 %v4192
    %v4326 = vpop.f32.mrb[0].mxu0
    %v4327 = vadd.f32 0.0, %v4326
    %v4328 = vpop.f32.mrb[0].mxu0
    %v4329 = vadd.f32 0.0, %v4328
    %v4330 = vpop.f32.mrb[0].mxu0
    %v4331 = vadd.f32 0.0, %v4330
    %v4332 = vpop.f32.mrb[0].mxu0
    %v4333 = vadd.f32 0.0, %v4332
    %4334 = vmatprep.mubr.bf16.mxu0 0
    %4335 = vmatmul.mubr.bf16.gmra.mrb[0].mxu0 %v4194
    %v4336 = vpop.f32.mrb[0].mxu0
    %v4337 = vadd.f32 0.0, %v4336
    %v4338 = vpop.f32.mrb[0].mxu0
    %v4339 = vadd.f32 0.0, %v4338
    %v4340 = vpop.f32.mrb[0].mxu0
    %v4341 = vadd.f32 0.0, %v4340
    %v4342 = vpop.f32.mrb[0].mxu0
    %v4343 = vadd.f32 0.0, %v4342
    %4344 = vmatprep.mubr.bf16.mxu0 0
    %4345 = vmatmul.mubr.bf16.gmra.mrb[0].mxu0 %v4196
    %v4346 = vpop.f32.mrb[0].mxu0
    %v4347 = vadd.f32 0.0, %v4346
    %v4348 = vpop.f32.mrb[0].mxu0
    %v4349 = vadd.f32 0.0, %v4348
    %v4350 = vpop.f32.mrb[0].mxu0
    %v4351 = vadd.f32 0.0, %v4350
    %v4352 = vpop.f32.mrb[0].mxu0
    %v4353 = vadd.f32 0.0, %v4352
    %4354 = vmatprep.mubr.bf16.mxu0 0
    %4355 = vmatmul.mubr.bf16.gmra.mrb[0].mxu0 %v4195
    %v4356 = vpop.f32.mrb[0].mxu0
    %v4357 = vadd.f32 0.0, %v4356
    %v4358 = vpop.f32.mrb[0].mxu0
    %v4359 = vadd.f32 0.0, %v4358
    %v4360 = vpop.f32.mrb[0].mxu0
    %v4361 = vpop.f32.mrb[0].mxu0
    %4362 = vdwg.mxu0
    %v4363 = vadd.f32 %v4148, %v4317
    %v4364 = vadd.f32 %v4149, %v4319
    %v4365 = vadd.f32 %v4150, %v4321
    %v4366 = vadd.f32 %v4151, %v4323
    %v4367 = vadd.f32 %v4152, %v4327
    %v4368 = vadd.f32 %v4153, %v4329
    %v4369 = vadd.f32 %v4154, %v4331
    %v4370 = vadd.f32 %v4155, %v4333
    %v4371 = vadd.f32 %v4156, %v4337
    %v4372 = vadd.f32 %v4157, %v4339
    %v4373 = vadd.f32 %v4158, %v4341
    %v4374 = vadd.f32 %v4159, %v4343
    %v4375 = vadd.f32 %v4160, %v4347
    %v4376 = vadd.f32 %v4161, %v4349
    %v4377 = vadd.f32 %v4162, %v4351
    %v4378 = vadd.f32 %v4163, %v4353
    %v4379 = vadd.f32 %v4164, %v4357
    %v4380 = vadd.f32 %v4165, %v4359
    %s4381 = scalar_lea.vmem %s4, 768
    %v4382 = vld [vmem:[%s4381] sm:$0xff]
    %v4383 = vld [vmem:[%s4381 + $0x8] sm:$0xff]
    %v4384 = vld [vmem:[%s4381 + $0x10] sm:$0xff]
    %v4385 = vld [vmem:[%s4381 + $0x18] sm:$0xff]
    %v4386 = vld [vmem:[%s4381 + $0x20] sm:$0xff]
    %v4387 = vld [vmem:[%s4381 + $0x28] sm:$0xff]
    %v4388 = vld [vmem:[%s4381 + $0x30] sm:$0xff]
    %v4389 = vld [vmem:[%s4381 + $0x38] sm:$0xff]
    %v4390 = vld [vmem:[%s4381 + $0x40] sm:$0xff]
    %v4391 = vld [vmem:[%s4381 + $0x48] sm:$0xff]
    %v4392 = vld [vmem:[%s4381 + $0x50] sm:$0xff]
    %v4393 = vld [vmem:[%s4381 + $0x58] sm:$0xff]
    %v4394 = vld [vmem:[%s4381 + $0x60] sm:$0xff]
    %v4395 = vld [vmem:[%s4381 + $0x68] sm:$0xff]
    %v4396 = vld [vmem:[%s4381 + $0x70] sm:$0xff]
    %v4397 = vld [vmem:[%s4381 + $0x78] sm:$0xff]
    %v4414 = vunpack.c.l.b16 %v4382
    %v4415 = vunpack.c.h.b16 %v4382
    %v4416 = vunpack.c.l.b16 %v4383
    %v4417 = vunpack.c.h.b16 %v4383
    %v4418 = vunpack.c.l.b16 %v4384
    %v4419 = vunpack.c.h.b16 %v4384
    %v4420 = vunpack.c.l.b16 %v4385
    %v4421 = vunpack.c.h.b16 %v4385
    %v4422 = vunpack.c.l.b16 %v4386
    %v4423 = vunpack.c.h.b16 %v4386
    %v4424 = vunpack.c.l.b16 %v4387
    %v4425 = vunpack.c.h.b16 %v4387
    %v4426 = vunpack.c.l.b16 %v4388
    %v4427 = vunpack.c.h.b16 %v4388
    %v4428 = vunpack.c.l.b16 %v4389
    %v4429 = vunpack.c.h.b16 %v4389
    %v4430 = vunpack.c.l.b16 %v4390
    %v4431 = vunpack.c.h.b16 %v4390
    %v4432 = vunpack.c.l.b16 %v4391
    %v4433 = vunpack.c.h.b16 %v4391
    %v4434 = vunpack.c.l.b16 %v4392
    %v4435 = vunpack.c.h.b16 %v4392
    %v4436 = vunpack.c.l.b16 %v4393
    %v4437 = vunpack.c.h.b16 %v4393
    %v4438 = vunpack.c.l.b16 %v4394
    %v4439 = vunpack.c.h.b16 %v4394
    %v4440 = vunpack.c.l.b16 %v4395
    %v4441 = vunpack.c.h.b16 %v4395
    %v4442 = vunpack.c.l.b16 %v4396
    %v4443 = vunpack.c.h.b16 %v4396
    %v4444 = vunpack.c.l.b16 %v4397
    %v4445 = vunpack.c.h.b16 %v4397
    %v4446 = vpack.c.b16 %v4416, %v4414
    %v4447 = vpack.c.b16 %v4417, %v4415
    %v4448 = vpack.c.b16 %v4420, %v4418
    %v4449 = vpack.c.b16 %v4421, %v4419
    %v4450 = vpack.c.b16 %v4424, %v4422
    %v4451 = vpack.c.b16 %v4425, %v4423
    %v4452 = vpack.c.b16 %v4428, %v4426
    %v4453 = vpack.c.b16 %v4429, %v4427
    %v4454 = vpack.c.b16 %v4432, %v4430
    %v4455 = vpack.c.b16 %v4433, %v4431
    %v4456 = vpack.c.b16 %v4436, %v4434
    %v4457 = vpack.c.b16 %v4437, %v4435
    %v4458 = vpack.c.b16 %v4440, %v4438
    %v4459 = vpack.c.b16 %v4441, %v4439
    %v4460 = vpack.c.b16 %v4444, %v4442
    %v4461 = vpack.c.b16 %v4445, %v4443
    %4478 = vmatprep.subr.bf16.mxu0 %v4447
    %4479 = vmatpush1.bf16.msra.mxu0 %v4446
    %4480 = vmatprep.subr.bf16.mxu0 %v4449
    %4481 = vmatpush1.bf16.msra.mxu0 %v4448
    %4482 = vmatprep.subr.bf16.mxu0 %v4451
    %4483 = vmatpush1.bf16.msra.mxu0 %v4450
    %4484 = vmatprep.subr.bf16.mxu0 %v4453
    %4485 = vmatpush1.bf16.msra.mxu0 %v4452
    %4486 = vmatprep.subr.bf16.mxu0 %v4455
    %4487 = vmatpush1.bf16.msra.mxu0 %v4454
    %4488 = vmatprep.subr.bf16.mxu0 %v4457
    %4489 = vmatpush1.bf16.msra.mxu0 %v4456
    %4490 = vmatprep.subr.bf16.mxu0 %v4459
    %4491 = vmatpush1.bf16.msra.mxu0 %v4458
    %4492 = vmatprep.subr.bf16.mxu0 %v4461
    %4493 = vmatpush1.bf16.msra.mxu0 %v4460
    %4494 = vmatprep.subr.bf16.mxu0 0
    %4495 = vmatpush1.bf16.msra.mxu0 0
    %4496 = vmatprep.subr.bf16.mxu0 0
    %4497 = vmatpush1.bf16.msra.mxu0 0
    %4498 = vmatprep.subr.bf16.mxu0 0
    %4499 = vmatpush1.bf16.msra.mxu0 0
    %4500 = vmatprep.subr.bf16.mxu0 0
    %4501 = vmatpush1.bf16.msra.mxu0 0
    %4502 = vmatprep.subr.bf16.mxu0 0
    %4503 = vmatpush1.bf16.msra.mxu0 0
    %4504 = vmatprep.subr.bf16.mxu0 0
    %4505 = vmatpush1.bf16.msra.mxu0 0
    %4506 = vmatprep.subr.bf16.mxu0 0
    %4507 = vmatpush1.bf16.msra.mxu0 0
    %4508 = vmatprep.subr.bf16.mxu0 0
    %4509 = vmatpush1.bf16.msra.mxu0 0
    %4510 = vmatprep.mubr.bf16.mxu0 0
    %4511 = vmatmul.mubr.bf16.gmra.mrb[0].mxu0 %v3170
    %v4512 = vpop.f32.mrb[0].mxu0
    %v4513 = vadd.f32 0.0, %v4512
    %v4514 = vpop.f32.mrb[0].mxu0
    %v4515 = vadd.f32 0.0, %v4514
    %v4516 = vpop.f32.mrb[0].mxu0
    %v4517 = vadd.f32 0.0, %v4516
    %v4518 = vpop.f32.mrb[0].mxu0
    %v4519 = vadd.f32 0.0, %v4518
    %4520 = vmatprep.mubr.bf16.mxu0 0
    %4521 = vmatmul.mubr.bf16.gmra.mrb[0].mxu0 %v3171
    %v4522 = vpop.f32.mrb[0].mxu0
    %v4523 = vadd.f32 0.0, %v4522
    %v4524 = vpop.f32.mrb[0].mxu0
    %v4525 = vadd.f32 0.0, %v4524
    %v4526 = vpop.f32.mrb[0].mxu0
    %v4527 = vadd.f32 0.0, %v4526
    %v4528 = vpop.f32.mrb[0].mxu0
    %v4529 = vadd.f32 0.0, %v4528
    %4530 = vmatprep.mubr.bf16.mxu0 0
    %4531 = vmatmul.mubr.bf16.gmra.mrb[0].mxu0 %v3172
    %v4532 = vpop.f32.mrb[0].mxu0
    %v4533 = vadd.f32 0.0, %v4532
    %v4534 = vpop.f32.mrb[0].mxu0
    %v4535 = vadd.f32 0.0, %v4534
    %v4536 = vpop.f32.mrb[0].mxu0
    %v4537 = vadd.f32 0.0, %v4536
    %v4538 = vpop.f32.mrb[0].mxu0
    %v4539 = vadd.f32 0.0, %v4538
    %4540 = vmatprep.mubr.bf16.mxu0 0
    %4541 = vmatmul.mubr.bf16.gmra.mrb[0].mxu0 %v3173
    %v4542 = vpop.f32.mrb[0].mxu0
    %v4543 = vadd.f32 0.0, %v4542
    %v4544 = vpop.f32.mrb[0].mxu0
    %v4545 = vadd.f32 0.0, %v4544
    %v4546 = vpop.f32.mrb[0].mxu0
    %v4547 = vadd.f32 0.0, %v4546
    %v4548 = vpop.f32.mrb[0].mxu0
    %v4549 = vadd.f32 0.0, %v4548
    %4550 = vmatprep.mubr.bf16.mxu0 0
    %4551 = vmatmul.mubr.bf16.gmra.mrb[0].mxu0 %v3174
    %v4552 = vpop.f32.mrb[0].mxu0
    %v4553 = vadd.f32 0.0, %v4552
    %v4554 = vpop.f32.mrb[0].mxu0
    %v4555 = vadd.f32 0.0, %v4554
    %v4556 = vpop.f32.mrb[0].mxu0
    %v4557 = vpop.f32.mrb[0].mxu0
    %4558 = vdwg.mxu0
    %v4559 = vadd.f32 %v4363, %v4513
    %v4560 = vadd.f32 %v4364, %v4515
    %v4561 = vadd.f32 %v4365, %v4517
    %v4562 = vadd.f32 %v4366, %v4519
    %v4563 = vadd.f32 %v4367, %v4523
    %v4564 = vadd.f32 %v4368, %v4525
    %v4565 = vadd.f32 %v4369, %v4527
    %v4566 = vadd.f32 %v4370, %v4529
    %v4567 = vadd.f32 %v4371, %v4533
    %v4568 = vadd.f32 %v4372, %v4535
    %v4569 = vadd.f32 %v4373, %v4537
    %v4570 = vadd.f32 %v4374, %v4539
    %v4571 = vadd.f32 %v4375, %v4543
    %v4572 = vadd.f32 %v4376, %v4545
    %v4573 = vadd.f32 %v4377, %v4547
    %v4574 = vadd.f32 %v4378, %v4549
    %v4575 = vadd.f32 %v4379, %v4553
    %v4576 = vadd.f32 %v4380, %v4555
    %s4577 = scalar_lea.vmem %s4, 896
    %v4578 = vld [vmem:[%s4577] sm:$0xff]
    %v4579 = vld [vmem:[%s4577 + $0x8] sm:$0xff]
    %v4580 = vld [vmem:[%s4577 + $0x10] sm:$0xff]
    %v4581 = vld [vmem:[%s4577 + $0x18] sm:$0xff]
    %v4582 = vld [vmem:[%s4577 + $0x20] sm:$0xff]
    %v4583 = vld [vmem:[%s4577 + $0x28] sm:$0xff]
    %v4584 = vld [vmem:[%s4577 + $0x30] sm:$0xff]
    %v4585 = vld [vmem:[%s4577 + $0x38] sm:$0xff]
    %v4586 = vld [vmem:[%s4577 + $0x40] sm:$0xff]
    %v4587 = vld [vmem:[%s4577 + $0x48] sm:$0xff]
    %v4588 = vld [vmem:[%s4577 + $0x50] sm:$0xff]
    %v4589 = vld [vmem:[%s4577 + $0x58] sm:$0xff]
    %v4590 = vld [vmem:[%s4577 + $0x60] sm:$0xff]
    %v4591 = vld [vmem:[%s4577 + $0x68] sm:$0xff]
    %v4592 = vld [vmem:[%s4577 + $0x70] sm:$0xff]
    %v4593 = vld [vmem:[%s4577 + $0x78] sm:$0xff]
    %v4599 = vrot.slane %v3174, 4
    %v4600 = vrot.slane %v3175, 4
    %v4601 = vsel %vm3222, %v4599, %v4600
    %v4602 = vrot.slane %v3176, 4
    %v4603 = vsel %vm3222, %v4600, %v4602
    %v4604 = vrot.slane %v3177, 4
    %v4605 = vsel %vm3222, %v4602, %v4604
    %v4606 = vrot.slane %v3178, 4
    %v4607 = vsel %vm3222, %v4604, %v4606
    %v4629 = vunpack.c.l.b16 %v4578
    %v4630 = vunpack.c.h.b16 %v4578
    %v4631 = vunpack.c.l.b16 %v4579
    %v4632 = vunpack.c.h.b16 %v4579
    %v4633 = vunpack.c.l.b16 %v4580
    %v4634 = vunpack.c.h.b16 %v4580
    %v4635 = vunpack.c.l.b16 %v4581
    %v4636 = vunpack.c.h.b16 %v4581
    %v4637 = vunpack.c.l.b16 %v4582
    %v4638 = vunpack.c.h.b16 %v4582
    %v4639 = vunpack.c.l.b16 %v4583
    %v4640 = vunpack.c.h.b16 %v4583
    %v4641 = vunpack.c.l.b16 %v4584
    %v4642 = vunpack.c.h.b16 %v4584
    %v4643 = vunpack.c.l.b16 %v4585
    %v4644 = vunpack.c.h.b16 %v4585
    %v4645 = vunpack.c.l.b16 %v4586
    %v4646 = vunpack.c.h.b16 %v4586
    %v4647 = vunpack.c.l.b16 %v4587
    %v4648 = vunpack.c.h.b16 %v4587
    %v4649 = vunpack.c.l.b16 %v4588
    %v4650 = vunpack.c.h.b16 %v4588
    %v4651 = vunpack.c.l.b16 %v4589
    %v4652 = vunpack.c.h.b16 %v4589
    %v4653 = vunpack.c.l.b16 %v4590
    %v4654 = vunpack.c.h.b16 %v4590
    %v4655 = vunpack.c.l.b16 %v4591
    %v4656 = vunpack.c.h.b16 %v4591
    %v4657 = vunpack.c.l.b16 %v4592
    %v4658 = vunpack.c.h.b16 %v4592
    %v4659 = vunpack.c.l.b16 %v4593
    %v4660 = vunpack.c.h.b16 %v4593
    %v4661 = vpack.c.b16 %v4631, %v4629
    %v4662 = vpack.c.b16 %v4632, %v4630
    %v4663 = vpack.c.b16 %v4635, %v4633
    %v4664 = vpack.c.b16 %v4636, %v4634
    %v4665 = vpack.c.b16 %v4639, %v4637
    %v4666 = vpack.c.b16 %v4640, %v4638
    %v4667 = vpack.c.b16 %v4643, %v4641
    %v4668 = vpack.c.b16 %v4644, %v4642
    %v4669 = vpack.c.b16 %v4647, %v4645
    %v4670 = vpack.c.b16 %v4648, %v4646
    %v4671 = vpack.c.b16 %v4651, %v4649
    %v4672 = vpack.c.b16 %v4652, %v4650
    %v4673 = vpack.c.b16 %v4655, %v4653
    %v4674 = vpack.c.b16 %v4656, %v4654
    %v4675 = vpack.c.b16 %v4659, %v4657
    %v4676 = vpack.c.b16 %v4660, %v4658
    %4693 = vmatprep.subr.bf16.mxu0 %v4662
    %4694 = vmatpush1.bf16.msra.mxu0 %v4661
    %4695 = vmatprep.subr.bf16.mxu0 %v4664
    %4696 = vmatpush1.bf16.msra.mxu0 %v4663
    %4697 = vmatprep.subr.bf16.mxu0 %v4666
    %4698 = vmatpush1.bf16.msra.mxu0 %v4665
    %4699 = vmatprep.subr.bf16.mxu0 %v4668
    %4700 = vmatpush1.bf16.msra.mxu0 %v4667
    %4701 = vmatprep.subr.bf16.mxu0 %v4670
    %4702 = vmatpush1.bf16.msra.mxu0 %v4669
    %4703 = vmatprep.subr.bf16.mxu0 %v4672
    %4704 = vmatpush1.bf16.msra.mxu0 %v4671
    %4705 = vmatprep.subr.bf16.mxu0 %v4674
    %4706 = vmatpush1.bf16.msra.mxu0 %v4673
    %4707 = vmatprep.subr.bf16.mxu0 %v4676
    %4708 = vmatpush1.bf16.msra.mxu0 %v4675
    %4709 = vmatprep.subr.bf16.mxu0 0
    %4710 = vmatpush1.bf16.msra.mxu0 0
    %4711 = vmatprep.subr.bf16.mxu0 0
    %4712 = vmatpush1.bf16.msra.mxu0 0
    %4713 = vmatprep.subr.bf16.mxu0 0
    %4714 = vmatpush1.bf16.msra.mxu0 0
    %4715 = vmatprep.subr.bf16.mxu0 0
    %4716 = vmatpush1.bf16.msra.mxu0 0
    %4717 = vmatprep.subr.bf16.mxu0 0
    %4718 = vmatpush1.bf16.msra.mxu0 0
    %4719 = vmatprep.subr.bf16.mxu0 0
    %4720 = vmatpush1.bf16.msra.mxu0 0
    %4721 = vmatprep.subr.bf16.mxu0 0
    %4722 = vmatpush1.bf16.msra.mxu0 0
    %4723 = vmatprep.subr.bf16.mxu0 0
    %4724 = vmatpush1.bf16.msra.mxu0 0
    %4725 = vmatprep.mubr.bf16.mxu0 0
    %4726 = vmatmul.mubr.bf16.gmra.mrb[0].mxu0 %v4601
    %v4727 = vpop.f32.mrb[0].mxu0
    %v4728 = vadd.f32 0.0, %v4727
    %v4729 = vpop.f32.mrb[0].mxu0
    %v4730 = vadd.f32 0.0, %v4729
    %v4731 = vpop.f32.mrb[0].mxu0
    %v4732 = vadd.f32 0.0, %v4731
    %v4733 = vpop.f32.mrb[0].mxu0
    %v4734 = vadd.f32 0.0, %v4733
    %4735 = vmatprep.mubr.bf16.mxu0 0
    %4736 = vmatmul.mubr.bf16.gmra.mrb[0].mxu0 %v4603
    %v4737 = vpop.f32.mrb[0].mxu0
    %v4738 = vadd.f32 0.0, %v4737
    %v4739 = vpop.f32.mrb[0].mxu0
    %v4740 = vadd.f32 0.0, %v4739
    %v4741 = vpop.f32.mrb[0].mxu0
    %v4742 = vadd.f32 0.0, %v4741
    %v4743 = vpop.f32.mrb[0].mxu0
    %v4744 = vadd.f32 0.0, %v4743
    %4745 = vmatprep.mubr.bf16.mxu0 0
    %4746 = vmatmul.mubr.bf16.gmra.mrb[0].mxu0 %v4605
    %v4747 = vpop.f32.mrb[0].mxu0
    %v4748 = vadd.f32 0.0, %v4747
    %v4749 = vpop.f32.mrb[0].mxu0
    %v4750 = vadd.f32 0.0, %v4749
    %v4751 = vpop.f32.mrb[0].mxu0
    %v4752 = vadd.f32 0.0, %v4751
    %v4753 = vpop.f32.mrb[0].mxu0
    %v4754 = vadd.f32 0.0, %v4753
    %4755 = vmatprep.mubr.bf16.mxu0 0
    %4756 = vmatmul.mubr.bf16.gmra.mrb[0].mxu0 %v4607
    %v4757 = vpop.f32.mrb[0].mxu0
    %v4758 = vadd.f32 0.0, %v4757
    %v4759 = vpop.f32.mrb[0].mxu0
    %v4760 = vadd.f32 0.0, %v4759
    %v4761 = vpop.f32.mrb[0].mxu0
    %v4762 = vadd.f32 0.0, %v4761
    %v4763 = vpop.f32.mrb[0].mxu0
    %v4764 = vadd.f32 0.0, %v4763
    %4765 = vmatprep.mubr.bf16.mxu0 0
    %4766 = vmatmul.mubr.bf16.gmra.mrb[0].mxu0 %v4606
    %v4767 = vpop.f32.mrb[0].mxu0
    %v4768 = vadd.f32 0.0, %v4767
    %v4769 = vpop.f32.mrb[0].mxu0
    %v4770 = vadd.f32 0.0, %v4769
    %v4771 = vpop.f32.mrb[0].mxu0
    %v4772 = vpop.f32.mrb[0].mxu0
    %4773 = vdwg.mxu0
    %v4774 = vadd.f32 %v4559, %v4728
    %v4775 = vadd.f32 %v4560, %v4730
    %v4776 = vadd.f32 %v4561, %v4732
    %v4777 = vadd.f32 %v4562, %v4734
    %v4778 = vadd.f32 %v4563, %v4738
    %v4779 = vadd.f32 %v4564, %v4740
    %v4780 = vadd.f32 %v4565, %v4742
    %v4781 = vadd.f32 %v4566, %v4744
    %v4782 = vadd.f32 %v4567, %v4748
    %v4783 = vadd.f32 %v4568, %v4750
    %v4784 = vadd.f32 %v4569, %v4752
    %v4785 = vadd.f32 %v4570, %v4754
    %v4786 = vadd.f32 %v4571, %v4758
    %v4787 = vadd.f32 %v4572, %v4760
    %v4788 = vadd.f32 %v4573, %v4762
    %v4789 = vadd.f32 %v4574, %v4764
    %v4790 = vadd.f32 %v4575, %v4768
    %v4791 = vadd.f32 %v4576, %v4770
    %s4792 = scalar_lea.vmem %s4, 1024
    %v4793 = vld [vmem:[%s4792] sm:$0xff]
    %v4794 = vld [vmem:[%s4792 + $0x8] sm:$0xff]
    %v4795 = vld [vmem:[%s4792 + $0x10] sm:$0xff]
    %v4796 = vld [vmem:[%s4792 + $0x18] sm:$0xff]
    %v4797 = vld [vmem:[%s4792 + $0x20] sm:$0xff]
    %v4798 = vld [vmem:[%s4792 + $0x28] sm:$0xff]
    %v4799 = vld [vmem:[%s4792 + $0x30] sm:$0xff]
    %v4800 = vld [vmem:[%s4792 + $0x38] sm:$0xff]
    %v4801 = vld [vmem:[%s4792 + $0x40] sm:$0xff]
    %v4802 = vld [vmem:[%s4792 + $0x48] sm:$0xff]
    %v4803 = vld [vmem:[%s4792 + $0x50] sm:$0xff]
    %v4804 = vld [vmem:[%s4792 + $0x58] sm:$0xff]
    %v4805 = vld [vmem:[%s4792 + $0x60] sm:$0xff]
    %v4806 = vld [vmem:[%s4792 + $0x68] sm:$0xff]
    %v4807 = vld [vmem:[%s4792 + $0x70] sm:$0xff]
    %v4808 = vld [vmem:[%s4792 + $0x78] sm:$0xff]
    %v4825 = vunpack.c.l.b16 %v4793
    %v4826 = vunpack.c.h.b16 %v4793
    %v4827 = vunpack.c.l.b16 %v4794
    %v4828 = vunpack.c.h.b16 %v4794
    %v4829 = vunpack.c.l.b16 %v4795
    %v4830 = vunpack.c.h.b16 %v4795
    %v4831 = vunpack.c.l.b16 %v4796
    %v4832 = vunpack.c.h.b16 %v4796
    %v4833 = vunpack.c.l.b16 %v4797
    %v4834 = vunpack.c.h.b16 %v4797
    %v4835 = vunpack.c.l.b16 %v4798
    %v4836 = vunpack.c.h.b16 %v4798
    %v4837 = vunpack.c.l.b16 %v4799
    %v4838 = vunpack.c.h.b16 %v4799
    %v4839 = vunpack.c.l.b16 %v4800
    %v4840 = vunpack.c.h.b16 %v4800
    %v4841 = vunpack.c.l.b16 %v4801
    %v4842 = vunpack.c.h.b16 %v4801
    %v4843 = vunpack.c.l.b16 %v4802
    %v4844 = vunpack.c.h.b16 %v4802
    %v4845 = vunpack.c.l.b16 %v4803
    %v4846 = vunpack.c.h.b16 %v4803
    %v4847 = vunpack.c.l.b16 %v4804
    %v4848 = vunpack.c.h.b16 %v4804
    %v4849 = vunpack.c.l.b16 %v4805
    %v4850 = vunpack.c.h.b16 %v4805
    %v4851 = vunpack.c.l.b16 %v4806
    %v4852 = vunpack.c.h.b16 %v4806
    %v4853 = vunpack.c.l.b16 %v4807
    %v4854 = vunpack.c.h.b16 %v4807
    %v4855 = vunpack.c.l.b16 %v4808
    %v4856 = vunpack.c.h.b16 %v4808
    %v4857 = vpack.c.b16 %v4827, %v4825
    %v4858 = vpack.c.b16 %v4828, %v4826
    %v4859 = vpack.c.b16 %v4831, %v4829
    %v4860 = vpack.c.b16 %v4832, %v4830
    %v4861 = vpack.c.b16 %v4835, %v4833
    %v4862 = vpack.c.b16 %v4836, %v4834
    %v4863 = vpack.c.b16 %v4839, %v4837
    %v4864 = vpack.c.b16 %v4840, %v4838
    %v4865 = vpack.c.b16 %v4843, %v4841
    %v4866 = vpack.c.b16 %v4844, %v4842
    %v4867 = vpack.c.b16 %v4847, %v4845
    %v4868 = vpack.c.b16 %v4848, %v4846
    %v4869 = vpack.c.b16 %v4851, %v4849
    %v4870 = vpack.c.b16 %v4852, %v4850
    %v4871 = vpack.c.b16 %v4855, %v4853
    %v4872 = vpack.c.b16 %v4856, %v4854
    %4889 = vmatprep.subr.bf16.mxu0 %v4858
    %4890 = vmatpush1.bf16.msra.mxu0 %v4857
    %4891 = vmatprep.subr.bf16.mxu0 %v4860
    %4892 = vmatpush1.bf16.msra.mxu0 %v4859
    %4893 = vmatprep.subr.bf16.mxu0 %v4862
    %4894 = vmatpush1.bf16.msra.mxu0 %v4861
    %4895 = vmatprep.subr.bf16.mxu0 %v4864
    %4896 = vmatpush1.bf16.msra.mxu0 %v4863
    %4897 = vmatprep.subr.bf16.mxu0 %v4866
    %4898 = vmatpush1.bf16.msra.mxu0 %v4865
    %4899 = vmatprep.subr.bf16.mxu0 %v4868
    %4900 = vmatpush1.bf16.msra.mxu0 %v4867
    %4901 = vmatprep.subr.bf16.mxu0 %v4870
    %4902 = vmatpush1.bf16.msra.mxu0 %v4869
    %4903 = vmatprep.subr.bf16.mxu0 %v4872
    %4904 = vmatpush1.bf16.msra.mxu0 %v4871
    %4905 = vmatprep.subr.bf16.mxu0 0
    %4906 = vmatpush1.bf16.msra.mxu0 0
    %4907 = vmatprep.subr.bf16.mxu0 0
    %4908 = vmatpush1.bf16.msra.mxu0 0
    %4909 = vmatprep.subr.bf16.mxu0 0
    %4910 = vmatpush1.bf16.msra.mxu0 0
    %4911 = vmatprep.subr.bf16.mxu0 0
    %4912 = vmatpush1.bf16.msra.mxu0 0
    %4913 = vmatprep.subr.bf16.mxu0 0
    %4914 = vmatpush1.bf16.msra.mxu0 0
    %4915 = vmatprep.subr.bf16.mxu0 0
    %4916 = vmatpush1.bf16.msra.mxu0 0
    %4917 = vmatprep.subr.bf16.mxu0 0
    %4918 = vmatpush1.bf16.msra.mxu0 0
    %4919 = vmatprep.subr.bf16.mxu0 0
    %4920 = vmatpush1.bf16.msra.mxu0 0
    %4921 = vmatprep.mubr.bf16.mxu0 0
    %4922 = vmatmul.mubr.bf16.gmra.mrb[0].mxu0 %v3179
    %v4923 = vpop.f32.mrb[0].mxu0
    %v4924 = vadd.f32 0.0, %v4923
    %v4925 = vpop.f32.mrb[0].mxu0
    %v4926 = vadd.f32 0.0, %v4925
    %v4927 = vpop.f32.mrb[0].mxu0
    %v4928 = vadd.f32 0.0, %v4927
    %v4929 = vpop.f32.mrb[0].mxu0
    %v4930 = vadd.f32 0.0, %v4929
    %4931 = vmatprep.mubr.bf16.mxu0 0
    %4932 = vmatmul.mubr.bf16.gmra.mrb[0].mxu0 %v3180
    %v4933 = vpop.f32.mrb[0].mxu0
    %v4934 = vadd.f32 0.0, %v4933
    %v4935 = vpop.f32.mrb[0].mxu0
    %v4936 = vadd.f32 0.0, %v4935
    %v4937 = vpop.f32.mrb[0].mxu0
    %v4938 = vadd.f32 0.0, %v4937
    %v4939 = vpop.f32.mrb[0].mxu0
    %v4940 = vadd.f32 0.0, %v4939
    %4941 = vmatprep.mubr.bf16.mxu0 0
    %4942 = vmatmul.mubr.bf16.gmra.mrb[0].mxu0 %v3181
    %v4943 = vpop.f32.mrb[0].mxu0
    %v4944 = vadd.f32 0.0, %v4943
    %v4945 = vpop.f32.mrb[0].mxu0
    %v4946 = vadd.f32 0.0, %v4945
    %v4947 = vpop.f32.mrb[0].mxu0
    %v4948 = vadd.f32 0.0, %v4947
    %v4949 = vpop.f32.mrb[0].mxu0
    %v4950 = vadd.f32 0.0, %v4949
    %4951 = vmatprep.mubr.bf16.mxu0 0
    %4952 = vmatmul.mubr.bf16.gmra.mrb[0].mxu0 %v3182
    %v4953 = vpop.f32.mrb[0].mxu0
    %v4954 = vadd.f32 0.0, %v4953
    %v4955 = vpop.f32.mrb[0].mxu0
    %v4956 = vadd.f32 0.0, %v4955
    %v4957 = vpop.f32.mrb[0].mxu0
    %v4958 = vadd.f32 0.0, %v4957
    %v4959 = vpop.f32.mrb[0].mxu0
    %v4960 = vadd.f32 0.0, %v4959
    %4961 = vmatprep.mubr.bf16.mxu0 0
    %4962 = vmatmul.mubr.bf16.gmra.mrb[0].mxu0 %v3183
    %v4963 = vpop.f32.mrb[0].mxu0
    %v4964 = vadd.f32 0.0, %v4963
    %v4965 = vpop.f32.mrb[0].mxu0
    %v4966 = vadd.f32 0.0, %v4965
    %v4967 = vpop.f32.mrb[0].mxu0
    %v4968 = vpop.f32.mrb[0].mxu0
    %4969 = vdwg.mxu0
    %v4970 = vadd.f32 %v4774, %v4924
    %v4971 = vadd.f32 %v4775, %v4926
    %v4972 = vadd.f32 %v4776, %v4928
    %v4973 = vadd.f32 %v4777, %v4930
    %v4974 = vadd.f32 %v4778, %v4934
    %v4975 = vadd.f32 %v4779, %v4936
    %v4976 = vadd.f32 %v4780, %v4938
    %v4977 = vadd.f32 %v4781, %v4940
    %v4978 = vadd.f32 %v4782, %v4944
    %v4979 = vadd.f32 %v4783, %v4946
    %v4980 = vadd.f32 %v4784, %v4948
    %v4981 = vadd.f32 %v4785, %v4950
    %v4982 = vadd.f32 %v4786, %v4954
    %v4983 = vadd.f32 %v4787, %v4956
    %v4984 = vadd.f32 %v4788, %v4958
    %v4985 = vadd.f32 %v4789, %v4960
    %v4986 = vadd.f32 %v4790, %v4964
    %v4987 = vadd.f32 %v4791, %v4966
    %v4988 = vld [vmem:[%s5] sm:$0x3]
    %v4990 = vlaneseq
    %v4991 = vshrl.u32 %v4990, 7
    %v4992 = vsub.s32 0, %v4991
    %v4993 = vrot.slane %v4988, %v4992
    %v4994 = vlaneseq
    %v4995 = vshrl.u32 %v4994, 7
    %v4996 = vsub.s32 1, %v4995
    %v4997 = vrot.slane %v4988, %v4996
    %v5000 = vadd.f32 %v4970, %v4993
    %v5001 = vadd.f32 %v4971, %v4997
    %v5002 = vadd.f32 %v4972, %v4993
    %v5003 = vadd.f32 %v4973, %v4997
    %v5004 = vadd.f32 %v4974, %v4993
    %v5005 = vadd.f32 %v4975, %v4997
    %v5006 = vadd.f32 %v4976, %v4993
    %v5007 = vadd.f32 %v4977, %v4997
    %v5008 = vadd.f32 %v4978, %v4993
    %v5009 = vadd.f32 %v4979, %v4997
    %v5010 = vadd.f32 %v4980, %v4993
    %v5011 = vadd.f32 %v4981, %v4997
    %v5012 = vadd.f32 %v4982, %v4993
    %v5013 = vadd.f32 %v4983, %v4997
    %v5014 = vadd.f32 %v4984, %v4993
    %v5015 = vadd.f32 %v4985, %v4997
    %v5016 = vadd.f32 %v4986, %v4993
    %v5017 = vadd.f32 %v4987, %v4997
    %v5018 = vmax.f32 %v5000, 0.0
    %v5019 = vmax.f32 %v5001, 0.0
    %v5020 = vmax.f32 %v5002, 0.0
    %v5021 = vmax.f32 %v5003, 0.0
    %v5022 = vmax.f32 %v5004, 0.0
    %v5023 = vmax.f32 %v5005, 0.0
    %v5024 = vmax.f32 %v5006, 0.0
    %v5025 = vmax.f32 %v5007, 0.0
    %v5026 = vmax.f32 %v5008, 0.0
    %v5027 = vmax.f32 %v5009, 0.0
    %v5028 = vmax.f32 %v5010, 0.0
    %v5029 = vmax.f32 %v5011, 0.0
    %v5030 = vmax.f32 %v5012, 0.0
    %v5031 = vmax.f32 %v5013, 0.0
    %v5032 = vmax.f32 %v5014, 0.0
    %v5033 = vmax.f32 %v5015, 0.0
    %v5034 = vmax.f32 %v5016, 0.0
    %v5035 = vmax.f32 %v5017, 0.0
    %v5036 = vld [vmem:[%s6] sm:$0x3]
    %vm5037 = vcmask 588800
    %v5039 = vsel %vm5037, %v5036, 0
    %5041 = vmatprep.subr.mxu0 %v5019
    %5042 = vmatpush1.msra.mxu0 %v5018
    %5043 = vmatprep.subr.mxu0 %v5021
    %5044 = vmatpush1.msra.mxu0 %v5020
    %5045 = vmatprep.subr.mxu0 %v5023
    %5046 = vmatpush1.msra.mxu0 %v5022
    %5047 = vmatprep.subr.mxu0 %v5025
    %5048 = vmatpush1.msra.mxu0 %v5024
    %5049 = vmatprep.subr.mxu0 %v5027
    %5050 = vmatpush1.msra.mxu0 %v5026
    %5051 = vmatprep.subr.mxu0 %v5029
    %5052 = vmatpush1.msra.mxu0 %v5028
    %5053 = vmatprep.subr.mxu0 %v5031
    %5054 = vmatpush1.msra.mxu0 %v5030
    %5055 = vmatprep.subr.mxu0 %v5033
    %5056 = vmatpush1.msra.mxu0 %v5032
    %5057 = vmatprep.subr.mxu0 %v5035
    %5058 = vmatpush1.msra.mxu0 %v5034
    %5059 = vmatprep.subr.mxu0 0.0
    %5060 = vmatpush1.msra.mxu0 0.0
    %5061 = vmatprep.subr.mxu0 0.0
    %5062 = vmatpush1.msra.mxu0 0.0
    %5063 = vmatprep.subr.mxu0 0.0
    %5064 = vmatpush1.msra.mxu0 0.0
    %5065 = vmatprep.subr.mxu0 0.0
    %5066 = vmatpush1.msra.mxu0 0.0
    %5067 = vmatprep.subr.mxu0 0.0
    %5068 = vmatpush1.msra.mxu0 0.0
    %5069 = vmatprep.subr.mxu0 0.0
    %5070 = vmatpush1.msra.mxu0 0.0
    %5071 = vmatprep.subr.mxu0 0.0
    %5072 = vmatpush1.msra.mxu0 0.0
    %5073 = vmatprep.subr.mxu0 0.0
    %5074 = vmatpush1.msra.mxu0 0.0
    %5075 = vmatprep.subr.mxu0 0.0
    %5076 = vmatpush1.msra.mxu0 0.0
    %5077 = vmatprep.subr.mxu0 0.0
    %5078 = vmatpush1.msra.mxu0 0.0
    %5079 = vmatprep.subr.mxu0 0.0
    %5080 = vmatpush1.msra.mxu0 0.0
    %5081 = vmatprep.subr.mxu0 0.0
    %5082 = vmatpush1.msra.mxu0 0.0
    %5083 = vmatprep.subr.mxu0 0.0
    %5084 = vmatpush1.msra.mxu0 0.0
    %5085 = vmatprep.subr.mxu0 0.0
    %5086 = vmatpush1.msra.mxu0 0.0
    %5087 = vmatprep.subr.mxu0 0.0
    %5088 = vmatpush1.msra.mxu0 0.0
    %5089 = vmatprep.subr.mxu0 0.0
    %5090 = vmatpush1.msra.mxu0 0.0
    %5091 = vmatprep.subr.mxu0 0.0
    %5092 = vmatpush1.msra.mxu0 0.0
    %5093 = vmatprep.subr.mxu0 0.0
    %5094 = vmatpush1.msra.mxu0 0.0
    %5095 = vmatprep.subr.mxu0 0.0
    %5096 = vmatpush1.msra.mxu0 0.0
    %5097 = vmatprep.subr.mxu0 0.0
    %5098 = vmatpush1.msra.mxu0 0.0
    %5099 = vmatprep.subr.mxu0 0.0
    %5100 = vmatpush1.msra.mxu0 0.0
    %5101 = vmatprep.subr.mxu0 0.0
    %5102 = vmatpush1.msra.mxu0 0.0
    %5103 = vmatprep.subr.mxu0 0.0
    %5104 = vmatpush1.msra.mxu0 0.0
    %5105 = vmatprep.mubr.f32.mxu0 0.0
    %5106 = vmatmul.mubr.f32.gmra.mrb[0].mxu0 %v5039
    %v5107 = vpop.f32.mrb[0].mxu0
    %v5108 = vadd.f32 0.0, %v5107
    %v5109 = vpop.f32.mrb[0].mxu0
    %v5110 = vadd.f32 0.0, %v5109
    %5111 = vdwg.mxu0
    %v5112 = vpack.c.bf16 %v5108, %v5108
    %v5113 = vpack.c.bf16 %v5110, %v5110
    %v5114 = vld [vmem:[%s7] sm:$0xf]
    %v5115 = vld [vmem:[%s7 + $0x4] sm:$0xf]
    %v5116 = vld [vmem:[%s7 + $0x8] sm:$0xf]
    %v5117 = vld [vmem:[%s7 + $0xc] sm:$0xf]
    %v5118 = vld [vmem:[%s7 + $0x10] sm:$0xf]
    %v5119 = vld [vmem:[%s7 + $0x14] sm:$0xf]
    %v5120 = vld [vmem:[%s7 + $0x18] sm:$0xf]
    %v5121 = vld [vmem:[%s7 + $0x1c] sm:$0xf]
    %v5122 = vld [vmem:[%s7 + $0x20] sm:$0xf]
    %v5123 = vld [vmem:[%s7 + $0x24] sm:$0xf]
    %v5124 = vld [vmem:[%s7 + $0x28] sm:$0xf]
    %v5125 = vld [vmem:[%s7 + $0x2c] sm:$0xf]
    %v5126 = vld [vmem:[%s7 + $0x30] sm:$0xf]
    %v5127 = vld [vmem:[%s7 + $0x34] sm:$0xf]
    %v5128 = vld [vmem:[%s7 + $0x38] sm:$0xf]
    %v5129 = vld [vmem:[%s7 + $0x3c] sm:$0xf]
    %v5130 = vld [vmem:[%s7 + $0x40] sm:$0xf]
    %v5131 = vld [vmem:[%s7 + $0x44] sm:$0xf]
    %v5132 = vld [vmem:[%s7 + $0x48] sm:$0xf]
    %v5133 = vld [vmem:[%s7 + $0x4c] sm:$0xf]
    %v5134 = vld [vmem:[%s7 + $0x50] sm:$0xf]
    %v5135 = vld [vmem:[%s7 + $0x54] sm:$0xf]
    %v5136 = vld [vmem:[%s7 + $0x58] sm:$0xf]
    %v5137 = vld [vmem:[%s7 + $0x5c] sm:$0xf]
    %v5138 = vld [vmem:[%s7 + $0x60] sm:$0xf]
    %v5139 = vld [vmem:[%s7 + $0x64] sm:$0xf]
    %v5140 = vld [vmem:[%s7 + $0x68] sm:$0xf]
    %v5141 = vld [vmem:[%s7 + $0x6c] sm:$0xf]
    %v5142 = vld [vmem:[%s7 + $0x70] sm:$0xf]
    %v5143 = vld [vmem:[%s7 + $0x74] sm:$0xf]
    %v5144 = vld [vmem:[%s7 + $0x78] sm:$0xf]
    %v5145 = vld [vmem:[%s7 + $0x7c] sm:$0xf]
    %v5146 = vld [vmem:[%s8] sm:$0x1]
    %v5148 = vlaneseq
    %v5149 = vshrl.u32 %v5148, 7
    %v5150 = vsub.s32 0, %v5149
    %v5151 = vrot.slane %v5146, %v5150
    %v5185 = vunpack.c.l.b16 %v5114
    %v5186 = vunpack.c.l.b16 %v5115
    %v5187 = vunpack.c.l.b16 %v5116
    %v5188 = vunpack.c.l.b16 %v5117
    %v5189 = vunpack.c.l.b16 %v5118
    %v5190 = vunpack.c.l.b16 %v5119
    %v5191 = vunpack.c.l.b16 %v5120
    %v5192 = vunpack.c.l.b16 %v5121
    %v5193 = vunpack.c.l.b16 %v5122
    %v5194 = vunpack.c.l.b16 %v5123
    %v5195 = vunpack.c.l.b16 %v5124
    %v5196 = vunpack.c.l.b16 %v5125
    %v5197 = vunpack.c.l.b16 %v5126
    %v5198 = vunpack.c.l.b16 %v5127
    %v5199 = vunpack.c.l.b16 %v5128
    %v5200 = vunpack.c.l.b16 %v5129
    %v5201 = vunpack.c.l.b16 %v5130
    %v5202 = vunpack.c.l.b16 %v5131
    %v5203 = vunpack.c.l.b16 %v5132
    %v5204 = vunpack.c.l.b16 %v5133
    %v5205 = vunpack.c.l.b16 %v5134
    %v5206 = vunpack.c.l.b16 %v5135
    %v5207 = vunpack.c.l.b16 %v5136
    %v5208 = vunpack.c.l.b16 %v5137
    %v5209 = vunpack.c.l.b16 %v5138
    %v5210 = vunpack.c.l.b16 %v5139
    %v5211 = vunpack.c.l.b16 %v5140
    %v5212 = vunpack.c.l.b16 %v5141
    %v5213 = vunpack.c.l.b16 %v5142
    %v5214 = vunpack.c.l.b16 %v5143
    %v5215 = vunpack.c.l.b16 %v5144
    %v5216 = vunpack.c.l.b16 %v5145
    %v5217 = vpack.c.b16 %v5186, %v5185
    %v5218 = vpack.c.b16 %v5188, %v5187
    %v5219 = vpack.c.b16 %v5190, %v5189
    %v5220 = vpack.c.b16 %v5192, %v5191
    %v5221 = vpack.c.b16 %v5194, %v5193
    %v5222 = vpack.c.b16 %v5196, %v5195
    %v5223 = vpack.c.b16 %v5198, %v5197
    %v5224 = vpack.c.b16 %v5200, %v5199
    %v5225 = vpack.c.b16 %v5202, %v5201
    %v5226 = vpack.c.b16 %v5204, %v5203
    %v5227 = vpack.c.b16 %v5206, %v5205
    %v5228 = vpack.c.b16 %v5208, %v5207
    %v5229 = vpack.c.b16 %v5210, %v5209
    %v5230 = vpack.c.b16 %v5212, %v5211
    %v5231 = vpack.c.b16 %v5214, %v5213
    %v5232 = vpack.c.b16 %v5216, %v5215
    %5249 = vmatprep.subr.bf16.mxu0 0
    %5250 = vmatpush1.bf16.msra.mxu0 %v5217
    %5251 = vmatprep.subr.bf16.mxu0 0
    %5252 = vmatpush1.bf16.msra.mxu0 %v5218
    %5253 = vmatprep.subr.bf16.mxu0 0
    %5254 = vmatpush1.bf16.msra.mxu0 %v5219
    %5255 = vmatprep.subr.bf16.mxu0 0
    %5256 = vmatpush1.bf16.msra.mxu0 %v5220
    %5257 = vmatprep.subr.bf16.mxu0 0
    %5258 = vmatpush1.bf16.msra.mxu0 %v5221
    %5259 = vmatprep.subr.bf16.mxu0 0
    %5260 = vmatpush1.bf16.msra.mxu0 %v5222
    %5261 = vmatprep.subr.bf16.mxu0 0
    %5262 = vmatpush1.bf16.msra.mxu0 %v5223
    %5263 = vmatprep.subr.bf16.mxu0 0
    %5264 = vmatpush1.bf16.msra.mxu0 %v5224
    %5265 = vmatprep.subr.bf16.mxu0 0
    %5266 = vmatpush1.bf16.msra.mxu0 %v5225
    %5267 = vmatprep.subr.bf16.mxu0 0
    %5268 = vmatpush1.bf16.msra.mxu0 %v5226
    %5269 = vmatprep.subr.bf16.mxu0 0
    %5270 = vmatpush1.bf16.msra.mxu0 %v5227
    %5271 = vmatprep.subr.bf16.mxu0 0
    %5272 = vmatpush1.bf16.msra.mxu0 %v5228
    %5273 = vmatprep.subr.bf16.mxu0 0
    %5274 = vmatpush1.bf16.msra.mxu0 %v5229
    %5275 = vmatprep.subr.bf16.mxu0 0
    %5276 = vmatpush1.bf16.msra.mxu0 %v5230
    %5277 = vmatprep.subr.bf16.mxu0 0
    %5278 = vmatpush1.bf16.msra.mxu0 %v5231
    %5279 = vmatprep.subr.bf16.mxu0 0
    %5280 = vmatpush1.bf16.msra.mxu0 %v5232
    %5281 = vmatprep.mubr.bf16.mxu0 %v5113
    %5282 = vmatmul.mubr.bf16.gmra.mrb[0].mxu0 %v5112
    %v5283 = vpop.f32.mrb[0].mxu0
    %v5284 = vadd.f32 %v5151, %v5283
    %v5285 = vpop.f32.mrb[0].mxu0
    %v5286 = vpop.f32.mrb[0].mxu0
    %v5287 = vpop.f32.mrb[0].mxu0
    %5288 = vdwg.mxu0
    %5289 = vst [vmem:[#allocation2] sm:$0x3] %v5284
    // Predicated region
    $region38: #{feature_extractor_forward.5} parent=1 // pred_check
      _
    $region39: #{feature_extractor_forward.5} parent=1 // pred_check_branch
      %5291 = sbr.rel (0) target = $region41
    $region40: #{feature_extractor_forward.5} parent=1 // pred_region
      %s5293 = ssub.s32 32, 32
      %5294 = vsyncadd [#allocation3], %s5293
      %s5296 = sshll.u32 [#allocation2], 4
      %s5297 = int_to_ptr.vmem [resolvable:$true] %s5296
      %5299 = dma.vmem_to_hbm [thread:$0]  %s5297, 32, %s9, [#allocation3]
    $region41: #{feature_extractor_forward.5} parent=1 // pred_fallthru
      _
    // Predicated region
    $region42: #{feature_extractor_forward.5} parent=1 // pred_check
      _
    $region43: #{feature_extractor_forward.5} parent=1 // pred_check_branch
      %5301 = sbr.rel (0) target = $region45
    $region44: #{feature_extractor_forward.5} parent=1 // pred_region
      %5302 = dma.done [#allocation3], 32
    $region45: #{feature_extractor_forward.5} parent=1 // pred_fallthru
      _
    %5303 = vsyncpa [#allocation3], 1

</llo_original>
